<compile_context>
chip_gen: v7x
topology: tpu7x:2x2x1
jax: 0.10.0
libtpu: 0.0.40
codegen_flags: <defaults>
</compile_context>

<pallas_src>
import functools

import jax
import jax.numpy as jnp
from jax import lax
from jax.experimental import pallas as pl
from jax.experimental.pallas import tpu as pltpu

IN_C, OUT_C, H, W, K = 3, 15, 32, 32, 3
HP, WP = H // 2, W // 2              # 16, 16 after 2x2 max-pool
HW = HP * WP                         # 256 pooled positions
HID1, HID2 = 32, 25
OUT_SIZE = 10
IN_SIZE = IN_C * H * W               # 3072
PATCH = IN_C * K * K                 # 27 im2col features (c*9 + ky*3 + kx)
PATCH_PAD = 32                       # padded contraction dim (multiple of 8)
NQ = 4                               # 2x2 pool quadrants
TILE_N = 8                           # samples per grid step (VMEM-safe on v5e/v6e/v7x)


# ----------------------------- Pallas kernel -------------------------------- #

def _fused_forward_kernel(pq_ref, wct_ref, bc_ref, wm_ref, mask_ref, s_ref,
                          b1_ref, w2_ref, b2_ref, w3_ref, b3_ref, out_ref,
                          *, tile_n):
    """conv3x3(pad=1) -> ReLU -> maxpool2x2 -> fc1+ReLU -> fc2+ReLU -> fc3
    for one block of `tile_n` samples, entirely in VMEM.

    pq_ref  : (1, 32, 4*tile_n*256)  transposed im2col patches;
              lane index = q*(tile_n*256) + n*256 + hw, sublane = patch feature
    wct_ref : (15, 32)   conv weight rows=out-channel, cols=padded feature
    bc_ref  : (15, 1)    conv bias (column vector, broadcast over lanes)
    wm_ref  : (256, 480) fc1 weight regrouped: wm[hw, c*32+o] = fc1_w[o, c*256+hw]
    mask_ref: (15, 480)  block-diagonal channel mask  mask[c, c'*32+o] = (c == c')
    s_ref   : (480, 32)  fold matrix  s[c*32+o, o'] = (o == o')
    out_ref : (tile_n, out_size)
    """
    nt = tile_n * HW
    p = pq_ref[0]                                                      # (32, 4*nt)

    # conv for every (quadrant, sample, position) of the block: ONE MXU matmul.
    y = jnp.dot(wct_ref[...], p, preferred_element_type=jnp.float32)  # (15, 4*nt)

    # MaxPool2d(2,2) == max over the 4 quadrant slices.  Bias + ReLU applied
    # after the max (monotone => bit-exact, 1 bias add / 1 ReLU instead of 4).
    m = jnp.maximum(jnp.maximum(y[:, 0 * nt:1 * nt], y[:, 1 * nt:2 * nt]),
                    jnp.maximum(y[:, 2 * nt:3 * nt], y[:, 3 * nt:4 * nt]))
    act = jnp.maximum(m + bc_ref[...], 0.0)                            # (15, nt)

    wm, maskc, sfold = wm_ref[...], mask_ref[...], s_ref[...]
    b1, w2, b2 = b1_ref[...], w2_ref[...], b2_ref[...]
    w3, b3 = w3_ref[...], b3_ref[...]
    ones_c = jnp.ones((1, OUT_C), jnp.float32)                         # hoisted

    for n in range(tile_n):                  # static unroll, tile_n is small
        a_n = act[:, n * HW:(n + 1) * HW]                              # (15, 256)
        # fc1 without materializing the 3840-wide flatten:
        #   d[c, c'*32+o] = sum_hw a_n[c,hw] * fc1_w[o, c'*256+hw]
        #   keep only c == c' (mask), sum over c, fold 32-wide blocks with s.
        d = jnp.dot(a_n, wm, preferred_element_type=jnp.float32)       # (15, 480)
        e = jnp.dot(ones_c, d * maskc,
                    preferred_element_type=jnp.float32)                # (1, 480)
        h1 = jnp.maximum(
            jnp.dot(e, sfold, preferred_element_type=jnp.float32) + b1, 0.0)
        h2 = jnp.maximum(
            jnp.dot(h1, w2, preferred_element_type=jnp.float32) + b2, 0.0)
        yo = jnp.dot(h2, w3, preferred_element_type=jnp.float32) + b3  # (1, out)
        out_ref[pl.ds(n, 1), :] = yo


# ------------------------- parameter prep (run once) ------------------------ #

def prepare_params(params):
    """All weight layout transforms precomputed once, outside the jitted forward."""
    conv_w, conv_b, fc1_w, fc1_b, fc2_w, fc2_b, fc3_w, fc3_b = params
    out_size = fc3_w.shape[0]

    wct = jnp.pad(conv_w.reshape(OUT_C, PATCH).astype(jnp.float32),
                  ((0, 0), (0, PATCH_PAD - PATCH)))                    # (15, 32)
    bc = conv_b.reshape(OUT_C, 1).astype(jnp.float32)                  # (15, 1)

    # wm[hw, c*32 + o] = fc1_w[o, c*256 + hw]   (PyTorch NCHW flatten order)
    wm = jnp.transpose(fc1_w.reshape(HID1, OUT_C, HW), (2, 1, 0)
                       ).reshape(HW, OUT_C * HID1).astype(jnp.float32)  # (256, 480)
    maskc = jnp.repeat(jnp.eye(OUT_C, dtype=jnp.float32), HID1, axis=1)  # (15, 480)
    sfold = jnp.tile(jnp.eye(HID1, dtype=jnp.float32), (OUT_C, 1))       # (480, 32)

    b1 = fc1_b.reshape(1, HID1).astype(jnp.float32)
    w2 = fc2_w.T.astype(jnp.float32)
    b2 = fc2_b.reshape(1, HID2).astype(jnp.float32)
    w3 = fc3_w.T.astype(jnp.float32)
    b3 = fc3_b.reshape(1, out_size).astype(jnp.float32)
    return (wct, bc, wm, maskc, sfold, b1, w2, b2, w3, b3)


# ------------------------------ JAX wrapper --------------------------------- #

def neuralnet_forward(x, kparams, tile_n=TILE_N):
    """x: (N, 3072) -> logits (N, out_size), one fused pallas_call."""
    wct, bc, wm, maskc, sfold, b1, w2, b2, w3, b3 = kparams
    out_size = w3.shape[1]

    n = x.shape[0]
    np_ = ((n + tile_n - 1) // tile_n) * tile_n
    g = np_ // tile_n
    xin = jnp.pad(x, ((0, np_ - n), (0, 0))) if np_ != n else x

    # im2col glue (depends on x, stays inside jit):
    x_nhwc = jnp.transpose(xin.reshape(np_, IN_C, H, W), (0, 2, 3, 1))
    xp = jnp.pad(x_nhwc, ((0, 0), (1, 1), (1, 1), (0, 0)))             # pad=1
    feats = [xp[:, ky:ky + H, kx:kx + W, c]
             for c in range(IN_C) for ky in range(K) for kx in range(K)]
    patches = jnp.stack(feats, axis=-1)                                # (NP,32,32,27)

    # pool quadrants (dy,dx) in {0,1}^2, then transpose so patch-features are
    # rows and (q, sample, pooled-position) are a single lane-dense axis.
    quads = jnp.stack([patches[:, dy::2, dx::2, :]
                       for dy in (0, 1) for dx in (0, 1)], axis=1)     # (NP,4,16,16,27)
    pq = quads.reshape(np_, NQ, HW, PATCH)
    pq = jnp.pad(pq, ((0, 0), (0, 0), (0, 0), (0, PATCH_PAD - PATCH)))
    pq = pq.reshape(g, tile_n, NQ, HW, PATCH_PAD)
    pq = jnp.transpose(pq, (0, 4, 2, 1, 3)).reshape(g, PATCH_PAD, NQ * tile_n * HW)

    x_lanes = NQ * tile_n * HW
    kernel = functools.partial(_fused_forward_kernel, tile_n=tile_n)

    out = pl.pallas_call(
        kernel,
        out_shape=jax.ShapeDtypeStruct((np_, out_size), jnp.float32),
        grid=(g,),
        in_specs=[
            pl.BlockSpec((1, PATCH_PAD, x_lanes), lambda i: (i, 0, 0)),
            pl.BlockSpec((OUT_C, PATCH_PAD), lambda i: (0, 0)),
            pl.BlockSpec((OUT_C, 1), lambda i: (0, 0)),
            pl.BlockSpec((HW, OUT_C * HID1), lambda i: (0, 0)),
            pl.BlockSpec((OUT_C, OUT_C * HID1), lambda i: (0, 0)),
            pl.BlockSpec((OUT_C * HID1, HID1), lambda i: (0, 0)),
            pl.BlockSpec((1, HID1), lambda i: (0, 0)),
            pl.BlockSpec((HID1, HID2), lambda i: (0, 0)),
            pl.BlockSpec((1, HID2), lambda i: (0, 0)),
            pl.BlockSpec((HID2, out_size), lambda i: (0, 0)),
            pl.BlockSpec((1, out_size), lambda i: (0, 0)),
        ],
        out_specs=pl.BlockSpec((tile_n, out_size), lambda i: (i, 0)),
        compiler_params=pltpu.CompilerParams(dimension_semantics=("parallel",)),
    )(pq, wct, bc, wm, maskc, sfold, b1, w2, b2, w3, b3)
    return out[:n]


# -------------------------- pure-JAX reference ------------------------------ #

def reference_forward(x, params):
    (conv_w, conv_b, fc1_w, fc1_b, fc2_w, fc2_b, fc3_w, fc3_b) = params
    n = x.shape[0]
    xi = x.reshape(n, IN_C, H, W)
    y = lax.conv_general_dilated(xi, conv_w, (1, 1), ((1, 1), (1, 1)),
                                 dimension_numbers=("NCHW", "OIHW", "NCHW"))
    y = jnp.maximum(y + conv_b.reshape(1, OUT_C, 1, 1), 0.0)
    y = lax.reduce_window(y, -jnp.inf, lax.max, (1, 1, 2, 2), (1, 1, 2, 2), "VALID")
    y = y.reshape(n, OUT_C * HW)                                       # NCHW flatten
    h1 = jnp.maximum(y @ fc1_w.T + fc1_b, 0.0)
    h2 = jnp.maximum(h1 @ fc2_w.T + fc2_b, 0.0)
    return h2 @ fc3_w.T + fc3_b


# ----------------------------------- main ----------------------------------- #

if __name__ == "__main__":
    key = jax.random.PRNGKey(0)
    ks = jax.random.split(key, 9)

    # Parameters in PyTorch shape conventions (deterministic synthetic init).
    conv_w = 0.05 * jax.random.normal(ks[0], (OUT_C, IN_C, K, K), jnp.float32)
    conv_b = 0.05 * jax.random.normal(ks[1], (OUT_C,), jnp.float32)
    fc1_w = 0.02 * jax.random.normal(ks[2], (HID1, OUT_C * HW), jnp.float32)
    fc1_b = 0.02 * jax.random.normal(ks[3], (HID1,), jnp.float32)
    fc2_w = 0.10 * jax.random.normal(ks[4], (HID2, HID1), jnp.float32)
    fc2_b = 0.10 * jax.random.normal(ks[5], (HID2,), jnp.float32)
    fc3_w = 0.10 * jax.random.normal(ks[6], (OUT_SIZE, HID2), jnp.float32)
    fc3_b = 0.10 * jax.random.normal(ks[7], (OUT_SIZE,), jnp.float32)
    params = (conv_w, conv_b, fc1_w, fc1_b, fc2_w, fc2_b, fc3_w, fc3_b)

    # One-time weight layout prep (outside jit, per the performance review).
    kparams = prepare_params(params)

    N = 16
    x = jax.random.normal(ks[8], (N, IN_SIZE), jnp.float32)

    fwd = jax.jit(neuralnet_forward)
    y = fwd(x, kparams)
    jax.block_until_ready(y)

    y_ref = reference_forward(x, params)
    assert y.shape == (N, OUT_SIZE), y.shape
    assert jnp.allclose(y, y_ref, rtol=1e-3, atol=1e-3), (
        f"max abs diff {jnp.max(jnp.abs(y - y_ref))}")

    print("KERNEL_OK")
</pallas_src>

<mosaic_0001>
module attributes {stable_mosaic.version = 11 : i64} {
  func.func @_fused_forward_kernel(%arg0: i32, %arg1: memref<1x32x8192xf32, #tpu.memory_space<vmem>>, %arg2: memref<15x32xf32, #tpu.memory_space<vmem>>, %arg3: memref<15x1xf32, #tpu.memory_space<vmem>>, %arg4: memref<256x480xf32, #tpu.memory_space<vmem>>, %arg5: memref<15x480xf32, #tpu.memory_space<vmem>>, %arg6: memref<480x32xf32, #tpu.memory_space<vmem>>, %arg7: memref<1x32xf32, #tpu.memory_space<vmem>>, %arg8: memref<32x25xf32, #tpu.memory_space<vmem>>, %arg9: memref<1x25xf32, #tpu.memory_space<vmem>>, %arg10: memref<25x10xf32, #tpu.memory_space<vmem>>, %arg11: memref<1x10xf32, #tpu.memory_space<vmem>>, %arg12: memref<8x10xf32, #tpu.memory_space<vmem>>) attributes {dimension_semantics = [#tpu.dimension_semantics<parallel>], iteration_bounds = array<i64: 2>, scalar_prefetch = 0 : i64, scratch_operands = 0 : i64, tpu.core_type = #tpu.core_type<tc>, window_params = [{transform_indices = @transform_0, window_bounds = array<i64: 1, 32, 8192>}, {pipeline_mode = #tpu.pipeline_mode<synchronous>, transform_indices = @transform_1, window_bounds = array<i64: 15, 32>}, {pipeline_mode = #tpu.pipeline_mode<synchronous>, transform_indices = @transform_2, window_bounds = array<i64: 15, 1>}, {pipeline_mode = #tpu.pipeline_mode<synchronous>, transform_indices = @transform_3, window_bounds = array<i64: 256, 480>}, {pipeline_mode = #tpu.pipeline_mode<synchronous>, transform_indices = @transform_4, window_bounds = array<i64: 15, 480>}, {pipeline_mode = #tpu.pipeline_mode<synchronous>, transform_indices = @transform_5, window_bounds = array<i64: 480, 32>}, {pipeline_mode = #tpu.pipeline_mode<synchronous>, transform_indices = @transform_6, window_bounds = array<i64: 1, 32>}, {pipeline_mode = #tpu.pipeline_mode<synchronous>, transform_indices = @transform_7, window_bounds = array<i64: 32, 25>}, {pipeline_mode = #tpu.pipeline_mode<synchronous>, transform_indices = @transform_8, window_bounds = array<i64: 1, 25>}, {pipeline_mode = #tpu.pipeline_mode<synchronous>, transform_indices = @transform_9, window_bounds = array<i64: 25, 10>}, {pipeline_mode = #tpu.pipeline_mode<synchronous>, transform_indices = @transform_10, window_bounds = array<i64: 1, 10>}, {transform_indices = @transform_11, window_bounds = array<i64: 8, 10>}]} {
    %c0 = arith.constant 0 : index
    %c0_0 = arith.constant 0 : index
    %c0_1 = arith.constant 0 : index
    %0 = vector.load %arg1[%c0, %c0_0, %c0_1] : memref<1x32x8192xf32, #tpu.memory_space<vmem>>, vector<1x32x8192xf32>
    %1 = vector.shape_cast %0 : vector<1x32x8192xf32> to vector<32x8192xf32>
    %c0_2 = arith.constant 0 : index
    %c0_3 = arith.constant 0 : index
    %2 = vector.load %arg2[%c0_2, %c0_3] : memref<15x32xf32, #tpu.memory_space<vmem>>, vector<15x32xf32>
    %cst = arith.constant dense<0.000000e+00> : vector<15x8192xf32>
    %3 = tpu.matmul %2, %1, %cst {dimension_numbers = #tpu.dot_dimension_numbers<[1], [0], [0], [1], [0, 0, 1, 1], [], []>} : vector<15x32xf32>, vector<32x8192xf32>, vector<15x8192xf32> -> vector<15x8192xf32>
    %4 = vector.extract_strided_slice %3 {offsets = [0, 0], sizes = [15, 2048], strides = [1, 1]} : vector<15x8192xf32> to vector<15x2048xf32>
    %5 = vector.extract_strided_slice %3 {offsets = [0, 2048], sizes = [15, 2048], strides = [1, 1]} : vector<15x8192xf32> to vector<15x2048xf32>
    %6 = arith.maximumf %4, %5 : vector<15x2048xf32>
    %7 = vector.extract_strided_slice %3 {offsets = [0, 4096], sizes = [15, 2048], strides = [1, 1]} : vector<15x8192xf32> to vector<15x2048xf32>
    %8 = vector.extract_strided_slice %3 {offsets = [0, 6144], sizes = [15, 2048], strides = [1, 1]} : vector<15x8192xf32> to vector<15x2048xf32>
    %9 = arith.maximumf %7, %8 : vector<15x2048xf32>
    %10 = arith.maximumf %6, %9 : vector<15x2048xf32>
    %c0_4 = arith.constant 0 : index
    %c0_5 = arith.constant 0 : index
    %11 = vector.load %arg3[%c0_4, %c0_5] : memref<15x1xf32, #tpu.memory_space<vmem>>, vector<15x1xf32>
    %12 = vector.broadcast %11 : vector<15x1xf32> to vector<15x2048xf32>
    %13 = arith.addf %10, %12 : vector<15x2048xf32>
    %cst_6 = arith.constant 0.000000e+00 : f32
    %14 = vector.broadcast %cst_6 : f32 to vector<15x2048xf32>
    %15 = arith.maximumf %13, %14 : vector<15x2048xf32>
    %c0_7 = arith.constant 0 : index
    %c0_8 = arith.constant 0 : index
    %16 = vector.load %arg4[%c0_7, %c0_8] : memref<256x480xf32, #tpu.memory_space<vmem>>, vector<256x480xf32>
    %c0_9 = arith.constant 0 : index
    %c0_10 = arith.constant 0 : index
    %17 = vector.load %arg5[%c0_9, %c0_10] : memref<15x480xf32, #tpu.memory_space<vmem>>, vector<15x480xf32>
    %c0_11 = arith.constant 0 : index
    %c0_12 = arith.constant 0 : index
    %18 = vector.load %arg6[%c0_11, %c0_12] : memref<480x32xf32, #tpu.memory_space<vmem>>, vector<480x32xf32>
    %c0_13 = arith.constant 0 : index
    %c0_14 = arith.constant 0 : index
    %19 = vector.load %arg7[%c0_13, %c0_14] : memref<1x32xf32, #tpu.memory_space<vmem>>, vector<1x32xf32>
    %c0_15 = arith.constant 0 : index
    %c0_16 = arith.constant 0 : index
    %20 = vector.load %arg8[%c0_15, %c0_16] : memref<32x25xf32, #tpu.memory_space<vmem>>, vector<32x25xf32>
    %c0_17 = arith.constant 0 : index
    %c0_18 = arith.constant 0 : index
    %21 = vector.load %arg9[%c0_17, %c0_18] : memref<1x25xf32, #tpu.memory_space<vmem>>, vector<1x25xf32>
    %c0_19 = arith.constant 0 : index
    %c0_20 = arith.constant 0 : index
    %22 = vector.load %arg10[%c0_19, %c0_20] : memref<25x10xf32, #tpu.memory_space<vmem>>, vector<25x10xf32>
    %c0_21 = arith.constant 0 : index
    %c0_22 = arith.constant 0 : index
    %23 = vector.load %arg11[%c0_21, %c0_22] : memref<1x10xf32, #tpu.memory_space<vmem>>, vector<1x10xf32>
    %cst_23 = arith.constant 1.000000e+00 : f32
    %24 = vector.broadcast %cst_23 : f32 to vector<1x15xf32>
    %25 = vector.extract_strided_slice %15 {offsets = [0, 0], sizes = [15, 256], strides = [1, 1]} : vector<15x2048xf32> to vector<15x256xf32>
    %cst_24 = arith.constant dense<0.000000e+00> : vector<15x480xf32>
    %26 = tpu.matmul %25, %16, %cst_24 {dimension_numbers = #tpu.dot_dimension_numbers<[1], [0], [0], [1], [0, 0, 1, 1], [], []>} : vector<15x256xf32>, vector<256x480xf32>, vector<15x480xf32> -> vector<15x480xf32>
    %27 = arith.mulf %26, %17 : vector<15x480xf32>
    %cst_25 = arith.constant dense<0.000000e+00> : vector<1x480xf32>
    %28 = tpu.matmul %24, %27, %cst_25 {dimension_numbers = #tpu.dot_dimension_numbers<[1], [0], [0], [1], [0, 0, 1, 1], [], []>} : vector<1x15xf32>, vector<15x480xf32>, vector<1x480xf32> -> vector<1x480xf32>
    %cst_26 = arith.constant dense<0.000000e+00> : vector<1x32xf32>
    %29 = tpu.matmul %28, %18, %cst_26 {dimension_numbers = #tpu.dot_dimension_numbers<[1], [0], [0], [1], [0, 0, 1, 1], [], []>} : vector<1x480xf32>, vector<480x32xf32>, vector<1x32xf32> -> vector<1x32xf32>
    %30 = arith.addf %29, %19 : vector<1x32xf32>
    %cst_27 = arith.constant 0.000000e+00 : f32
    %31 = vector.broadcast %cst_27 : f32 to vector<1x32xf32>
    %32 = arith.maximumf %30, %31 : vector<1x32xf32>
    %cst_28 = arith.constant dense<0.000000e+00> : vector<1x25xf32>
    %33 = tpu.matmul %32, %20, %cst_28 {dimension_numbers = #tpu.dot_dimension_numbers<[1], [0], [0], [1], [0, 0, 1, 1], [], []>} : vector<1x32xf32>, vector<32x25xf32>, vector<1x25xf32> -> vector<1x25xf32>
    %34 = arith.addf %33, %21 : vector<1x25xf32>
    %cst_29 = arith.constant 0.000000e+00 : f32
    %35 = vector.broadcast %cst_29 : f32 to vector<1x25xf32>
    %36 = arith.maximumf %34, %35 : vector<1x25xf32>
    %cst_30 = arith.constant dense<0.000000e+00> : vector<1x10xf32>
    %37 = tpu.matmul %36, %22, %cst_30 {dimension_numbers = #tpu.dot_dimension_numbers<[1], [0], [0], [1], [0, 0, 1, 1], [], []>} : vector<1x25xf32>, vector<25x10xf32>, vector<1x10xf32> -> vector<1x10xf32>
    %38 = arith.addf %37, %23 : vector<1x10xf32>
    %c0_31 = arith.constant 0 : index
    %c0_32 = arith.constant 0 : index
    %39 = vector.load %arg12[%c0_31, %c0_32] : memref<8x10xf32, #tpu.memory_space<vmem>>, vector<1x10xf32>
    tpu.vector_store %arg12[%c0_31, %c0_32], %38 {strides = array<i32>} : memref<8x10xf32, #tpu.memory_space<vmem>>, vector<1x10xf32>,
    %40 = vector.extract_strided_slice %15 {offsets = [0, 256], sizes = [15, 256], strides = [1, 1]} : vector<15x2048xf32> to vector<15x256xf32>
    %cst_33 = arith.constant dense<0.000000e+00> : vector<15x480xf32>
    %41 = tpu.matmul %40, %16, %cst_33 {dimension_numbers = #tpu.dot_dimension_numbers<[1], [0], [0], [1], [0, 0, 1, 1], [], []>} : vector<15x256xf32>, vector<256x480xf32>, vector<15x480xf32> -> vector<15x480xf32>
    %42 = arith.mulf %41, %17 : vector<15x480xf32>
    %cst_34 = arith.constant dense<0.000000e+00> : vector<1x480xf32>
    %43 = tpu.matmul %24, %42, %cst_34 {dimension_numbers = #tpu.dot_dimension_numbers<[1], [0], [0], [1], [0, 0, 1, 1], [], []>} : vector<1x15xf32>, vector<15x480xf32>, vector<1x480xf32> -> vector<1x480xf32>
    %cst_35 = arith.constant dense<0.000000e+00> : vector<1x32xf32>
    %44 = tpu.matmul %43, %18, %cst_35 {dimension_numbers = #tpu.dot_dimension_numbers<[1], [0], [0], [1], [0, 0, 1, 1], [], []>} : vector<1x480xf32>, vector<480x32xf32>, vector<1x32xf32> -> vector<1x32xf32>
    %45 = arith.addf %44, %19 : vector<1x32xf32>
    %cst_36 = arith.constant 0.000000e+00 : f32
    %46 = vector.broadcast %cst_36 : f32 to vector<1x32xf32>
    %47 = arith.maximumf %45, %46 : vector<1x32xf32>
    %cst_37 = arith.constant dense<0.000000e+00> : vector<1x25xf32>
    %48 = tpu.matmul %47, %20, %cst_37 {dimension_numbers = #tpu.dot_dimension_numbers<[1], [0], [0], [1], [0, 0, 1, 1], [], []>} : vector<1x32xf32>, vector<32x25xf32>, vector<1x25xf32> -> vector<1x25xf32>
    %49 = arith.addf %48, %21 : vector<1x25xf32>
    %cst_38 = arith.constant 0.000000e+00 : f32
    %50 = vector.broadcast %cst_38 : f32 to vector<1x25xf32>
    %51 = arith.maximumf %49, %50 : vector<1x25xf32>
    %cst_39 = arith.constant dense<0.000000e+00> : vector<1x10xf32>
    %52 = tpu.matmul %51, %22, %cst_39 {dimension_numbers = #tpu.dot_dimension_numbers<[1], [0], [0], [1], [0, 0, 1, 1], [], []>} : vector<1x25xf32>, vector<25x10xf32>, vector<1x10xf32> -> vector<1x10xf32>
    %53 = arith.addf %52, %23 : vector<1x10xf32>
    %c1 = arith.constant 1 : index
    %c0_40 = arith.constant 0 : index
    %54 = vector.load %arg12[%c1, %c0_40] : memref<8x10xf32, #tpu.memory_space<vmem>>, vector<1x10xf32>
    tpu.vector_store %arg12[%c1, %c0_40], %53 {strides = array<i32>} : memref<8x10xf32, #tpu.memory_space<vmem>>, vector<1x10xf32>,
    %55 = vector.extract_strided_slice %15 {offsets = [0, 512], sizes = [15, 256], strides = [1, 1]} : vector<15x2048xf32> to vector<15x256xf32>
    %cst_41 = arith.constant dense<0.000000e+00> : vector<15x480xf32>
    %56 = tpu.matmul %55, %16, %cst_41 {dimension_numbers = #tpu.dot_dimension_numbers<[1], [0], [0], [1], [0, 0, 1, 1], [], []>} : vector<15x256xf32>, vector<256x480xf32>, vector<15x480xf32> -> vector<15x480xf32>
    %57 = arith.mulf %56, %17 : vector<15x480xf32>
    %cst_42 = arith.constant dense<0.000000e+00> : vector<1x480xf32>
    %58 = tpu.matmul %24, %57, %cst_42 {dimension_numbers = #tpu.dot_dimension_numbers<[1], [0], [0], [1], [0, 0, 1, 1], [], []>} : vector<1x15xf32>, vector<15x480xf32>, vector<1x480xf32> -> vector<1x480xf32>
    %cst_43 = arith.constant dense<0.000000e+00> : vector<1x32xf32>
    %59 = tpu.matmul %58, %18, %cst_43 {dimension_numbers = #tpu.dot_dimension_numbers<[1], [0], [0], [1], [0, 0, 1, 1], [], []>} : vector<1x480xf32>, vector<480x32xf32>, vector<1x32xf32> -> vector<1x32xf32>
    %60 = arith.addf %59, %19 : vector<1x32xf32>
    %cst_44 = arith.constant 0.000000e+00 : f32
    %61 = vector.broadcast %cst_44 : f32 to vector<1x32xf32>
    %62 = arith.maximumf %60, %61 : vector<1x32xf32>
    %cst_45 = arith.constant dense<0.000000e+00> : vector<1x25xf32>
    %63 = tpu.matmul %62, %20, %cst_45 {dimension_numbers = #tpu.dot_dimension_numbers<[1], [0], [0], [1], [0, 0, 1, 1], [], []>} : vector<1x32xf32>, vector<32x25xf32>, vector<1x25xf32> -> vector<1x25xf32>
    %64 = arith.addf %63, %21 : vector<1x25xf32>
    %cst_46 = arith.constant 0.000000e+00 : f32
    %65 = vector.broadcast %cst_46 : f32 to vector<1x25xf32>
    %66 = arith.maximumf %64, %65 : vector<1x25xf32>
    %cst_47 = arith.constant dense<0.000000e+00> : vector<1x10xf32>
    %67 = tpu.matmul %66, %22, %cst_47 {dimension_numbers = #tpu.dot_dimension_numbers<[1], [0], [0], [1], [0, 0, 1, 1], [], []>} : vector<1x25xf32>, vector<25x10xf32>, vector<1x10xf32> -> vector<1x10xf32>
    %68 = arith.addf %67, %23 : vector<1x10xf32>
    %c2 = arith.constant 2 : index
    %c0_48 = arith.constant 0 : index
    %69 = vector.load %arg12[%c2, %c0_48] : memref<8x10xf32, #tpu.memory_space<vmem>>, vector<1x10xf32>
    tpu.vector_store %arg12[%c2, %c0_48], %68 {strides = array<i32>} : memref<8x10xf32, #tpu.memory_space<vmem>>, vector<1x10xf32>,
    %70 = vector.extract_strided_slice %15 {offsets = [0, 768], sizes = [15, 256], strides = [1, 1]} : vector<15x2048xf32> to vector<15x256xf32>
    %cst_49 = arith.constant dense<0.000000e+00> : vector<15x480xf32>
    %71 = tpu.matmul %70, %16, %cst_49 {dimension_numbers = #tpu.dot_dimension_numbers<[1], [0], [0], [1], [0, 0, 1, 1], [], []>} : vector<15x256xf32>, vector<256x480xf32>, vector<15x480xf32> -> vector<15x480xf32>
    %72 = arith.mulf %71, %17 : vector<15x480xf32>
    %cst_50 = arith.constant dense<0.000000e+00> : vector<1x480xf32>
    %73 = tpu.matmul %24, %72, %cst_50 {dimension_numbers = #tpu.dot_dimension_numbers<[1], [0], [0], [1], [0, 0, 1, 1], [], []>} : vector<1x15xf32>, vector<15x480xf32>, vector<1x480xf32> -> vector<1x480xf32>
    %cst_51 = arith.constant dense<0.000000e+00> : vector<1x32xf32>
    %74 = tpu.matmul %73, %18, %cst_51 {dimension_numbers = #tpu.dot_dimension_numbers<[1], [0], [0], [1], [0, 0, 1, 1], [], []>} : vector<1x480xf32>, vector<480x32xf32>, vector<1x32xf32> -> vector<1x32xf32>
    %75 = arith.addf %74, %19 : vector<1x32xf32>
    %cst_52 = arith.constant 0.000000e+00 : f32
    %76 = vector.broadcast %cst_52 : f32 to vector<1x32xf32>
    %77 = arith.maximumf %75, %76 : vector<1x32xf32>
    %cst_53 = arith.constant dense<0.000000e+00> : vector<1x25xf32>
    %78 = tpu.matmul %77, %20, %cst_53 {dimension_numbers = #tpu.dot_dimension_numbers<[1], [0], [0], [1], [0, 0, 1, 1], [], []>} : vector<1x32xf32>, vector<32x25xf32>, vector<1x25xf32> -> vector<1x25xf32>
    %79 = arith.addf %78, %21 : vector<1x25xf32>
    %cst_54 = arith.constant 0.000000e+00 : f32
    %80 = vector.broadcast %cst_54 : f32 to vector<1x25xf32>
    %81 = arith.maximumf %79, %80 : vector<1x25xf32>
    %cst_55 = arith.constant dense<0.000000e+00> : vector<1x10xf32>
    %82 = tpu.matmul %81, %22, %cst_55 {dimension_numbers = #tpu.dot_dimension_numbers<[1], [0], [0], [1], [0, 0, 1, 1], [], []>} : vector<1x25xf32>, vector<25x10xf32>, vector<1x10xf32> -> vector<1x10xf32>
    %83 = arith.addf %82, %23 : vector<1x10xf32>
    %c3 = arith.constant 3 : index
    %c0_56 = arith.constant 0 : index
    %84 = vector.load %arg12[%c3, %c0_56] : memref<8x10xf32, #tpu.memory_space<vmem>>, vector<1x10xf32>
    tpu.vector_store %arg12[%c3, %c0_56], %83 {strides = array<i32>} : memref<8x10xf32, #tpu.memory_space<vmem>>, vector<1x10xf32>,
    %85 = vector.extract_strided_slice %15 {offsets = [0, 1024], sizes = [15, 256], strides = [1, 1]} : vector<15x2048xf32> to vector<15x256xf32>
    %cst_57 = arith.constant dense<0.000000e+00> : vector<15x480xf32>
    %86 = tpu.matmul %85, %16, %cst_57 {dimension_numbers = #tpu.dot_dimension_numbers<[1], [0], [0], [1], [0, 0, 1, 1], [], []>} : vector<15x256xf32>, vector<256x480xf32>, vector<15x480xf32> -> vector<15x480xf32>
    %87 = arith.mulf %86, %17 : vector<15x480xf32>
    %cst_58 = arith.constant dense<0.000000e+00> : vector<1x480xf32>
    %88 = tpu.matmul %24, %87, %cst_58 {dimension_numbers = #tpu.dot_dimension_numbers<[1], [0], [0], [1], [0, 0, 1, 1], [], []>} : vector<1x15xf32>, vector<15x480xf32>, vector<1x480xf32> -> vector<1x480xf32>
    %cst_59 = arith.constant dense<0.000000e+00> : vector<1x32xf32>
    %89 = tpu.matmul %88, %18, %cst_59 {dimension_numbers = #tpu.dot_dimension_numbers<[1], [0], [0], [1], [0, 0, 1, 1], [], []>} : vector<1x480xf32>, vector<480x32xf32>, vector<1x32xf32> -> vector<1x32xf32>
    %90 = arith.addf %89, %19 : vector<1x32xf32>
    %cst_60 = arith.constant 0.000000e+00 : f32
    %91 = vector.broadcast %cst_60 : f32 to vector<1x32xf32>
    %92 = arith.maximumf %90, %91 : vector<1x32xf32>
    %cst_61 = arith.constant dense<0.000000e+00> : vector<1x25xf32>
    %93 = tpu.matmul %92, %20, %cst_61 {dimension_numbers = #tpu.dot_dimension_numbers<[1], [0], [0], [1], [0, 0, 1, 1], [], []>} : vector<1x32xf32>, vector<32x25xf32>, vector<1x25xf32> -> vector<1x25xf32>
    %94 = arith.addf %93, %21 : vector<1x25xf32>
    %cst_62 = arith.constant 0.000000e+00 : f32
    %95 = vector.broadcast %cst_62 : f32 to vector<1x25xf32>
    %96 = arith.maximumf %94, %95 : vector<1x25xf32>
    %cst_63 = arith.constant dense<0.000000e+00> : vector<1x10xf32>
    %97 = tpu.matmul %96, %22, %cst_63 {dimension_numbers = #tpu.dot_dimension_numbers<[1], [0], [0], [1], [0, 0, 1, 1], [], []>} : vector<1x25xf32>, vector<25x10xf32>, vector<1x10xf32> -> vector<1x10xf32>
    %98 = arith.addf %97, %23 : vector<1x10xf32>
    %c4 = arith.constant 4 : index
    %c0_64 = arith.constant 0 : index
    %99 = vector.load %arg12[%c4, %c0_64] : memref<8x10xf32, #tpu.memory_space<vmem>>, vector<1x10xf32>
    tpu.vector_store %arg12[%c4, %c0_64], %98 {strides = array<i32>} : memref<8x10xf32, #tpu.memory_space<vmem>>, vector<1x10xf32>,
    %100 = vector.extract_strided_slice %15 {offsets = [0, 1280], sizes = [15, 256], strides = [1, 1]} : vector<15x2048xf32> to vector<15x256xf32>
    %cst_65 = arith.constant dense<0.000000e+00> : vector<15x480xf32>
    %101 = tpu.matmul %100, %16, %cst_65 {dimension_numbers = #tpu.dot_dimension_numbers<[1], [0], [0], [1], [0, 0, 1, 1], [], []>} : vector<15x256xf32>, vector<256x480xf32>, vector<15x480xf32> -> vector<15x480xf32>
    %102 = arith.mulf %101, %17 : vector<15x480xf32>
    %cst_66 = arith.constant dense<0.000000e+00> : vector<1x480xf32>
    %103 = tpu.matmul %24, %102, %cst_66 {dimension_numbers = #tpu.dot_dimension_numbers<[1], [0], [0], [1], [0, 0, 1, 1], [], []>} : vector<1x15xf32>, vector<15x480xf32>, vector<1x480xf32> -> vector<1x480xf32>
    %cst_67 = arith.constant dense<0.000000e+00> : vector<1x32xf32>
    %104 = tpu.matmul %103, %18, %cst_67 {dimension_numbers = #tpu.dot_dimension_numbers<[1], [0], [0], [1], [0, 0, 1, 1], [], []>} : vector<1x480xf32>, vector<480x32xf32>, vector<1x32xf32> -> vector<1x32xf32>
    %105 = arith.addf %104, %19 : vector<1x32xf32>
    %cst_68 = arith.constant 0.000000e+00 : f32
    %106 = vector.broadcast %cst_68 : f32 to vector<1x32xf32>
    %107 = arith.maximumf %105, %106 : vector<1x32xf32>
    %cst_69 = arith.constant dense<0.000000e+00> : vector<1x25xf32>
    %108 = tpu.matmul %107, %20, %cst_69 {dimension_numbers = #tpu.dot_dimension_numbers<[1], [0], [0], [1], [0, 0, 1, 1], [], []>} : vector<1x32xf32>, vector<32x25xf32>, vector<1x25xf32> -> vector<1x25xf32>
    %109 = arith.addf %108, %21 : vector<1x25xf32>
    %cst_70 = arith.constant 0.000000e+00 : f32
    %110 = vector.broadcast %cst_70 : f32 to vector<1x25xf32>
    %111 = arith.maximumf %109, %110 : vector<1x25xf32>
    %cst_71 = arith.constant dense<0.000000e+00> : vector<1x10xf32>
    %112 = tpu.matmul %111, %22, %cst_71 {dimension_numbers = #tpu.dot_dimension_numbers<[1], [0], [0], [1], [0, 0, 1, 1], [], []>} : vector<1x25xf32>, vector<25x10xf32>, vector<1x10xf32> -> vector<1x10xf32>
    %113 = arith.addf %112, %23 : vector<1x10xf32>
    %c5 = arith.constant 5 : index
    %c0_72 = arith.constant 0 : index
    %114 = vector.load %arg12[%c5, %c0_72] : memref<8x10xf32, #tpu.memory_space<vmem>>, vector<1x10xf32>
    tpu.vector_store %arg12[%c5, %c0_72], %113 {strides = array<i32>} : memref<8x10xf32, #tpu.memory_space<vmem>>, vector<1x10xf32>,
    %115 = vector.extract_strided_slice %15 {offsets = [0, 1536], sizes = [15, 256], strides = [1, 1]} : vector<15x2048xf32> to vector<15x256xf32>
    %cst_73 = arith.constant dense<0.000000e+00> : vector<15x480xf32>
    %116 = tpu.matmul %115, %16, %cst_73 {dimension_numbers = #tpu.dot_dimension_numbers<[1], [0], [0], [1], [0, 0, 1, 1], [], []>} : vector<15x256xf32>, vector<256x480xf32>, vector<15x480xf32> -> vector<15x480xf32>
    %117 = arith.mulf %116, %17 : vector<15x480xf32>
    %cst_74 = arith.constant dense<0.000000e+00> : vector<1x480xf32>
    %118 = tpu.matmul %24, %117, %cst_74 {dimension_numbers = #tpu.dot_dimension_numbers<[1], [0], [0], [1], [0, 0, 1, 1], [], []>} : vector<1x15xf32>, vector<15x480xf32>, vector<1x480xf32> -> vector<1x480xf32>
    %cst_75 = arith.constant dense<0.000000e+00> : vector<1x32xf32>
    %119 = tpu.matmul %118, %18, %cst_75 {dimension_numbers = #tpu.dot_dimension_numbers<[1], [0], [0], [1], [0, 0, 1, 1], [], []>} : vector<1x480xf32>, vector<480x32xf32>, vector<1x32xf32> -> vector<1x32xf32>
    %120 = arith.addf %119, %19 : vector<1x32xf32>
    %cst_76 = arith.constant 0.000000e+00 : f32
    %121 = vector.broadcast %cst_76 : f32 to vector<1x32xf32>
    %122 = arith.maximumf %120, %121 : vector<1x32xf32>
    %cst_77 = arith.constant dense<0.000000e+00> : vector<1x25xf32>
    %123 = tpu.matmul %122, %20, %cst_77 {dimension_numbers = #tpu.dot_dimension_numbers<[1], [0], [0], [1], [0, 0, 1, 1], [], []>} : vector<1x32xf32>, vector<32x25xf32>, vector<1x25xf32> -> vector<1x25xf32>
    %124 = arith.addf %123, %21 : vector<1x25xf32>
    %cst_78 = arith.constant 0.000000e+00 : f32
    %125 = vector.broadcast %cst_78 : f32 to vector<1x25xf32>
    %126 = arith.maximumf %124, %125 : vector<1x25xf32>
    %cst_79 = arith.constant dense<0.000000e+00> : vector<1x10xf32>
    %127 = tpu.matmul %126, %22, %cst_79 {dimension_numbers = #tpu.dot_dimension_numbers<[1], [0], [0], [1], [0, 0, 1, 1], [], []>} : vector<1x25xf32>, vector<25x10xf32>, vector<1x10xf32> -> vector<1x10xf32>
    %128 = arith.addf %127, %23 : vector<1x10xf32>
    %c6 = arith.constant 6 : index
    %c0_80 = arith.constant 0 : index
    %129 = vector.load %arg12[%c6, %c0_80] : memref<8x10xf32, #tpu.memory_space<vmem>>, vector<1x10xf32>
    tpu.vector_store %arg12[%c6, %c0_80], %128 {strides = array<i32>} : memref<8x10xf32, #tpu.memory_space<vmem>>, vector<1x10xf32>,
    %130 = vector.extract_strided_slice %15 {offsets = [0, 1792], sizes = [15, 256], strides = [1, 1]} : vector<15x2048xf32> to vector<15x256xf32>
    %cst_81 = arith.constant dense<0.000000e+00> : vector<15x480xf32>
    %131 = tpu.matmul %130, %16, %cst_81 {dimension_numbers = #tpu.dot_dimension_numbers<[1], [0], [0], [1], [0, 0, 1, 1], [], []>} : vector<15x256xf32>, vector<256x480xf32>, vector<15x480xf32> -> vector<15x480xf32>
    %132 = arith.mulf %131, %17 : vector<15x480xf32>
    %cst_82 = arith.constant dense<0.000000e+00> : vector<1x480xf32>
    %133 = tpu.matmul %24, %132, %cst_82 {dimension_numbers = #tpu.dot_dimension_numbers<[1], [0], [0], [1], [0, 0, 1, 1], [], []>} : vector<1x15xf32>, vector<15x480xf32>, vector<1x480xf32> -> vector<1x480xf32>
    %cst_83 = arith.constant dense<0.000000e+00> : vector<1x32xf32>
    %134 = tpu.matmul %133, %18, %cst_83 {dimension_numbers = #tpu.dot_dimension_numbers<[1], [0], [0], [1], [0, 0, 1, 1], [], []>} : vector<1x480xf32>, vector<480x32xf32>, vector<1x32xf32> -> vector<1x32xf32>
    %135 = arith.addf %134, %19 : vector<1x32xf32>
    %cst_84 = arith.constant 0.000000e+00 : f32
    %136 = vector.broadcast %cst_84 : f32 to vector<1x32xf32>
    %137 = arith.maximumf %135, %136 : vector<1x32xf32>
    %cst_85 = arith.constant dense<0.000000e+00> : vector<1x25xf32>
    %138 = tpu.matmul %137, %20, %cst_85 {dimension_numbers = #tpu.dot_dimension_numbers<[1], [0], [0], [1], [0, 0, 1, 1], [], []>} : vector<1x32xf32>, vector<32x25xf32>, vector<1x25xf32> -> vector<1x25xf32>
    %139 = arith.addf %138, %21 : vector<1x25xf32>
    %cst_86 = arith.constant 0.000000e+00 : f32
    %140 = vector.broadcast %cst_86 : f32 to vector<1x25xf32>
    %141 = arith.maximumf %139, %140 : vector<1x25xf32>
    %cst_87 = arith.constant dense<0.000000e+00> : vector<1x10xf32>
    %142 = tpu.matmul %141, %22, %cst_87 {dimension_numbers = #tpu.dot_dimension_numbers<[1], [0], [0], [1], [0, 0, 1, 1], [], []>} : vector<1x25xf32>, vector<25x10xf32>, vector<1x10xf32> -> vector<1x10xf32>
    %143 = arith.addf %142, %23 : vector<1x10xf32>
    %c7 = arith.constant 7 : index
    %c0_88 = arith.constant 0 : index
    %144 = vector.load %arg12[%c7, %c0_88] : memref<8x10xf32, #tpu.memory_space<vmem>>, vector<1x10xf32>
    tpu.vector_store %arg12[%c7, %c0_88], %143 {strides = array<i32>} : memref<8x10xf32, #tpu.memory_space<vmem>>, vector<1x10xf32>,
    return
  }
  func.func @transform_0(%arg0: i32) -> (i32, i32, i32) {
    %c0_i32 = arith.constant 0 : i32
    %c0_i32_0 = arith.constant 0 : i32
    %c0_i32_1 = arith.constant 0 : i32
    return %arg0, %c0_i32, %c0_i32_0 : i32, i32, i32
  }
  func.func @transform_1(%arg0: i32) -> (i32, i32) {
    %c0_i32 = arith.constant 0 : i32
    %c0_i32_0 = arith.constant 0 : i32
    %c0_i32_1 = arith.constant 0 : i32
    return %c0_i32, %c0_i32_0 : i32, i32
  }
  func.func @transform_2(%arg0: i32) -> (i32, i32) {
    %c0_i32 = arith.constant 0 : i32
    %c0_i32_0 = arith.constant 0 : i32
    %c0_i32_1 = arith.constant 0 : i32
    return %c0_i32, %c0_i32_0 : i32, i32
  }
  func.func @transform_3(%arg0: i32) -> (i32, i32) {
    %c0_i32 = arith.constant 0 : i32
    %c0_i32_0 = arith.constant 0 : i32
    %c0_i32_1 = arith.constant 0 : i32
    return %c0_i32, %c0_i32_0 : i32, i32
  }
  func.func @transform_4(%arg0: i32) -> (i32, i32) {
    %c0_i32 = arith.constant 0 : i32
    %c0_i32_0 = arith.constant 0 : i32
    %c0_i32_1 = arith.constant 0 : i32
    return %c0_i32, %c0_i32_0 : i32, i32
  }
  func.func @transform_5(%arg0: i32) -> (i32, i32) {
    %c0_i32 = arith.constant 0 : i32
    %c0_i32_0 = arith.constant 0 : i32
    %c0_i32_1 = arith.constant 0 : i32
    return %c0_i32, %c0_i32_0 : i32, i32
  }
  func.func @transform_6(%arg0: i32) -> (i32, i32) {
    %c0_i32 = arith.constant 0 : i32
    %c0_i32_0 = arith.constant 0 : i32
    %c0_i32_1 = arith.constant 0 : i32
    return %c0_i32, %c0_i32_0 : i32, i32
  }
  func.func @transform_7(%arg0: i32) -> (i32, i32) {
    %c0_i32 = arith.constant 0 : i32
    %c0_i32_0 = arith.constant 0 : i32
    %c0_i32_1 = arith.constant 0 : i32
    return %c0_i32, %c0_i32_0 : i32, i32
  }
  func.func @transform_8(%arg0: i32) -> (i32, i32) {
    %c0_i32 = arith.constant 0 : i32
    %c0_i32_0 = arith.constant 0 : i32
    %c0_i32_1 = arith.constant 0 : i32
    return %c0_i32, %c0_i32_0 : i32, i32
  }
  func.func @transform_9(%arg0: i32) -> (i32, i32) {
    %c0_i32 = arith.constant 0 : i32
    %c0_i32_0 = arith.constant 0 : i32
    %c0_i32_1 = arith.constant 0 : i32
    return %c0_i32, %c0_i32_0 : i32, i32
  }
  func.func @transform_10(%arg0: i32) -> (i32, i32) {
    %c0_i32 = arith.constant 0 : i32
    %c0_i32_0 = arith.constant 0 : i32
    %c0_i32_1 = arith.constant 0 : i32
    return %c0_i32, %c0_i32_0 : i32, i32
  }
  func.func @transform_11(%arg0: i32) -> (i32, i32) {
    %c0_i32 = arith.constant 0 : i32
    %c0_i32_0 = arith.constant 0 : i32
    return %arg0, %c0_i32 : i32, i32
  }
}

</mosaic_0001>

<llo_original>
// kernel: neuralnet_forward.1
$region0: #{neuralnet_forward.1}
  #allocation0 [shape = 'u32[]', space=smem, size = 0x4, offset = 0x4, fixed_abs, tag = 'smem constant byte address 0x4 - core index']
  #allocation1 [shape = 'u32[144,128]{1,0:T(1,128)}', space=vmem, size = 0x12000, scoped, tag = 'internal scratch']
  %s0 = inlined_call_operand.vmem [shape: f32[2,32,8192], index: 0, kind: input, shape index: {}]
  %s1 = inlined_call_operand.vmem [shape: f32[15,32], index: 1, kind: input, shape index: {}]
  %s2 = inlined_call_operand.vmem [shape: f32[15,1], index: 2, kind: input, shape index: {}]
  %s3 = inlined_call_operand.vmem [shape: f32[256,480], index: 3, kind: input, shape index: {}]
  %s4 = inlined_call_operand.vmem [shape: f32[15,480], index: 4, kind: input, shape index: {}]
  %s5 = inlined_call_operand.vmem [shape: f32[480,32], index: 5, kind: input, shape index: {}]
  %s6 = inlined_call_operand.vmem [shape: f32[1,32], index: 6, kind: input, shape index: {}]
  %s7 = inlined_call_operand.vmem [shape: f32[32,25], index: 7, kind: input, shape index: {}]
  %s8 = inlined_call_operand.vmem [shape: f32[1,25], index: 8, kind: input, shape index: {}]
  %s9 = inlined_call_operand.vmem [shape: f32[25,10], index: 9, kind: input, shape index: {}]
  %s10 = inlined_call_operand.vmem [shape: f32[1,10], index: 10, kind: input, shape index: {}]
  %s11 = inlined_call_operand.hbm [shape: f32[16,10], index: 11, kind: output, shape index: {}]
  %s12 = sld [smem:[#allocation0]]
  $region77: #{neuralnet_forward.1} parent=0
    _
  %s14 = ssub.s32 1, %s12
  %s15 = scalar_select 0, %s14, %s12
  $region1: #{neuralnet_forward.1} parent=0
    #allocation2 [shape = 'u8[8192]{0}', space=vmem, size = 0x2000, scoped, tag = 'output window, operand 0']
    #allocation3 [shape = 's32[2]{0}', space=sflag, size = 0x8, scoped, tag = 'scoped memory for neuralnet_forward.1']
    %16 = vsyncpa [#allocation3], 0
    %s17 = scalar_lea.sflag [#allocation3], 1
    %18 = vsyncpa %s17, 0
    loop: start=0, step=1, limit=4
    $region2: #{neuralnet_forward.1} parent=1 // loop_pre_header
      _
    $region3: #{neuralnet_forward.1} parent=1 // loop_header
      %s20 = sphi 0, %s24
      %p21 = scmp.ge.s32.totalorder %s20, 4
      %s30 = sphi 0, %s32
      %s33 = sphi 0, %s30
      %s34 = sphi 0, %s33
      %s50 = sphi 0, %s34
      %s54 = sphi 0, %s54
      %s56 = sphi 0, %s54
      %s57 = sphi 0, %s56
      %s71 = sphi 0, %s57
      %s75 = sphi 0, %s75
      %s77 = sphi 0, %s75
      %s78 = sphi 0, %s77
      %s92 = sphi 0, %s78
      %s96 = sphi 0, %s96
      %s98 = sphi 0, %s96
      %s99 = sphi 0, %s98
      %s113 = sphi 0, %s99
      %s117 = sphi 0, %s117
      %s119 = sphi 0, %s117
      %s120 = sphi 0, %s119
      %s134 = sphi 0, %s120
      %s138 = sphi 0, %s138
      %s140 = sphi 0, %s138
      %s141 = sphi 0, %s140
      %s155 = sphi 0, %s141
      %s159 = sphi 0, %s159
      %s161 = sphi 0, %s159
      %s162 = sphi 0, %s161
      %s176 = sphi 0, %s162
      %s180 = sphi 0, %s180
      %s182 = sphi 0, %s180
      %s183 = sphi 0, %s182
      %s197 = sphi 0, %s183
      %s201 = sphi 0, %s201
      %s203 = sphi 0, %s201
      %s204 = sphi 0, %s203
      %s218 = sphi 0, %s204
      %s222 = sphi 0, %s222
      %s224 = sphi 0, %s222
      %s225 = sphi 0, %s224
      %s239 = sphi 0, %s225
      %s243 = sphi 0, %s243
      %s245 = sphi 0, %s243
      %s246 = sphi 0, %s245
      %s260 = sphi 0, %s246
      %s266 = sphi 0, %s268
      %s269 = sphi 0, %s266
      %s270 = sphi 0, %s269
      %s286 = sphi 0, %s270
    $region4: #{neuralnet_forward.1} parent=1 // loop_header_branch
      %23 = sbr.rel (%p21) target = $region8
    $region5: #{neuralnet_forward.1} parent=1 // loop_body
      %s25 = ssub.s32 %s20, 1
      %s26 = ssub.s32 %s20, 2
      %s27 = sadd.s32 %s20, 1
      %s28 = ssub.s32 %s20, %s27
      %p29 = scmp.eq.s32.totalorder %s28, 0
      %s31 = sadd.s32 %s30, 1
      %s32 = scalar_select %p29, %s30, %s31
      %p35 = pneg %p29
      %p36 = scmp.eq.s32.totalorder %s20, 1
      %p37 = por %p35, %p36
      %p38 = scmp.ne.s32.totalorder %s30, %s33
      %p39 = scmp.eq.s32.totalorder %s20, 0
      %p40 = por %p38, %p39
      %p41 = scmp.ne.s32.totalorder %s30, %s33
      %p42 = scmp.eq.s32.totalorder %s25, 1
      %p43 = por %p41, %p42
      %p44 = scmp.ne.s32.totalorder %s33, %s34
      %p45 = scmp.eq.s32.totalorder %s25, 0
      %p46 = por %p44, %p45
      %p47 = scmp.ne.s32.totalorder %s33, %s34
      %p48 = scmp.eq.s32.totalorder %s26, 1
      %p49 = por %p47, %p48
      %p51 = scmp.ne.s32.totalorder %s34, %s50
      %p52 = scmp.eq.s32.totalorder %s26, 0
      %p53 = por %p51, %p52
      %s55 = sadd.s32 %s54, 1
      %p58 = scmp.eq.s32.totalorder %s20, 1
      %p59 = scmp.ne.s32.totalorder %s54, %s56
      %p60 = scmp.eq.s32.totalorder %s20, 0
      %p61 = por %p59, %p60
      %p62 = scmp.ne.s32.totalorder %s54, %s56
      %p63 = scmp.eq.s32.totalorder %s25, 1
      %p64 = por %p62, %p63
      %p65 = scmp.ne.s32.totalorder %s56, %s57
      %p66 = scmp.eq.s32.totalorder %s25, 0
      %p67 = por %p65, %p66
      %p68 = scmp.ne.s32.totalorder %s56, %s57
      %p69 = scmp.eq.s32.totalorder %s26, 1
      %p70 = por %p68, %p69
      %p72 = scmp.ne.s32.totalorder %s57, %s71
      %p73 = scmp.eq.s32.totalorder %s26, 0
      %p74 = por %p72, %p73
      %s76 = sadd.s32 %s75, 1
      %p79 = scmp.eq.s32.totalorder %s20, 1
      %p80 = scmp.ne.s32.totalorder %s75, %s77
      %p81 = scmp.eq.s32.totalorder %s20, 0
      %p82 = por %p80, %p81
      %p83 = scmp.ne.s32.totalorder %s75, %s77
      %p84 = scmp.eq.s32.totalorder %s25, 1
      %p85 = por %p83, %p84
      %p86 = scmp.ne.s32.totalorder %s77, %s78
      %p87 = scmp.eq.s32.totalorder %s25, 0
      %p88 = por %p86, %p87
      %p89 = scmp.ne.s32.totalorder %s77, %s78
      %p90 = scmp.eq.s32.totalorder %s26, 1
      %p91 = por %p89, %p90
      %p93 = scmp.ne.s32.totalorder %s78, %s92
      %p94 = scmp.eq.s32.totalorder %s26, 0
      %p95 = por %p93, %p94
      %s97 = sadd.s32 %s96, 1
      %p100 = scmp.eq.s32.totalorder %s20, 1
      %p101 = scmp.ne.s32.totalorder %s96, %s98
      %p102 = scmp.eq.s32.totalorder %s20, 0
      %p103 = por %p101, %p102
      %p104 = scmp.ne.s32.totalorder %s96, %s98
      %p105 = scmp.eq.s32.totalorder %s25, 1
      %p106 = por %p104, %p105
      %p107 = scmp.ne.s32.totalorder %s98, %s99
      %p108 = scmp.eq.s32.totalorder %s25, 0
      %p109 = por %p107, %p108
      %p110 = scmp.ne.s32.totalorder %s98, %s99
      %p111 = scmp.eq.s32.totalorder %s26, 1
      %p112 = por %p110, %p111
      %p114 = scmp.ne.s32.totalorder %s99, %s113
      %p115 = scmp.eq.s32.totalorder %s26, 0
      %p116 = por %p114, %p115
      %s118 = sadd.s32 %s117, 1
      %p121 = scmp.eq.s32.totalorder %s20, 1
      %p122 = scmp.ne.s32.totalorder %s117, %s119
      %p123 = scmp.eq.s32.totalorder %s20, 0
      %p124 = por %p122, %p123
      %p125 = scmp.ne.s32.totalorder %s117, %s119
      %p126 = scmp.eq.s32.totalorder %s25, 1
      %p127 = por %p125, %p126
      %p128 = scmp.ne.s32.totalorder %s119, %s120
      %p129 = scmp.eq.s32.totalorder %s25, 0
      %p130 = por %p128, %p129
      %p131 = scmp.ne.s32.totalorder %s119, %s120
      %p132 = scmp.eq.s32.totalorder %s26, 1
      %p133 = por %p131, %p132
      %p135 = scmp.ne.s32.totalorder %s120, %s134
      %p136 = scmp.eq.s32.totalorder %s26, 0
      %p137 = por %p135, %p136
      %s139 = sadd.s32 %s138, 1
      %p142 = scmp.eq.s32.totalorder %s20, 1
      %p143 = scmp.ne.s32.totalorder %s138, %s140
      %p144 = scmp.eq.s32.totalorder %s20, 0
      %p145 = por %p143, %p144
      %p146 = scmp.ne.s32.totalorder %s138, %s140
      %p147 = scmp.eq.s32.totalorder %s25, 1
      %p148 = por %p146, %p147
      %p149 = scmp.ne.s32.totalorder %s140, %s141
      %p150 = scmp.eq.s32.totalorder %s25, 0
      %p151 = por %p149, %p150
      %p152 = scmp.ne.s32.totalorder %s140, %s141
      %p153 = scmp.eq.s32.totalorder %s26, 1
      %p154 = por %p152, %p153
      %p156 = scmp.ne.s32.totalorder %s141, %s155
      %p157 = scmp.eq.s32.totalorder %s26, 0
      %p158 = por %p156, %p157
      %s160 = sadd.s32 %s159, 1
      %p163 = scmp.eq.s32.totalorder %s20, 1
      %p164 = scmp.ne.s32.totalorder %s159, %s161
      %p165 = scmp.eq.s32.totalorder %s20, 0
      %p166 = por %p164, %p165
      %p167 = scmp.ne.s32.totalorder %s159, %s161
      %p168 = scmp.eq.s32.totalorder %s25, 1
      %p169 = por %p167, %p168
      %p170 = scmp.ne.s32.totalorder %s161, %s162
      %p171 = scmp.eq.s32.totalorder %s25, 0
      %p172 = por %p170, %p171
      %p173 = scmp.ne.s32.totalorder %s161, %s162
      %p174 = scmp.eq.s32.totalorder %s26, 1
      %p175 = por %p173, %p174
      %p177 = scmp.ne.s32.totalorder %s162, %s176
      %p178 = scmp.eq.s32.totalorder %s26, 0
      %p179 = por %p177, %p178
      %s181 = sadd.s32 %s180, 1
      %p184 = scmp.eq.s32.totalorder %s20, 1
      %p185 = scmp.ne.s32.totalorder %s180, %s182
      %p186 = scmp.eq.s32.totalorder %s20, 0
      %p187 = por %p185, %p186
      %p188 = scmp.ne.s32.totalorder %s180, %s182
      %p189 = scmp.eq.s32.totalorder %s25, 1
      %p190 = por %p188, %p189
      %p191 = scmp.ne.s32.totalorder %s182, %s183
      %p192 = scmp.eq.s32.totalorder %s25, 0
      %p193 = por %p191, %p192
      %p194 = scmp.ne.s32.totalorder %s182, %s183
      %p195 = scmp.eq.s32.totalorder %s26, 1
      %p196 = por %p194, %p195
      %p198 = scmp.ne.s32.totalorder %s183, %s197
      %p199 = scmp.eq.s32.totalorder %s26, 0
      %p200 = por %p198, %p199
      %s202 = sadd.s32 %s201, 1
      %p205 = scmp.eq.s32.totalorder %s20, 1
      %p206 = scmp.ne.s32.totalorder %s201, %s203
      %p207 = scmp.eq.s32.totalorder %s20, 0
      %p208 = por %p206, %p207
      %p209 = scmp.ne.s32.totalorder %s201, %s203
      %p210 = scmp.eq.s32.totalorder %s25, 1
      %p211 = por %p209, %p210
      %p212 = scmp.ne.s32.totalorder %s203, %s204
      %p213 = scmp.eq.s32.totalorder %s25, 0
      %p214 = por %p212, %p213
      %p215 = scmp.ne.s32.totalorder %s203, %s204
      %p216 = scmp.eq.s32.totalorder %s26, 1
      %p217 = por %p215, %p216
      %p219 = scmp.ne.s32.totalorder %s204, %s218
      %p220 = scmp.eq.s32.totalorder %s26, 0
      %p221 = por %p219, %p220
      %s223 = sadd.s32 %s222, 1
      %p226 = scmp.eq.s32.totalorder %s20, 1
      %p227 = scmp.ne.s32.totalorder %s222, %s224
      %p228 = scmp.eq.s32.totalorder %s20, 0
      %p229 = por %p227, %p228
      %p230 = scmp.ne.s32.totalorder %s222, %s224
      %p231 = scmp.eq.s32.totalorder %s25, 1
      %p232 = por %p230, %p231
      %p233 = scmp.ne.s32.totalorder %s224, %s225
      %p234 = scmp.eq.s32.totalorder %s25, 0
      %p235 = por %p233, %p234
      %p236 = scmp.ne.s32.totalorder %s224, %s225
      %p237 = scmp.eq.s32.totalorder %s26, 1
      %p238 = por %p236, %p237
      %p240 = scmp.ne.s32.totalorder %s225, %s239
      %p241 = scmp.eq.s32.totalorder %s26, 0
      %p242 = por %p240, %p241
      %s244 = sadd.s32 %s243, 1
      %p247 = scmp.eq.s32.totalorder %s20, 1
      %p248 = scmp.ne.s32.totalorder %s243, %s245
      %p249 = scmp.eq.s32.totalorder %s20, 0
      %p250 = por %p248, %p249
      %p251 = scmp.ne.s32.totalorder %s243, %s245
      %p252 = scmp.eq.s32.totalorder %s25, 1
      %p253 = por %p251, %p252
      %p254 = scmp.ne.s32.totalorder %s245, %s246
      %p255 = scmp.eq.s32.totalorder %s25, 0
      %p256 = por %p254, %p255
      %p257 = scmp.ne.s32.totalorder %s245, %s246
      %p258 = scmp.eq.s32.totalorder %s26, 1
      %p259 = por %p257, %p258
      %p261 = scmp.ne.s32.totalorder %s246, %s260
      %p262 = scmp.eq.s32.totalorder %s26, 0
      %p263 = por %p261, %p262
      %s264 = ssub.s32 %s20, %s27
      %p265 = scmp.eq.s32.totalorder %s264, 0
      %s267 = sadd.s32 %s266, 1
      %s268 = scalar_select %p265, %s266, %s267
      %p271 = pneg %p265
      %p272 = scmp.eq.s32.totalorder %s20, 1
      %p273 = por %p271, %p272
      %p274 = scmp.ne.s32.totalorder %s266, %s269
      %p275 = scmp.eq.s32.totalorder %s20, 0
      %p276 = por %p274, %p275
      %p277 = scmp.ne.s32.totalorder %s266, %s269
      %p278 = scmp.eq.s32.totalorder %s25, 1
      %p279 = por %p277, %p278
      %p280 = scmp.ne.s32.totalorder %s269, %s270
      %p281 = scmp.eq.s32.totalorder %s25, 0
      %p282 = por %p280, %p281
      %p283 = scmp.ne.s32.totalorder %s269, %s270
      %p284 = scmp.eq.s32.totalorder %s26, 1
      %p285 = por %p283, %p284
      %p287 = scmp.ne.s32.totalorder %s270, %s286
      %p288 = scmp.eq.s32.totalorder %s26, 0
      %p289 = por %p287, %p288
      %p290 = scmp.le.s32.totalorder 1, %s20
      %p291 = scmp.lt.s32.totalorder %s20, 3
      %p292 = pnand %p290, %p291
      %p293 = pneg %p292
      // Predicated region
      $region9: #{neuralnet_forward.1} parent=5 // pred_check
        _
      $region10: #{neuralnet_forward.1} parent=5 // pred_check_branch
        %295 = sbr.rel (%p292) target = $region12
      $region11: #{neuralnet_forward.1} parent=5 // pred_region
        %s296 = ssub.s32 %s20, 1
        // Predicated region
        $region13: #{neuralnet_forward.1} parent=11 // pred_check
          %p297 = pneg %p67
        $region14: #{neuralnet_forward.1} parent=11 // pred_check_branch
          %299 = sbr.rel (%p297) target = $region16
        $region15: #{neuralnet_forward.1} parent=11 // pred_region
          _
        $region16: #{neuralnet_forward.1} parent=11 // pred_fallthru
          _
        // Predicated region
        $region17: #{neuralnet_forward.1} parent=11 // pred_check
          %p300 = pneg %p88
        $region18: #{neuralnet_forward.1} parent=11 // pred_check_branch
          %302 = sbr.rel (%p300) target = $region20
        $region19: #{neuralnet_forward.1} parent=11 // pred_region
          _
        $region20: #{neuralnet_forward.1} parent=11 // pred_fallthru
          _
        // Predicated region
        $region21: #{neuralnet_forward.1} parent=11 // pred_check
          %p303 = pneg %p109
        $region22: #{neuralnet_forward.1} parent=11 // pred_check_branch
          %305 = sbr.rel (%p303) target = $region24
        $region23: #{neuralnet_forward.1} parent=11 // pred_region
          _
        $region24: #{neuralnet_forward.1} parent=11 // pred_fallthru
          _
        // Predicated region
        $region25: #{neuralnet_forward.1} parent=11 // pred_check
          %p306 = pneg %p130
        $region26: #{neuralnet_forward.1} parent=11 // pred_check_branch
          %308 = sbr.rel (%p306) target = $region28
        $region27: #{neuralnet_forward.1} parent=11 // pred_region
          _
        $region28: #{neuralnet_forward.1} parent=11 // pred_fallthru
          _
        // Predicated region
        $region29: #{neuralnet_forward.1} parent=11 // pred_check
          %p309 = pneg %p151
        $region30: #{neuralnet_forward.1} parent=11 // pred_check_branch
          %311 = sbr.rel (%p309) target = $region32
        $region31: #{neuralnet_forward.1} parent=11 // pred_region
          _
        $region32: #{neuralnet_forward.1} parent=11 // pred_fallthru
          _
        // Predicated region
        $region33: #{neuralnet_forward.1} parent=11 // pred_check
          %p312 = pneg %p172
        $region34: #{neuralnet_forward.1} parent=11 // pred_check_branch
          %314 = sbr.rel (%p312) target = $region36
        $region35: #{neuralnet_forward.1} parent=11 // pred_region
          _
        $region36: #{neuralnet_forward.1} parent=11 // pred_fallthru
          _
        // Predicated region
        $region37: #{neuralnet_forward.1} parent=11 // pred_check
          %p315 = pneg %p193
        $region38: #{neuralnet_forward.1} parent=11 // pred_check_branch
          %317 = sbr.rel (%p315) target = $region40
        $region39: #{neuralnet_forward.1} parent=11 // pred_region
          _
        $region40: #{neuralnet_forward.1} parent=11 // pred_fallthru
          _
        // Predicated region
        $region41: #{neuralnet_forward.1} parent=11 // pred_check
          %p318 = pneg %p214
        $region42: #{neuralnet_forward.1} parent=11 // pred_check_branch
          %320 = sbr.rel (%p318) target = $region44
        $region43: #{neuralnet_forward.1} parent=11 // pred_region
          _
        $region44: #{neuralnet_forward.1} parent=11 // pred_fallthru
          _
        // Predicated region
        $region45: #{neuralnet_forward.1} parent=11 // pred_check
          %p321 = pneg %p235
        $region46: #{neuralnet_forward.1} parent=11 // pred_check_branch
          %323 = sbr.rel (%p321) target = $region48
        $region47: #{neuralnet_forward.1} parent=11 // pred_region
          _
        $region48: #{neuralnet_forward.1} parent=11 // pred_fallthru
          _
        // Predicated region
        $region49: #{neuralnet_forward.1} parent=11 // pred_check
          %p324 = pneg %p256
        $region50: #{neuralnet_forward.1} parent=11 // pred_check_branch
          %326 = sbr.rel (%p324) target = $region52
        $region51: #{neuralnet_forward.1} parent=11 // pred_region
          _
        $region52: #{neuralnet_forward.1} parent=11 // pred_fallthru
          _
      $region12: #{neuralnet_forward.1} parent=5 // pred_fallthru
        _
      %p327 = scmp.lt.s32.totalorder %s20, 2
      // Predicated region
      $region53: #{neuralnet_forward.1} parent=5 // pred_check
        %p328 = pneg %p327
      $region54: #{neuralnet_forward.1} parent=5 // pred_check_branch
        %330 = sbr.rel (%p328) target = $region56
      $region55: #{neuralnet_forward.1} parent=5 // pred_region
        // Predicated region
        $region57: #{neuralnet_forward.1} parent=55 // pred_check
          %p331 = pneg %p40
        $region58: #{neuralnet_forward.1} parent=55 // pred_check_branch
          %333 = sbr.rel (%p331) target = $region60
        $region59: #{neuralnet_forward.1} parent=55 // pred_region
          %p334 = scmp.lt.s32.totalorder %s20, 1
          %s335 = scalar_select %p334, %s20, 1
          %s336 = smul.addr %s335, 256
          %s337 = smul.addr %s336, 8
          %s338 = scalar_lea.vmem %s0, %s337
        $region60: #{neuralnet_forward.1} parent=55 // pred_fallthru
          _
      $region56: #{neuralnet_forward.1} parent=5 // pred_fallthru
        _
      %p339 = scmp.le.s32.totalorder 1, %s20
      %p340 = scmp.lt.s32.totalorder %s20, 3
      %p341 = pnand %p339, %p340
      %p342 = pneg %p341
      // Predicated region
      $region61: #{neuralnet_forward.1} parent=5 // pred_check
        _
      $region62: #{neuralnet_forward.1} parent=5 // pred_check_branch
        %344 = sbr.rel (%p341) target = $region64
      $region63: #{neuralnet_forward.1} parent=5 // pred_region
        %s345 = ssub.s32 %s20, 1
        %p346 = scmp.lt.s32.totalorder %s25, 1
        %s347 = scalar_select %p346, %s25, 1
        %s348 = smul.addr %s347, 256
        %s349 = smul.addr %s348, 8
        %s350 = scalar_lea.vmem %s0, %s349
        %p351 = pneg %p46
        %p352 = pneg %p43
        %p353 = pneg %p67
        %p354 = pneg %p64
        %p355 = pneg %p88
        %p356 = pneg %p85
        %p357 = pneg %p109
        %p358 = pneg %p106
        %p359 = pneg %p130
        %p360 = pneg %p127
        %p361 = pneg %p151
        %p362 = pneg %p148
        %p363 = pneg %p172
        %p364 = pneg %p169
        %p365 = pneg %p193
        %p366 = pneg %p190
        %p367 = pneg %p214
        %p368 = pneg %p211
        %p369 = pneg %p235
        %p370 = pneg %p232
        %p371 = pneg %p256
        %p372 = pneg %p253
        %p373 = pneg %p282
        %p374 = pneg %p279
        %s375 = sand.u32 %s269, 1
        %s376 = scalar_lea.sflag [#allocation3], %s375
        %s377 = sand.u32 %s269, 1
        %s378 = smul.addr %s377, 8
        %s379 = scalar_lea.vmem [#allocation2], %s378
        %p380 = scmp.lt.s32.totalorder %s25, 1
        %s381 = scalar_select %p380, %s25, 1
        %s382 = smul.addr %s381, 256
        %s383 = smul.addr %s382, 8
        %s384 = scalar_lea.vmem %s0, %s383
        %v385 = vld [vmem:[%s384] sm:$0xff]
        %v386 = vld [vmem:[%s384 + $0x8] sm:$0xff]
        %v387 = vld [vmem:[%s384 + $0x10] sm:$0xff]
        %v388 = vld [vmem:[%s384 + $0x18] sm:$0xff]
        %v389 = vld [vmem:[%s384 + $0x20] sm:$0xff]
        %v390 = vld [vmem:[%s384 + $0x28] sm:$0xff]
        %v391 = vld [vmem:[%s384 + $0x30] sm:$0xff]
        %v392 = vld [vmem:[%s384 + $0x38] sm:$0xff]
        %v393 = vld [vmem:[%s384 + $0x40] sm:$0xff]
        %v394 = vld [vmem:[%s384 + $0x48] sm:$0xff]
        %v395 = vld [vmem:[%s384 + $0x50] sm:$0xff]
        %v396 = vld [vmem:[%s384 + $0x58] sm:$0xff]
        %v397 = vld [vmem:[%s384 + $0x60] sm:$0xff]
        %v398 = vld [vmem:[%s384 + $0x68] sm:$0xff]
        %v399 = vld [vmem:[%s384 + $0x70] sm:$0xff]
        %v400 = vld [vmem:[%s384 + $0x78] sm:$0xff]
        %v401 = vld [vmem:[%s384 + $0x80] sm:$0xff]
        %v402 = vld [vmem:[%s384 + $0x88] sm:$0xff]
        %v403 = vld [vmem:[%s384 + $0x90] sm:$0xff]
        %v404 = vld [vmem:[%s384 + $0x98] sm:$0xff]
        %v405 = vld [vmem:[%s384 + $0xa0] sm:$0xff]
        %v406 = vld [vmem:[%s384 + $0xa8] sm:$0xff]
        %v407 = vld [vmem:[%s384 + $0xb0] sm:$0xff]
        %v408 = vld [vmem:[%s384 + $0xb8] sm:$0xff]
        %v409 = vld [vmem:[%s384 + $0xc0] sm:$0xff]
        %v410 = vld [vmem:[%s384 + $0xc8] sm:$0xff]
        %v411 = vld [vmem:[%s384 + $0xd0] sm:$0xff]
        %v412 = vld [vmem:[%s384 + $0xd8] sm:$0xff]
        %v413 = vld [vmem:[%s384 + $0xe0] sm:$0xff]
        %v414 = vld [vmem:[%s384 + $0xe8] sm:$0xff]
        %v415 = vld [vmem:[%s384 + $0xf0] sm:$0xff]
        %v416 = vld [vmem:[%s384 + $0xf8] sm:$0xff]
        %v417 = vld [vmem:[%s384 + $0x100] sm:$0xff]
        %v418 = vld [vmem:[%s384 + $0x108] sm:$0xff]
        %v419 = vld [vmem:[%s384 + $0x110] sm:$0xff]
        %v420 = vld [vmem:[%s384 + $0x118] sm:$0xff]
        %v421 = vld [vmem:[%s384 + $0x120] sm:$0xff]
        %v422 = vld [vmem:[%s384 + $0x128] sm:$0xff]
        %v423 = vld [vmem:[%s384 + $0x130] sm:$0xff]
        %v424 = vld [vmem:[%s384 + $0x138] sm:$0xff]
        %v425 = vld [vmem:[%s384 + $0x140] sm:$0xff]
        %v426 = vld [vmem:[%s384 + $0x148] sm:$0xff]
        %v427 = vld [vmem:[%s384 + $0x150] sm:$0xff]
        %v428 = vld [vmem:[%s384 + $0x158] sm:$0xff]
        %v429 = vld [vmem:[%s384 + $0x160] sm:$0xff]
        %v430 = vld [vmem:[%s384 + $0x168] sm:$0xff]
        %v431 = vld [vmem:[%s384 + $0x170] sm:$0xff]
        %v432 = vld [vmem:[%s384 + $0x178] sm:$0xff]
        %v433 = vld [vmem:[%s384 + $0x180] sm:$0xff]
        %v434 = vld [vmem:[%s384 + $0x188] sm:$0xff]
        %v435 = vld [vmem:[%s384 + $0x190] sm:$0xff]
        %v436 = vld [vmem:[%s384 + $0x198] sm:$0xff]
        %v437 = vld [vmem:[%s384 + $0x1a0] sm:$0xff]
        %v438 = vld [vmem:[%s384 + $0x1a8] sm:$0xff]
        %v439 = vld [vmem:[%s384 + $0x1b0] sm:$0xff]
        %v440 = vld [vmem:[%s384 + $0x1b8] sm:$0xff]
        %v441 = vld [vmem:[%s384 + $0x1c0] sm:$0xff]
        %v442 = vld [vmem:[%s384 + $0x1c8] sm:$0xff]
        %v443 = vld [vmem:[%s384 + $0x1d0] sm:$0xff]
        %v444 = vld [vmem:[%s384 + $0x1d8] sm:$0xff]
        %v445 = vld [vmem:[%s384 + $0x1e0] sm:$0xff]
        %v446 = vld [vmem:[%s384 + $0x1e8] sm:$0xff]
        %v447 = vld [vmem:[%s384 + $0x1f0] sm:$0xff]
        %v448 = vld [vmem:[%s384 + $0x1f8] sm:$0xff]
        %v449 = vld [vmem:[%s384 + $0x200] sm:$0xff]
        %v450 = vld [vmem:[%s384 + $0x208] sm:$0xff]
        %v451 = vld [vmem:[%s384 + $0x210] sm:$0xff]
        %v452 = vld [vmem:[%s384 + $0x218] sm:$0xff]
        %v453 = vld [vmem:[%s384 + $0x220] sm:$0xff]
        %v454 = vld [vmem:[%s384 + $0x228] sm:$0xff]
        %v455 = vld [vmem:[%s384 + $0x230] sm:$0xff]
        %v456 = vld [vmem:[%s384 + $0x238] sm:$0xff]
        %v457 = vld [vmem:[%s384 + $0x240] sm:$0xff]
        %v458 = vld [vmem:[%s384 + $0x248] sm:$0xff]
        %v459 = vld [vmem:[%s384 + $0x250] sm:$0xff]
        %v460 = vld [vmem:[%s384 + $0x258] sm:$0xff]
        %v461 = vld [vmem:[%s384 + $0x260] sm:$0xff]
        %v462 = vld [vmem:[%s384 + $0x268] sm:$0xff]
        %v463 = vld [vmem:[%s384 + $0x270] sm:$0xff]
        %v464 = vld [vmem:[%s384 + $0x278] sm:$0xff]
        %v465 = vld [vmem:[%s384 + $0x280] sm:$0xff]
        %v466 = vld [vmem:[%s384 + $0x288] sm:$0xff]
        %v467 = vld [vmem:[%s384 + $0x290] sm:$0xff]
        %v468 = vld [vmem:[%s384 + $0x298] sm:$0xff]
        %v469 = vld [vmem:[%s384 + $0x2a0] sm:$0xff]
        %v470 = vld [vmem:[%s384 + $0x2a8] sm:$0xff]
        %v471 = vld [vmem:[%s384 + $0x2b0] sm:$0xff]
        %v472 = vld [vmem:[%s384 + $0x2b8] sm:$0xff]
        %v473 = vld [vmem:[%s384 + $0x2c0] sm:$0xff]
        %v474 = vld [vmem:[%s384 + $0x2c8] sm:$0xff]
        %v475 = vld [vmem:[%s384 + $0x2d0] sm:$0xff]
        %v476 = vld [vmem:[%s384 + $0x2d8] sm:$0xff]
        %v477 = vld [vmem:[%s384 + $0x2e0] sm:$0xff]
        %v478 = vld [vmem:[%s384 + $0x2e8] sm:$0xff]
        %v479 = vld [vmem:[%s384 + $0x2f0] sm:$0xff]
        %v480 = vld [vmem:[%s384 + $0x2f8] sm:$0xff]
        %v481 = vld [vmem:[%s384 + $0x300] sm:$0xff]
        %v482 = vld [vmem:[%s384 + $0x308] sm:$0xff]
        %v483 = vld [vmem:[%s384 + $0x310] sm:$0xff]
        %v484 = vld [vmem:[%s384 + $0x318] sm:$0xff]
        %v485 = vld [vmem:[%s384 + $0x320] sm:$0xff]
        %v486 = vld [vmem:[%s384 + $0x328] sm:$0xff]
        %v487 = vld [vmem:[%s384 + $0x330] sm:$0xff]
        %v488 = vld [vmem:[%s384 + $0x338] sm:$0xff]
        %v489 = vld [vmem:[%s384 + $0x340] sm:$0xff]
        %v490 = vld [vmem:[%s384 + $0x348] sm:$0xff]
        %v491 = vld [vmem:[%s384 + $0x350] sm:$0xff]
        %v492 = vld [vmem:[%s384 + $0x358] sm:$0xff]
        %v493 = vld [vmem:[%s384 + $0x360] sm:$0xff]
        %v494 = vld [vmem:[%s384 + $0x368] sm:$0xff]
        %v495 = vld [vmem:[%s384 + $0x370] sm:$0xff]
        %v496 = vld [vmem:[%s384 + $0x378] sm:$0xff]
        %v497 = vld [vmem:[%s384 + $0x380] sm:$0xff]
        %v498 = vld [vmem:[%s384 + $0x388] sm:$0xff]
        %v499 = vld [vmem:[%s384 + $0x390] sm:$0xff]
        %v500 = vld [vmem:[%s384 + $0x398] sm:$0xff]
        %v501 = vld [vmem:[%s384 + $0x3a0] sm:$0xff]
        %v502 = vld [vmem:[%s384 + $0x3a8] sm:$0xff]
        %v503 = vld [vmem:[%s384 + $0x3b0] sm:$0xff]
        %v504 = vld [vmem:[%s384 + $0x3b8] sm:$0xff]
        %v505 = vld [vmem:[%s384 + $0x3c0] sm:$0xff]
        %v506 = vld [vmem:[%s384 + $0x3c8] sm:$0xff]
        %v507 = vld [vmem:[%s384 + $0x3d0] sm:$0xff]
        %v508 = vld [vmem:[%s384 + $0x3d8] sm:$0xff]
        %v509 = vld [vmem:[%s384 + $0x3e0] sm:$0xff]
        %v510 = vld [vmem:[%s384 + $0x3e8] sm:$0xff]
        %v511 = vld [vmem:[%s384 + $0x3f0] sm:$0xff]
        %v512 = vld [vmem:[%s384 + $0x3f8] sm:$0xff]
        %v513 = vld [vmem:[%s384 + $0x400] sm:$0xff]
        %v514 = vld [vmem:[%s384 + $0x408] sm:$0xff]
        %v515 = vld [vmem:[%s384 + $0x410] sm:$0xff]
        %v516 = vld [vmem:[%s384 + $0x418] sm:$0xff]
        %v517 = vld [vmem:[%s384 + $0x420] sm:$0xff]
        %v518 = vld [vmem:[%s384 + $0x428] sm:$0xff]
        %v519 = vld [vmem:[%s384 + $0x430] sm:$0xff]
        %v520 = vld [vmem:[%s384 + $0x438] sm:$0xff]
        %v521 = vld [vmem:[%s384 + $0x440] sm:$0xff]
        %v522 = vld [vmem:[%s384 + $0x448] sm:$0xff]
        %v523 = vld [vmem:[%s384 + $0x450] sm:$0xff]
        %v524 = vld [vmem:[%s384 + $0x458] sm:$0xff]
        %v525 = vld [vmem:[%s384 + $0x460] sm:$0xff]
        %v526 = vld [vmem:[%s384 + $0x468] sm:$0xff]
        %v527 = vld [vmem:[%s384 + $0x470] sm:$0xff]
        %v528 = vld [vmem:[%s384 + $0x478] sm:$0xff]
        %v529 = vld [vmem:[%s384 + $0x480] sm:$0xff]
        %v530 = vld [vmem:[%s384 + $0x488] sm:$0xff]
        %v531 = vld [vmem:[%s384 + $0x490] sm:$0xff]
        %v532 = vld [vmem:[%s384 + $0x498] sm:$0xff]
        %v533 = vld [vmem:[%s384 + $0x4a0] sm:$0xff]
        %v534 = vld [vmem:[%s384 + $0x4a8] sm:$0xff]
        %v535 = vld [vmem:[%s384 + $0x4b0] sm:$0xff]
        %v536 = vld [vmem:[%s384 + $0x4b8] sm:$0xff]
        %v537 = vld [vmem:[%s384 + $0x4c0] sm:$0xff]
        %v538 = vld [vmem:[%s384 + $0x4c8] sm:$0xff]
        %v539 = vld [vmem:[%s384 + $0x4d0] sm:$0xff]
        %v540 = vld [vmem:[%s384 + $0x4d8] sm:$0xff]
        %v541 = vld [vmem:[%s384 + $0x4e0] sm:$0xff]
        %v542 = vld [vmem:[%s384 + $0x4e8] sm:$0xff]
        %v543 = vld [vmem:[%s384 + $0x4f0] sm:$0xff]
        %v544 = vld [vmem:[%s384 + $0x4f8] sm:$0xff]
        %v545 = vld [vmem:[%s384 + $0x500] sm:$0xff]
        %v546 = vld [vmem:[%s384 + $0x508] sm:$0xff]
        %v547 = vld [vmem:[%s384 + $0x510] sm:$0xff]
        %v548 = vld [vmem:[%s384 + $0x518] sm:$0xff]
        %v549 = vld [vmem:[%s384 + $0x520] sm:$0xff]
        %v550 = vld [vmem:[%s384 + $0x528] sm:$0xff]
        %v551 = vld [vmem:[%s384 + $0x530] sm:$0xff]
        %v552 = vld [vmem:[%s384 + $0x538] sm:$0xff]
        %v553 = vld [vmem:[%s384 + $0x540] sm:$0xff]
        %v554 = vld [vmem:[%s384 + $0x548] sm:$0xff]
        %v555 = vld [vmem:[%s384 + $0x550] sm:$0xff]
        %v556 = vld [vmem:[%s384 + $0x558] sm:$0xff]
        %v557 = vld [vmem:[%s384 + $0x560] sm:$0xff]
        %v558 = vld [vmem:[%s384 + $0x568] sm:$0xff]
        %v559 = vld [vmem:[%s384 + $0x570] sm:$0xff]
        %v560 = vld [vmem:[%s384 + $0x578] sm:$0xff]
        %v561 = vld [vmem:[%s384 + $0x580] sm:$0xff]
        %v562 = vld [vmem:[%s384 + $0x588] sm:$0xff]
        %v563 = vld [vmem:[%s384 + $0x590] sm:$0xff]
        %v564 = vld [vmem:[%s384 + $0x598] sm:$0xff]
        %v565 = vld [vmem:[%s384 + $0x5a0] sm:$0xff]
        %v566 = vld [vmem:[%s384 + $0x5a8] sm:$0xff]
        %v567 = vld [vmem:[%s384 + $0x5b0] sm:$0xff]
        %v568 = vld [vmem:[%s384 + $0x5b8] sm:$0xff]
        %v569 = vld [vmem:[%s384 + $0x5c0] sm:$0xff]
        %v570 = vld [vmem:[%s384 + $0x5c8] sm:$0xff]
        %v571 = vld [vmem:[%s384 + $0x5d0] sm:$0xff]
        %v572 = vld [vmem:[%s384 + $0x5d8] sm:$0xff]
        %v573 = vld [vmem:[%s384 + $0x5e0] sm:$0xff]
        %v574 = vld [vmem:[%s384 + $0x5e8] sm:$0xff]
        %v575 = vld [vmem:[%s384 + $0x5f0] sm:$0xff]
        %v576 = vld [vmem:[%s384 + $0x5f8] sm:$0xff]
        %v577 = vld [vmem:[%s384 + $0x600] sm:$0xff]
        %v578 = vld [vmem:[%s384 + $0x608] sm:$0xff]
        %v579 = vld [vmem:[%s384 + $0x610] sm:$0xff]
        %v580 = vld [vmem:[%s384 + $0x618] sm:$0xff]
        %v581 = vld [vmem:[%s384 + $0x620] sm:$0xff]
        %v582 = vld [vmem:[%s384 + $0x628] sm:$0xff]
        %v583 = vld [vmem:[%s384 + $0x630] sm:$0xff]
        %v584 = vld [vmem:[%s384 + $0x638] sm:$0xff]
        %v585 = vld [vmem:[%s384 + $0x640] sm:$0xff]
        %v586 = vld [vmem:[%s384 + $0x648] sm:$0xff]
        %v587 = vld [vmem:[%s384 + $0x650] sm:$0xff]
        %v588 = vld [vmem:[%s384 + $0x658] sm:$0xff]
        %v589 = vld [vmem:[%s384 + $0x660] sm:$0xff]
        %v590 = vld [vmem:[%s384 + $0x668] sm:$0xff]
        %v591 = vld [vmem:[%s384 + $0x670] sm:$0xff]
        %v592 = vld [vmem:[%s384 + $0x678] sm:$0xff]
        %v593 = vld [vmem:[%s384 + $0x680] sm:$0xff]
        %v594 = vld [vmem:[%s384 + $0x688] sm:$0xff]
        %v595 = vld [vmem:[%s384 + $0x690] sm:$0xff]
        %v596 = vld [vmem:[%s384 + $0x698] sm:$0xff]
        %v597 = vld [vmem:[%s384 + $0x6a0] sm:$0xff]
        %v598 = vld [vmem:[%s384 + $0x6a8] sm:$0xff]
        %v599 = vld [vmem:[%s384 + $0x6b0] sm:$0xff]
        %v600 = vld [vmem:[%s384 + $0x6b8] sm:$0xff]
        %v601 = vld [vmem:[%s384 + $0x6c0] sm:$0xff]
        %v602 = vld [vmem:[%s384 + $0x6c8] sm:$0xff]
        %v603 = vld [vmem:[%s384 + $0x6d0] sm:$0xff]
        %v604 = vld [vmem:[%s384 + $0x6d8] sm:$0xff]
        %v605 = vld [vmem:[%s384 + $0x6e0] sm:$0xff]
        %v606 = vld [vmem:[%s384 + $0x6e8] sm:$0xff]
        %v607 = vld [vmem:[%s384 + $0x6f0] sm:$0xff]
        %v608 = vld [vmem:[%s384 + $0x6f8] sm:$0xff]
        %v609 = vld [vmem:[%s384 + $0x700] sm:$0xff]
        %v610 = vld [vmem:[%s384 + $0x708] sm:$0xff]
        %v611 = vld [vmem:[%s384 + $0x710] sm:$0xff]
        %v612 = vld [vmem:[%s384 + $0x718] sm:$0xff]
        %v613 = vld [vmem:[%s384 + $0x720] sm:$0xff]
        %v614 = vld [vmem:[%s384 + $0x728] sm:$0xff]
        %v615 = vld [vmem:[%s384 + $0x730] sm:$0xff]
        %v616 = vld [vmem:[%s384 + $0x738] sm:$0xff]
        %v617 = vld [vmem:[%s384 + $0x740] sm:$0xff]
        %v618 = vld [vmem:[%s384 + $0x748] sm:$0xff]
        %v619 = vld [vmem:[%s384 + $0x750] sm:$0xff]
        %v620 = vld [vmem:[%s384 + $0x758] sm:$0xff]
        %v621 = vld [vmem:[%s384 + $0x760] sm:$0xff]
        %v622 = vld [vmem:[%s384 + $0x768] sm:$0xff]
        %v623 = vld [vmem:[%s384 + $0x770] sm:$0xff]
        %v624 = vld [vmem:[%s384 + $0x778] sm:$0xff]
        %v625 = vld [vmem:[%s384 + $0x780] sm:$0xff]
        %v626 = vld [vmem:[%s384 + $0x788] sm:$0xff]
        %v627 = vld [vmem:[%s384 + $0x790] sm:$0xff]
        %v628 = vld [vmem:[%s384 + $0x798] sm:$0xff]
        %v629 = vld [vmem:[%s384 + $0x7a0] sm:$0xff]
        %v630 = vld [vmem:[%s384 + $0x7a8] sm:$0xff]
        %v631 = vld [vmem:[%s384 + $0x7b0] sm:$0xff]
        %v632 = vld [vmem:[%s384 + $0x7b8] sm:$0xff]
        %v633 = vld [vmem:[%s384 + $0x7c0] sm:$0xff]
        %v634 = vld [vmem:[%s384 + $0x7c8] sm:$0xff]
        %v635 = vld [vmem:[%s384 + $0x7d0] sm:$0xff]
        %v636 = vld [vmem:[%s384 + $0x7d8] sm:$0xff]
        %v637 = vld [vmem:[%s384 + $0x7e0] sm:$0xff]
        %v638 = vld [vmem:[%s384 + $0x7e8] sm:$0xff]
        %v639 = vld [vmem:[%s384 + $0x7f0] sm:$0xff]
        %v640 = vld [vmem:[%s384 + $0x7f8] sm:$0xff]
        %v641 = vld [vmem:[%s1] sm:$0xff]
        %v642 = vld [vmem:[%s1 + $0x8] sm:$0x7f]
        %vm643 = vcmask 261120
        %v645 = vsel %vm643, %v641, 0
        %v648 = vsel %vm643, %v642, 0
        %650 = vmatprep.subr.mxu0 %v386
        %651 = vmatpush1.msra.mxu0 %v385
        %652 = vmatprep.subr.mxu0 %v450
        %653 = vmatpush1.msra.mxu0 %v449
        %654 = vmatprep.subr.mxu0 %v514
        %655 = vmatpush1.msra.mxu0 %v513
        %656 = vmatprep.subr.mxu0 %v578
        %657 = vmatpush1.msra.mxu0 %v577
        %658 = vmatprep.subr.mxu0 0.0
        %659 = vmatpush1.msra.mxu0 0.0
        %660 = vmatprep.subr.mxu0 0.0
        %661 = vmatpush1.msra.mxu0 0.0
        %662 = vmatprep.subr.mxu0 0.0
        %663 = vmatpush1.msra.mxu0 0.0
        %664 = vmatprep.subr.mxu0 0.0
        %665 = vmatpush1.msra.mxu0 0.0
        %666 = vmatprep.subr.mxu0 0.0
        %667 = vmatpush1.msra.mxu0 0.0
        %668 = vmatprep.subr.mxu0 0.0
        %669 = vmatpush1.msra.mxu0 0.0
        %670 = vmatprep.subr.mxu0 0.0
        %671 = vmatpush1.msra.mxu0 0.0
        %672 = vmatprep.subr.mxu0 0.0
        %673 = vmatpush1.msra.mxu0 0.0
        %674 = vmatprep.subr.mxu0 0.0
        %675 = vmatpush1.msra.mxu0 0.0
        %676 = vmatprep.subr.mxu0 0.0
        %677 = vmatpush1.msra.mxu0 0.0
        %678 = vmatprep.subr.mxu0 0.0
        %679 = vmatpush1.msra.mxu0 0.0
        %680 = vmatprep.subr.mxu0 0.0
        %681 = vmatpush1.msra.mxu0 0.0
        %682 = vmatprep.subr.mxu0 0.0
        %683 = vmatpush1.msra.mxu0 0.0
        %684 = vmatprep.subr.mxu0 0.0
        %685 = vmatpush1.msra.mxu0 0.0
        %686 = vmatprep.subr.mxu0 0.0
        %687 = vmatpush1.msra.mxu0 0.0
        %688 = vmatprep.subr.mxu0 0.0
        %689 = vmatpush1.msra.mxu0 0.0
        %690 = vmatprep.subr.mxu0 0.0
        %691 = vmatpush1.msra.mxu0 0.0
        %692 = vmatprep.subr.mxu0 0.0
        %693 = vmatpush1.msra.mxu0 0.0
        %694 = vmatprep.subr.mxu0 0.0
        %695 = vmatpush1.msra.mxu0 0.0
        %696 = vmatprep.subr.mxu0 0.0
        %697 = vmatpush1.msra.mxu0 0.0
        %698 = vmatprep.subr.mxu0 0.0
        %699 = vmatpush1.msra.mxu0 0.0
        %700 = vmatprep.subr.mxu0 0.0
        %701 = vmatpush1.msra.mxu0 0.0
        %702 = vmatprep.subr.mxu0 0.0
        %703 = vmatpush1.msra.mxu0 0.0
        %704 = vmatprep.subr.mxu0 0.0
        %705 = vmatpush1.msra.mxu0 0.0
        %706 = vmatprep.subr.mxu0 0.0
        %707 = vmatpush1.msra.mxu0 0.0
        %708 = vmatprep.subr.mxu0 0.0
        %709 = vmatpush1.msra.mxu0 0.0
        %710 = vmatprep.subr.mxu0 0.0
        %711 = vmatpush1.msra.mxu0 0.0
        %712 = vmatprep.subr.mxu0 0.0
        %713 = vmatpush1.msra.mxu0 0.0
        %714 = vmatprep.mubr.f32.mxu0 0.0
        %715 = vmatmul.mubr.f32.gmra.mrb[0].mxu0 %v645
        %v716 = vpop.f32.mrb[0].mxu0
        %v717 = vadd.f32 0.0, %v716
        %v718 = vpop.f32.mrb[0].mxu0
        %v719 = vadd.f32 0.0, %v718
        %720 = vmatprep.mubr.f32.mxu0 0.0
        %721 = vmatmul.mubr.f32.gmra.mrb[0].mxu0 %v648
        %v722 = vpop.f32.mrb[0].mxu0
        %v723 = vadd.f32 0.0, %v722
        %v724 = vpop.f32.mrb[0].mxu0
        %v725 = vadd.f32 0.0, %v724
        %726 = vdwg.mxu0
        %727 = vmatprep.subr.mxu0 %v388
        %728 = vmatpush1.msra.mxu0 %v387
        %729 = vmatprep.subr.mxu0 %v452
        %730 = vmatpush1.msra.mxu0 %v451
        %731 = vmatprep.subr.mxu0 %v516
        %732 = vmatpush1.msra.mxu0 %v515
        %733 = vmatprep.subr.mxu0 %v580
        %734 = vmatpush1.msra.mxu0 %v579
        %735 = vmatprep.subr.mxu0 0.0
        %736 = vmatpush1.msra.mxu0 0.0
        %737 = vmatprep.subr.mxu0 0.0
        %738 = vmatpush1.msra.mxu0 0.0
        %739 = vmatprep.subr.mxu0 0.0
        %740 = vmatpush1.msra.mxu0 0.0
        %741 = vmatprep.subr.mxu0 0.0
        %742 = vmatpush1.msra.mxu0 0.0
        %743 = vmatprep.subr.mxu0 0.0
        %744 = vmatpush1.msra.mxu0 0.0
        %745 = vmatprep.subr.mxu0 0.0
        %746 = vmatpush1.msra.mxu0 0.0
        %747 = vmatprep.subr.mxu0 0.0
        %748 = vmatpush1.msra.mxu0 0.0
        %749 = vmatprep.subr.mxu0 0.0
        %750 = vmatpush1.msra.mxu0 0.0
        %751 = vmatprep.subr.mxu0 0.0
        %752 = vmatpush1.msra.mxu0 0.0
        %753 = vmatprep.subr.mxu0 0.0
        %754 = vmatpush1.msra.mxu0 0.0
        %755 = vmatprep.subr.mxu0 0.0
        %756 = vmatpush1.msra.mxu0 0.0
        %757 = vmatprep.subr.mxu0 0.0
        %758 = vmatpush1.msra.mxu0 0.0
        %759 = vmatprep.subr.mxu0 0.0
        %760 = vmatpush1.msra.mxu0 0.0
        %761 = vmatprep.subr.mxu0 0.0
        %762 = vmatpush1.msra.mxu0 0.0
        %763 = vmatprep.subr.mxu0 0.0
        %764 = vmatpush1.msra.mxu0 0.0
        %765 = vmatprep.subr.mxu0 0.0
        %766 = vmatpush1.msra.mxu0 0.0
        %767 = vmatprep.subr.mxu0 0.0
        %768 = vmatpush1.msra.mxu0 0.0
        %769 = vmatprep.subr.mxu0 0.0
        %770 = vmatpush1.msra.mxu0 0.0
        %771 = vmatprep.subr.mxu0 0.0
        %772 = vmatpush1.msra.mxu0 0.0
        %773 = vmatprep.subr.mxu0 0.0
        %774 = vmatpush1.msra.mxu0 0.0
        %775 = vmatprep.subr.mxu0 0.0
        %776 = vmatpush1.msra.mxu0 0.0
        %777 = vmatprep.subr.mxu0 0.0
        %778 = vmatpush1.msra.mxu0 0.0
        %779 = vmatprep.subr.mxu0 0.0
        %780 = vmatpush1.msra.mxu0 0.0
        %781 = vmatprep.subr.mxu0 0.0
        %782 = vmatpush1.msra.mxu0 0.0
        %783 = vmatprep.subr.mxu0 0.0
        %784 = vmatpush1.msra.mxu0 0.0
        %785 = vmatprep.subr.mxu0 0.0
        %786 = vmatpush1.msra.mxu0 0.0
        %787 = vmatprep.subr.mxu0 0.0
        %788 = vmatpush1.msra.mxu0 0.0
        %789 = vmatprep.subr.mxu0 0.0
        %790 = vmatpush1.msra.mxu0 0.0
        %791 = vmatprep.mubr.f32.mxu0 0.0
        %792 = vmatmul.mubr.f32.gmra.mrb[0].mxu0 %v645
        %v793 = vpop.f32.mrb[0].mxu0
        %v794 = vadd.f32 0.0, %v793
        %v795 = vpop.f32.mrb[0].mxu0
        %v796 = vadd.f32 0.0, %v795
        %797 = vmatprep.mubr.f32.mxu0 0.0
        %798 = vmatmul.mubr.f32.gmra.mrb[0].mxu0 %v648
        %v799 = vpop.f32.mrb[0].mxu0
        %v800 = vadd.f32 0.0, %v799
        %v801 = vpop.f32.mrb[0].mxu0
        %v802 = vadd.f32 0.0, %v801
        %803 = vdwg.mxu0
        %804 = vmatprep.subr.mxu0 %v390
        %805 = vmatpush1.msra.mxu0 %v389
        %806 = vmatprep.subr.mxu0 %v454
        %807 = vmatpush1.msra.mxu0 %v453
        %808 = vmatprep.subr.mxu0 %v518
        %809 = vmatpush1.msra.mxu0 %v517
        %810 = vmatprep.subr.mxu0 %v582
        %811 = vmatpush1.msra.mxu0 %v581
        %812 = vmatprep.subr.mxu0 0.0
        %813 = vmatpush1.msra.mxu0 0.0
        %814 = vmatprep.subr.mxu0 0.0
        %815 = vmatpush1.msra.mxu0 0.0
        %816 = vmatprep.subr.mxu0 0.0
        %817 = vmatpush1.msra.mxu0 0.0
        %818 = vmatprep.subr.mxu0 0.0
        %819 = vmatpush1.msra.mxu0 0.0
        %820 = vmatprep.subr.mxu0 0.0
        %821 = vmatpush1.msra.mxu0 0.0
        %822 = vmatprep.subr.mxu0 0.0
        %823 = vmatpush1.msra.mxu0 0.0
        %824 = vmatprep.subr.mxu0 0.0
        %825 = vmatpush1.msra.mxu0 0.0
        %826 = vmatprep.subr.mxu0 0.0
        %827 = vmatpush1.msra.mxu0 0.0
        %828 = vmatprep.subr.mxu0 0.0
        %829 = vmatpush1.msra.mxu0 0.0
        %830 = vmatprep.subr.mxu0 0.0
        %831 = vmatpush1.msra.mxu0 0.0
        %832 = vmatprep.subr.mxu0 0.0
        %833 = vmatpush1.msra.mxu0 0.0
        %834 = vmatprep.subr.mxu0 0.0
        %835 = vmatpush1.msra.mxu0 0.0
        %836 = vmatprep.subr.mxu0 0.0
        %837 = vmatpush1.msra.mxu0 0.0
        %838 = vmatprep.subr.mxu0 0.0
        %839 = vmatpush1.msra.mxu0 0.0
        %840 = vmatprep.subr.mxu0 0.0
        %841 = vmatpush1.msra.mxu0 0.0
        %842 = vmatprep.subr.mxu0 0.0
        %843 = vmatpush1.msra.mxu0 0.0
        %844 = vmatprep.subr.mxu0 0.0
        %845 = vmatpush1.msra.mxu0 0.0
        %846 = vmatprep.subr.mxu0 0.0
        %847 = vmatpush1.msra.mxu0 0.0
        %848 = vmatprep.subr.mxu0 0.0
        %849 = vmatpush1.msra.mxu0 0.0
        %850 = vmatprep.subr.mxu0 0.0
        %851 = vmatpush1.msra.mxu0 0.0
        %852 = vmatprep.subr.mxu0 0.0
        %853 = vmatpush1.msra.mxu0 0.0
        %854 = vmatprep.subr.mxu0 0.0
        %855 = vmatpush1.msra.mxu0 0.0
        %856 = vmatprep.subr.mxu0 0.0
        %857 = vmatpush1.msra.mxu0 0.0
        %858 = vmatprep.subr.mxu0 0.0
        %859 = vmatpush1.msra.mxu0 0.0
        %860 = vmatprep.subr.mxu0 0.0
        %861 = vmatpush1.msra.mxu0 0.0
        %862 = vmatprep.subr.mxu0 0.0
        %863 = vmatpush1.msra.mxu0 0.0
        %864 = vmatprep.subr.mxu0 0.0
        %865 = vmatpush1.msra.mxu0 0.0
        %866 = vmatprep.subr.mxu0 0.0
        %867 = vmatpush1.msra.mxu0 0.0
        %868 = vmatprep.mubr.f32.mxu0 0.0
        %869 = vmatmul.mubr.f32.gmra.mrb[0].mxu0 %v645
        %v870 = vpop.f32.mrb[0].mxu0
        %v871 = vadd.f32 0.0, %v870
        %v872 = vpop.f32.mrb[0].mxu0
        %v873 = vadd.f32 0.0, %v872
        %874 = vmatprep.mubr.f32.mxu0 0.0
        %875 = vmatmul.mubr.f32.gmra.mrb[0].mxu0 %v648
        %v876 = vpop.f32.mrb[0].mxu0
        %v877 = vadd.f32 0.0, %v876
        %v878 = vpop.f32.mrb[0].mxu0
        %v879 = vadd.f32 0.0, %v878
        %880 = vdwg.mxu0
        %881 = vmatprep.subr.mxu0 %v392
        %882 = vmatpush1.msra.mxu0 %v391
        %883 = vmatprep.subr.mxu0 %v456
        %884 = vmatpush1.msra.mxu0 %v455
        %885 = vmatprep.subr.mxu0 %v520
        %886 = vmatpush1.msra.mxu0 %v519
        %887 = vmatprep.subr.mxu0 %v584
        %888 = vmatpush1.msra.mxu0 %v583
        %889 = vmatprep.subr.mxu0 0.0
        %890 = vmatpush1.msra.mxu0 0.0
        %891 = vmatprep.subr.mxu0 0.0
        %892 = vmatpush1.msra.mxu0 0.0
        %893 = vmatprep.subr.mxu0 0.0
        %894 = vmatpush1.msra.mxu0 0.0
        %895 = vmatprep.subr.mxu0 0.0
        %896 = vmatpush1.msra.mxu0 0.0
        %897 = vmatprep.subr.mxu0 0.0
        %898 = vmatpush1.msra.mxu0 0.0
        %899 = vmatprep.subr.mxu0 0.0
        %900 = vmatpush1.msra.mxu0 0.0
        %901 = vmatprep.subr.mxu0 0.0
        %902 = vmatpush1.msra.mxu0 0.0
        %903 = vmatprep.subr.mxu0 0.0
        %904 = vmatpush1.msra.mxu0 0.0
        %905 = vmatprep.subr.mxu0 0.0
        %906 = vmatpush1.msra.mxu0 0.0
        %907 = vmatprep.subr.mxu0 0.0
        %908 = vmatpush1.msra.mxu0 0.0
        %909 = vmatprep.subr.mxu0 0.0
        %910 = vmatpush1.msra.mxu0 0.0
        %911 = vmatprep.subr.mxu0 0.0
        %912 = vmatpush1.msra.mxu0 0.0
        %913 = vmatprep.subr.mxu0 0.0
        %914 = vmatpush1.msra.mxu0 0.0
        %915 = vmatprep.subr.mxu0 0.0
        %916 = vmatpush1.msra.mxu0 0.0
        %917 = vmatprep.subr.mxu0 0.0
        %918 = vmatpush1.msra.mxu0 0.0
        %919 = vmatprep.subr.mxu0 0.0
        %920 = vmatpush1.msra.mxu0 0.0
        %921 = vmatprep.subr.mxu0 0.0
        %922 = vmatpush1.msra.mxu0 0.0
        %923 = vmatprep.subr.mxu0 0.0
        %924 = vmatpush1.msra.mxu0 0.0
        %925 = vmatprep.subr.mxu0 0.0
        %926 = vmatpush1.msra.mxu0 0.0
        %927 = vmatprep.subr.mxu0 0.0
        %928 = vmatpush1.msra.mxu0 0.0
        %929 = vmatprep.subr.mxu0 0.0
        %930 = vmatpush1.msra.mxu0 0.0
        %931 = vmatprep.subr.mxu0 0.0
        %932 = vmatpush1.msra.mxu0 0.0
        %933 = vmatprep.subr.mxu0 0.0
        %934 = vmatpush1.msra.mxu0 0.0
        %935 = vmatprep.subr.mxu0 0.0
        %936 = vmatpush1.msra.mxu0 0.0
        %937 = vmatprep.subr.mxu0 0.0
        %938 = vmatpush1.msra.mxu0 0.0
        %939 = vmatprep.subr.mxu0 0.0
        %940 = vmatpush1.msra.mxu0 0.0
        %941 = vmatprep.subr.mxu0 0.0
        %942 = vmatpush1.msra.mxu0 0.0
        %943 = vmatprep.subr.mxu0 0.0
        %944 = vmatpush1.msra.mxu0 0.0
        %945 = vmatprep.mubr.f32.mxu0 0.0
        %946 = vmatmul.mubr.f32.gmra.mrb[0].mxu0 %v645
        %v947 = vpop.f32.mrb[0].mxu0
        %v948 = vadd.f32 0.0, %v947
        %v949 = vpop.f32.mrb[0].mxu0
        %v950 = vadd.f32 0.0, %v949
        %951 = vmatprep.mubr.f32.mxu0 0.0
        %952 = vmatmul.mubr.f32.gmra.mrb[0].mxu0 %v648
        %v953 = vpop.f32.mrb[0].mxu0
        %v954 = vadd.f32 0.0, %v953
        %v955 = vpop.f32.mrb[0].mxu0
        %v956 = vadd.f32 0.0, %v955
        %957 = vdwg.mxu0
        %958 = vmatprep.subr.mxu0 %v394
        %959 = vmatpush1.msra.mxu0 %v393
        %960 = vmatprep.subr.mxu0 %v458
        %961 = vmatpush1.msra.mxu0 %v457
        %962 = vmatprep.subr.mxu0 %v522
        %963 = vmatpush1.msra.mxu0 %v521
        %964 = vmatprep.subr.mxu0 %v586
        %965 = vmatpush1.msra.mxu0 %v585
        %966 = vmatprep.subr.mxu0 0.0
        %967 = vmatpush1.msra.mxu0 0.0
        %968 = vmatprep.subr.mxu0 0.0
        %969 = vmatpush1.msra.mxu0 0.0
        %970 = vmatprep.subr.mxu0 0.0
        %971 = vmatpush1.msra.mxu0 0.0
        %972 = vmatprep.subr.mxu0 0.0
        %973 = vmatpush1.msra.mxu0 0.0
        %974 = vmatprep.subr.mxu0 0.0
        %975 = vmatpush1.msra.mxu0 0.0
        %976 = vmatprep.subr.mxu0 0.0
        %977 = vmatpush1.msra.mxu0 0.0
        %978 = vmatprep.subr.mxu0 0.0
        %979 = vmatpush1.msra.mxu0 0.0
        %980 = vmatprep.subr.mxu0 0.0
        %981 = vmatpush1.msra.mxu0 0.0
        %982 = vmatprep.subr.mxu0 0.0
        %983 = vmatpush1.msra.mxu0 0.0
        %984 = vmatprep.subr.mxu0 0.0
        %985 = vmatpush1.msra.mxu0 0.0
        %986 = vmatprep.subr.mxu0 0.0
        %987 = vmatpush1.msra.mxu0 0.0
        %988 = vmatprep.subr.mxu0 0.0
        %989 = vmatpush1.msra.mxu0 0.0
        %990 = vmatprep.subr.mxu0 0.0
        %991 = vmatpush1.msra.mxu0 0.0
        %992 = vmatprep.subr.mxu0 0.0
        %993 = vmatpush1.msra.mxu0 0.0
        %994 = vmatprep.subr.mxu0 0.0
        %995 = vmatpush1.msra.mxu0 0.0
        %996 = vmatprep.subr.mxu0 0.0
        %997 = vmatpush1.msra.mxu0 0.0
        %998 = vmatprep.subr.mxu0 0.0
        %999 = vmatpush1.msra.mxu0 0.0
        %1000 = vmatprep.subr.mxu0 0.0
        %1001 = vmatpush1.msra.mxu0 0.0
        %1002 = vmatprep.subr.mxu0 0.0
        %1003 = vmatpush1.msra.mxu0 0.0
        %1004 = vmatprep.subr.mxu0 0.0
        %1005 = vmatpush1.msra.mxu0 0.0
        %1006 = vmatprep.subr.mxu0 0.0
        %1007 = vmatpush1.msra.mxu0 0.0
        %1008 = vmatprep.subr.mxu0 0.0
        %1009 = vmatpush1.msra.mxu0 0.0
        %1010 = vmatprep.subr.mxu0 0.0
        %1011 = vmatpush1.msra.mxu0 0.0
        %1012 = vmatprep.subr.mxu0 0.0
        %1013 = vmatpush1.msra.mxu0 0.0
        %1014 = vmatprep.subr.mxu0 0.0
        %1015 = vmatpush1.msra.mxu0 0.0
        %1016 = vmatprep.subr.mxu0 0.0
        %1017 = vmatpush1.msra.mxu0 0.0
        %1018 = vmatprep.subr.mxu0 0.0
        %1019 = vmatpush1.msra.mxu0 0.0
        %1020 = vmatprep.subr.mxu0 0.0
        %1021 = vmatpush1.msra.mxu0 0.0
        %1022 = vmatprep.mubr.f32.mxu0 0.0
        %1023 = vmatmul.mubr.f32.gmra.mrb[0].mxu0 %v645
        %v1024 = vpop.f32.mrb[0].mxu0
        %v1025 = vadd.f32 0.0, %v1024
        %v1026 = vpop.f32.mrb[0].mxu0
        %v1027 = vadd.f32 0.0, %v1026
        %1028 = vmatprep.mubr.f32.mxu0 0.0
        %1029 = vmatmul.mubr.f32.gmra.mrb[0].mxu0 %v648
        %v1030 = vpop.f32.mrb[0].mxu0
        %v1031 = vadd.f32 0.0, %v1030
        %v1032 = vpop.f32.mrb[0].mxu0
        %v1033 = vadd.f32 0.0, %v1032
        %1034 = vdwg.mxu0
        %1035 = vmatprep.subr.mxu0 %v396
        %1036 = vmatpush1.msra.mxu0 %v395
        %1037 = vmatprep.subr.mxu0 %v460
        %1038 = vmatpush1.msra.mxu0 %v459
        %1039 = vmatprep.subr.mxu0 %v524
        %1040 = vmatpush1.msra.mxu0 %v523
        %1041 = vmatprep.subr.mxu0 %v588
        %1042 = vmatpush1.msra.mxu0 %v587
        %1043 = vmatprep.subr.mxu0 0.0
        %1044 = vmatpush1.msra.mxu0 0.0
        %1045 = vmatprep.subr.mxu0 0.0
        %1046 = vmatpush1.msra.mxu0 0.0
        %1047 = vmatprep.subr.mxu0 0.0
        %1048 = vmatpush1.msra.mxu0 0.0
        %1049 = vmatprep.subr.mxu0 0.0
        %1050 = vmatpush1.msra.mxu0 0.0
        %1051 = vmatprep.subr.mxu0 0.0
        %1052 = vmatpush1.msra.mxu0 0.0
        %1053 = vmatprep.subr.mxu0 0.0
        %1054 = vmatpush1.msra.mxu0 0.0
        %1055 = vmatprep.subr.mxu0 0.0
        %1056 = vmatpush1.msra.mxu0 0.0
        %1057 = vmatprep.subr.mxu0 0.0
        %1058 = vmatpush1.msra.mxu0 0.0
        %1059 = vmatprep.subr.mxu0 0.0
        %1060 = vmatpush1.msra.mxu0 0.0
        %1061 = vmatprep.subr.mxu0 0.0
        %1062 = vmatpush1.msra.mxu0 0.0
        %1063 = vmatprep.subr.mxu0 0.0
        %1064 = vmatpush1.msra.mxu0 0.0
        %1065 = vmatprep.subr.mxu0 0.0
        %1066 = vmatpush1.msra.mxu0 0.0
        %1067 = vmatprep.subr.mxu0 0.0
        %1068 = vmatpush1.msra.mxu0 0.0
        %1069 = vmatprep.subr.mxu0 0.0
        %1070 = vmatpush1.msra.mxu0 0.0
        %1071 = vmatprep.subr.mxu0 0.0
        %1072 = vmatpush1.msra.mxu0 0.0
        %1073 = vmatprep.subr.mxu0 0.0
        %1074 = vmatpush1.msra.mxu0 0.0
        %1075 = vmatprep.subr.mxu0 0.0
        %1076 = vmatpush1.msra.mxu0 0.0
        %1077 = vmatprep.subr.mxu0 0.0
        %1078 = vmatpush1.msra.mxu0 0.0
        %1079 = vmatprep.subr.mxu0 0.0
        %1080 = vmatpush1.msra.mxu0 0.0
        %1081 = vmatprep.subr.mxu0 0.0
        %1082 = vmatpush1.msra.mxu0 0.0
        %1083 = vmatprep.subr.mxu0 0.0
        %1084 = vmatpush1.msra.mxu0 0.0
        %1085 = vmatprep.subr.mxu0 0.0
        %1086 = vmatpush1.msra.mxu0 0.0
        %1087 = vmatprep.subr.mxu0 0.0
        %1088 = vmatpush1.msra.mxu0 0.0
        %1089 = vmatprep.subr.mxu0 0.0
        %1090 = vmatpush1.msra.mxu0 0.0
        %1091 = vmatprep.subr.mxu0 0.0
        %1092 = vmatpush1.msra.mxu0 0.0
        %1093 = vmatprep.subr.mxu0 0.0
        %1094 = vmatpush1.msra.mxu0 0.0
        %1095 = vmatprep.subr.mxu0 0.0
        %1096 = vmatpush1.msra.mxu0 0.0
        %1097 = vmatprep.subr.mxu0 0.0
        %1098 = vmatpush1.msra.mxu0 0.0
        %1099 = vmatprep.mubr.f32.mxu0 0.0
        %1100 = vmatmul.mubr.f32.gmra.mrb[0].mxu0 %v645
        %v1101 = vpop.f32.mrb[0].mxu0
        %v1102 = vadd.f32 0.0, %v1101
        %v1103 = vpop.f32.mrb[0].mxu0
        %v1104 = vadd.f32 0.0, %v1103
        %1105 = vmatprep.mubr.f32.mxu0 0.0
        %1106 = vmatmul.mubr.f32.gmra.mrb[0].mxu0 %v648
        %v1107 = vpop.f32.mrb[0].mxu0
        %v1108 = vadd.f32 0.0, %v1107
        %v1109 = vpop.f32.mrb[0].mxu0
        %v1110 = vadd.f32 0.0, %v1109
        %1111 = vdwg.mxu0
        %1112 = vmatprep.subr.mxu0 %v398
        %1113 = vmatpush1.msra.mxu0 %v397
        %1114 = vmatprep.subr.mxu0 %v462
        %1115 = vmatpush1.msra.mxu0 %v461
        %1116 = vmatprep.subr.mxu0 %v526
        %1117 = vmatpush1.msra.mxu0 %v525
        %1118 = vmatprep.subr.mxu0 %v590
        %1119 = vmatpush1.msra.mxu0 %v589
        %1120 = vmatprep.subr.mxu0 0.0
        %1121 = vmatpush1.msra.mxu0 0.0
        %1122 = vmatprep.subr.mxu0 0.0
        %1123 = vmatpush1.msra.mxu0 0.0
        %1124 = vmatprep.subr.mxu0 0.0
        %1125 = vmatpush1.msra.mxu0 0.0
        %1126 = vmatprep.subr.mxu0 0.0
        %1127 = vmatpush1.msra.mxu0 0.0
        %1128 = vmatprep.subr.mxu0 0.0
        %1129 = vmatpush1.msra.mxu0 0.0
        %1130 = vmatprep.subr.mxu0 0.0
        %1131 = vmatpush1.msra.mxu0 0.0
        %1132 = vmatprep.subr.mxu0 0.0
        %1133 = vmatpush1.msra.mxu0 0.0
        %1134 = vmatprep.subr.mxu0 0.0
        %1135 = vmatpush1.msra.mxu0 0.0
        %1136 = vmatprep.subr.mxu0 0.0
        %1137 = vmatpush1.msra.mxu0 0.0
        %1138 = vmatprep.subr.mxu0 0.0
        %1139 = vmatpush1.msra.mxu0 0.0
        %1140 = vmatprep.subr.mxu0 0.0
        %1141 = vmatpush1.msra.mxu0 0.0
        %1142 = vmatprep.subr.mxu0 0.0
        %1143 = vmatpush1.msra.mxu0 0.0
        %1144 = vmatprep.subr.mxu0 0.0
        %1145 = vmatpush1.msra.mxu0 0.0
        %1146 = vmatprep.subr.mxu0 0.0
        %1147 = vmatpush1.msra.mxu0 0.0
        %1148 = vmatprep.subr.mxu0 0.0
        %1149 = vmatpush1.msra.mxu0 0.0
        %1150 = vmatprep.subr.mxu0 0.0
        %1151 = vmatpush1.msra.mxu0 0.0
        %1152 = vmatprep.subr.mxu0 0.0
        %1153 = vmatpush1.msra.mxu0 0.0
        %1154 = vmatprep.subr.mxu0 0.0
        %1155 = vmatpush1.msra.mxu0 0.0
        %1156 = vmatprep.subr.mxu0 0.0
        %1157 = vmatpush1.msra.mxu0 0.0
        %1158 = vmatprep.subr.mxu0 0.0
        %1159 = vmatpush1.msra.mxu0 0.0
        %1160 = vmatprep.subr.mxu0 0.0
        %1161 = vmatpush1.msra.mxu0 0.0
        %1162 = vmatprep.subr.mxu0 0.0
        %1163 = vmatpush1.msra.mxu0 0.0
        %1164 = vmatprep.subr.mxu0 0.0
        %1165 = vmatpush1.msra.mxu0 0.0
        %1166 = vmatprep.subr.mxu0 0.0
        %1167 = vmatpush1.msra.mxu0 0.0
        %1168 = vmatprep.subr.mxu0 0.0
        %1169 = vmatpush1.msra.mxu0 0.0
        %1170 = vmatprep.subr.mxu0 0.0
        %1171 = vmatpush1.msra.mxu0 0.0
        %1172 = vmatprep.subr.mxu0 0.0
        %1173 = vmatpush1.msra.mxu0 0.0
        %1174 = vmatprep.subr.mxu0 0.0
        %1175 = vmatpush1.msra.mxu0 0.0
        %1176 = vmatprep.mubr.f32.mxu0 0.0
        %1177 = vmatmul.mubr.f32.gmra.mrb[0].mxu0 %v645
        %v1178 = vpop.f32.mrb[0].mxu0
        %v1179 = vadd.f32 0.0, %v1178
        %v1180 = vpop.f32.mrb[0].mxu0
        %v1181 = vadd.f32 0.0, %v1180
        %1182 = vmatprep.mubr.f32.mxu0 0.0
        %1183 = vmatmul.mubr.f32.gmra.mrb[0].mxu0 %v648
        %v1184 = vpop.f32.mrb[0].mxu0
        %v1185 = vadd.f32 0.0, %v1184
        %v1186 = vpop.f32.mrb[0].mxu0
        %v1187 = vadd.f32 0.0, %v1186
        %1188 = vdwg.mxu0
        %1189 = vmatprep.subr.mxu0 %v400
        %1190 = vmatpush1.msra.mxu0 %v399
        %1191 = vmatprep.subr.mxu0 %v464
        %1192 = vmatpush1.msra.mxu0 %v463
        %1193 = vmatprep.subr.mxu0 %v528
        %1194 = vmatpush1.msra.mxu0 %v527
        %1195 = vmatprep.subr.mxu0 %v592
        %1196 = vmatpush1.msra.mxu0 %v591
        %1197 = vmatprep.subr.mxu0 0.0
        %1198 = vmatpush1.msra.mxu0 0.0
        %1199 = vmatprep.subr.mxu0 0.0
        %1200 = vmatpush1.msra.mxu0 0.0
        %1201 = vmatprep.subr.mxu0 0.0
        %1202 = vmatpush1.msra.mxu0 0.0
        %1203 = vmatprep.subr.mxu0 0.0
        %1204 = vmatpush1.msra.mxu0 0.0
        %1205 = vmatprep.subr.mxu0 0.0
        %1206 = vmatpush1.msra.mxu0 0.0
        %1207 = vmatprep.subr.mxu0 0.0
        %1208 = vmatpush1.msra.mxu0 0.0
        %1209 = vmatprep.subr.mxu0 0.0
        %1210 = vmatpush1.msra.mxu0 0.0
        %1211 = vmatprep.subr.mxu0 0.0
        %1212 = vmatpush1.msra.mxu0 0.0
        %1213 = vmatprep.subr.mxu0 0.0
        %1214 = vmatpush1.msra.mxu0 0.0
        %1215 = vmatprep.subr.mxu0 0.0
        %1216 = vmatpush1.msra.mxu0 0.0
        %1217 = vmatprep.subr.mxu0 0.0
        %1218 = vmatpush1.msra.mxu0 0.0
        %1219 = vmatprep.subr.mxu0 0.0
        %1220 = vmatpush1.msra.mxu0 0.0
        %1221 = vmatprep.subr.mxu0 0.0
        %1222 = vmatpush1.msra.mxu0 0.0
        %1223 = vmatprep.subr.mxu0 0.0
        %1224 = vmatpush1.msra.mxu0 0.0
        %1225 = vmatprep.subr.mxu0 0.0
        %1226 = vmatpush1.msra.mxu0 0.0
        %1227 = vmatprep.subr.mxu0 0.0
        %1228 = vmatpush1.msra.mxu0 0.0
        %1229 = vmatprep.subr.mxu0 0.0
        %1230 = vmatpush1.msra.mxu0 0.0
        %1231 = vmatprep.subr.mxu0 0.0
        %1232 = vmatpush1.msra.mxu0 0.0
        %1233 = vmatprep.subr.mxu0 0.0
        %1234 = vmatpush1.msra.mxu0 0.0
        %1235 = vmatprep.subr.mxu0 0.0
        %1236 = vmatpush1.msra.mxu0 0.0
        %1237 = vmatprep.subr.mxu0 0.0
        %1238 = vmatpush1.msra.mxu0 0.0
        %1239 = vmatprep.subr.mxu0 0.0
        %1240 = vmatpush1.msra.mxu0 0.0
        %1241 = vmatprep.subr.mxu0 0.0
        %1242 = vmatpush1.msra.mxu0 0.0
        %1243 = vmatprep.subr.mxu0 0.0
        %1244 = vmatpush1.msra.mxu0 0.0
        %1245 = vmatprep.subr.mxu0 0.0
        %1246 = vmatpush1.msra.mxu0 0.0
        %1247 = vmatprep.subr.mxu0 0.0
        %1248 = vmatpush1.msra.mxu0 0.0
        %1249 = vmatprep.subr.mxu0 0.0
        %1250 = vmatpush1.msra.mxu0 0.0
        %1251 = vmatprep.subr.mxu0 0.0
        %1252 = vmatpush1.msra.mxu0 0.0
        %1253 = vmatprep.mubr.f32.mxu0 0.0
        %1254 = vmatmul.mubr.f32.gmra.mrb[0].mxu0 %v645
        %v1255 = vpop.f32.mrb[0].mxu0
        %v1256 = vadd.f32 0.0, %v1255
        %v1257 = vpop.f32.mrb[0].mxu0
        %v1258 = vadd.f32 0.0, %v1257
        %1259 = vmatprep.mubr.f32.mxu0 0.0
        %1260 = vmatmul.mubr.f32.gmra.mrb[0].mxu0 %v648
        %v1261 = vpop.f32.mrb[0].mxu0
        %v1262 = vadd.f32 0.0, %v1261
        %v1263 = vpop.f32.mrb[0].mxu0
        %v1264 = vadd.f32 0.0, %v1263
        %1265 = vdwg.mxu0
        %1266 = vmatprep.subr.mxu0 %v402
        %1267 = vmatpush1.msra.mxu0 %v401
        %1268 = vmatprep.subr.mxu0 %v466
        %1269 = vmatpush1.msra.mxu0 %v465
        %1270 = vmatprep.subr.mxu0 %v530
        %1271 = vmatpush1.msra.mxu0 %v529
        %1272 = vmatprep.subr.mxu0 %v594
        %1273 = vmatpush1.msra.mxu0 %v593
        %1274 = vmatprep.subr.mxu0 0.0
        %1275 = vmatpush1.msra.mxu0 0.0
        %1276 = vmatprep.subr.mxu0 0.0
        %1277 = vmatpush1.msra.mxu0 0.0
        %1278 = vmatprep.subr.mxu0 0.0
        %1279 = vmatpush1.msra.mxu0 0.0
        %1280 = vmatprep.subr.mxu0 0.0
        %1281 = vmatpush1.msra.mxu0 0.0
        %1282 = vmatprep.subr.mxu0 0.0
        %1283 = vmatpush1.msra.mxu0 0.0
        %1284 = vmatprep.subr.mxu0 0.0
        %1285 = vmatpush1.msra.mxu0 0.0
        %1286 = vmatprep.subr.mxu0 0.0
        %1287 = vmatpush1.msra.mxu0 0.0
        %1288 = vmatprep.subr.mxu0 0.0
        %1289 = vmatpush1.msra.mxu0 0.0
        %1290 = vmatprep.subr.mxu0 0.0
        %1291 = vmatpush1.msra.mxu0 0.0
        %1292 = vmatprep.subr.mxu0 0.0
        %1293 = vmatpush1.msra.mxu0 0.0
        %1294 = vmatprep.subr.mxu0 0.0
        %1295 = vmatpush1.msra.mxu0 0.0
        %1296 = vmatprep.subr.mxu0 0.0
        %1297 = vmatpush1.msra.mxu0 0.0
        %1298 = vmatprep.subr.mxu0 0.0
        %1299 = vmatpush1.msra.mxu0 0.0
        %1300 = vmatprep.subr.mxu0 0.0
        %1301 = vmatpush1.msra.mxu0 0.0
        %1302 = vmatprep.subr.mxu0 0.0
        %1303 = vmatpush1.msra.mxu0 0.0
        %1304 = vmatprep.subr.mxu0 0.0
        %1305 = vmatpush1.msra.mxu0 0.0
        %1306 = vmatprep.subr.mxu0 0.0
        %1307 = vmatpush1.msra.mxu0 0.0
        %1308 = vmatprep.subr.mxu0 0.0
        %1309 = vmatpush1.msra.mxu0 0.0
        %1310 = vmatprep.subr.mxu0 0.0
        %1311 = vmatpush1.msra.mxu0 0.0
        %1312 = vmatprep.subr.mxu0 0.0
        %1313 = vmatpush1.msra.mxu0 0.0
        %1314 = vmatprep.subr.mxu0 0.0
        %1315 = vmatpush1.msra.mxu0 0.0
        %1316 = vmatprep.subr.mxu0 0.0
        %1317 = vmatpush1.msra.mxu0 0.0
        %1318 = vmatprep.subr.mxu0 0.0
        %1319 = vmatpush1.msra.mxu0 0.0
        %1320 = vmatprep.subr.mxu0 0.0
        %1321 = vmatpush1.msra.mxu0 0.0
        %1322 = vmatprep.subr.mxu0 0.0
        %1323 = vmatpush1.msra.mxu0 0.0
        %1324 = vmatprep.subr.mxu0 0.0
        %1325 = vmatpush1.msra.mxu0 0.0
        %1326 = vmatprep.subr.mxu0 0.0
        %1327 = vmatpush1.msra.mxu0 0.0
        %1328 = vmatprep.subr.mxu0 0.0
        %1329 = vmatpush1.msra.mxu0 0.0
        %1330 = vmatprep.mubr.f32.mxu0 0.0
        %1331 = vmatmul.mubr.f32.gmra.mrb[0].mxu0 %v645
        %v1332 = vpop.f32.mrb[0].mxu0
        %v1333 = vadd.f32 0.0, %v1332
        %v1334 = vpop.f32.mrb[0].mxu0
        %v1335 = vadd.f32 0.0, %v1334
        %1336 = vmatprep.mubr.f32.mxu0 0.0
        %1337 = vmatmul.mubr.f32.gmra.mrb[0].mxu0 %v648
        %v1338 = vpop.f32.mrb[0].mxu0
        %v1339 = vadd.f32 0.0, %v1338
        %v1340 = vpop.f32.mrb[0].mxu0
        %v1341 = vadd.f32 0.0, %v1340
        %1342 = vdwg.mxu0
        %1343 = vmatprep.subr.mxu0 %v404
        %1344 = vmatpush1.msra.mxu0 %v403
        %1345 = vmatprep.subr.mxu0 %v468
        %1346 = vmatpush1.msra.mxu0 %v467
        %1347 = vmatprep.subr.mxu0 %v532
        %1348 = vmatpush1.msra.mxu0 %v531
        %1349 = vmatprep.subr.mxu0 %v596
        %1350 = vmatpush1.msra.mxu0 %v595
        %1351 = vmatprep.subr.mxu0 0.0
        %1352 = vmatpush1.msra.mxu0 0.0
        %1353 = vmatprep.subr.mxu0 0.0
        %1354 = vmatpush1.msra.mxu0 0.0
        %1355 = vmatprep.subr.mxu0 0.0
        %1356 = vmatpush1.msra.mxu0 0.0
        %1357 = vmatprep.subr.mxu0 0.0
        %1358 = vmatpush1.msra.mxu0 0.0
        %1359 = vmatprep.subr.mxu0 0.0
        %1360 = vmatpush1.msra.mxu0 0.0
        %1361 = vmatprep.subr.mxu0 0.0
        %1362 = vmatpush1.msra.mxu0 0.0
        %1363 = vmatprep.subr.mxu0 0.0
        %1364 = vmatpush1.msra.mxu0 0.0
        %1365 = vmatprep.subr.mxu0 0.0
        %1366 = vmatpush1.msra.mxu0 0.0
        %1367 = vmatprep.subr.mxu0 0.0
        %1368 = vmatpush1.msra.mxu0 0.0
        %1369 = vmatprep.subr.mxu0 0.0
        %1370 = vmatpush1.msra.mxu0 0.0
        %1371 = vmatprep.subr.mxu0 0.0
        %1372 = vmatpush1.msra.mxu0 0.0
        %1373 = vmatprep.subr.mxu0 0.0
        %1374 = vmatpush1.msra.mxu0 0.0
        %1375 = vmatprep.subr.mxu0 0.0
        %1376 = vmatpush1.msra.mxu0 0.0
        %1377 = vmatprep.subr.mxu0 0.0
        %1378 = vmatpush1.msra.mxu0 0.0
        %1379 = vmatprep.subr.mxu0 0.0
        %1380 = vmatpush1.msra.mxu0 0.0
        %1381 = vmatprep.subr.mxu0 0.0
        %1382 = vmatpush1.msra.mxu0 0.0
        %1383 = vmatprep.subr.mxu0 0.0
        %1384 = vmatpush1.msra.mxu0 0.0
        %1385 = vmatprep.subr.mxu0 0.0
        %1386 = vmatpush1.msra.mxu0 0.0
        %1387 = vmatprep.subr.mxu0 0.0
        %1388 = vmatpush1.msra.mxu0 0.0
        %1389 = vmatprep.subr.mxu0 0.0
        %1390 = vmatpush1.msra.mxu0 0.0
        %1391 = vmatprep.subr.mxu0 0.0
        %1392 = vmatpush1.msra.mxu0 0.0
        %1393 = vmatprep.subr.mxu0 0.0
        %1394 = vmatpush1.msra.mxu0 0.0
        %1395 = vmatprep.subr.mxu0 0.0
        %1396 = vmatpush1.msra.mxu0 0.0
        %1397 = vmatprep.subr.mxu0 0.0
        %1398 = vmatpush1.msra.mxu0 0.0
        %1399 = vmatprep.subr.mxu0 0.0
        %1400 = vmatpush1.msra.mxu0 0.0
        %1401 = vmatprep.subr.mxu0 0.0
        %1402 = vmatpush1.msra.mxu0 0.0
        %1403 = vmatprep.subr.mxu0 0.0
        %1404 = vmatpush1.msra.mxu0 0.0
        %1405 = vmatprep.subr.mxu0 0.0
        %1406 = vmatpush1.msra.mxu0 0.0
        %1407 = vmatprep.mubr.f32.mxu0 0.0
        %1408 = vmatmul.mubr.f32.gmra.mrb[0].mxu0 %v645
        %v1409 = vpop.f32.mrb[0].mxu0
        %v1410 = vadd.f32 0.0, %v1409
        %v1411 = vpop.f32.mrb[0].mxu0
        %v1412 = vadd.f32 0.0, %v1411
        %1413 = vmatprep.mubr.f32.mxu0 0.0
        %1414 = vmatmul.mubr.f32.gmra.mrb[0].mxu0 %v648
        %v1415 = vpop.f32.mrb[0].mxu0
        %v1416 = vadd.f32 0.0, %v1415
        %v1417 = vpop.f32.mrb[0].mxu0
        %v1418 = vadd.f32 0.0, %v1417
        %1419 = vdwg.mxu0
        %1420 = vmatprep.subr.mxu0 %v406
        %1421 = vmatpush1.msra.mxu0 %v405
        %1422 = vmatprep.subr.mxu0 %v470
        %1423 = vmatpush1.msra.mxu0 %v469
        %1424 = vmatprep.subr.mxu0 %v534
        %1425 = vmatpush1.msra.mxu0 %v533
        %1426 = vmatprep.subr.mxu0 %v598
        %1427 = vmatpush1.msra.mxu0 %v597
        %1428 = vmatprep.subr.mxu0 0.0
        %1429 = vmatpush1.msra.mxu0 0.0
        %1430 = vmatprep.subr.mxu0 0.0
        %1431 = vmatpush1.msra.mxu0 0.0
        %1432 = vmatprep.subr.mxu0 0.0
        %1433 = vmatpush1.msra.mxu0 0.0
        %1434 = vmatprep.subr.mxu0 0.0
        %1435 = vmatpush1.msra.mxu0 0.0
        %1436 = vmatprep.subr.mxu0 0.0
        %1437 = vmatpush1.msra.mxu0 0.0
        %1438 = vmatprep.subr.mxu0 0.0
        %1439 = vmatpush1.msra.mxu0 0.0
        %1440 = vmatprep.subr.mxu0 0.0
        %1441 = vmatpush1.msra.mxu0 0.0
        %1442 = vmatprep.subr.mxu0 0.0
        %1443 = vmatpush1.msra.mxu0 0.0
        %1444 = vmatprep.subr.mxu0 0.0
        %1445 = vmatpush1.msra.mxu0 0.0
        %1446 = vmatprep.subr.mxu0 0.0
        %1447 = vmatpush1.msra.mxu0 0.0
        %1448 = vmatprep.subr.mxu0 0.0
        %1449 = vmatpush1.msra.mxu0 0.0
        %1450 = vmatprep.subr.mxu0 0.0
        %1451 = vmatpush1.msra.mxu0 0.0
        %1452 = vmatprep.subr.mxu0 0.0
        %1453 = vmatpush1.msra.mxu0 0.0
        %1454 = vmatprep.subr.mxu0 0.0
        %1455 = vmatpush1.msra.mxu0 0.0
        %1456 = vmatprep.subr.mxu0 0.0
        %1457 = vmatpush1.msra.mxu0 0.0
        %1458 = vmatprep.subr.mxu0 0.0
        %1459 = vmatpush1.msra.mxu0 0.0
        %1460 = vmatprep.subr.mxu0 0.0
        %1461 = vmatpush1.msra.mxu0 0.0
        %1462 = vmatprep.subr.mxu0 0.0
        %1463 = vmatpush1.msra.mxu0 0.0
        %1464 = vmatprep.subr.mxu0 0.0
        %1465 = vmatpush1.msra.mxu0 0.0
        %1466 = vmatprep.subr.mxu0 0.0
        %1467 = vmatpush1.msra.mxu0 0.0
        %1468 = vmatprep.subr.mxu0 0.0
        %1469 = vmatpush1.msra.mxu0 0.0
        %1470 = vmatprep.subr.mxu0 0.0
        %1471 = vmatpush1.msra.mxu0 0.0
        %1472 = vmatprep.subr.mxu0 0.0
        %1473 = vmatpush1.msra.mxu0 0.0
        %1474 = vmatprep.subr.mxu0 0.0
        %1475 = vmatpush1.msra.mxu0 0.0
        %1476 = vmatprep.subr.mxu0 0.0
        %1477 = vmatpush1.msra.mxu0 0.0
        %1478 = vmatprep.subr.mxu0 0.0
        %1479 = vmatpush1.msra.mxu0 0.0
        %1480 = vmatprep.subr.mxu0 0.0
        %1481 = vmatpush1.msra.mxu0 0.0
        %1482 = vmatprep.subr.mxu0 0.0
        %1483 = vmatpush1.msra.mxu0 0.0
        %1484 = vmatprep.mubr.f32.mxu0 0.0
        %1485 = vmatmul.mubr.f32.gmra.mrb[0].mxu0 %v645
        %v1486 = vpop.f32.mrb[0].mxu0
        %v1487 = vadd.f32 0.0, %v1486
        %v1488 = vpop.f32.mrb[0].mxu0
        %v1489 = vadd.f32 0.0, %v1488
        %1490 = vmatprep.mubr.f32.mxu0 0.0
        %1491 = vmatmul.mubr.f32.gmra.mrb[0].mxu0 %v648
        %v1492 = vpop.f32.mrb[0].mxu0
        %v1493 = vadd.f32 0.0, %v1492
        %v1494 = vpop.f32.mrb[0].mxu0
        %v1495 = vadd.f32 0.0, %v1494
        %1496 = vdwg.mxu0
        %1497 = vmatprep.subr.mxu0 %v408
        %1498 = vmatpush1.msra.mxu0 %v407
        %1499 = vmatprep.subr.mxu0 %v472
        %1500 = vmatpush1.msra.mxu0 %v471
        %1501 = vmatprep.subr.mxu0 %v536
        %1502 = vmatpush1.msra.mxu0 %v535
        %1503 = vmatprep.subr.mxu0 %v600
        %1504 = vmatpush1.msra.mxu0 %v599
        %1505 = vmatprep.subr.mxu0 0.0
        %1506 = vmatpush1.msra.mxu0 0.0
        %1507 = vmatprep.subr.mxu0 0.0
        %1508 = vmatpush1.msra.mxu0 0.0
        %1509 = vmatprep.subr.mxu0 0.0
        %1510 = vmatpush1.msra.mxu0 0.0
        %1511 = vmatprep.subr.mxu0 0.0
        %1512 = vmatpush1.msra.mxu0 0.0
        %1513 = vmatprep.subr.mxu0 0.0
        %1514 = vmatpush1.msra.mxu0 0.0
        %1515 = vmatprep.subr.mxu0 0.0
        %1516 = vmatpush1.msra.mxu0 0.0
        %1517 = vmatprep.subr.mxu0 0.0
        %1518 = vmatpush1.msra.mxu0 0.0
        %1519 = vmatprep.subr.mxu0 0.0
        %1520 = vmatpush1.msra.mxu0 0.0
        %1521 = vmatprep.subr.mxu0 0.0
        %1522 = vmatpush1.msra.mxu0 0.0
        %1523 = vmatprep.subr.mxu0 0.0
        %1524 = vmatpush1.msra.mxu0 0.0
        %1525 = vmatprep.subr.mxu0 0.0
        %1526 = vmatpush1.msra.mxu0 0.0
        %1527 = vmatprep.subr.mxu0 0.0
        %1528 = vmatpush1.msra.mxu0 0.0
        %1529 = vmatprep.subr.mxu0 0.0
        %1530 = vmatpush1.msra.mxu0 0.0
        %1531 = vmatprep.subr.mxu0 0.0
        %1532 = vmatpush1.msra.mxu0 0.0
        %1533 = vmatprep.subr.mxu0 0.0
        %1534 = vmatpush1.msra.mxu0 0.0
        %1535 = vmatprep.subr.mxu0 0.0
        %1536 = vmatpush1.msra.mxu0 0.0
        %1537 = vmatprep.subr.mxu0 0.0
        %1538 = vmatpush1.msra.mxu0 0.0
        %1539 = vmatprep.subr.mxu0 0.0
        %1540 = vmatpush1.msra.mxu0 0.0
        %1541 = vmatprep.subr.mxu0 0.0
        %1542 = vmatpush1.msra.mxu0 0.0
        %1543 = vmatprep.subr.mxu0 0.0
        %1544 = vmatpush1.msra.mxu0 0.0
        %1545 = vmatprep.subr.mxu0 0.0
        %1546 = vmatpush1.msra.mxu0 0.0
        %1547 = vmatprep.subr.mxu0 0.0
        %1548 = vmatpush1.msra.mxu0 0.0
        %1549 = vmatprep.subr.mxu0 0.0
        %1550 = vmatpush1.msra.mxu0 0.0
        %1551 = vmatprep.subr.mxu0 0.0
        %1552 = vmatpush1.msra.mxu0 0.0
        %1553 = vmatprep.subr.mxu0 0.0
        %1554 = vmatpush1.msra.mxu0 0.0
        %1555 = vmatprep.subr.mxu0 0.0
        %1556 = vmatpush1.msra.mxu0 0.0
        %1557 = vmatprep.subr.mxu0 0.0
        %1558 = vmatpush1.msra.mxu0 0.0
        %1559 = vmatprep.subr.mxu0 0.0
        %1560 = vmatpush1.msra.mxu0 0.0
        %1561 = vmatprep.mubr.f32.mxu0 0.0
        %1562 = vmatmul.mubr.f32.gmra.mrb[0].mxu0 %v645
        %v1563 = vpop.f32.mrb[0].mxu0
        %v1564 = vadd.f32 0.0, %v1563
        %v1565 = vpop.f32.mrb[0].mxu0
        %v1566 = vadd.f32 0.0, %v1565
        %1567 = vmatprep.mubr.f32.mxu0 0.0
        %1568 = vmatmul.mubr.f32.gmra.mrb[0].mxu0 %v648
        %v1569 = vpop.f32.mrb[0].mxu0
        %v1570 = vadd.f32 0.0, %v1569
        %v1571 = vpop.f32.mrb[0].mxu0
        %v1572 = vadd.f32 0.0, %v1571
        %1573 = vdwg.mxu0
        %1574 = vmatprep.subr.mxu0 %v410
        %1575 = vmatpush1.msra.mxu0 %v409
        %1576 = vmatprep.subr.mxu0 %v474
        %1577 = vmatpush1.msra.mxu0 %v473
        %1578 = vmatprep.subr.mxu0 %v538
        %1579 = vmatpush1.msra.mxu0 %v537
        %1580 = vmatprep.subr.mxu0 %v602
        %1581 = vmatpush1.msra.mxu0 %v601
        %1582 = vmatprep.subr.mxu0 0.0
        %1583 = vmatpush1.msra.mxu0 0.0
        %1584 = vmatprep.subr.mxu0 0.0
        %1585 = vmatpush1.msra.mxu0 0.0
        %1586 = vmatprep.subr.mxu0 0.0
        %1587 = vmatpush1.msra.mxu0 0.0
        %1588 = vmatprep.subr.mxu0 0.0
        %1589 = vmatpush1.msra.mxu0 0.0
        %1590 = vmatprep.subr.mxu0 0.0
        %1591 = vmatpush1.msra.mxu0 0.0
        %1592 = vmatprep.subr.mxu0 0.0
        %1593 = vmatpush1.msra.mxu0 0.0
        %1594 = vmatprep.subr.mxu0 0.0
        %1595 = vmatpush1.msra.mxu0 0.0
        %1596 = vmatprep.subr.mxu0 0.0
        %1597 = vmatpush1.msra.mxu0 0.0
        %1598 = vmatprep.subr.mxu0 0.0
        %1599 = vmatpush1.msra.mxu0 0.0
        %1600 = vmatprep.subr.mxu0 0.0
        %1601 = vmatpush1.msra.mxu0 0.0
        %1602 = vmatprep.subr.mxu0 0.0
        %1603 = vmatpush1.msra.mxu0 0.0
        %1604 = vmatprep.subr.mxu0 0.0
        %1605 = vmatpush1.msra.mxu0 0.0
        %1606 = vmatprep.subr.mxu0 0.0
        %1607 = vmatpush1.msra.mxu0 0.0
        %1608 = vmatprep.subr.mxu0 0.0
        %1609 = vmatpush1.msra.mxu0 0.0
        %1610 = vmatprep.subr.mxu0 0.0
        %1611 = vmatpush1.msra.mxu0 0.0
        %1612 = vmatprep.subr.mxu0 0.0
        %1613 = vmatpush1.msra.mxu0 0.0
        %1614 = vmatprep.subr.mxu0 0.0
        %1615 = vmatpush1.msra.mxu0 0.0
        %1616 = vmatprep.subr.mxu0 0.0
        %1617 = vmatpush1.msra.mxu0 0.0
        %1618 = vmatprep.subr.mxu0 0.0
        %1619 = vmatpush1.msra.mxu0 0.0
        %1620 = vmatprep.subr.mxu0 0.0
        %1621 = vmatpush1.msra.mxu0 0.0
        %1622 = vmatprep.subr.mxu0 0.0
        %1623 = vmatpush1.msra.mxu0 0.0
        %1624 = vmatprep.subr.mxu0 0.0
        %1625 = vmatpush1.msra.mxu0 0.0
        %1626 = vmatprep.subr.mxu0 0.0
        %1627 = vmatpush1.msra.mxu0 0.0
        %1628 = vmatprep.subr.mxu0 0.0
        %1629 = vmatpush1.msra.mxu0 0.0
        %1630 = vmatprep.subr.mxu0 0.0
        %1631 = vmatpush1.msra.mxu0 0.0
        %1632 = vmatprep.subr.mxu0 0.0
        %1633 = vmatpush1.msra.mxu0 0.0
        %1634 = vmatprep.subr.mxu0 0.0
        %1635 = vmatpush1.msra.mxu0 0.0
        %1636 = vmatprep.subr.mxu0 0.0
        %1637 = vmatpush1.msra.mxu0 0.0
        %1638 = vmatprep.mubr.f32.mxu0 0.0
        %1639 = vmatmul.mubr.f32.gmra.mrb[0].mxu0 %v645
        %v1640 = vpop.f32.mrb[0].mxu0
        %v1641 = vadd.f32 0.0, %v1640
        %v1642 = vpop.f32.mrb[0].mxu0
        %v1643 = vadd.f32 0.0, %v1642
        %1644 = vmatprep.mubr.f32.mxu0 0.0
        %1645 = vmatmul.mubr.f32.gmra.mrb[0].mxu0 %v648
        %v1646 = vpop.f32.mrb[0].mxu0
        %v1647 = vadd.f32 0.0, %v1646
        %v1648 = vpop.f32.mrb[0].mxu0
        %v1649 = vadd.f32 0.0, %v1648
        %1650 = vdwg.mxu0
        %1651 = vmatprep.subr.mxu0 %v412
        %1652 = vmatpush1.msra.mxu0 %v411
        %1653 = vmatprep.subr.mxu0 %v476
        %1654 = vmatpush1.msra.mxu0 %v475
        %1655 = vmatprep.subr.mxu0 %v540
        %1656 = vmatpush1.msra.mxu0 %v539
        %1657 = vmatprep.subr.mxu0 %v604
        %1658 = vmatpush1.msra.mxu0 %v603
        %1659 = vmatprep.subr.mxu0 0.0
        %1660 = vmatpush1.msra.mxu0 0.0
        %1661 = vmatprep.subr.mxu0 0.0
        %1662 = vmatpush1.msra.mxu0 0.0
        %1663 = vmatprep.subr.mxu0 0.0
        %1664 = vmatpush1.msra.mxu0 0.0
        %1665 = vmatprep.subr.mxu0 0.0
        %1666 = vmatpush1.msra.mxu0 0.0
        %1667 = vmatprep.subr.mxu0 0.0
        %1668 = vmatpush1.msra.mxu0 0.0
        %1669 = vmatprep.subr.mxu0 0.0
        %1670 = vmatpush1.msra.mxu0 0.0
        %1671 = vmatprep.subr.mxu0 0.0
        %1672 = vmatpush1.msra.mxu0 0.0
        %1673 = vmatprep.subr.mxu0 0.0
        %1674 = vmatpush1.msra.mxu0 0.0
        %1675 = vmatprep.subr.mxu0 0.0
        %1676 = vmatpush1.msra.mxu0 0.0
        %1677 = vmatprep.subr.mxu0 0.0
        %1678 = vmatpush1.msra.mxu0 0.0
        %1679 = vmatprep.subr.mxu0 0.0
        %1680 = vmatpush1.msra.mxu0 0.0
        %1681 = vmatprep.subr.mxu0 0.0
        %1682 = vmatpush1.msra.mxu0 0.0
        %1683 = vmatprep.subr.mxu0 0.0
        %1684 = vmatpush1.msra.mxu0 0.0
        %1685 = vmatprep.subr.mxu0 0.0
        %1686 = vmatpush1.msra.mxu0 0.0
        %1687 = vmatprep.subr.mxu0 0.0
        %1688 = vmatpush1.msra.mxu0 0.0
        %1689 = vmatprep.subr.mxu0 0.0
        %1690 = vmatpush1.msra.mxu0 0.0
        %1691 = vmatprep.subr.mxu0 0.0
        %1692 = vmatpush1.msra.mxu0 0.0
        %1693 = vmatprep.subr.mxu0 0.0
        %1694 = vmatpush1.msra.mxu0 0.0
        %1695 = vmatprep.subr.mxu0 0.0
        %1696 = vmatpush1.msra.mxu0 0.0
        %1697 = vmatprep.subr.mxu0 0.0
        %1698 = vmatpush1.msra.mxu0 0.0
        %1699 = vmatprep.subr.mxu0 0.0
        %1700 = vmatpush1.msra.mxu0 0.0
        %1701 = vmatprep.subr.mxu0 0.0
        %1702 = vmatpush1.msra.mxu0 0.0
        %1703 = vmatprep.subr.mxu0 0.0
        %1704 = vmatpush1.msra.mxu0 0.0
        %1705 = vmatprep.subr.mxu0 0.0
        %1706 = vmatpush1.msra.mxu0 0.0
        %1707 = vmatprep.subr.mxu0 0.0
        %1708 = vmatpush1.msra.mxu0 0.0
        %1709 = vmatprep.subr.mxu0 0.0
        %1710 = vmatpush1.msra.mxu0 0.0
        %1711 = vmatprep.subr.mxu0 0.0
        %1712 = vmatpush1.msra.mxu0 0.0
        %1713 = vmatprep.subr.mxu0 0.0
        %1714 = vmatpush1.msra.mxu0 0.0
        %1715 = vmatprep.mubr.f32.mxu0 0.0
        %1716 = vmatmul.mubr.f32.gmra.mrb[0].mxu0 %v645
        %v1717 = vpop.f32.mrb[0].mxu0
        %v1718 = vadd.f32 0.0, %v1717
        %v1719 = vpop.f32.mrb[0].mxu0
        %v1720 = vadd.f32 0.0, %v1719
        %1721 = vmatprep.mubr.f32.mxu0 0.0
        %1722 = vmatmul.mubr.f32.gmra.mrb[0].mxu0 %v648
        %v1723 = vpop.f32.mrb[0].mxu0
        %v1724 = vadd.f32 0.0, %v1723
        %v1725 = vpop.f32.mrb[0].mxu0
        %v1726 = vadd.f32 0.0, %v1725
        %1727 = vdwg.mxu0
        %1728 = vmatprep.subr.mxu0 %v414
        %1729 = vmatpush1.msra.mxu0 %v413
        %1730 = vmatprep.subr.mxu0 %v478
        %1731 = vmatpush1.msra.mxu0 %v477
        %1732 = vmatprep.subr.mxu0 %v542
        %1733 = vmatpush1.msra.mxu0 %v541
        %1734 = vmatprep.subr.mxu0 %v606
        %1735 = vmatpush1.msra.mxu0 %v605
        %1736 = vmatprep.subr.mxu0 0.0
        %1737 = vmatpush1.msra.mxu0 0.0
        %1738 = vmatprep.subr.mxu0 0.0
        %1739 = vmatpush1.msra.mxu0 0.0
        %1740 = vmatprep.subr.mxu0 0.0
        %1741 = vmatpush1.msra.mxu0 0.0
        %1742 = vmatprep.subr.mxu0 0.0
        %1743 = vmatpush1.msra.mxu0 0.0
        %1744 = vmatprep.subr.mxu0 0.0
        %1745 = vmatpush1.msra.mxu0 0.0
        %1746 = vmatprep.subr.mxu0 0.0
        %1747 = vmatpush1.msra.mxu0 0.0
        %1748 = vmatprep.subr.mxu0 0.0
        %1749 = vmatpush1.msra.mxu0 0.0
        %1750 = vmatprep.subr.mxu0 0.0
        %1751 = vmatpush1.msra.mxu0 0.0
        %1752 = vmatprep.subr.mxu0 0.0
        %1753 = vmatpush1.msra.mxu0 0.0
        %1754 = vmatprep.subr.mxu0 0.0
        %1755 = vmatpush1.msra.mxu0 0.0
        %1756 = vmatprep.subr.mxu0 0.0
        %1757 = vmatpush1.msra.mxu0 0.0
        %1758 = vmatprep.subr.mxu0 0.0
        %1759 = vmatpush1.msra.mxu0 0.0
        %1760 = vmatprep.subr.mxu0 0.0
        %1761 = vmatpush1.msra.mxu0 0.0
        %1762 = vmatprep.subr.mxu0 0.0
        %1763 = vmatpush1.msra.mxu0 0.0
        %1764 = vmatprep.subr.mxu0 0.0
        %1765 = vmatpush1.msra.mxu0 0.0
        %1766 = vmatprep.subr.mxu0 0.0
        %1767 = vmatpush1.msra.mxu0 0.0
        %1768 = vmatprep.subr.mxu0 0.0
        %1769 = vmatpush1.msra.mxu0 0.0
        %1770 = vmatprep.subr.mxu0 0.0
        %1771 = vmatpush1.msra.mxu0 0.0
        %1772 = vmatprep.subr.mxu0 0.0
        %1773 = vmatpush1.msra.mxu0 0.0
        %1774 = vmatprep.subr.mxu0 0.0
        %1775 = vmatpush1.msra.mxu0 0.0
        %1776 = vmatprep.subr.mxu0 0.0
        %1777 = vmatpush1.msra.mxu0 0.0
        %1778 = vmatprep.subr.mxu0 0.0
        %1779 = vmatpush1.msra.mxu0 0.0
        %1780 = vmatprep.subr.mxu0 0.0
        %1781 = vmatpush1.msra.mxu0 0.0
        %1782 = vmatprep.subr.mxu0 0.0
        %1783 = vmatpush1.msra.mxu0 0.0
        %1784 = vmatprep.subr.mxu0 0.0
        %1785 = vmatpush1.msra.mxu0 0.0
        %1786 = vmatprep.subr.mxu0 0.0
        %1787 = vmatpush1.msra.mxu0 0.0
        %1788 = vmatprep.subr.mxu0 0.0
        %1789 = vmatpush1.msra.mxu0 0.0
        %1790 = vmatprep.subr.mxu0 0.0
        %1791 = vmatpush1.msra.mxu0 0.0
        %1792 = vmatprep.mubr.f32.mxu0 0.0
        %1793 = vmatmul.mubr.f32.gmra.mrb[0].mxu0 %v645
        %v1794 = vpop.f32.mrb[0].mxu0
        %v1795 = vadd.f32 0.0, %v1794
        %v1796 = vpop.f32.mrb[0].mxu0
        %v1797 = vadd.f32 0.0, %v1796
        %1798 = vmatprep.mubr.f32.mxu0 0.0
        %1799 = vmatmul.mubr.f32.gmra.mrb[0].mxu0 %v648
        %v1800 = vpop.f32.mrb[0].mxu0
        %v1801 = vadd.f32 0.0, %v1800
        %v1802 = vpop.f32.mrb[0].mxu0
        %v1803 = vadd.f32 0.0, %v1802
        %1804 = vdwg.mxu0
        %1805 = vmatprep.subr.mxu0 %v416
        %1806 = vmatpush1.msra.mxu0 %v415
        %1807 = vmatprep.subr.mxu0 %v480
        %1808 = vmatpush1.msra.mxu0 %v479
        %1809 = vmatprep.subr.mxu0 %v544
        %1810 = vmatpush1.msra.mxu0 %v543
        %1811 = vmatprep.subr.mxu0 %v608
        %1812 = vmatpush1.msra.mxu0 %v607
        %1813 = vmatprep.subr.mxu0 0.0
        %1814 = vmatpush1.msra.mxu0 0.0
        %1815 = vmatprep.subr.mxu0 0.0
        %1816 = vmatpush1.msra.mxu0 0.0
        %1817 = vmatprep.subr.mxu0 0.0
        %1818 = vmatpush1.msra.mxu0 0.0
        %1819 = vmatprep.subr.mxu0 0.0
        %1820 = vmatpush1.msra.mxu0 0.0
        %1821 = vmatprep.subr.mxu0 0.0
        %1822 = vmatpush1.msra.mxu0 0.0
        %1823 = vmatprep.subr.mxu0 0.0
        %1824 = vmatpush1.msra.mxu0 0.0
        %1825 = vmatprep.subr.mxu0 0.0
        %1826 = vmatpush1.msra.mxu0 0.0
        %1827 = vmatprep.subr.mxu0 0.0
        %1828 = vmatpush1.msra.mxu0 0.0
        %1829 = vmatprep.subr.mxu0 0.0
        %1830 = vmatpush1.msra.mxu0 0.0
        %1831 = vmatprep.subr.mxu0 0.0
        %1832 = vmatpush1.msra.mxu0 0.0
        %1833 = vmatprep.subr.mxu0 0.0
        %1834 = vmatpush1.msra.mxu0 0.0
        %1835 = vmatprep.subr.mxu0 0.0
        %1836 = vmatpush1.msra.mxu0 0.0
        %1837 = vmatprep.subr.mxu0 0.0
        %1838 = vmatpush1.msra.mxu0 0.0
        %1839 = vmatprep.subr.mxu0 0.0
        %1840 = vmatpush1.msra.mxu0 0.0
        %1841 = vmatprep.subr.mxu0 0.0
        %1842 = vmatpush1.msra.mxu0 0.0
        %1843 = vmatprep.subr.mxu0 0.0
        %1844 = vmatpush1.msra.mxu0 0.0
        %1845 = vmatprep.subr.mxu0 0.0
        %1846 = vmatpush1.msra.mxu0 0.0
        %1847 = vmatprep.subr.mxu0 0.0
        %1848 = vmatpush1.msra.mxu0 0.0
        %1849 = vmatprep.subr.mxu0 0.0
        %1850 = vmatpush1.msra.mxu0 0.0
        %1851 = vmatprep.subr.mxu0 0.0
        %1852 = vmatpush1.msra.mxu0 0.0
        %1853 = vmatprep.subr.mxu0 0.0
        %1854 = vmatpush1.msra.mxu0 0.0
        %1855 = vmatprep.subr.mxu0 0.0
        %1856 = vmatpush1.msra.mxu0 0.0
        %1857 = vmatprep.subr.mxu0 0.0
        %1858 = vmatpush1.msra.mxu0 0.0
        %1859 = vmatprep.subr.mxu0 0.0
        %1860 = vmatpush1.msra.mxu0 0.0
        %1861 = vmatprep.subr.mxu0 0.0
        %1862 = vmatpush1.msra.mxu0 0.0
        %1863 = vmatprep.subr.mxu0 0.0
        %1864 = vmatpush1.msra.mxu0 0.0
        %1865 = vmatprep.subr.mxu0 0.0
        %1866 = vmatpush1.msra.mxu0 0.0
        %1867 = vmatprep.subr.mxu0 0.0
        %1868 = vmatpush1.msra.mxu0 0.0
        %1869 = vmatprep.mubr.f32.mxu0 0.0
        %1870 = vmatmul.mubr.f32.gmra.mrb[0].mxu0 %v645
        %v1871 = vpop.f32.mrb[0].mxu0
        %v1872 = vadd.f32 0.0, %v1871
        %v1873 = vpop.f32.mrb[0].mxu0
        %v1874 = vadd.f32 0.0, %v1873
        %1875 = vmatprep.mubr.f32.mxu0 0.0
        %1876 = vmatmul.mubr.f32.gmra.mrb[0].mxu0 %v648
        %v1877 = vpop.f32.mrb[0].mxu0
        %v1878 = vadd.f32 0.0, %v1877
        %v1879 = vpop.f32.mrb[0].mxu0
        %v1880 = vadd.f32 0.0, %v1879
        %1881 = vdwg.mxu0
        %1882 = vmatprep.subr.mxu0 %v418
        %1883 = vmatpush1.msra.mxu0 %v417
        %1884 = vmatprep.subr.mxu0 %v482
        %1885 = vmatpush1.msra.mxu0 %v481
        %1886 = vmatprep.subr.mxu0 %v546
        %1887 = vmatpush1.msra.mxu0 %v545
        %1888 = vmatprep.subr.mxu0 %v610
        %1889 = vmatpush1.msra.mxu0 %v609
        %1890 = vmatprep.subr.mxu0 0.0
        %1891 = vmatpush1.msra.mxu0 0.0
        %1892 = vmatprep.subr.mxu0 0.0
        %1893 = vmatpush1.msra.mxu0 0.0
        %1894 = vmatprep.subr.mxu0 0.0
        %1895 = vmatpush1.msra.mxu0 0.0
        %1896 = vmatprep.subr.mxu0 0.0
        %1897 = vmatpush1.msra.mxu0 0.0
        %1898 = vmatprep.subr.mxu0 0.0
        %1899 = vmatpush1.msra.mxu0 0.0
        %1900 = vmatprep.subr.mxu0 0.0
        %1901 = vmatpush1.msra.mxu0 0.0
        %1902 = vmatprep.subr.mxu0 0.0
        %1903 = vmatpush1.msra.mxu0 0.0
        %1904 = vmatprep.subr.mxu0 0.0
        %1905 = vmatpush1.msra.mxu0 0.0
        %1906 = vmatprep.subr.mxu0 0.0
        %1907 = vmatpush1.msra.mxu0 0.0
        %1908 = vmatprep.subr.mxu0 0.0
        %1909 = vmatpush1.msra.mxu0 0.0
        %1910 = vmatprep.subr.mxu0 0.0
        %1911 = vmatpush1.msra.mxu0 0.0
        %1912 = vmatprep.subr.mxu0 0.0
        %1913 = vmatpush1.msra.mxu0 0.0
        %1914 = vmatprep.subr.mxu0 0.0
        %1915 = vmatpush1.msra.mxu0 0.0
        %1916 = vmatprep.subr.mxu0 0.0
        %1917 = vmatpush1.msra.mxu0 0.0
        %1918 = vmatprep.subr.mxu0 0.0
        %1919 = vmatpush1.msra.mxu0 0.0
        %1920 = vmatprep.subr.mxu0 0.0
        %1921 = vmatpush1.msra.mxu0 0.0
        %1922 = vmatprep.subr.mxu0 0.0
        %1923 = vmatpush1.msra.mxu0 0.0
        %1924 = vmatprep.subr.mxu0 0.0
        %1925 = vmatpush1.msra.mxu0 0.0
        %1926 = vmatprep.subr.mxu0 0.0
        %1927 = vmatpush1.msra.mxu0 0.0
        %1928 = vmatprep.subr.mxu0 0.0
        %1929 = vmatpush1.msra.mxu0 0.0
        %1930 = vmatprep.subr.mxu0 0.0
        %1931 = vmatpush1.msra.mxu0 0.0
        %1932 = vmatprep.subr.mxu0 0.0
        %1933 = vmatpush1.msra.mxu0 0.0
        %1934 = vmatprep.subr.mxu0 0.0
        %1935 = vmatpush1.msra.mxu0 0.0
        %1936 = vmatprep.subr.mxu0 0.0
        %1937 = vmatpush1.msra.mxu0 0.0
        %1938 = vmatprep.subr.mxu0 0.0
        %1939 = vmatpush1.msra.mxu0 0.0
        %1940 = vmatprep.subr.mxu0 0.0
        %1941 = vmatpush1.msra.mxu0 0.0
        %1942 = vmatprep.subr.mxu0 0.0
        %1943 = vmatpush1.msra.mxu0 0.0
        %1944 = vmatprep.subr.mxu0 0.0
        %1945 = vmatpush1.msra.mxu0 0.0
        %1946 = vmatprep.mubr.f32.mxu0 0.0
        %1947 = vmatmul.mubr.f32.gmra.mrb[0].mxu0 %v645
        %v1948 = vpop.f32.mrb[0].mxu0
        %v1949 = vadd.f32 0.0, %v1948
        %v1950 = vpop.f32.mrb[0].mxu0
        %v1951 = vadd.f32 0.0, %v1950
        %1952 = vmatprep.mubr.f32.mxu0 0.0
        %1953 = vmatmul.mubr.f32.gmra.mrb[0].mxu0 %v648
        %v1954 = vpop.f32.mrb[0].mxu0
        %v1955 = vadd.f32 0.0, %v1954
        %v1956 = vpop.f32.mrb[0].mxu0
        %v1957 = vadd.f32 0.0, %v1956
        %1958 = vdwg.mxu0
        %1959 = vmatprep.subr.mxu0 %v420
        %1960 = vmatpush1.msra.mxu0 %v419
        %1961 = vmatprep.subr.mxu0 %v484
        %1962 = vmatpush1.msra.mxu0 %v483
        %1963 = vmatprep.subr.mxu0 %v548
        %1964 = vmatpush1.msra.mxu0 %v547
        %1965 = vmatprep.subr.mxu0 %v612
        %1966 = vmatpush1.msra.mxu0 %v611
        %1967 = vmatprep.subr.mxu0 0.0
        %1968 = vmatpush1.msra.mxu0 0.0
        %1969 = vmatprep.subr.mxu0 0.0
        %1970 = vmatpush1.msra.mxu0 0.0
        %1971 = vmatprep.subr.mxu0 0.0
        %1972 = vmatpush1.msra.mxu0 0.0
        %1973 = vmatprep.subr.mxu0 0.0
        %1974 = vmatpush1.msra.mxu0 0.0
        %1975 = vmatprep.subr.mxu0 0.0
        %1976 = vmatpush1.msra.mxu0 0.0
        %1977 = vmatprep.subr.mxu0 0.0
        %1978 = vmatpush1.msra.mxu0 0.0
        %1979 = vmatprep.subr.mxu0 0.0
        %1980 = vmatpush1.msra.mxu0 0.0
        %1981 = vmatprep.subr.mxu0 0.0
        %1982 = vmatpush1.msra.mxu0 0.0
        %1983 = vmatprep.subr.mxu0 0.0
        %1984 = vmatpush1.msra.mxu0 0.0
        %1985 = vmatprep.subr.mxu0 0.0
        %1986 = vmatpush1.msra.mxu0 0.0
        %1987 = vmatprep.subr.mxu0 0.0
        %1988 = vmatpush1.msra.mxu0 0.0
        %1989 = vmatprep.subr.mxu0 0.0
        %1990 = vmatpush1.msra.mxu0 0.0
        %1991 = vmatprep.subr.mxu0 0.0
        %1992 = vmatpush1.msra.mxu0 0.0
        %1993 = vmatprep.subr.mxu0 0.0
        %1994 = vmatpush1.msra.mxu0 0.0
        %1995 = vmatprep.subr.mxu0 0.0
        %1996 = vmatpush1.msra.mxu0 0.0
        %1997 = vmatprep.subr.mxu0 0.0
        %1998 = vmatpush1.msra.mxu0 0.0
        %1999 = vmatprep.subr.mxu0 0.0
        %2000 = vmatpush1.msra.mxu0 0.0
        %2001 = vmatprep.subr.mxu0 0.0
        %2002 = vmatpush1.msra.mxu0 0.0
        %2003 = vmatprep.subr.mxu0 0.0
        %2004 = vmatpush1.msra.mxu0 0.0
        %2005 = vmatprep.subr.mxu0 0.0
        %2006 = vmatpush1.msra.mxu0 0.0
        %2007 = vmatprep.subr.mxu0 0.0
        %2008 = vmatpush1.msra.mxu0 0.0
        %2009 = vmatprep.subr.mxu0 0.0
        %2010 = vmatpush1.msra.mxu0 0.0
        %2011 = vmatprep.subr.mxu0 0.0
        %2012 = vmatpush1.msra.mxu0 0.0
        %2013 = vmatprep.subr.mxu0 0.0
        %2014 = vmatpush1.msra.mxu0 0.0
        %2015 = vmatprep.subr.mxu0 0.0
        %2016 = vmatpush1.msra.mxu0 0.0
        %2017 = vmatprep.subr.mxu0 0.0
        %2018 = vmatpush1.msra.mxu0 0.0
        %2019 = vmatprep.subr.mxu0 0.0
        %2020 = vmatpush1.msra.mxu0 0.0
        %2021 = vmatprep.subr.mxu0 0.0
        %2022 = vmatpush1.msra.mxu0 0.0
        %2023 = vmatprep.mubr.f32.mxu0 0.0
        %2024 = vmatmul.mubr.f32.gmra.mrb[0].mxu0 %v645
        %v2025 = vpop.f32.mrb[0].mxu0
        %v2026 = vadd.f32 0.0, %v2025
        %v2027 = vpop.f32.mrb[0].mxu0
        %v2028 = vadd.f32 0.0, %v2027
        %2029 = vmatprep.mubr.f32.mxu0 0.0
        %2030 = vmatmul.mubr.f32.gmra.mrb[0].mxu0 %v648
        %v2031 = vpop.f32.mrb[0].mxu0
        %v2032 = vadd.f32 0.0, %v2031
        %v2033 = vpop.f32.mrb[0].mxu0
        %v2034 = vadd.f32 0.0, %v2033
        %2035 = vdwg.mxu0
        %2036 = vmatprep.subr.mxu0 %v422
        %2037 = vmatpush1.msra.mxu0 %v421
        %2038 = vmatprep.subr.mxu0 %v486
        %2039 = vmatpush1.msra.mxu0 %v485
        %2040 = vmatprep.subr.mxu0 %v550
        %2041 = vmatpush1.msra.mxu0 %v549
        %2042 = vmatprep.subr.mxu0 %v614
        %2043 = vmatpush1.msra.mxu0 %v613
        %2044 = vmatprep.subr.mxu0 0.0
        %2045 = vmatpush1.msra.mxu0 0.0
        %2046 = vmatprep.subr.mxu0 0.0
        %2047 = vmatpush1.msra.mxu0 0.0
        %2048 = vmatprep.subr.mxu0 0.0
        %2049 = vmatpush1.msra.mxu0 0.0
        %2050 = vmatprep.subr.mxu0 0.0
        %2051 = vmatpush1.msra.mxu0 0.0
        %2052 = vmatprep.subr.mxu0 0.0
        %2053 = vmatpush1.msra.mxu0 0.0
        %2054 = vmatprep.subr.mxu0 0.0
        %2055 = vmatpush1.msra.mxu0 0.0
        %2056 = vmatprep.subr.mxu0 0.0
        %2057 = vmatpush1.msra.mxu0 0.0
        %2058 = vmatprep.subr.mxu0 0.0
        %2059 = vmatpush1.msra.mxu0 0.0
        %2060 = vmatprep.subr.mxu0 0.0
        %2061 = vmatpush1.msra.mxu0 0.0
        %2062 = vmatprep.subr.mxu0 0.0
        %2063 = vmatpush1.msra.mxu0 0.0
        %2064 = vmatprep.subr.mxu0 0.0
        %2065 = vmatpush1.msra.mxu0 0.0
        %2066 = vmatprep.subr.mxu0 0.0
        %2067 = vmatpush1.msra.mxu0 0.0
        %2068 = vmatprep.subr.mxu0 0.0
        %2069 = vmatpush1.msra.mxu0 0.0
        %2070 = vmatprep.subr.mxu0 0.0
        %2071 = vmatpush1.msra.mxu0 0.0
        %2072 = vmatprep.subr.mxu0 0.0
        %2073 = vmatpush1.msra.mxu0 0.0
        %2074 = vmatprep.subr.mxu0 0.0
        %2075 = vmatpush1.msra.mxu0 0.0
        %2076 = vmatprep.subr.mxu0 0.0
        %2077 = vmatpush1.msra.mxu0 0.0
        %2078 = vmatprep.subr.mxu0 0.0
        %2079 = vmatpush1.msra.mxu0 0.0
        %2080 = vmatprep.subr.mxu0 0.0
        %2081 = vmatpush1.msra.mxu0 0.0
        %2082 = vmatprep.subr.mxu0 0.0
        %2083 = vmatpush1.msra.mxu0 0.0
        %2084 = vmatprep.subr.mxu0 0.0
        %2085 = vmatpush1.msra.mxu0 0.0
        %2086 = vmatprep.subr.mxu0 0.0
        %2087 = vmatpush1.msra.mxu0 0.0
        %2088 = vmatprep.subr.mxu0 0.0
        %2089 = vmatpush1.msra.mxu0 0.0
        %2090 = vmatprep.subr.mxu0 0.0
        %2091 = vmatpush1.msra.mxu0 0.0
        %2092 = vmatprep.subr.mxu0 0.0
        %2093 = vmatpush1.msra.mxu0 0.0
        %2094 = vmatprep.subr.mxu0 0.0
        %2095 = vmatpush1.msra.mxu0 0.0
        %2096 = vmatprep.subr.mxu0 0.0
        %2097 = vmatpush1.msra.mxu0 0.0
        %2098 = vmatprep.subr.mxu0 0.0
        %2099 = vmatpush1.msra.mxu0 0.0
        %2100 = vmatprep.mubr.f32.mxu0 0.0
        %2101 = vmatmul.mubr.f32.gmra.mrb[0].mxu0 %v645
        %v2102 = vpop.f32.mrb[0].mxu0
        %v2103 = vadd.f32 0.0, %v2102
        %v2104 = vpop.f32.mrb[0].mxu0
        %v2105 = vadd.f32 0.0, %v2104
        %2106 = vmatprep.mubr.f32.mxu0 0.0
        %2107 = vmatmul.mubr.f32.gmra.mrb[0].mxu0 %v648
        %v2108 = vpop.f32.mrb[0].mxu0
        %v2109 = vadd.f32 0.0, %v2108
        %v2110 = vpop.f32.mrb[0].mxu0
        %v2111 = vadd.f32 0.0, %v2110
        %2112 = vdwg.mxu0
        %2113 = vmatprep.subr.mxu0 %v424
        %2114 = vmatpush1.msra.mxu0 %v423
        %2115 = vmatprep.subr.mxu0 %v488
        %2116 = vmatpush1.msra.mxu0 %v487
        %2117 = vmatprep.subr.mxu0 %v552
        %2118 = vmatpush1.msra.mxu0 %v551
        %2119 = vmatprep.subr.mxu0 %v616
        %2120 = vmatpush1.msra.mxu0 %v615
        %2121 = vmatprep.subr.mxu0 0.0
        %2122 = vmatpush1.msra.mxu0 0.0
        %2123 = vmatprep.subr.mxu0 0.0
        %2124 = vmatpush1.msra.mxu0 0.0
        %2125 = vmatprep.subr.mxu0 0.0
        %2126 = vmatpush1.msra.mxu0 0.0
        %2127 = vmatprep.subr.mxu0 0.0
        %2128 = vmatpush1.msra.mxu0 0.0
        %2129 = vmatprep.subr.mxu0 0.0
        %2130 = vmatpush1.msra.mxu0 0.0
        %2131 = vmatprep.subr.mxu0 0.0
        %2132 = vmatpush1.msra.mxu0 0.0
        %2133 = vmatprep.subr.mxu0 0.0
        %2134 = vmatpush1.msra.mxu0 0.0
        %2135 = vmatprep.subr.mxu0 0.0
        %2136 = vmatpush1.msra.mxu0 0.0
        %2137 = vmatprep.subr.mxu0 0.0
        %2138 = vmatpush1.msra.mxu0 0.0
        %2139 = vmatprep.subr.mxu0 0.0
        %2140 = vmatpush1.msra.mxu0 0.0
        %2141 = vmatprep.subr.mxu0 0.0
        %2142 = vmatpush1.msra.mxu0 0.0
        %2143 = vmatprep.subr.mxu0 0.0
        %2144 = vmatpush1.msra.mxu0 0.0
        %2145 = vmatprep.subr.mxu0 0.0
        %2146 = vmatpush1.msra.mxu0 0.0
        %2147 = vmatprep.subr.mxu0 0.0
        %2148 = vmatpush1.msra.mxu0 0.0
        %2149 = vmatprep.subr.mxu0 0.0
        %2150 = vmatpush1.msra.mxu0 0.0
        %2151 = vmatprep.subr.mxu0 0.0
        %2152 = vmatpush1.msra.mxu0 0.0
        %2153 = vmatprep.subr.mxu0 0.0
        %2154 = vmatpush1.msra.mxu0 0.0
        %2155 = vmatprep.subr.mxu0 0.0
        %2156 = vmatpush1.msra.mxu0 0.0
        %2157 = vmatprep.subr.mxu0 0.0
        %2158 = vmatpush1.msra.mxu0 0.0
        %2159 = vmatprep.subr.mxu0 0.0
        %2160 = vmatpush1.msra.mxu0 0.0
        %2161 = vmatprep.subr.mxu0 0.0
        %2162 = vmatpush1.msra.mxu0 0.0
        %2163 = vmatprep.subr.mxu0 0.0
        %2164 = vmatpush1.msra.mxu0 0.0
        %2165 = vmatprep.subr.mxu0 0.0
        %2166 = vmatpush1.msra.mxu0 0.0
        %2167 = vmatprep.subr.mxu0 0.0
        %2168 = vmatpush1.msra.mxu0 0.0
        %2169 = vmatprep.subr.mxu0 0.0
        %2170 = vmatpush1.msra.mxu0 0.0
        %2171 = vmatprep.subr.mxu0 0.0
        %2172 = vmatpush1.msra.mxu0 0.0
        %2173 = vmatprep.subr.mxu0 0.0
        %2174 = vmatpush1.msra.mxu0 0.0
        %2175 = vmatprep.subr.mxu0 0.0
        %2176 = vmatpush1.msra.mxu0 0.0
        %2177 = vmatprep.mubr.f32.mxu0 0.0
        %2178 = vmatmul.mubr.f32.gmra.mrb[0].mxu0 %v645
        %v2179 = vpop.f32.mrb[0].mxu0
        %v2180 = vadd.f32 0.0, %v2179
        %v2181 = vpop.f32.mrb[0].mxu0
        %v2182 = vadd.f32 0.0, %v2181
        %2183 = vmatprep.mubr.f32.mxu0 0.0
        %2184 = vmatmul.mubr.f32.gmra.mrb[0].mxu0 %v648
        %v2185 = vpop.f32.mrb[0].mxu0
        %v2186 = vadd.f32 0.0, %v2185
        %v2187 = vpop.f32.mrb[0].mxu0
        %v2188 = vadd.f32 0.0, %v2187
        %2189 = vdwg.mxu0
        %2190 = vmatprep.subr.mxu0 %v426
        %2191 = vmatpush1.msra.mxu0 %v425
        %2192 = vmatprep.subr.mxu0 %v490
        %2193 = vmatpush1.msra.mxu0 %v489
        %2194 = vmatprep.subr.mxu0 %v554
        %2195 = vmatpush1.msra.mxu0 %v553
        %2196 = vmatprep.subr.mxu0 %v618
        %2197 = vmatpush1.msra.mxu0 %v617
        %2198 = vmatprep.subr.mxu0 0.0
        %2199 = vmatpush1.msra.mxu0 0.0
        %2200 = vmatprep.subr.mxu0 0.0
        %2201 = vmatpush1.msra.mxu0 0.0
        %2202 = vmatprep.subr.mxu0 0.0
        %2203 = vmatpush1.msra.mxu0 0.0
        %2204 = vmatprep.subr.mxu0 0.0
        %2205 = vmatpush1.msra.mxu0 0.0
        %2206 = vmatprep.subr.mxu0 0.0
        %2207 = vmatpush1.msra.mxu0 0.0
        %2208 = vmatprep.subr.mxu0 0.0
        %2209 = vmatpush1.msra.mxu0 0.0
        %2210 = vmatprep.subr.mxu0 0.0
        %2211 = vmatpush1.msra.mxu0 0.0
        %2212 = vmatprep.subr.mxu0 0.0
        %2213 = vmatpush1.msra.mxu0 0.0
        %2214 = vmatprep.subr.mxu0 0.0
        %2215 = vmatpush1.msra.mxu0 0.0
        %2216 = vmatprep.subr.mxu0 0.0
        %2217 = vmatpush1.msra.mxu0 0.0
        %2218 = vmatprep.subr.mxu0 0.0
        %2219 = vmatpush1.msra.mxu0 0.0
        %2220 = vmatprep.subr.mxu0 0.0
        %2221 = vmatpush1.msra.mxu0 0.0
        %2222 = vmatprep.subr.mxu0 0.0
        %2223 = vmatpush1.msra.mxu0 0.0
        %2224 = vmatprep.subr.mxu0 0.0
        %2225 = vmatpush1.msra.mxu0 0.0
        %2226 = vmatprep.subr.mxu0 0.0
        %2227 = vmatpush1.msra.mxu0 0.0
        %2228 = vmatprep.subr.mxu0 0.0
        %2229 = vmatpush1.msra.mxu0 0.0
        %2230 = vmatprep.subr.mxu0 0.0
        %2231 = vmatpush1.msra.mxu0 0.0
        %2232 = vmatprep.subr.mxu0 0.0
        %2233 = vmatpush1.msra.mxu0 0.0
        %2234 = vmatprep.subr.mxu0 0.0
        %2235 = vmatpush1.msra.mxu0 0.0
        %2236 = vmatprep.subr.mxu0 0.0
        %2237 = vmatpush1.msra.mxu0 0.0
        %2238 = vmatprep.subr.mxu0 0.0
        %2239 = vmatpush1.msra.mxu0 0.0
        %2240 = vmatprep.subr.mxu0 0.0
        %2241 = vmatpush1.msra.mxu0 0.0
        %2242 = vmatprep.subr.mxu0 0.0
        %2243 = vmatpush1.msra.mxu0 0.0
        %2244 = vmatprep.subr.mxu0 0.0
        %2245 = vmatpush1.msra.mxu0 0.0
        %2246 = vmatprep.subr.mxu0 0.0
        %2247 = vmatpush1.msra.mxu0 0.0
        %2248 = vmatprep.subr.mxu0 0.0
        %2249 = vmatpush1.msra.mxu0 0.0
        %2250 = vmatprep.subr.mxu0 0.0
        %2251 = vmatpush1.msra.mxu0 0.0
        %2252 = vmatprep.subr.mxu0 0.0
        %2253 = vmatpush1.msra.mxu0 0.0
        %2254 = vmatprep.mubr.f32.mxu0 0.0
        %2255 = vmatmul.mubr.f32.gmra.mrb[0].mxu0 %v645
        %v2256 = vpop.f32.mrb[0].mxu0
        %v2257 = vadd.f32 0.0, %v2256
        %v2258 = vpop.f32.mrb[0].mxu0
        %v2259 = vadd.f32 0.0, %v2258
        %2260 = vmatprep.mubr.f32.mxu0 0.0
        %2261 = vmatmul.mubr.f32.gmra.mrb[0].mxu0 %v648
        %v2262 = vpop.f32.mrb[0].mxu0
        %v2263 = vadd.f32 0.0, %v2262
        %v2264 = vpop.f32.mrb[0].mxu0
        %v2265 = vadd.f32 0.0, %v2264
        %2266 = vdwg.mxu0
        %2267 = vmatprep.subr.mxu0 %v428
        %2268 = vmatpush1.msra.mxu0 %v427
        %2269 = vmatprep.subr.mxu0 %v492
        %2270 = vmatpush1.msra.mxu0 %v491
        %2271 = vmatprep.subr.mxu0 %v556
        %2272 = vmatpush1.msra.mxu0 %v555
        %2273 = vmatprep.subr.mxu0 %v620
        %2274 = vmatpush1.msra.mxu0 %v619
        %2275 = vmatprep.subr.mxu0 0.0
        %2276 = vmatpush1.msra.mxu0 0.0
        %2277 = vmatprep.subr.mxu0 0.0
        %2278 = vmatpush1.msra.mxu0 0.0
        %2279 = vmatprep.subr.mxu0 0.0
        %2280 = vmatpush1.msra.mxu0 0.0
        %2281 = vmatprep.subr.mxu0 0.0
        %2282 = vmatpush1.msra.mxu0 0.0
        %2283 = vmatprep.subr.mxu0 0.0
        %2284 = vmatpush1.msra.mxu0 0.0
        %2285 = vmatprep.subr.mxu0 0.0
        %2286 = vmatpush1.msra.mxu0 0.0
        %2287 = vmatprep.subr.mxu0 0.0
        %2288 = vmatpush1.msra.mxu0 0.0
        %2289 = vmatprep.subr.mxu0 0.0
        %2290 = vmatpush1.msra.mxu0 0.0
        %2291 = vmatprep.subr.mxu0 0.0
        %2292 = vmatpush1.msra.mxu0 0.0
        %2293 = vmatprep.subr.mxu0 0.0
        %2294 = vmatpush1.msra.mxu0 0.0
        %2295 = vmatprep.subr.mxu0 0.0
        %2296 = vmatpush1.msra.mxu0 0.0
        %2297 = vmatprep.subr.mxu0 0.0
        %2298 = vmatpush1.msra.mxu0 0.0
        %2299 = vmatprep.subr.mxu0 0.0
        %2300 = vmatpush1.msra.mxu0 0.0
        %2301 = vmatprep.subr.mxu0 0.0
        %2302 = vmatpush1.msra.mxu0 0.0
        %2303 = vmatprep.subr.mxu0 0.0
        %2304 = vmatpush1.msra.mxu0 0.0
        %2305 = vmatprep.subr.mxu0 0.0
        %2306 = vmatpush1.msra.mxu0 0.0
        %2307 = vmatprep.subr.mxu0 0.0
        %2308 = vmatpush1.msra.mxu0 0.0
        %2309 = vmatprep.subr.mxu0 0.0
        %2310 = vmatpush1.msra.mxu0 0.0
        %2311 = vmatprep.subr.mxu0 0.0
        %2312 = vmatpush1.msra.mxu0 0.0
        %2313 = vmatprep.subr.mxu0 0.0
        %2314 = vmatpush1.msra.mxu0 0.0
        %2315 = vmatprep.subr.mxu0 0.0
        %2316 = vmatpush1.msra.mxu0 0.0
        %2317 = vmatprep.subr.mxu0 0.0
        %2318 = vmatpush1.msra.mxu0 0.0
        %2319 = vmatprep.subr.mxu0 0.0
        %2320 = vmatpush1.msra.mxu0 0.0
        %2321 = vmatprep.subr.mxu0 0.0
        %2322 = vmatpush1.msra.mxu0 0.0
        %2323 = vmatprep.subr.mxu0 0.0
        %2324 = vmatpush1.msra.mxu0 0.0
        %2325 = vmatprep.subr.mxu0 0.0
        %2326 = vmatpush1.msra.mxu0 0.0
        %2327 = vmatprep.subr.mxu0 0.0
        %2328 = vmatpush1.msra.mxu0 0.0
        %2329 = vmatprep.subr.mxu0 0.0
        %2330 = vmatpush1.msra.mxu0 0.0
        %2331 = vmatprep.mubr.f32.mxu0 0.0
        %2332 = vmatmul.mubr.f32.gmra.mrb[0].mxu0 %v645
        %v2333 = vpop.f32.mrb[0].mxu0
        %v2334 = vadd.f32 0.0, %v2333
        %v2335 = vpop.f32.mrb[0].mxu0
        %v2336 = vadd.f32 0.0, %v2335
        %2337 = vmatprep.mubr.f32.mxu0 0.0
        %2338 = vmatmul.mubr.f32.gmra.mrb[0].mxu0 %v648
        %v2339 = vpop.f32.mrb[0].mxu0
        %v2340 = vadd.f32 0.0, %v2339
        %v2341 = vpop.f32.mrb[0].mxu0
        %v2342 = vadd.f32 0.0, %v2341
        %2343 = vdwg.mxu0
        %2344 = vmatprep.subr.mxu0 %v430
        %2345 = vmatpush1.msra.mxu0 %v429
        %2346 = vmatprep.subr.mxu0 %v494
        %2347 = vmatpush1.msra.mxu0 %v493
        %2348 = vmatprep.subr.mxu0 %v558
        %2349 = vmatpush1.msra.mxu0 %v557
        %2350 = vmatprep.subr.mxu0 %v622
        %2351 = vmatpush1.msra.mxu0 %v621
        %2352 = vmatprep.subr.mxu0 0.0
        %2353 = vmatpush1.msra.mxu0 0.0
        %2354 = vmatprep.subr.mxu0 0.0
        %2355 = vmatpush1.msra.mxu0 0.0
        %2356 = vmatprep.subr.mxu0 0.0
        %2357 = vmatpush1.msra.mxu0 0.0
        %2358 = vmatprep.subr.mxu0 0.0
        %2359 = vmatpush1.msra.mxu0 0.0
        %2360 = vmatprep.subr.mxu0 0.0
        %2361 = vmatpush1.msra.mxu0 0.0
        %2362 = vmatprep.subr.mxu0 0.0
        %2363 = vmatpush1.msra.mxu0 0.0
        %2364 = vmatprep.subr.mxu0 0.0
        %2365 = vmatpush1.msra.mxu0 0.0
        %2366 = vmatprep.subr.mxu0 0.0
        %2367 = vmatpush1.msra.mxu0 0.0
        %2368 = vmatprep.subr.mxu0 0.0
        %2369 = vmatpush1.msra.mxu0 0.0
        %2370 = vmatprep.subr.mxu0 0.0
        %2371 = vmatpush1.msra.mxu0 0.0
        %2372 = vmatprep.subr.mxu0 0.0
        %2373 = vmatpush1.msra.mxu0 0.0
        %2374 = vmatprep.subr.mxu0 0.0
        %2375 = vmatpush1.msra.mxu0 0.0
        %2376 = vmatprep.subr.mxu0 0.0
        %2377 = vmatpush1.msra.mxu0 0.0
        %2378 = vmatprep.subr.mxu0 0.0
        %2379 = vmatpush1.msra.mxu0 0.0
        %2380 = vmatprep.subr.mxu0 0.0
        %2381 = vmatpush1.msra.mxu0 0.0
        %2382 = vmatprep.subr.mxu0 0.0
        %2383 = vmatpush1.msra.mxu0 0.0
        %2384 = vmatprep.subr.mxu0 0.0
        %2385 = vmatpush1.msra.mxu0 0.0
        %2386 = vmatprep.subr.mxu0 0.0
        %2387 = vmatpush1.msra.mxu0 0.0
        %2388 = vmatprep.subr.mxu0 0.0
        %2389 = vmatpush1.msra.mxu0 0.0
        %2390 = vmatprep.subr.mxu0 0.0
        %2391 = vmatpush1.msra.mxu0 0.0
        %2392 = vmatprep.subr.mxu0 0.0
        %2393 = vmatpush1.msra.mxu0 0.0
        %2394 = vmatprep.subr.mxu0 0.0
        %2395 = vmatpush1.msra.mxu0 0.0
        %2396 = vmatprep.subr.mxu0 0.0
        %2397 = vmatpush1.msra.mxu0 0.0
        %2398 = vmatprep.subr.mxu0 0.0
        %2399 = vmatpush1.msra.mxu0 0.0
        %2400 = vmatprep.subr.mxu0 0.0
        %2401 = vmatpush1.msra.mxu0 0.0
        %2402 = vmatprep.subr.mxu0 0.0
        %2403 = vmatpush1.msra.mxu0 0.0
        %2404 = vmatprep.subr.mxu0 0.0
        %2405 = vmatpush1.msra.mxu0 0.0
        %2406 = vmatprep.subr.mxu0 0.0
        %2407 = vmatpush1.msra.mxu0 0.0
        %2408 = vmatprep.mubr.f32.mxu0 0.0
        %2409 = vmatmul.mubr.f32.gmra.mrb[0].mxu0 %v645
        %v2410 = vpop.f32.mrb[0].mxu0
        %v2411 = vadd.f32 0.0, %v2410
        %v2412 = vpop.f32.mrb[0].mxu0
        %v2413 = vadd.f32 0.0, %v2412
        %2414 = vmatprep.mubr.f32.mxu0 0.0
        %2415 = vmatmul.mubr.f32.gmra.mrb[0].mxu0 %v648
        %v2416 = vpop.f32.mrb[0].mxu0
        %v2417 = vadd.f32 0.0, %v2416
        %v2418 = vpop.f32.mrb[0].mxu0
        %v2419 = vadd.f32 0.0, %v2418
        %2420 = vdwg.mxu0
        %2421 = vmatprep.subr.mxu0 %v432
        %2422 = vmatpush1.msra.mxu0 %v431
        %2423 = vmatprep.subr.mxu0 %v496
        %2424 = vmatpush1.msra.mxu0 %v495
        %2425 = vmatprep.subr.mxu0 %v560
        %2426 = vmatpush1.msra.mxu0 %v559
        %2427 = vmatprep.subr.mxu0 %v624
        %2428 = vmatpush1.msra.mxu0 %v623
        %2429 = vmatprep.subr.mxu0 0.0
        %2430 = vmatpush1.msra.mxu0 0.0
        %2431 = vmatprep.subr.mxu0 0.0
        %2432 = vmatpush1.msra.mxu0 0.0
        %2433 = vmatprep.subr.mxu0 0.0
        %2434 = vmatpush1.msra.mxu0 0.0
        %2435 = vmatprep.subr.mxu0 0.0
        %2436 = vmatpush1.msra.mxu0 0.0
        %2437 = vmatprep.subr.mxu0 0.0
        %2438 = vmatpush1.msra.mxu0 0.0
        %2439 = vmatprep.subr.mxu0 0.0
        %2440 = vmatpush1.msra.mxu0 0.0
        %2441 = vmatprep.subr.mxu0 0.0
        %2442 = vmatpush1.msra.mxu0 0.0
        %2443 = vmatprep.subr.mxu0 0.0
        %2444 = vmatpush1.msra.mxu0 0.0
        %2445 = vmatprep.subr.mxu0 0.0
        %2446 = vmatpush1.msra.mxu0 0.0
        %2447 = vmatprep.subr.mxu0 0.0
        %2448 = vmatpush1.msra.mxu0 0.0
        %2449 = vmatprep.subr.mxu0 0.0
        %2450 = vmatpush1.msra.mxu0 0.0
        %2451 = vmatprep.subr.mxu0 0.0
        %2452 = vmatpush1.msra.mxu0 0.0
        %2453 = vmatprep.subr.mxu0 0.0
        %2454 = vmatpush1.msra.mxu0 0.0
        %2455 = vmatprep.subr.mxu0 0.0
        %2456 = vmatpush1.msra.mxu0 0.0
        %2457 = vmatprep.subr.mxu0 0.0
        %2458 = vmatpush1.msra.mxu0 0.0
        %2459 = vmatprep.subr.mxu0 0.0
        %2460 = vmatpush1.msra.mxu0 0.0
        %2461 = vmatprep.subr.mxu0 0.0
        %2462 = vmatpush1.msra.mxu0 0.0
        %2463 = vmatprep.subr.mxu0 0.0
        %2464 = vmatpush1.msra.mxu0 0.0
        %2465 = vmatprep.subr.mxu0 0.0
        %2466 = vmatpush1.msra.mxu0 0.0
        %2467 = vmatprep.subr.mxu0 0.0
        %2468 = vmatpush1.msra.mxu0 0.0
        %2469 = vmatprep.subr.mxu0 0.0
        %2470 = vmatpush1.msra.mxu0 0.0
        %2471 = vmatprep.subr.mxu0 0.0
        %2472 = vmatpush1.msra.mxu0 0.0
        %2473 = vmatprep.subr.mxu0 0.0
        %2474 = vmatpush1.msra.mxu0 0.0
        %2475 = vmatprep.subr.mxu0 0.0
        %2476 = vmatpush1.msra.mxu0 0.0
        %2477 = vmatprep.subr.mxu0 0.0
        %2478 = vmatpush1.msra.mxu0 0.0
        %2479 = vmatprep.subr.mxu0 0.0
        %2480 = vmatpush1.msra.mxu0 0.0
        %2481 = vmatprep.subr.mxu0 0.0
        %2482 = vmatpush1.msra.mxu0 0.0
        %2483 = vmatprep.subr.mxu0 0.0
        %2484 = vmatpush1.msra.mxu0 0.0
        %2485 = vmatprep.mubr.f32.mxu0 0.0
        %2486 = vmatmul.mubr.f32.gmra.mrb[0].mxu0 %v645
        %v2487 = vpop.f32.mrb[0].mxu0
        %v2488 = vadd.f32 0.0, %v2487
        %v2489 = vpop.f32.mrb[0].mxu0
        %v2490 = vadd.f32 0.0, %v2489
        %2491 = vmatprep.mubr.f32.mxu0 0.0
        %2492 = vmatmul.mubr.f32.gmra.mrb[0].mxu0 %v648
        %v2493 = vpop.f32.mrb[0].mxu0
        %v2494 = vadd.f32 0.0, %v2493
        %v2495 = vpop.f32.mrb[0].mxu0
        %v2496 = vadd.f32 0.0, %v2495
        %2497 = vdwg.mxu0
        %2498 = vmatprep.subr.mxu0 %v434
        %2499 = vmatpush1.msra.mxu0 %v433
        %2500 = vmatprep.subr.mxu0 %v498
        %2501 = vmatpush1.msra.mxu0 %v497
        %2502 = vmatprep.subr.mxu0 %v562
        %2503 = vmatpush1.msra.mxu0 %v561
        %2504 = vmatprep.subr.mxu0 %v626
        %2505 = vmatpush1.msra.mxu0 %v625
        %2506 = vmatprep.subr.mxu0 0.0
        %2507 = vmatpush1.msra.mxu0 0.0
        %2508 = vmatprep.subr.mxu0 0.0
        %2509 = vmatpush1.msra.mxu0 0.0
        %2510 = vmatprep.subr.mxu0 0.0
        %2511 = vmatpush1.msra.mxu0 0.0
        %2512 = vmatprep.subr.mxu0 0.0
        %2513 = vmatpush1.msra.mxu0 0.0
        %2514 = vmatprep.subr.mxu0 0.0
        %2515 = vmatpush1.msra.mxu0 0.0
        %2516 = vmatprep.subr.mxu0 0.0
        %2517 = vmatpush1.msra.mxu0 0.0
        %2518 = vmatprep.subr.mxu0 0.0
        %2519 = vmatpush1.msra.mxu0 0.0
        %2520 = vmatprep.subr.mxu0 0.0
        %2521 = vmatpush1.msra.mxu0 0.0
        %2522 = vmatprep.subr.mxu0 0.0
        %2523 = vmatpush1.msra.mxu0 0.0
        %2524 = vmatprep.subr.mxu0 0.0
        %2525 = vmatpush1.msra.mxu0 0.0
        %2526 = vmatprep.subr.mxu0 0.0
        %2527 = vmatpush1.msra.mxu0 0.0
        %2528 = vmatprep.subr.mxu0 0.0
        %2529 = vmatpush1.msra.mxu0 0.0
        %2530 = vmatprep.subr.mxu0 0.0
        %2531 = vmatpush1.msra.mxu0 0.0
        %2532 = vmatprep.subr.mxu0 0.0
        %2533 = vmatpush1.msra.mxu0 0.0
        %2534 = vmatprep.subr.mxu0 0.0
        %2535 = vmatpush1.msra.mxu0 0.0
        %2536 = vmatprep.subr.mxu0 0.0
        %2537 = vmatpush1.msra.mxu0 0.0
        %2538 = vmatprep.subr.mxu0 0.0
        %2539 = vmatpush1.msra.mxu0 0.0
        %2540 = vmatprep.subr.mxu0 0.0
        %2541 = vmatpush1.msra.mxu0 0.0
        %2542 = vmatprep.subr.mxu0 0.0
        %2543 = vmatpush1.msra.mxu0 0.0
        %2544 = vmatprep.subr.mxu0 0.0
        %2545 = vmatpush1.msra.mxu0 0.0
        %2546 = vmatprep.subr.mxu0 0.0
        %2547 = vmatpush1.msra.mxu0 0.0
        %2548 = vmatprep.subr.mxu0 0.0
        %2549 = vmatpush1.msra.mxu0 0.0
        %2550 = vmatprep.subr.mxu0 0.0
        %2551 = vmatpush1.msra.mxu0 0.0
        %2552 = vmatprep.subr.mxu0 0.0
        %2553 = vmatpush1.msra.mxu0 0.0
        %2554 = vmatprep.subr.mxu0 0.0
        %2555 = vmatpush1.msra.mxu0 0.0
        %2556 = vmatprep.subr.mxu0 0.0
        %2557 = vmatpush1.msra.mxu0 0.0
        %2558 = vmatprep.subr.mxu0 0.0
        %2559 = vmatpush1.msra.mxu0 0.0
        %2560 = vmatprep.subr.mxu0 0.0
        %2561 = vmatpush1.msra.mxu0 0.0
        %2562 = vmatprep.mubr.f32.mxu0 0.0
        %2563 = vmatmul.mubr.f32.gmra.mrb[0].mxu0 %v645
        %v2564 = vpop.f32.mrb[0].mxu0
        %v2565 = vadd.f32 0.0, %v2564
        %v2566 = vpop.f32.mrb[0].mxu0
        %v2567 = vadd.f32 0.0, %v2566
        %2568 = vmatprep.mubr.f32.mxu0 0.0
        %2569 = vmatmul.mubr.f32.gmra.mrb[0].mxu0 %v648
        %v2570 = vpop.f32.mrb[0].mxu0
        %v2571 = vadd.f32 0.0, %v2570
        %v2572 = vpop.f32.mrb[0].mxu0
        %v2573 = vadd.f32 0.0, %v2572
        %2574 = vdwg.mxu0
        %2575 = vmatprep.subr.mxu0 %v436
        %2576 = vmatpush1.msra.mxu0 %v435
        %2577 = vmatprep.subr.mxu0 %v500
        %2578 = vmatpush1.msra.mxu0 %v499
        %2579 = vmatprep.subr.mxu0 %v564
        %2580 = vmatpush1.msra.mxu0 %v563
        %2581 = vmatprep.subr.mxu0 %v628
        %2582 = vmatpush1.msra.mxu0 %v627
        %2583 = vmatprep.subr.mxu0 0.0
        %2584 = vmatpush1.msra.mxu0 0.0
        %2585 = vmatprep.subr.mxu0 0.0
        %2586 = vmatpush1.msra.mxu0 0.0
        %2587 = vmatprep.subr.mxu0 0.0
        %2588 = vmatpush1.msra.mxu0 0.0
        %2589 = vmatprep.subr.mxu0 0.0
        %2590 = vmatpush1.msra.mxu0 0.0
        %2591 = vmatprep.subr.mxu0 0.0
        %2592 = vmatpush1.msra.mxu0 0.0
        %2593 = vmatprep.subr.mxu0 0.0
        %2594 = vmatpush1.msra.mxu0 0.0
        %2595 = vmatprep.subr.mxu0 0.0
        %2596 = vmatpush1.msra.mxu0 0.0
        %2597 = vmatprep.subr.mxu0 0.0
        %2598 = vmatpush1.msra.mxu0 0.0
        %2599 = vmatprep.subr.mxu0 0.0
        %2600 = vmatpush1.msra.mxu0 0.0
        %2601 = vmatprep.subr.mxu0 0.0
        %2602 = vmatpush1.msra.mxu0 0.0
        %2603 = vmatprep.subr.mxu0 0.0
        %2604 = vmatpush1.msra.mxu0 0.0
        %2605 = vmatprep.subr.mxu0 0.0
        %2606 = vmatpush1.msra.mxu0 0.0
        %2607 = vmatprep.subr.mxu0 0.0
        %2608 = vmatpush1.msra.mxu0 0.0
        %2609 = vmatprep.subr.mxu0 0.0
        %2610 = vmatpush1.msra.mxu0 0.0
        %2611 = vmatprep.subr.mxu0 0.0
        %2612 = vmatpush1.msra.mxu0 0.0
        %2613 = vmatprep.subr.mxu0 0.0
        %2614 = vmatpush1.msra.mxu0 0.0
        %2615 = vmatprep.subr.mxu0 0.0
        %2616 = vmatpush1.msra.mxu0 0.0
        %2617 = vmatprep.subr.mxu0 0.0
        %2618 = vmatpush1.msra.mxu0 0.0
        %2619 = vmatprep.subr.mxu0 0.0
        %2620 = vmatpush1.msra.mxu0 0.0
        %2621 = vmatprep.subr.mxu0 0.0
        %2622 = vmatpush1.msra.mxu0 0.0
        %2623 = vmatprep.subr.mxu0 0.0
        %2624 = vmatpush1.msra.mxu0 0.0
        %2625 = vmatprep.subr.mxu0 0.0
        %2626 = vmatpush1.msra.mxu0 0.0
        %2627 = vmatprep.subr.mxu0 0.0
        %2628 = vmatpush1.msra.mxu0 0.0
        %2629 = vmatprep.subr.mxu0 0.0
        %2630 = vmatpush1.msra.mxu0 0.0
        %2631 = vmatprep.subr.mxu0 0.0
        %2632 = vmatpush1.msra.mxu0 0.0
        %2633 = vmatprep.subr.mxu0 0.0
        %2634 = vmatpush1.msra.mxu0 0.0
        %2635 = vmatprep.subr.mxu0 0.0
        %2636 = vmatpush1.msra.mxu0 0.0
        %2637 = vmatprep.subr.mxu0 0.0
        %2638 = vmatpush1.msra.mxu0 0.0
        %2639 = vmatprep.mubr.f32.mxu0 0.0
        %2640 = vmatmul.mubr.f32.gmra.mrb[0].mxu0 %v645
        %v2641 = vpop.f32.mrb[0].mxu0
        %v2642 = vadd.f32 0.0, %v2641
        %v2643 = vpop.f32.mrb[0].mxu0
        %v2644 = vadd.f32 0.0, %v2643
        %2645 = vmatprep.mubr.f32.mxu0 0.0
        %2646 = vmatmul.mubr.f32.gmra.mrb[0].mxu0 %v648
        %v2647 = vpop.f32.mrb[0].mxu0
        %v2648 = vadd.f32 0.0, %v2647
        %v2649 = vpop.f32.mrb[0].mxu0
        %v2650 = vadd.f32 0.0, %v2649
        %2651 = vdwg.mxu0
        %2652 = vmatprep.subr.mxu0 %v438
        %2653 = vmatpush1.msra.mxu0 %v437
        %2654 = vmatprep.subr.mxu0 %v502
        %2655 = vmatpush1.msra.mxu0 %v501
        %2656 = vmatprep.subr.mxu0 %v566
        %2657 = vmatpush1.msra.mxu0 %v565
        %2658 = vmatprep.subr.mxu0 %v630
        %2659 = vmatpush1.msra.mxu0 %v629
        %2660 = vmatprep.subr.mxu0 0.0
        %2661 = vmatpush1.msra.mxu0 0.0
        %2662 = vmatprep.subr.mxu0 0.0
        %2663 = vmatpush1.msra.mxu0 0.0
        %2664 = vmatprep.subr.mxu0 0.0
        %2665 = vmatpush1.msra.mxu0 0.0
        %2666 = vmatprep.subr.mxu0 0.0
        %2667 = vmatpush1.msra.mxu0 0.0
        %2668 = vmatprep.subr.mxu0 0.0
        %2669 = vmatpush1.msra.mxu0 0.0
        %2670 = vmatprep.subr.mxu0 0.0
        %2671 = vmatpush1.msra.mxu0 0.0
        %2672 = vmatprep.subr.mxu0 0.0
        %2673 = vmatpush1.msra.mxu0 0.0
        %2674 = vmatprep.subr.mxu0 0.0
        %2675 = vmatpush1.msra.mxu0 0.0
        %2676 = vmatprep.subr.mxu0 0.0
        %2677 = vmatpush1.msra.mxu0 0.0
        %2678 = vmatprep.subr.mxu0 0.0
        %2679 = vmatpush1.msra.mxu0 0.0
        %2680 = vmatprep.subr.mxu0 0.0
        %2681 = vmatpush1.msra.mxu0 0.0
        %2682 = vmatprep.subr.mxu0 0.0
        %2683 = vmatpush1.msra.mxu0 0.0
        %2684 = vmatprep.subr.mxu0 0.0
        %2685 = vmatpush1.msra.mxu0 0.0
        %2686 = vmatprep.subr.mxu0 0.0
        %2687 = vmatpush1.msra.mxu0 0.0
        %2688 = vmatprep.subr.mxu0 0.0
        %2689 = vmatpush1.msra.mxu0 0.0
        %2690 = vmatprep.subr.mxu0 0.0
        %2691 = vmatpush1.msra.mxu0 0.0
        %2692 = vmatprep.subr.mxu0 0.0
        %2693 = vmatpush1.msra.mxu0 0.0
        %2694 = vmatprep.subr.mxu0 0.0
        %2695 = vmatpush1.msra.mxu0 0.0
        %2696 = vmatprep.subr.mxu0 0.0
        %2697 = vmatpush1.msra.mxu0 0.0
        %2698 = vmatprep.subr.mxu0 0.0
        %2699 = vmatpush1.msra.mxu0 0.0
        %2700 = vmatprep.subr.mxu0 0.0
        %2701 = vmatpush1.msra.mxu0 0.0
        %2702 = vmatprep.subr.mxu0 0.0
        %2703 = vmatpush1.msra.mxu0 0.0
        %2704 = vmatprep.subr.mxu0 0.0
        %2705 = vmatpush1.msra.mxu0 0.0
        %2706 = vmatprep.subr.mxu0 0.0
        %2707 = vmatpush1.msra.mxu0 0.0
        %2708 = vmatprep.subr.mxu0 0.0
        %2709 = vmatpush1.msra.mxu0 0.0
        %2710 = vmatprep.subr.mxu0 0.0
        %2711 = vmatpush1.msra.mxu0 0.0
        %2712 = vmatprep.subr.mxu0 0.0
        %2713 = vmatpush1.msra.mxu0 0.0
        %2714 = vmatprep.subr.mxu0 0.0
        %2715 = vmatpush1.msra.mxu0 0.0
        %2716 = vmatprep.mubr.f32.mxu0 0.0
        %2717 = vmatmul.mubr.f32.gmra.mrb[0].mxu0 %v645
        %v2718 = vpop.f32.mrb[0].mxu0
        %v2719 = vadd.f32 0.0, %v2718
        %v2720 = vpop.f32.mrb[0].mxu0
        %v2721 = vadd.f32 0.0, %v2720
        %2722 = vmatprep.mubr.f32.mxu0 0.0
        %2723 = vmatmul.mubr.f32.gmra.mrb[0].mxu0 %v648
        %v2724 = vpop.f32.mrb[0].mxu0
        %v2725 = vadd.f32 0.0, %v2724
        %v2726 = vpop.f32.mrb[0].mxu0
        %v2727 = vadd.f32 0.0, %v2726
        %2728 = vdwg.mxu0
        %2729 = vmatprep.subr.mxu0 %v440
        %2730 = vmatpush1.msra.mxu0 %v439
        %2731 = vmatprep.subr.mxu0 %v504
        %2732 = vmatpush1.msra.mxu0 %v503
        %2733 = vmatprep.subr.mxu0 %v568
        %2734 = vmatpush1.msra.mxu0 %v567
        %2735 = vmatprep.subr.mxu0 %v632
        %2736 = vmatpush1.msra.mxu0 %v631
        %2737 = vmatprep.subr.mxu0 0.0
        %2738 = vmatpush1.msra.mxu0 0.0
        %2739 = vmatprep.subr.mxu0 0.0
        %2740 = vmatpush1.msra.mxu0 0.0
        %2741 = vmatprep.subr.mxu0 0.0
        %2742 = vmatpush1.msra.mxu0 0.0
        %2743 = vmatprep.subr.mxu0 0.0
        %2744 = vmatpush1.msra.mxu0 0.0
        %2745 = vmatprep.subr.mxu0 0.0
        %2746 = vmatpush1.msra.mxu0 0.0
        %2747 = vmatprep.subr.mxu0 0.0
        %2748 = vmatpush1.msra.mxu0 0.0
        %2749 = vmatprep.subr.mxu0 0.0
        %2750 = vmatpush1.msra.mxu0 0.0
        %2751 = vmatprep.subr.mxu0 0.0
        %2752 = vmatpush1.msra.mxu0 0.0
        %2753 = vmatprep.subr.mxu0 0.0
        %2754 = vmatpush1.msra.mxu0 0.0
        %2755 = vmatprep.subr.mxu0 0.0
        %2756 = vmatpush1.msra.mxu0 0.0
        %2757 = vmatprep.subr.mxu0 0.0
        %2758 = vmatpush1.msra.mxu0 0.0
        %2759 = vmatprep.subr.mxu0 0.0
        %2760 = vmatpush1.msra.mxu0 0.0
        %2761 = vmatprep.subr.mxu0 0.0
        %2762 = vmatpush1.msra.mxu0 0.0
        %2763 = vmatprep.subr.mxu0 0.0
        %2764 = vmatpush1.msra.mxu0 0.0
        %2765 = vmatprep.subr.mxu0 0.0
        %2766 = vmatpush1.msra.mxu0 0.0
        %2767 = vmatprep.subr.mxu0 0.0
        %2768 = vmatpush1.msra.mxu0 0.0
        %2769 = vmatprep.subr.mxu0 0.0
        %2770 = vmatpush1.msra.mxu0 0.0
        %2771 = vmatprep.subr.mxu0 0.0
        %2772 = vmatpush1.msra.mxu0 0.0
        %2773 = vmatprep.subr.mxu0 0.0
        %2774 = vmatpush1.msra.mxu0 0.0
        %2775 = vmatprep.subr.mxu0 0.0
        %2776 = vmatpush1.msra.mxu0 0.0
        %2777 = vmatprep.subr.mxu0 0.0
        %2778 = vmatpush1.msra.mxu0 0.0
        %2779 = vmatprep.subr.mxu0 0.0
        %2780 = vmatpush1.msra.mxu0 0.0
        %2781 = vmatprep.subr.mxu0 0.0
        %2782 = vmatpush1.msra.mxu0 0.0
        %2783 = vmatprep.subr.mxu0 0.0
        %2784 = vmatpush1.msra.mxu0 0.0
        %2785 = vmatprep.subr.mxu0 0.0
        %2786 = vmatpush1.msra.mxu0 0.0
        %2787 = vmatprep.subr.mxu0 0.0
        %2788 = vmatpush1.msra.mxu0 0.0
        %2789 = vmatprep.subr.mxu0 0.0
        %2790 = vmatpush1.msra.mxu0 0.0
        %2791 = vmatprep.subr.mxu0 0.0
        %2792 = vmatpush1.msra.mxu0 0.0
        %2793 = vmatprep.mubr.f32.mxu0 0.0
        %2794 = vmatmul.mubr.f32.gmra.mrb[0].mxu0 %v645
        %v2795 = vpop.f32.mrb[0].mxu0
        %v2796 = vadd.f32 0.0, %v2795
        %v2797 = vpop.f32.mrb[0].mxu0
        %v2798 = vadd.f32 0.0, %v2797
        %2799 = vmatprep.mubr.f32.mxu0 0.0
        %2800 = vmatmul.mubr.f32.gmra.mrb[0].mxu0 %v648
        %v2801 = vpop.f32.mrb[0].mxu0
        %v2802 = vadd.f32 0.0, %v2801
        %v2803 = vpop.f32.mrb[0].mxu0
        %v2804 = vadd.f32 0.0, %v2803
        %2805 = vdwg.mxu0
        %2806 = vmatprep.subr.mxu0 %v442
        %2807 = vmatpush1.msra.mxu0 %v441
        %2808 = vmatprep.subr.mxu0 %v506
        %2809 = vmatpush1.msra.mxu0 %v505
        %2810 = vmatprep.subr.mxu0 %v570
        %2811 = vmatpush1.msra.mxu0 %v569
        %2812 = vmatprep.subr.mxu0 %v634
        %2813 = vmatpush1.msra.mxu0 %v633
        %2814 = vmatprep.subr.mxu0 0.0
        %2815 = vmatpush1.msra.mxu0 0.0
        %2816 = vmatprep.subr.mxu0 0.0
        %2817 = vmatpush1.msra.mxu0 0.0
        %2818 = vmatprep.subr.mxu0 0.0
        %2819 = vmatpush1.msra.mxu0 0.0
        %2820 = vmatprep.subr.mxu0 0.0
        %2821 = vmatpush1.msra.mxu0 0.0
        %2822 = vmatprep.subr.mxu0 0.0
        %2823 = vmatpush1.msra.mxu0 0.0
        %2824 = vmatprep.subr.mxu0 0.0
        %2825 = vmatpush1.msra.mxu0 0.0
        %2826 = vmatprep.subr.mxu0 0.0
        %2827 = vmatpush1.msra.mxu0 0.0
        %2828 = vmatprep.subr.mxu0 0.0
        %2829 = vmatpush1.msra.mxu0 0.0
        %2830 = vmatprep.subr.mxu0 0.0
        %2831 = vmatpush1.msra.mxu0 0.0
        %2832 = vmatprep.subr.mxu0 0.0
        %2833 = vmatpush1.msra.mxu0 0.0
        %2834 = vmatprep.subr.mxu0 0.0
        %2835 = vmatpush1.msra.mxu0 0.0
        %2836 = vmatprep.subr.mxu0 0.0
        %2837 = vmatpush1.msra.mxu0 0.0
        %2838 = vmatprep.subr.mxu0 0.0
        %2839 = vmatpush1.msra.mxu0 0.0
        %2840 = vmatprep.subr.mxu0 0.0
        %2841 = vmatpush1.msra.mxu0 0.0
        %2842 = vmatprep.subr.mxu0 0.0
        %2843 = vmatpush1.msra.mxu0 0.0
        %2844 = vmatprep.subr.mxu0 0.0
        %2845 = vmatpush1.msra.mxu0 0.0
        %2846 = vmatprep.subr.mxu0 0.0
        %2847 = vmatpush1.msra.mxu0 0.0
        %2848 = vmatprep.subr.mxu0 0.0
        %2849 = vmatpush1.msra.mxu0 0.0
        %2850 = vmatprep.subr.mxu0 0.0
        %2851 = vmatpush1.msra.mxu0 0.0
        %2852 = vmatprep.subr.mxu0 0.0
        %2853 = vmatpush1.msra.mxu0 0.0
        %2854 = vmatprep.subr.mxu0 0.0
        %2855 = vmatpush1.msra.mxu0 0.0
        %2856 = vmatprep.subr.mxu0 0.0
        %2857 = vmatpush1.msra.mxu0 0.0
        %2858 = vmatprep.subr.mxu0 0.0
        %2859 = vmatpush1.msra.mxu0 0.0
        %2860 = vmatprep.subr.mxu0 0.0
        %2861 = vmatpush1.msra.mxu0 0.0
        %2862 = vmatprep.subr.mxu0 0.0
        %2863 = vmatpush1.msra.mxu0 0.0
        %2864 = vmatprep.subr.mxu0 0.0
        %2865 = vmatpush1.msra.mxu0 0.0
        %2866 = vmatprep.subr.mxu0 0.0
        %2867 = vmatpush1.msra.mxu0 0.0
        %2868 = vmatprep.subr.mxu0 0.0
        %2869 = vmatpush1.msra.mxu0 0.0
        %2870 = vmatprep.mubr.f32.mxu0 0.0
        %2871 = vmatmul.mubr.f32.gmra.mrb[0].mxu0 %v645
        %v2872 = vpop.f32.mrb[0].mxu0
        %v2873 = vadd.f32 0.0, %v2872
        %v2874 = vpop.f32.mrb[0].mxu0
        %v2875 = vadd.f32 0.0, %v2874
        %2876 = vmatprep.mubr.f32.mxu0 0.0
        %2877 = vmatmul.mubr.f32.gmra.mrb[0].mxu0 %v648
        %v2878 = vpop.f32.mrb[0].mxu0
        %v2879 = vadd.f32 0.0, %v2878
        %v2880 = vpop.f32.mrb[0].mxu0
        %v2881 = vadd.f32 0.0, %v2880
        %2882 = vdwg.mxu0
        %2883 = vmatprep.subr.mxu0 %v444
        %2884 = vmatpush1.msra.mxu0 %v443
        %2885 = vmatprep.subr.mxu0 %v508
        %2886 = vmatpush1.msra.mxu0 %v507
        %2887 = vmatprep.subr.mxu0 %v572
        %2888 = vmatpush1.msra.mxu0 %v571
        %2889 = vmatprep.subr.mxu0 %v636
        %2890 = vmatpush1.msra.mxu0 %v635
        %2891 = vmatprep.subr.mxu0 0.0
        %2892 = vmatpush1.msra.mxu0 0.0
        %2893 = vmatprep.subr.mxu0 0.0
        %2894 = vmatpush1.msra.mxu0 0.0
        %2895 = vmatprep.subr.mxu0 0.0
        %2896 = vmatpush1.msra.mxu0 0.0
        %2897 = vmatprep.subr.mxu0 0.0
        %2898 = vmatpush1.msra.mxu0 0.0
        %2899 = vmatprep.subr.mxu0 0.0
        %2900 = vmatpush1.msra.mxu0 0.0
        %2901 = vmatprep.subr.mxu0 0.0
        %2902 = vmatpush1.msra.mxu0 0.0
        %2903 = vmatprep.subr.mxu0 0.0
        %2904 = vmatpush1.msra.mxu0 0.0
        %2905 = vmatprep.subr.mxu0 0.0
        %2906 = vmatpush1.msra.mxu0 0.0
        %2907 = vmatprep.subr.mxu0 0.0
        %2908 = vmatpush1.msra.mxu0 0.0
        %2909 = vmatprep.subr.mxu0 0.0
        %2910 = vmatpush1.msra.mxu0 0.0
        %2911 = vmatprep.subr.mxu0 0.0
        %2912 = vmatpush1.msra.mxu0 0.0
        %2913 = vmatprep.subr.mxu0 0.0
        %2914 = vmatpush1.msra.mxu0 0.0
        %2915 = vmatprep.subr.mxu0 0.0
        %2916 = vmatpush1.msra.mxu0 0.0
        %2917 = vmatprep.subr.mxu0 0.0
        %2918 = vmatpush1.msra.mxu0 0.0
        %2919 = vmatprep.subr.mxu0 0.0
        %2920 = vmatpush1.msra.mxu0 0.0
        %2921 = vmatprep.subr.mxu0 0.0
        %2922 = vmatpush1.msra.mxu0 0.0
        %2923 = vmatprep.subr.mxu0 0.0
        %2924 = vmatpush1.msra.mxu0 0.0
        %2925 = vmatprep.subr.mxu0 0.0
        %2926 = vmatpush1.msra.mxu0 0.0
        %2927 = vmatprep.subr.mxu0 0.0
        %2928 = vmatpush1.msra.mxu0 0.0
        %2929 = vmatprep.subr.mxu0 0.0
        %2930 = vmatpush1.msra.mxu0 0.0
        %2931 = vmatprep.subr.mxu0 0.0
        %2932 = vmatpush1.msra.mxu0 0.0
        %2933 = vmatprep.subr.mxu0 0.0
        %2934 = vmatpush1.msra.mxu0 0.0
        %2935 = vmatprep.subr.mxu0 0.0
        %2936 = vmatpush1.msra.mxu0 0.0
        %2937 = vmatprep.subr.mxu0 0.0
        %2938 = vmatpush1.msra.mxu0 0.0
        %2939 = vmatprep.subr.mxu0 0.0
        %2940 = vmatpush1.msra.mxu0 0.0
        %2941 = vmatprep.subr.mxu0 0.0
        %2942 = vmatpush1.msra.mxu0 0.0
        %2943 = vmatprep.subr.mxu0 0.0
        %2944 = vmatpush1.msra.mxu0 0.0
        %2945 = vmatprep.subr.mxu0 0.0
        %2946 = vmatpush1.msra.mxu0 0.0
        %2947 = vmatprep.mubr.f32.mxu0 0.0
        %2948 = vmatmul.mubr.f32.gmra.mrb[0].mxu0 %v645
        %v2949 = vpop.f32.mrb[0].mxu0
        %v2950 = vadd.f32 0.0, %v2949
        %v2951 = vpop.f32.mrb[0].mxu0
        %v2952 = vadd.f32 0.0, %v2951
        %2953 = vmatprep.mubr.f32.mxu0 0.0
        %2954 = vmatmul.mubr.f32.gmra.mrb[0].mxu0 %v648
        %v2955 = vpop.f32.mrb[0].mxu0
        %v2956 = vadd.f32 0.0, %v2955
        %v2957 = vpop.f32.mrb[0].mxu0
        %v2958 = vadd.f32 0.0, %v2957
        %2959 = vdwg.mxu0
        %2960 = vmatprep.subr.mxu0 %v446
        %2961 = vmatpush1.msra.mxu0 %v445
        %2962 = vmatprep.subr.mxu0 %v510
        %2963 = vmatpush1.msra.mxu0 %v509
        %2964 = vmatprep.subr.mxu0 %v574
        %2965 = vmatpush1.msra.mxu0 %v573
        %2966 = vmatprep.subr.mxu0 %v638
        %2967 = vmatpush1.msra.mxu0 %v637
        %2968 = vmatprep.subr.mxu0 0.0
        %2969 = vmatpush1.msra.mxu0 0.0
        %2970 = vmatprep.subr.mxu0 0.0
        %2971 = vmatpush1.msra.mxu0 0.0
        %2972 = vmatprep.subr.mxu0 0.0
        %2973 = vmatpush1.msra.mxu0 0.0
        %2974 = vmatprep.subr.mxu0 0.0
        %2975 = vmatpush1.msra.mxu0 0.0
        %2976 = vmatprep.subr.mxu0 0.0
        %2977 = vmatpush1.msra.mxu0 0.0
        %2978 = vmatprep.subr.mxu0 0.0
        %2979 = vmatpush1.msra.mxu0 0.0
        %2980 = vmatprep.subr.mxu0 0.0
        %2981 = vmatpush1.msra.mxu0 0.0
        %2982 = vmatprep.subr.mxu0 0.0
        %2983 = vmatpush1.msra.mxu0 0.0
        %2984 = vmatprep.subr.mxu0 0.0
        %2985 = vmatpush1.msra.mxu0 0.0
        %2986 = vmatprep.subr.mxu0 0.0
        %2987 = vmatpush1.msra.mxu0 0.0
        %2988 = vmatprep.subr.mxu0 0.0
        %2989 = vmatpush1.msra.mxu0 0.0
        %2990 = vmatprep.subr.mxu0 0.0
        %2991 = vmatpush1.msra.mxu0 0.0
        %2992 = vmatprep.subr.mxu0 0.0
        %2993 = vmatpush1.msra.mxu0 0.0
        %2994 = vmatprep.subr.mxu0 0.0
        %2995 = vmatpush1.msra.mxu0 0.0
        %2996 = vmatprep.subr.mxu0 0.0
        %2997 = vmatpush1.msra.mxu0 0.0
        %2998 = vmatprep.subr.mxu0 0.0
        %2999 = vmatpush1.msra.mxu0 0.0
        %3000 = vmatprep.subr.mxu0 0.0
        %3001 = vmatpush1.msra.mxu0 0.0
        %3002 = vmatprep.subr.mxu0 0.0
        %3003 = vmatpush1.msra.mxu0 0.0
        %3004 = vmatprep.subr.mxu0 0.0
        %3005 = vmatpush1.msra.mxu0 0.0
        %3006 = vmatprep.subr.mxu0 0.0
        %3007 = vmatpush1.msra.mxu0 0.0
        %3008 = vmatprep.subr.mxu0 0.0
        %3009 = vmatpush1.msra.mxu0 0.0
        %3010 = vmatprep.subr.mxu0 0.0
        %3011 = vmatpush1.msra.mxu0 0.0
        %3012 = vmatprep.subr.mxu0 0.0
        %3013 = vmatpush1.msra.mxu0 0.0
        %3014 = vmatprep.subr.mxu0 0.0
        %3015 = vmatpush1.msra.mxu0 0.0
        %3016 = vmatprep.subr.mxu0 0.0
        %3017 = vmatpush1.msra.mxu0 0.0
        %3018 = vmatprep.subr.mxu0 0.0
        %3019 = vmatpush1.msra.mxu0 0.0
        %3020 = vmatprep.subr.mxu0 0.0
        %3021 = vmatpush1.msra.mxu0 0.0
        %3022 = vmatprep.subr.mxu0 0.0
        %3023 = vmatpush1.msra.mxu0 0.0
        %3024 = vmatprep.mubr.f32.mxu0 0.0
        %3025 = vmatmul.mubr.f32.gmra.mrb[0].mxu0 %v645
        %v3026 = vpop.f32.mrb[0].mxu0
        %v3027 = vadd.f32 0.0, %v3026
        %v3028 = vpop.f32.mrb[0].mxu0
        %v3029 = vadd.f32 0.0, %v3028
        %3030 = vmatprep.mubr.f32.mxu0 0.0
        %3031 = vmatmul.mubr.f32.gmra.mrb[0].mxu0 %v648
        %v3032 = vpop.f32.mrb[0].mxu0
        %v3033 = vadd.f32 0.0, %v3032
        %v3034 = vpop.f32.mrb[0].mxu0
        %v3035 = vadd.f32 0.0, %v3034
        %3036 = vdwg.mxu0
        %3037 = vmatprep.subr.mxu0 %v448
        %3038 = vmatpush1.msra.mxu0 %v447
        %3039 = vmatprep.subr.mxu0 %v512
        %3040 = vmatpush1.msra.mxu0 %v511
        %3041 = vmatprep.subr.mxu0 %v576
        %3042 = vmatpush1.msra.mxu0 %v575
        %3043 = vmatprep.subr.mxu0 %v640
        %3044 = vmatpush1.msra.mxu0 %v639
        %3045 = vmatprep.subr.mxu0 0.0
        %3046 = vmatpush1.msra.mxu0 0.0
        %3047 = vmatprep.subr.mxu0 0.0
        %3048 = vmatpush1.msra.mxu0 0.0
        %3049 = vmatprep.subr.mxu0 0.0
        %3050 = vmatpush1.msra.mxu0 0.0
        %3051 = vmatprep.subr.mxu0 0.0
        %3052 = vmatpush1.msra.mxu0 0.0
        %3053 = vmatprep.subr.mxu0 0.0
        %3054 = vmatpush1.msra.mxu0 0.0
        %3055 = vmatprep.subr.mxu0 0.0
        %3056 = vmatpush1.msra.mxu0 0.0
        %3057 = vmatprep.subr.mxu0 0.0
        %3058 = vmatpush1.msra.mxu0 0.0
        %3059 = vmatprep.subr.mxu0 0.0
        %3060 = vmatpush1.msra.mxu0 0.0
        %3061 = vmatprep.subr.mxu0 0.0
        %3062 = vmatpush1.msra.mxu0 0.0
        %3063 = vmatprep.subr.mxu0 0.0
        %3064 = vmatpush1.msra.mxu0 0.0
        %3065 = vmatprep.subr.mxu0 0.0
        %3066 = vmatpush1.msra.mxu0 0.0
        %3067 = vmatprep.subr.mxu0 0.0
        %3068 = vmatpush1.msra.mxu0 0.0
        %3069 = vmatprep.subr.mxu0 0.0
        %3070 = vmatpush1.msra.mxu0 0.0
        %3071 = vmatprep.subr.mxu0 0.0
        %3072 = vmatpush1.msra.mxu0 0.0
        %3073 = vmatprep.subr.mxu0 0.0
        %3074 = vmatpush1.msra.mxu0 0.0
        %3075 = vmatprep.subr.mxu0 0.0
        %3076 = vmatpush1.msra.mxu0 0.0
        %3077 = vmatprep.subr.mxu0 0.0
        %3078 = vmatpush1.msra.mxu0 0.0
        %3079 = vmatprep.subr.mxu0 0.0
        %3080 = vmatpush1.msra.mxu0 0.0
        %3081 = vmatprep.subr.mxu0 0.0
        %3082 = vmatpush1.msra.mxu0 0.0
        %3083 = vmatprep.subr.mxu0 0.0
        %3084 = vmatpush1.msra.mxu0 0.0
        %3085 = vmatprep.subr.mxu0 0.0
        %3086 = vmatpush1.msra.mxu0 0.0
        %3087 = vmatprep.subr.mxu0 0.0
        %3088 = vmatpush1.msra.mxu0 0.0
        %3089 = vmatprep.subr.mxu0 0.0
        %3090 = vmatpush1.msra.mxu0 0.0
        %3091 = vmatprep.subr.mxu0 0.0
        %3092 = vmatpush1.msra.mxu0 0.0
        %3093 = vmatprep.subr.mxu0 0.0
        %3094 = vmatpush1.msra.mxu0 0.0
        %3095 = vmatprep.subr.mxu0 0.0
        %3096 = vmatpush1.msra.mxu0 0.0
        %3097 = vmatprep.subr.mxu0 0.0
        %3098 = vmatpush1.msra.mxu0 0.0
        %3099 = vmatprep.subr.mxu0 0.0
        %3100 = vmatpush1.msra.mxu0 0.0
        %3101 = vmatprep.mubr.f32.mxu0 0.0
        %3102 = vmatmul.mubr.f32.gmra.mrb[0].mxu0 %v645
        %v3103 = vpop.f32.mrb[0].mxu0
        %v3104 = vadd.f32 0.0, %v3103
        %v3105 = vpop.f32.mrb[0].mxu0
        %v3106 = vadd.f32 0.0, %v3105
        %3107 = vmatprep.mubr.f32.mxu0 0.0
        %3108 = vmatmul.mubr.f32.gmra.mrb[0].mxu0 %v648
        %v3109 = vpop.f32.mrb[0].mxu0
        %v3110 = vadd.f32 0.0, %v3109
        %v3111 = vpop.f32.mrb[0].mxu0
        %v3112 = vadd.f32 0.0, %v3111
        %3113 = vdwg.mxu0
        %v3114 = vmax.f32 %v717, %v1333
        %v3115 = vmax.f32 %v719, %v1335
        %v3116 = vmax.f32 %v794, %v1410
        %v3117 = vmax.f32 %v796, %v1412
        %v3118 = vmax.f32 %v871, %v1487
        %v3119 = vmax.f32 %v873, %v1489
        %v3120 = vmax.f32 %v948, %v1564
        %v3121 = vmax.f32 %v950, %v1566
        %v3122 = vmax.f32 %v1025, %v1641
        %v3123 = vmax.f32 %v1027, %v1643
        %v3124 = vmax.f32 %v1102, %v1718
        %v3125 = vmax.f32 %v1104, %v1720
        %v3126 = vmax.f32 %v1179, %v1795
        %v3127 = vmax.f32 %v1181, %v1797
        %v3128 = vmax.f32 %v1256, %v1872
        %v3129 = vmax.f32 %v1258, %v1874
        %v3130 = vmax.f32 %v723, %v1339
        %v3131 = vmax.f32 %v725, %v1341
        %v3132 = vmax.f32 %v800, %v1416
        %v3133 = vmax.f32 %v802, %v1418
        %v3134 = vmax.f32 %v877, %v1493
        %v3135 = vmax.f32 %v879, %v1495
        %v3136 = vmax.f32 %v954, %v1570
        %v3137 = vmax.f32 %v956, %v1572
        %v3138 = vmax.f32 %v1031, %v1647
        %v3139 = vmax.f32 %v1033, %v1649
        %v3140 = vmax.f32 %v1108, %v1724
        %v3141 = vmax.f32 %v1110, %v1726
        %v3142 = vmax.f32 %v1185, %v1801
        %v3143 = vmax.f32 %v1187, %v1803
        %v3144 = vmax.f32 %v1262, %v1878
        %v3145 = vmax.f32 %v1264, %v1880
        %v3146 = vmax.f32 %v1949, %v2565
        %v3147 = vmax.f32 %v1951, %v2567
        %v3148 = vmax.f32 %v2026, %v2642
        %v3149 = vmax.f32 %v2028, %v2644
        %v3150 = vmax.f32 %v2103, %v2719
        %v3151 = vmax.f32 %v2105, %v2721
        %v3152 = vmax.f32 %v2180, %v2796
        %v3153 = vmax.f32 %v2182, %v2798
        %v3154 = vmax.f32 %v2257, %v2873
        %v3155 = vmax.f32 %v2259, %v2875
        %v3156 = vmax.f32 %v2334, %v2950
        %v3157 = vmax.f32 %v2336, %v2952
        %v3158 = vmax.f32 %v2411, %v3027
        %v3159 = vmax.f32 %v2413, %v3029
        %v3160 = vmax.f32 %v2488, %v3104
        %v3161 = vmax.f32 %v2490, %v3106
        %v3162 = vmax.f32 %v1955, %v2571
        %v3163 = vmax.f32 %v1957, %v2573
        %v3164 = vmax.f32 %v2032, %v2648
        %v3165 = vmax.f32 %v2034, %v2650
        %v3166 = vmax.f32 %v2109, %v2725
        %v3167 = vmax.f32 %v2111, %v2727
        %v3168 = vmax.f32 %v2186, %v2802
        %v3169 = vmax.f32 %v2188, %v2804
        %v3170 = vmax.f32 %v2263, %v2879
        %v3171 = vmax.f32 %v2265, %v2881
        %v3172 = vmax.f32 %v2340, %v2956
        %v3173 = vmax.f32 %v2342, %v2958
        %v3174 = vmax.f32 %v2417, %v3033
        %v3175 = vmax.f32 %v2419, %v3035
        %v3176 = vmax.f32 %v2494, %v3110
        %v3177 = vmax.f32 %v2496, %v3112
        %v3178 = vmax.f32 %v3114, %v3146
        %v3179 = vmax.f32 %v3115, %v3147
        %v3180 = vmax.f32 %v3116, %v3148
        %v3181 = vmax.f32 %v3117, %v3149
        %v3182 = vmax.f32 %v3118, %v3150
        %v3183 = vmax.f32 %v3119, %v3151
        %v3184 = vmax.f32 %v3120, %v3152
        %v3185 = vmax.f32 %v3121, %v3153
        %v3186 = vmax.f32 %v3122, %v3154
        %v3187 = vmax.f32 %v3123, %v3155
        %v3188 = vmax.f32 %v3124, %v3156
        %v3189 = vmax.f32 %v3125, %v3157
        %v3190 = vmax.f32 %v3126, %v3158
        %v3191 = vmax.f32 %v3127, %v3159
        %v3192 = vmax.f32 %v3128, %v3160
        %v3193 = vmax.f32 %v3129, %v3161
        %v3194 = vmax.f32 %v3130, %v3162
        %v3195 = vmax.f32 %v3131, %v3163
        %v3196 = vmax.f32 %v3132, %v3164
        %v3197 = vmax.f32 %v3133, %v3165
        %v3198 = vmax.f32 %v3134, %v3166
        %v3199 = vmax.f32 %v3135, %v3167
        %v3200 = vmax.f32 %v3136, %v3168
        %v3201 = vmax.f32 %v3137, %v3169
        %v3202 = vmax.f32 %v3138, %v3170
        %v3203 = vmax.f32 %v3139, %v3171
        %v3204 = vmax.f32 %v3140, %v3172
        %v3205 = vmax.f32 %v3141, %v3173
        %v3206 = vmax.f32 %v3142, %v3174
        %v3207 = vmax.f32 %v3143, %v3175
        %v3208 = vmax.f32 %v3144, %v3176
        %v3209 = vmax.f32 %v3145, %v3177
        %v3210 = vld [vmem:[%s2] sm:$0xff]
        %v3211 = vld [vmem:[%s2 + $0x8] sm:$0x7f]
        %3213 = vset.pattern.permute.xlu0 0
        %3214 = vperm.xlu0 %3213, %v3210
        %v3215 = vpop.permute.xlu0 %3214
        %3218 = vset.pattern.permute.xlu0 0
        %3219 = vperm.xlu0 %3218, %v3211
        %v3220 = vpop.permute.xlu0 %3219
        %v3222 = vadd.f32 %v3178, %v3215
        %v3223 = vadd.f32 %v3179, %v3215
        %v3224 = vadd.f32 %v3180, %v3215
        %v3225 = vadd.f32 %v3181, %v3215
        %v3226 = vadd.f32 %v3182, %v3215
        %v3227 = vadd.f32 %v3183, %v3215
        %v3228 = vadd.f32 %v3184, %v3215
        %v3229 = vadd.f32 %v3185, %v3215
        %v3230 = vadd.f32 %v3186, %v3215
        %v3231 = vadd.f32 %v3187, %v3215
        %v3232 = vadd.f32 %v3188, %v3215
        %v3233 = vadd.f32 %v3189, %v3215
        %v3234 = vadd.f32 %v3190, %v3215
        %v3235 = vadd.f32 %v3191, %v3215
        %v3236 = vadd.f32 %v3192, %v3215
        %v3237 = vadd.f32 %v3193, %v3215
        %v3238 = vadd.f32 %v3194, %v3220
        %v3239 = vadd.f32 %v3195, %v3220
        %v3240 = vadd.f32 %v3196, %v3220
        %v3241 = vadd.f32 %v3197, %v3220
        %v3242 = vadd.f32 %v3198, %v3220
        %v3243 = vadd.f32 %v3199, %v3220
        %v3244 = vadd.f32 %v3200, %v3220
        %v3245 = vadd.f32 %v3201, %v3220
        %v3246 = vadd.f32 %v3202, %v3220
        %v3247 = vadd.f32 %v3203, %v3220
        %v3248 = vadd.f32 %v3204, %v3220
        %v3249 = vadd.f32 %v3205, %v3220
        %v3250 = vadd.f32 %v3206, %v3220
        %v3251 = vadd.f32 %v3207, %v3220
        %v3252 = vadd.f32 %v3208, %v3220
        %v3253 = vadd.f32 %v3209, %v3220
        %v3254 = vmax.f32 %v3222, 0.0
        %v3255 = vmax.f32 %v3223, 0.0
        %v3256 = vmax.f32 %v3224, 0.0
        %v3257 = vmax.f32 %v3225, 0.0
        %v3258 = vmax.f32 %v3226, 0.0
        %v3259 = vmax.f32 %v3227, 0.0
        %v3260 = vmax.f32 %v3228, 0.0
        %v3261 = vmax.f32 %v3229, 0.0
        %v3262 = vmax.f32 %v3230, 0.0
        %v3263 = vmax.f32 %v3231, 0.0
        %v3264 = vmax.f32 %v3232, 0.0
        %v3265 = vmax.f32 %v3233, 0.0
        %v3266 = vmax.f32 %v3234, 0.0
        %v3267 = vmax.f32 %v3235, 0.0
        %v3268 = vmax.f32 %v3236, 0.0
        %v3269 = vmax.f32 %v3237, 0.0
        %v3270 = vmax.f32 %v3238, 0.0
        %v3271 = vmax.f32 %v3239, 0.0
        %v3272 = vmax.f32 %v3240, 0.0
        %v3273 = vmax.f32 %v3241, 0.0
        %v3274 = vmax.f32 %v3242, 0.0
        %v3275 = vmax.f32 %v3243, 0.0
        %v3276 = vmax.f32 %v3244, 0.0
        %v3277 = vmax.f32 %v3245, 0.0
        %v3278 = vmax.f32 %v3246, 0.0
        %v3279 = vmax.f32 %v3247, 0.0
        %v3280 = vmax.f32 %v3248, 0.0
        %v3281 = vmax.f32 %v3249, 0.0
        %v3282 = vmax.f32 %v3250, 0.0
        %v3283 = vmax.f32 %v3251, 0.0
        %v3284 = vmax.f32 %v3252, 0.0
        %v3285 = vmax.f32 %v3253, 0.0
        %v3286 = vld [vmem:[%s3] sm:$0xff]
        %v3287 = vld [vmem:[%s3 + $0x8] sm:$0xff]
        %v3288 = vld [vmem:[%s3 + $0x10] sm:$0xff]
        %v3289 = vld [vmem:[%s3 + $0x18] sm:$0xff]
        %v3290 = vld [vmem:[%s3 + $0x20] sm:$0xff]
        %v3291 = vld [vmem:[%s3 + $0x28] sm:$0xff]
        %v3292 = vld [vmem:[%s3 + $0x30] sm:$0xff]
        %v3293 = vld [vmem:[%s3 + $0x38] sm:$0xff]
        %v3294 = vld [vmem:[%s3 + $0x40] sm:$0xff]
        %v3295 = vld [vmem:[%s3 + $0x48] sm:$0xff]
        %v3296 = vld [vmem:[%s3 + $0x50] sm:$0xff]
        %v3297 = vld [vmem:[%s3 + $0x58] sm:$0xff]
        %v3298 = vld [vmem:[%s3 + $0x60] sm:$0xff]
        %v3299 = vld [vmem:[%s3 + $0x68] sm:$0xff]
        %v3300 = vld [vmem:[%s3 + $0x70] sm:$0xff]
        %v3301 = vld [vmem:[%s3 + $0x78] sm:$0xff]
        %v3302 = vld [vmem:[%s3 + $0x80] sm:$0xff]
        %v3303 = vld [vmem:[%s3 + $0x88] sm:$0xff]
        %v3304 = vld [vmem:[%s3 + $0x90] sm:$0xff]
        %v3305 = vld [vmem:[%s3 + $0x98] sm:$0xff]
        %v3306 = vld [vmem:[%s3 + $0xa0] sm:$0xff]
        %v3307 = vld [vmem:[%s3 + $0xa8] sm:$0xff]
        %v3308 = vld [vmem:[%s3 + $0xb0] sm:$0xff]
        %v3309 = vld [vmem:[%s3 + $0xb8] sm:$0xff]
        %v3310 = vld [vmem:[%s3 + $0xc0] sm:$0xff]
        %v3311 = vld [vmem:[%s3 + $0xc8] sm:$0xff]
        %v3312 = vld [vmem:[%s3 + $0xd0] sm:$0xff]
        %v3313 = vld [vmem:[%s3 + $0xd8] sm:$0xff]
        %v3314 = vld [vmem:[%s3 + $0xe0] sm:$0xff]
        %v3315 = vld [vmem:[%s3 + $0xe8] sm:$0xff]
        %v3316 = vld [vmem:[%s3 + $0xf0] sm:$0xff]
        %v3317 = vld [vmem:[%s3 + $0xf8] sm:$0xff]
        %v3318 = vld [vmem:[%s3 + $0x100] sm:$0xff]
        %v3319 = vld [vmem:[%s3 + $0x108] sm:$0xff]
        %v3320 = vld [vmem:[%s3 + $0x110] sm:$0xff]
        %v3321 = vld [vmem:[%s3 + $0x118] sm:$0xff]
        %v3322 = vld [vmem:[%s3 + $0x120] sm:$0xff]
        %v3323 = vld [vmem:[%s3 + $0x128] sm:$0xff]
        %v3324 = vld [vmem:[%s3 + $0x130] sm:$0xff]
        %v3325 = vld [vmem:[%s3 + $0x138] sm:$0xff]
        %v3326 = vld [vmem:[%s3 + $0x140] sm:$0xff]
        %v3327 = vld [vmem:[%s3 + $0x148] sm:$0xff]
        %v3328 = vld [vmem:[%s3 + $0x150] sm:$0xff]
        %v3329 = vld [vmem:[%s3 + $0x158] sm:$0xff]
        %v3330 = vld [vmem:[%s3 + $0x160] sm:$0xff]
        %v3331 = vld [vmem:[%s3 + $0x168] sm:$0xff]
        %v3332 = vld [vmem:[%s3 + $0x170] sm:$0xff]
        %v3333 = vld [vmem:[%s3 + $0x178] sm:$0xff]
        %v3334 = vld [vmem:[%s3 + $0x180] sm:$0xff]
        %v3335 = vld [vmem:[%s3 + $0x188] sm:$0xff]
        %v3336 = vld [vmem:[%s3 + $0x190] sm:$0xff]
        %v3337 = vld [vmem:[%s3 + $0x198] sm:$0xff]
        %v3338 = vld [vmem:[%s3 + $0x1a0] sm:$0xff]
        %v3339 = vld [vmem:[%s3 + $0x1a8] sm:$0xff]
        %v3340 = vld [vmem:[%s3 + $0x1b0] sm:$0xff]
        %v3341 = vld [vmem:[%s3 + $0x1b8] sm:$0xff]
        %v3342 = vld [vmem:[%s3 + $0x1c0] sm:$0xff]
        %v3343 = vld [vmem:[%s3 + $0x1c8] sm:$0xff]
        %v3344 = vld [vmem:[%s3 + $0x1d0] sm:$0xff]
        %v3345 = vld [vmem:[%s3 + $0x1d8] sm:$0xff]
        %v3346 = vld [vmem:[%s3 + $0x1e0] sm:$0xff]
        %v3347 = vld [vmem:[%s3 + $0x1e8] sm:$0xff]
        %v3348 = vld [vmem:[%s3 + $0x1f0] sm:$0xff]
        %v3349 = vld [vmem:[%s3 + $0x1f8] sm:$0xff]
        %v3350 = vld [vmem:[%s3 + $0x200] sm:$0xff]
        %v3351 = vld [vmem:[%s3 + $0x208] sm:$0xff]
        %v3352 = vld [vmem:[%s3 + $0x210] sm:$0xff]
        %v3353 = vld [vmem:[%s3 + $0x218] sm:$0xff]
        %v3354 = vld [vmem:[%s3 + $0x220] sm:$0xff]
        %v3355 = vld [vmem:[%s3 + $0x228] sm:$0xff]
        %v3356 = vld [vmem:[%s3 + $0x230] sm:$0xff]
        %v3357 = vld [vmem:[%s3 + $0x238] sm:$0xff]
        %v3358 = vld [vmem:[%s3 + $0x240] sm:$0xff]
        %v3359 = vld [vmem:[%s3 + $0x248] sm:$0xff]
        %v3360 = vld [vmem:[%s3 + $0x250] sm:$0xff]
        %v3361 = vld [vmem:[%s3 + $0x258] sm:$0xff]
        %v3362 = vld [vmem:[%s3 + $0x260] sm:$0xff]
        %v3363 = vld [vmem:[%s3 + $0x268] sm:$0xff]
        %v3364 = vld [vmem:[%s3 + $0x270] sm:$0xff]
        %v3365 = vld [vmem:[%s3 + $0x278] sm:$0xff]
        %v3366 = vld [vmem:[%s3 + $0x280] sm:$0xff]
        %v3367 = vld [vmem:[%s3 + $0x288] sm:$0xff]
        %v3368 = vld [vmem:[%s3 + $0x290] sm:$0xff]
        %v3369 = vld [vmem:[%s3 + $0x298] sm:$0xff]
        %v3370 = vld [vmem:[%s3 + $0x2a0] sm:$0xff]
        %v3371 = vld [vmem:[%s3 + $0x2a8] sm:$0xff]
        %v3372 = vld [vmem:[%s3 + $0x2b0] sm:$0xff]
        %v3373 = vld [vmem:[%s3 + $0x2b8] sm:$0xff]
        %v3374 = vld [vmem:[%s3 + $0x2c0] sm:$0xff]
        %v3375 = vld [vmem:[%s3 + $0x2c8] sm:$0xff]
        %v3376 = vld [vmem:[%s3 + $0x2d0] sm:$0xff]
        %v3377 = vld [vmem:[%s3 + $0x2d8] sm:$0xff]
        %v3378 = vld [vmem:[%s3 + $0x2e0] sm:$0xff]
        %v3379 = vld [vmem:[%s3 + $0x2e8] sm:$0xff]
        %v3380 = vld [vmem:[%s3 + $0x2f0] sm:$0xff]
        %v3381 = vld [vmem:[%s3 + $0x2f8] sm:$0xff]
        %v3382 = vld [vmem:[%s3 + $0x300] sm:$0xff]
        %v3383 = vld [vmem:[%s3 + $0x308] sm:$0xff]
        %v3384 = vld [vmem:[%s3 + $0x310] sm:$0xff]
        %v3385 = vld [vmem:[%s3 + $0x318] sm:$0xff]
        %v3386 = vld [vmem:[%s3 + $0x320] sm:$0xff]
        %v3387 = vld [vmem:[%s3 + $0x328] sm:$0xff]
        %v3388 = vld [vmem:[%s3 + $0x330] sm:$0xff]
        %v3389 = vld [vmem:[%s3 + $0x338] sm:$0xff]
        %v3390 = vld [vmem:[%s3 + $0x340] sm:$0xff]
        %v3391 = vld [vmem:[%s3 + $0x348] sm:$0xff]
        %v3392 = vld [vmem:[%s3 + $0x350] sm:$0xff]
        %v3393 = vld [vmem:[%s3 + $0x358] sm:$0xff]
        %v3394 = vld [vmem:[%s3 + $0x360] sm:$0xff]
        %v3395 = vld [vmem:[%s3 + $0x368] sm:$0xff]
        %v3396 = vld [vmem:[%s3 + $0x370] sm:$0xff]
        %v3397 = vld [vmem:[%s3 + $0x378] sm:$0xff]
        %v3398 = vld [vmem:[%s3 + $0x380] sm:$0xff]
        %v3399 = vld [vmem:[%s3 + $0x388] sm:$0xff]
        %v3400 = vld [vmem:[%s3 + $0x390] sm:$0xff]
        %v3401 = vld [vmem:[%s3 + $0x398] sm:$0xff]
        %v3402 = vld [vmem:[%s3 + $0x3a0] sm:$0xff]
        %v3403 = vld [vmem:[%s3 + $0x3a8] sm:$0xff]
        %v3404 = vld [vmem:[%s3 + $0x3b0] sm:$0xff]
        %v3405 = vld [vmem:[%s3 + $0x3b8] sm:$0xff]
        %v3406 = vld [vmem:[%s3 + $0x3c0] sm:$0xff]
        %v3407 = vld [vmem:[%s3 + $0x3c8] sm:$0xff]
        %v3408 = vld [vmem:[%s3 + $0x3d0] sm:$0xff]
        %v3409 = vld [vmem:[%s3 + $0x3d8] sm:$0xff]
        %v3410 = vld [vmem:[%s3 + $0x3e0] sm:$0xff]
        %v3411 = vld [vmem:[%s3 + $0x3e8] sm:$0xff]
        %v3412 = vld [vmem:[%s3 + $0x3f0] sm:$0xff]
        %v3413 = vld [vmem:[%s3 + $0x3f8] sm:$0xff]
        %v3414 = vld [vmem:[%s4] sm:$0xff]
        %v3415 = vld [vmem:[%s4 + $0x8] sm:$0xff]
        %v3416 = vld [vmem:[%s4 + $0x10] sm:$0xff]
        %v3417 = vld [vmem:[%s4 + $0x18] sm:$0xff]
        %v3418 = vld [vmem:[%s4 + $0x20] sm:$0x7f]
        %v3419 = vld [vmem:[%s4 + $0x28] sm:$0x7f]
        %v3420 = vld [vmem:[%s4 + $0x30] sm:$0x7f]
        %v3421 = vld [vmem:[%s4 + $0x38] sm:$0x7f]
        %v3422 = vld [vmem:[%s5] sm:$0xff]
        %v3423 = vld [vmem:[%s5 + $0x8] sm:$0xff]
        %v3424 = vld [vmem:[%s5 + $0x10] sm:$0xff]
        %v3425 = vld [vmem:[%s5 + $0x18] sm:$0xff]
        %v3426 = vld [vmem:[%s5 + $0x20] sm:$0xff]
        %v3427 = vld [vmem:[%s5 + $0x28] sm:$0xff]
        %v3428 = vld [vmem:[%s5 + $0x30] sm:$0xff]
        %v3429 = vld [vmem:[%s5 + $0x38] sm:$0xff]
        %v3430 = vld [vmem:[%s5 + $0x40] sm:$0xff]
        %v3431 = vld [vmem:[%s5 + $0x48] sm:$0xff]
        %v3432 = vld [vmem:[%s5 + $0x50] sm:$0xff]
        %v3433 = vld [vmem:[%s5 + $0x58] sm:$0xff]
        %v3434 = vld [vmem:[%s5 + $0x60] sm:$0xff]
        %v3435 = vld [vmem:[%s5 + $0x68] sm:$0xff]
        %v3436 = vld [vmem:[%s5 + $0x70] sm:$0xff]
        %v3437 = vld [vmem:[%s5 + $0x78] sm:$0xff]
        %v3438 = vld [vmem:[%s5 + $0x80] sm:$0xff]
        %v3439 = vld [vmem:[%s5 + $0x88] sm:$0xff]
        %v3440 = vld [vmem:[%s5 + $0x90] sm:$0xff]
        %v3441 = vld [vmem:[%s5 + $0x98] sm:$0xff]
        %v3442 = vld [vmem:[%s5 + $0xa0] sm:$0xff]
        %v3443 = vld [vmem:[%s5 + $0xa8] sm:$0xff]
        %v3444 = vld [vmem:[%s5 + $0xb0] sm:$0xff]
        %v3445 = vld [vmem:[%s5 + $0xb8] sm:$0xff]
        %v3446 = vld [vmem:[%s5 + $0xc0] sm:$0xff]
        %v3447 = vld [vmem:[%s5 + $0xc8] sm:$0xff]
        %v3448 = vld [vmem:[%s5 + $0xd0] sm:$0xff]
        %v3449 = vld [vmem:[%s5 + $0xd8] sm:$0xff]
        %v3450 = vld [vmem:[%s5 + $0xe0] sm:$0xff]
        %v3451 = vld [vmem:[%s5 + $0xe8] sm:$0xff]
        %v3452 = vld [vmem:[%s5 + $0xf0] sm:$0xff]
        %v3453 = vld [vmem:[%s5 + $0xf8] sm:$0xff]
        %v3454 = vld [vmem:[%s5 + $0x100] sm:$0xff]
        %v3455 = vld [vmem:[%s5 + $0x108] sm:$0xff]
        %v3456 = vld [vmem:[%s5 + $0x110] sm:$0xff]
        %v3457 = vld [vmem:[%s5 + $0x118] sm:$0xff]
        %v3458 = vld [vmem:[%s5 + $0x120] sm:$0xff]
        %v3459 = vld [vmem:[%s5 + $0x128] sm:$0xff]
        %v3460 = vld [vmem:[%s5 + $0x130] sm:$0xff]
        %v3461 = vld [vmem:[%s5 + $0x138] sm:$0xff]
        %v3462 = vld [vmem:[%s5 + $0x140] sm:$0xff]
        %v3463 = vld [vmem:[%s5 + $0x148] sm:$0xff]
        %v3464 = vld [vmem:[%s5 + $0x150] sm:$0xff]
        %v3465 = vld [vmem:[%s5 + $0x158] sm:$0xff]
        %v3466 = vld [vmem:[%s5 + $0x160] sm:$0xff]
        %v3467 = vld [vmem:[%s5 + $0x168] sm:$0xff]
        %v3468 = vld [vmem:[%s5 + $0x170] sm:$0xff]
        %v3469 = vld [vmem:[%s5 + $0x178] sm:$0xff]
        %v3470 = vld [vmem:[%s5 + $0x180] sm:$0xff]
        %v3471 = vld [vmem:[%s5 + $0x188] sm:$0xff]
        %v3472 = vld [vmem:[%s5 + $0x190] sm:$0xff]
        %v3473 = vld [vmem:[%s5 + $0x198] sm:$0xff]
        %v3474 = vld [vmem:[%s5 + $0x1a0] sm:$0xff]
        %v3475 = vld [vmem:[%s5 + $0x1a8] sm:$0xff]
        %v3476 = vld [vmem:[%s5 + $0x1b0] sm:$0xff]
        %v3477 = vld [vmem:[%s5 + $0x1b8] sm:$0xff]
        %v3478 = vld [vmem:[%s5 + $0x1c0] sm:$0xff]
        %v3479 = vld [vmem:[%s5 + $0x1c8] sm:$0xff]
        %v3480 = vld [vmem:[%s5 + $0x1d0] sm:$0xff]
        %v3481 = vld [vmem:[%s5 + $0x1d8] sm:$0xff]
        %v3482 = vld [vmem:[%s6] sm:$0x1]
        %v3483 = vld [vmem:[%s7] sm:$0xff]
        %v3484 = vld [vmem:[%s7 + $0x8] sm:$0xff]
        %v3485 = vld [vmem:[%s7 + $0x10] sm:$0xff]
        %v3486 = vld [vmem:[%s7 + $0x18] sm:$0xff]
        %v3487 = vld [vmem:[%s8] sm:$0x1]
        %v3488 = vld [vmem:[%s9] sm:$0xff]
        %v3489 = vld [vmem:[%s9 + $0x8] sm:$0xff]
        %v3490 = vld [vmem:[%s9 + $0x10] sm:$0xff]
        %v3491 = vld [vmem:[%s9 + $0x18] sm:$0x1]
        %v3492 = vld [vmem:[%s10] sm:$0x1]
        %3493 = vmatprep.subr.mxu0 %v3287
        %3494 = vmatpush1.msra.mxu0 %v3286
        %3495 = vmatprep.subr.mxu0 %v3291
        %3496 = vmatpush1.msra.mxu0 %v3290
        %3497 = vmatprep.subr.mxu0 %v3295
        %3498 = vmatpush1.msra.mxu0 %v3294
        %3499 = vmatprep.subr.mxu0 %v3299
        %3500 = vmatpush1.msra.mxu0 %v3298
        %3501 = vmatprep.subr.mxu0 %v3303
        %3502 = vmatpush1.msra.mxu0 %v3302
        %3503 = vmatprep.subr.mxu0 %v3307
        %3504 = vmatpush1.msra.mxu0 %v3306
        %3505 = vmatprep.subr.mxu0 %v3311
        %3506 = vmatpush1.msra.mxu0 %v3310
        %3507 = vmatprep.subr.mxu0 %v3315
        %3508 = vmatpush1.msra.mxu0 %v3314
        %3509 = vmatprep.subr.mxu0 %v3319
        %3510 = vmatpush1.msra.mxu0 %v3318
        %3511 = vmatprep.subr.mxu0 %v3323
        %3512 = vmatpush1.msra.mxu0 %v3322
        %3513 = vmatprep.subr.mxu0 %v3327
        %3514 = vmatpush1.msra.mxu0 %v3326
        %3515 = vmatprep.subr.mxu0 %v3331
        %3516 = vmatpush1.msra.mxu0 %v3330
        %3517 = vmatprep.subr.mxu0 %v3335
        %3518 = vmatpush1.msra.mxu0 %v3334
        %3519 = vmatprep.subr.mxu0 %v3339
        %3520 = vmatpush1.msra.mxu0 %v3338
        %3521 = vmatprep.subr.mxu0 %v3343
        %3522 = vmatpush1.msra.mxu0 %v3342
        %3523 = vmatprep.subr.mxu0 %v3347
        %3524 = vmatpush1.msra.mxu0 %v3346
        %3525 = vmatprep.subr.mxu0 %v3351
        %3526 = vmatpush1.msra.mxu0 %v3350
        %3527 = vmatprep.subr.mxu0 %v3355
        %3528 = vmatpush1.msra.mxu0 %v3354
        %3529 = vmatprep.subr.mxu0 %v3359
        %3530 = vmatpush1.msra.mxu0 %v3358
        %3531 = vmatprep.subr.mxu0 %v3363
        %3532 = vmatpush1.msra.mxu0 %v3362
        %3533 = vmatprep.subr.mxu0 %v3367
        %3534 = vmatpush1.msra.mxu0 %v3366
        %3535 = vmatprep.subr.mxu0 %v3371
        %3536 = vmatpush1.msra.mxu0 %v3370
        %3537 = vmatprep.subr.mxu0 %v3375
        %3538 = vmatpush1.msra.mxu0 %v3374
        %3539 = vmatprep.subr.mxu0 %v3379
        %3540 = vmatpush1.msra.mxu0 %v3378
        %3541 = vmatprep.subr.mxu0 %v3383
        %3542 = vmatpush1.msra.mxu0 %v3382
        %3543 = vmatprep.subr.mxu0 %v3387
        %3544 = vmatpush1.msra.mxu0 %v3386
        %3545 = vmatprep.subr.mxu0 %v3391
        %3546 = vmatpush1.msra.mxu0 %v3390
        %3547 = vmatprep.subr.mxu0 %v3395
        %3548 = vmatpush1.msra.mxu0 %v3394
        %3549 = vmatprep.subr.mxu0 %v3399
        %3550 = vmatpush1.msra.mxu0 %v3398
        %3551 = vmatprep.subr.mxu0 %v3403
        %3552 = vmatpush1.msra.mxu0 %v3402
        %3553 = vmatprep.subr.mxu0 %v3407
        %3554 = vmatpush1.msra.mxu0 %v3406
        %3555 = vmatprep.subr.mxu0 %v3411
        %3556 = vmatpush1.msra.mxu0 %v3410
        %3557 = vmatprep.mubr.f32.mxu0 %v3255
        %3558 = vmatmul.mubr.f32.gmra.mrb[0].mxu0 %v3254
        %v3559 = vpop.f32.mrb[0].mxu0
        %v3560 = vadd.f32 0.0, %v3559
        %v3561 = vpop.f32.mrb[0].mxu0
        %v3562 = vadd.f32 0.0, %v3561
        %3563 = vmatprep.mubr.f32.mxu0 %v3271
        %3564 = vmatmul.mubr.f32.gmra.mrb[0].mxu0 %v3270
        %v3565 = vpop.f32.mrb[0].mxu0
        %v3566 = vadd.f32 0.0, %v3565
        %v3567 = vpop.f32.mrb[0].mxu0
        %v3568 = vadd.f32 0.0, %v3567
        %3569 = vdwg.mxu0
        %3570 = vmatprep.subr.mxu0 %v3289
        %3571 = vmatpush1.msra.mxu0 %v3288
        %3572 = vmatprep.subr.mxu0 %v3293
        %3573 = vmatpush1.msra.mxu0 %v3292
        %3574 = vmatprep.subr.mxu0 %v3297
        %3575 = vmatpush1.msra.mxu0 %v3296
        %3576 = vmatprep.subr.mxu0 %v3301
        %3577 = vmatpush1.msra.mxu0 %v3300
        %3578 = vmatprep.subr.mxu0 %v3305
        %3579 = vmatpush1.msra.mxu0 %v3304
        %3580 = vmatprep.subr.mxu0 %v3309
        %3581 = vmatpush1.msra.mxu0 %v3308
        %3582 = vmatprep.subr.mxu0 %v3313
        %3583 = vmatpush1.msra.mxu0 %v3312
        %3584 = vmatprep.subr.mxu0 %v3317
        %3585 = vmatpush1.msra.mxu0 %v3316
        %3586 = vmatprep.subr.mxu0 %v3321
        %3587 = vmatpush1.msra.mxu0 %v3320
        %3588 = vmatprep.subr.mxu0 %v3325
        %3589 = vmatpush1.msra.mxu0 %v3324
        %3590 = vmatprep.subr.mxu0 %v3329
        %3591 = vmatpush1.msra.mxu0 %v3328
        %3592 = vmatprep.subr.mxu0 %v3333
        %3593 = vmatpush1.msra.mxu0 %v3332
        %3594 = vmatprep.subr.mxu0 %v3337
        %3595 = vmatpush1.msra.mxu0 %v3336
        %3596 = vmatprep.subr.mxu0 %v3341
        %3597 = vmatpush1.msra.mxu0 %v3340
        %3598 = vmatprep.subr.mxu0 %v3345
        %3599 = vmatpush1.msra.mxu0 %v3344
        %3600 = vmatprep.subr.mxu0 %v3349
        %3601 = vmatpush1.msra.mxu0 %v3348
        %3602 = vmatprep.subr.mxu0 %v3353
        %3603 = vmatpush1.msra.mxu0 %v3352
        %3604 = vmatprep.subr.mxu0 %v3357
        %3605 = vmatpush1.msra.mxu0 %v3356
        %3606 = vmatprep.subr.mxu0 %v3361
        %3607 = vmatpush1.msra.mxu0 %v3360
        %3608 = vmatprep.subr.mxu0 %v3365
        %3609 = vmatpush1.msra.mxu0 %v3364
        %3610 = vmatprep.subr.mxu0 %v3369
        %3611 = vmatpush1.msra.mxu0 %v3368
        %3612 = vmatprep.subr.mxu0 %v3373
        %3613 = vmatpush1.msra.mxu0 %v3372
        %3614 = vmatprep.subr.mxu0 %v3377
        %3615 = vmatpush1.msra.mxu0 %v3376
        %3616 = vmatprep.subr.mxu0 %v3381
        %3617 = vmatpush1.msra.mxu0 %v3380
        %3618 = vmatprep.subr.mxu0 %v3385
        %3619 = vmatpush1.msra.mxu0 %v3384
        %3620 = vmatprep.subr.mxu0 %v3389
        %3621 = vmatpush1.msra.mxu0 %v3388
        %3622 = vmatprep.subr.mxu0 %v3393
        %3623 = vmatpush1.msra.mxu0 %v3392
        %3624 = vmatprep.subr.mxu0 %v3397
        %3625 = vmatpush1.msra.mxu0 %v3396
        %3626 = vmatprep.subr.mxu0 %v3401
        %3627 = vmatpush1.msra.mxu0 %v3400
        %3628 = vmatprep.subr.mxu0 %v3405
        %3629 = vmatpush1.msra.mxu0 %v3404
        %3630 = vmatprep.subr.mxu0 %v3409
        %3631 = vmatpush1.msra.mxu0 %v3408
        %3632 = vmatprep.subr.mxu0 %v3413
        %3633 = vmatpush1.msra.mxu0 %v3412
        %3634 = vmatprep.mubr.f32.mxu0 %v3255
        %3635 = vmatmul.mubr.f32.gmra.mrb[0].mxu0 %v3254
        %v3636 = vpop.f32.mrb[0].mxu0
        %v3637 = vadd.f32 0.0, %v3636
        %v3638 = vpop.f32.mrb[0].mxu0
        %v3639 = vadd.f32 0.0, %v3638
        %3640 = vmatprep.mubr.f32.mxu0 %v3271
        %3641 = vmatmul.mubr.f32.gmra.mrb[0].mxu0 %v3270
        %v3642 = vpop.f32.mrb[0].mxu0
        %v3643 = vadd.f32 0.0, %v3642
        %v3644 = vpop.f32.mrb[0].mxu0
        %v3645 = vadd.f32 0.0, %v3644
        %3646 = vdwg.mxu0
        %v3647 = vmul.f32 %v3560, %v3414
        %v3648 = vmul.f32 %v3562, %v3415
        %v3649 = vmul.f32 %v3637, %v3416
        %v3650 = vmul.f32 %v3639, %v3417
        %v3651 = vmul.f32 %v3566, %v3418
        %v3652 = vmul.f32 %v3568, %v3419
        %v3653 = vmul.f32 %v3643, %v3420
        %v3654 = vmul.f32 %v3645, %v3421
        %vm3655 = vcmask 121856
        %v3657 = vsel %vm3655, 1.0, 0
        %vm3659 = vcmask 1046528
        %v3661 = vsel %vm3659, %v3651, 0
        %v3664 = vsel %vm3659, %v3652, 0
        %v3667 = vsel %vm3659, %v3653, 0
        %v3670 = vsel %vm3659, %v3654, 0
        %3672 = vmatprep.subr.mxu0 %v3648
        %3673 = vmatpush1.msra.mxu0 %v3647
        %3674 = vmatprep.subr.mxu0 %v3664
        %3675 = vmatpush1.msra.mxu0 %v3661
        %3676 = vmatprep.subr.mxu0 0.0
        %3677 = vmatpush1.msra.mxu0 0.0
        %3678 = vmatprep.subr.mxu0 0.0
        %3679 = vmatpush1.msra.mxu0 0.0
        %3680 = vmatprep.subr.mxu0 0.0
        %3681 = vmatpush1.msra.mxu0 0.0
        %3682 = vmatprep.subr.mxu0 0.0
        %3683 = vmatpush1.msra.mxu0 0.0
        %3684 = vmatprep.subr.mxu0 0.0
        %3685 = vmatpush1.msra.mxu0 0.0
        %3686 = vmatprep.subr.mxu0 0.0
        %3687 = vmatpush1.msra.mxu0 0.0
        %3688 = vmatprep.subr.mxu0 0.0
        %3689 = vmatpush1.msra.mxu0 0.0
        %3690 = vmatprep.subr.mxu0 0.0
        %3691 = vmatpush1.msra.mxu0 0.0
        %3692 = vmatprep.subr.mxu0 0.0
        %3693 = vmatpush1.msra.mxu0 0.0
        %3694 = vmatprep.subr.mxu0 0.0
        %3695 = vmatpush1.msra.mxu0 0.0
        %3696 = vmatprep.subr.mxu0 0.0
        %3697 = vmatpush1.msra.mxu0 0.0
        %3698 = vmatprep.subr.mxu0 0.0
        %3699 = vmatpush1.msra.mxu0 0.0
        %3700 = vmatprep.subr.mxu0 0.0
        %3701 = vmatpush1.msra.mxu0 0.0
        %3702 = vmatprep.subr.mxu0 0.0
        %3703 = vmatpush1.msra.mxu0 0.0
        %3704 = vmatprep.subr.mxu0 0.0
        %3705 = vmatpush1.msra.mxu0 0.0
        %3706 = vmatprep.subr.mxu0 0.0
        %3707 = vmatpush1.msra.mxu0 0.0
        %3708 = vmatprep.subr.mxu0 0.0
        %3709 = vmatpush1.msra.mxu0 0.0
        %3710 = vmatprep.subr.mxu0 0.0
        %3711 = vmatpush1.msra.mxu0 0.0
        %3712 = vmatprep.subr.mxu0 0.0
        %3713 = vmatpush1.msra.mxu0 0.0
        %3714 = vmatprep.subr.mxu0 0.0
        %3715 = vmatpush1.msra.mxu0 0.0
        %3716 = vmatprep.subr.mxu0 0.0
        %3717 = vmatpush1.msra.mxu0 0.0
        %3718 = vmatprep.subr.mxu0 0.0
        %3719 = vmatpush1.msra.mxu0 0.0
        %3720 = vmatprep.subr.mxu0 0.0
        %3721 = vmatpush1.msra.mxu0 0.0
        %3722 = vmatprep.subr.mxu0 0.0
        %3723 = vmatpush1.msra.mxu0 0.0
        %3724 = vmatprep.subr.mxu0 0.0
        %3725 = vmatpush1.msra.mxu0 0.0
        %3726 = vmatprep.subr.mxu0 0.0
        %3727 = vmatpush1.msra.mxu0 0.0
        %3728 = vmatprep.subr.mxu0 0.0
        %3729 = vmatpush1.msra.mxu0 0.0
        %3730 = vmatprep.subr.mxu0 0.0
        %3731 = vmatpush1.msra.mxu0 0.0
        %3732 = vmatprep.subr.mxu0 0.0
        %3733 = vmatpush1.msra.mxu0 0.0
        %3734 = vmatprep.subr.mxu0 0.0
        %3735 = vmatpush1.msra.mxu0 0.0
        %3736 = vmatprep.mubr.f32.mxu0 0.0
        %3737 = vmatmul.mubr.f32.gmra.mrb[0].mxu0 %v3657
        %v3738 = vpop.f32.mrb[0].mxu0
        %v3739 = vadd.f32 0.0, %v3738
        %v3740 = vpop.f32.mrb[0].mxu0
        %v3741 = vadd.f32 0.0, %v3740
        %3742 = vdwg.mxu0
        %3743 = vmatprep.subr.mxu0 %v3650
        %3744 = vmatpush1.msra.mxu0 %v3649
        %3745 = vmatprep.subr.mxu0 %v3670
        %3746 = vmatpush1.msra.mxu0 %v3667
        %3747 = vmatprep.subr.mxu0 0.0
        %3748 = vmatpush1.msra.mxu0 0.0
        %3749 = vmatprep.subr.mxu0 0.0
        %3750 = vmatpush1.msra.mxu0 0.0
        %3751 = vmatprep.subr.mxu0 0.0
        %3752 = vmatpush1.msra.mxu0 0.0
        %3753 = vmatprep.subr.mxu0 0.0
        %3754 = vmatpush1.msra.mxu0 0.0
        %3755 = vmatprep.subr.mxu0 0.0
        %3756 = vmatpush1.msra.mxu0 0.0
        %3757 = vmatprep.subr.mxu0 0.0
        %3758 = vmatpush1.msra.mxu0 0.0
        %3759 = vmatprep.subr.mxu0 0.0
        %3760 = vmatpush1.msra.mxu0 0.0
        %3761 = vmatprep.subr.mxu0 0.0
        %3762 = vmatpush1.msra.mxu0 0.0
        %3763 = vmatprep.subr.mxu0 0.0
        %3764 = vmatpush1.msra.mxu0 0.0
        %3765 = vmatprep.subr.mxu0 0.0
        %3766 = vmatpush1.msra.mxu0 0.0
        %3767 = vmatprep.subr.mxu0 0.0
        %3768 = vmatpush1.msra.mxu0 0.0
        %3769 = vmatprep.subr.mxu0 0.0
        %3770 = vmatpush1.msra.mxu0 0.0
        %3771 = vmatprep.subr.mxu0 0.0
        %3772 = vmatpush1.msra.mxu0 0.0
        %3773 = vmatprep.subr.mxu0 0.0
        %3774 = vmatpush1.msra.mxu0 0.0
        %3775 = vmatprep.subr.mxu0 0.0
        %3776 = vmatpush1.msra.mxu0 0.0
        %3777 = vmatprep.subr.mxu0 0.0
        %3778 = vmatpush1.msra.mxu0 0.0
        %3779 = vmatprep.subr.mxu0 0.0
        %3780 = vmatpush1.msra.mxu0 0.0
        %3781 = vmatprep.subr.mxu0 0.0
        %3782 = vmatpush1.msra.mxu0 0.0
        %3783 = vmatprep.subr.mxu0 0.0
        %3784 = vmatpush1.msra.mxu0 0.0
        %3785 = vmatprep.subr.mxu0 0.0
        %3786 = vmatpush1.msra.mxu0 0.0
        %3787 = vmatprep.subr.mxu0 0.0
        %3788 = vmatpush1.msra.mxu0 0.0
        %3789 = vmatprep.subr.mxu0 0.0
        %3790 = vmatpush1.msra.mxu0 0.0
        %3791 = vmatprep.subr.mxu0 0.0
        %3792 = vmatpush1.msra.mxu0 0.0
        %3793 = vmatprep.subr.mxu0 0.0
        %3794 = vmatpush1.msra.mxu0 0.0
        %3795 = vmatprep.subr.mxu0 0.0
        %3796 = vmatpush1.msra.mxu0 0.0
        %3797 = vmatprep.subr.mxu0 0.0
        %3798 = vmatpush1.msra.mxu0 0.0
        %3799 = vmatprep.subr.mxu0 0.0
        %3800 = vmatpush1.msra.mxu0 0.0
        %3801 = vmatprep.subr.mxu0 0.0
        %3802 = vmatpush1.msra.mxu0 0.0
        %3803 = vmatprep.subr.mxu0 0.0
        %3804 = vmatpush1.msra.mxu0 0.0
        %3805 = vmatprep.subr.mxu0 0.0
        %3806 = vmatpush1.msra.mxu0 0.0
        %3807 = vmatprep.mubr.f32.mxu0 0.0
        %3808 = vmatmul.mubr.f32.gmra.mrb[0].mxu0 %v3657
        %v3809 = vpop.f32.mrb[0].mxu0
        %v3810 = vadd.f32 0.0, %v3809
        %v3811 = vpop.f32.mrb[0].mxu0
        %v3812 = vadd.f32 0.0, %v3811
        %3813 = vdwg.mxu0
        %vm3814 = vcmask 785408
        %v3816 = vsel %vm3814, %v3812, 0
        %3818 = vmatprep.subr.mxu0 0.0
        %3819 = vmatpush1.msra.mxu0 %v3422
        %3820 = vmatprep.subr.mxu0 0.0
        %3821 = vmatpush1.msra.mxu0 %v3423
        %3822 = vmatprep.subr.mxu0 0.0
        %3823 = vmatpush1.msra.mxu0 %v3424
        %3824 = vmatprep.subr.mxu0 0.0
        %3825 = vmatpush1.msra.mxu0 %v3425
        %3826 = vmatprep.subr.mxu0 0.0
        %3827 = vmatpush1.msra.mxu0 %v3426
        %3828 = vmatprep.subr.mxu0 0.0
        %3829 = vmatpush1.msra.mxu0 %v3427
        %3830 = vmatprep.subr.mxu0 0.0
        %3831 = vmatpush1.msra.mxu0 %v3428
        %3832 = vmatprep.subr.mxu0 0.0
        %3833 = vmatpush1.msra.mxu0 %v3429
        %3834 = vmatprep.subr.mxu0 0.0
        %3835 = vmatpush1.msra.mxu0 %v3430
        %3836 = vmatprep.subr.mxu0 0.0
        %3837 = vmatpush1.msra.mxu0 %v3431
        %3838 = vmatprep.subr.mxu0 0.0
        %3839 = vmatpush1.msra.mxu0 %v3432
        %3840 = vmatprep.subr.mxu0 0.0
        %3841 = vmatpush1.msra.mxu0 %v3433
        %3842 = vmatprep.subr.mxu0 0.0
        %3843 = vmatpush1.msra.mxu0 %v3434
        %3844 = vmatprep.subr.mxu0 0.0
        %3845 = vmatpush1.msra.mxu0 %v3435
        %3846 = vmatprep.subr.mxu0 0.0
        %3847 = vmatpush1.msra.mxu0 %v3436
        %3848 = vmatprep.subr.mxu0 0.0
        %3849 = vmatpush1.msra.mxu0 %v3437
        %3850 = vmatprep.subr.mxu0 0.0
        %3851 = vmatpush1.msra.mxu0 %v3438
        %3852 = vmatprep.subr.mxu0 0.0
        %3853 = vmatpush1.msra.mxu0 %v3439
        %3854 = vmatprep.subr.mxu0 0.0
        %3855 = vmatpush1.msra.mxu0 %v3440
        %3856 = vmatprep.subr.mxu0 0.0
        %3857 = vmatpush1.msra.mxu0 %v3441
        %3858 = vmatprep.subr.mxu0 0.0
        %3859 = vmatpush1.msra.mxu0 %v3442
        %3860 = vmatprep.subr.mxu0 0.0
        %3861 = vmatpush1.msra.mxu0 %v3443
        %3862 = vmatprep.subr.mxu0 0.0
        %3863 = vmatpush1.msra.mxu0 %v3444
        %3864 = vmatprep.subr.mxu0 0.0
        %3865 = vmatpush1.msra.mxu0 %v3445
        %3866 = vmatprep.subr.mxu0 0.0
        %3867 = vmatpush1.msra.mxu0 %v3446
        %3868 = vmatprep.subr.mxu0 0.0
        %3869 = vmatpush1.msra.mxu0 %v3447
        %3870 = vmatprep.subr.mxu0 0.0
        %3871 = vmatpush1.msra.mxu0 %v3448
        %3872 = vmatprep.subr.mxu0 0.0
        %3873 = vmatpush1.msra.mxu0 %v3449
        %3874 = vmatprep.subr.mxu0 0.0
        %3875 = vmatpush1.msra.mxu0 %v3450
        %3876 = vmatprep.subr.mxu0 0.0
        %3877 = vmatpush1.msra.mxu0 %v3451
        %3878 = vmatprep.subr.mxu0 0.0
        %3879 = vmatpush1.msra.mxu0 %v3452
        %3880 = vmatprep.subr.mxu0 0.0
        %3881 = vmatpush1.msra.mxu0 %v3453
        %3882 = vmatprep.mubr.f32.mxu0 %v3741
        %3883 = vmatmul.mubr.f32.gmra.mrb[0].mxu0 %v3739
        %v3884 = vpop.f32.mrb[0].mxu0
        %v3885 = vadd.f32 %v3482, %v3884
        %v3886 = vpop.f32.mrb[0].mxu0
        %3887 = vdwg.mxu0
        %3888 = vmatprep.subr.mxu0 0.0
        %3889 = vmatpush1.msra.mxu0 %v3454
        %3890 = vmatprep.subr.mxu0 0.0
        %3891 = vmatpush1.msra.mxu0 %v3455
        %3892 = vmatprep.subr.mxu0 0.0
        %3893 = vmatpush1.msra.mxu0 %v3456
        %3894 = vmatprep.subr.mxu0 0.0
        %3895 = vmatpush1.msra.mxu0 %v3457
        %3896 = vmatprep.subr.mxu0 0.0
        %3897 = vmatpush1.msra.mxu0 %v3458
        %3898 = vmatprep.subr.mxu0 0.0
        %3899 = vmatpush1.msra.mxu0 %v3459
        %3900 = vmatprep.subr.mxu0 0.0
        %3901 = vmatpush1.msra.mxu0 %v3460
        %3902 = vmatprep.subr.mxu0 0.0
        %3903 = vmatpush1.msra.mxu0 %v3461
        %3904 = vmatprep.subr.mxu0 0.0
        %3905 = vmatpush1.msra.mxu0 %v3462
        %3906 = vmatprep.subr.mxu0 0.0
        %3907 = vmatpush1.msra.mxu0 %v3463
        %3908 = vmatprep.subr.mxu0 0.0
        %3909 = vmatpush1.msra.mxu0 %v3464
        %3910 = vmatprep.subr.mxu0 0.0
        %3911 = vmatpush1.msra.mxu0 %v3465
        %3912 = vmatprep.subr.mxu0 0.0
        %3913 = vmatpush1.msra.mxu0 %v3466
        %3914 = vmatprep.subr.mxu0 0.0
        %3915 = vmatpush1.msra.mxu0 %v3467
        %3916 = vmatprep.subr.mxu0 0.0
        %3917 = vmatpush1.msra.mxu0 %v3468
        %3918 = vmatprep.subr.mxu0 0.0
        %3919 = vmatpush1.msra.mxu0 %v3469
        %3920 = vmatprep.subr.mxu0 0.0
        %3921 = vmatpush1.msra.mxu0 %v3470
        %3922 = vmatprep.subr.mxu0 0.0
        %3923 = vmatpush1.msra.mxu0 %v3471
        %3924 = vmatprep.subr.mxu0 0.0
        %3925 = vmatpush1.msra.mxu0 %v3472
        %3926 = vmatprep.subr.mxu0 0.0
        %3927 = vmatpush1.msra.mxu0 %v3473
        %3928 = vmatprep.subr.mxu0 0.0
        %3929 = vmatpush1.msra.mxu0 %v3474
        %3930 = vmatprep.subr.mxu0 0.0
        %3931 = vmatpush1.msra.mxu0 %v3475
        %3932 = vmatprep.subr.mxu0 0.0
        %3933 = vmatpush1.msra.mxu0 %v3476
        %3934 = vmatprep.subr.mxu0 0.0
        %3935 = vmatpush1.msra.mxu0 %v3477
        %3936 = vmatprep.subr.mxu0 0.0
        %3937 = vmatpush1.msra.mxu0 %v3478
        %3938 = vmatprep.subr.mxu0 0.0
        %3939 = vmatpush1.msra.mxu0 %v3479
        %3940 = vmatprep.subr.mxu0 0.0
        %3941 = vmatpush1.msra.mxu0 %v3480
        %3942 = vmatprep.subr.mxu0 0.0
        %3943 = vmatpush1.msra.mxu0 %v3481
        %3944 = vmatprep.subr.mxu0 0.0
        %3945 = vmatpush1.msra.mxu0 0.0
        %3946 = vmatprep.subr.mxu0 0.0
        %3947 = vmatpush1.msra.mxu0 0.0
        %3948 = vmatprep.subr.mxu0 0.0
        %3949 = vmatpush1.msra.mxu0 0.0
        %3950 = vmatprep.subr.mxu0 0.0
        %3951 = vmatpush1.msra.mxu0 0.0
        %3952 = vmatprep.mubr.f32.mxu0 %v3816
        %3953 = vmatmul.mubr.f32.gmra.mrb[0].mxu0 %v3810
        %v3954 = vpop.f32.mrb[0].mxu0
        %v3955 = vadd.f32 %v3885, %v3954
        %v3956 = vpop.f32.mrb[0].mxu0
        %3957 = vdwg.mxu0
        %v3958 = vmax.f32 %v3955, 0.0
        %v3960 = vsel %vm643, %v3958, 0
        %3962 = vmatprep.subr.mxu0 0.0
        %3963 = vmatpush1.msra.mxu0 %v3483
        %3964 = vmatprep.subr.mxu0 0.0
        %3965 = vmatpush1.msra.mxu0 %v3484
        %3966 = vmatprep.subr.mxu0 0.0
        %3967 = vmatpush1.msra.mxu0 %v3485
        %3968 = vmatprep.subr.mxu0 0.0
        %3969 = vmatpush1.msra.mxu0 %v3486
        %3970 = vmatprep.subr.mxu0 0.0
        %3971 = vmatpush1.msra.mxu0 0.0
        %3972 = vmatprep.subr.mxu0 0.0
        %3973 = vmatpush1.msra.mxu0 0.0
        %3974 = vmatprep.subr.mxu0 0.0
        %3975 = vmatpush1.msra.mxu0 0.0
        %3976 = vmatprep.subr.mxu0 0.0
        %3977 = vmatpush1.msra.mxu0 0.0
        %3978 = vmatprep.subr.mxu0 0.0
        %3979 = vmatpush1.msra.mxu0 0.0
        %3980 = vmatprep.subr.mxu0 0.0
        %3981 = vmatpush1.msra.mxu0 0.0
        %3982 = vmatprep.subr.mxu0 0.0
        %3983 = vmatpush1.msra.mxu0 0.0
        %3984 = vmatprep.subr.mxu0 0.0
        %3985 = vmatpush1.msra.mxu0 0.0
        %3986 = vmatprep.subr.mxu0 0.0
        %3987 = vmatpush1.msra.mxu0 0.0
        %3988 = vmatprep.subr.mxu0 0.0
        %3989 = vmatpush1.msra.mxu0 0.0
        %3990 = vmatprep.subr.mxu0 0.0
        %3991 = vmatpush1.msra.mxu0 0.0
        %3992 = vmatprep.subr.mxu0 0.0
        %3993 = vmatpush1.msra.mxu0 0.0
        %3994 = vmatprep.subr.mxu0 0.0
        %3995 = vmatpush1.msra.mxu0 0.0
        %3996 = vmatprep.subr.mxu0 0.0
        %3997 = vmatpush1.msra.mxu0 0.0
        %3998 = vmatprep.subr.mxu0 0.0
        %3999 = vmatpush1.msra.mxu0 0.0
        %4000 = vmatprep.subr.mxu0 0.0
        %4001 = vmatpush1.msra.mxu0 0.0
        %4002 = vmatprep.subr.mxu0 0.0
        %4003 = vmatpush1.msra.mxu0 0.0
        %4004 = vmatprep.subr.mxu0 0.0
        %4005 = vmatpush1.msra.mxu0 0.0
        %4006 = vmatprep.subr.mxu0 0.0
        %4007 = vmatpush1.msra.mxu0 0.0
        %4008 = vmatprep.subr.mxu0 0.0
        %4009 = vmatpush1.msra.mxu0 0.0
        %4010 = vmatprep.subr.mxu0 0.0
        %4011 = vmatpush1.msra.mxu0 0.0
        %4012 = vmatprep.subr.mxu0 0.0
        %4013 = vmatpush1.msra.mxu0 0.0
        %4014 = vmatprep.subr.mxu0 0.0
        %4015 = vmatpush1.msra.mxu0 0.0
        %4016 = vmatprep.subr.mxu0 0.0
        %4017 = vmatpush1.msra.mxu0 0.0
        %4018 = vmatprep.subr.mxu0 0.0
        %4019 = vmatpush1.msra.mxu0 0.0
        %4020 = vmatprep.subr.mxu0 0.0
        %4021 = vmatpush1.msra.mxu0 0.0
        %4022 = vmatprep.subr.mxu0 0.0
        %4023 = vmatpush1.msra.mxu0 0.0
        %4024 = vmatprep.subr.mxu0 0.0
        %4025 = vmatpush1.msra.mxu0 0.0
        %4026 = vmatprep.mubr.f32.mxu0 0.0
        %4027 = vmatmul.mubr.f32.gmra.mrb[0].mxu0 %v3960
        %v4028 = vpop.f32.mrb[0].mxu0
        %v4029 = vadd.f32 %v3487, %v4028
        %v4030 = vpop.f32.mrb[0].mxu0
        %4031 = vdwg.mxu0
        %v4032 = vmax.f32 %v4029, 0.0
        %vm4033 = vcmask 203776
        %v4035 = vsel %vm4033, %v4032, 0
        %vm4037 = vcmask 1040384
        %v4039 = vsel %vm4037, %v3491, 0
        %4041 = vmatprep.subr.mxu0 0.0
        %4042 = vmatpush1.msra.mxu0 %v3488
        %4043 = vmatprep.subr.mxu0 0.0
        %4044 = vmatpush1.msra.mxu0 %v3489
        %4045 = vmatprep.subr.mxu0 0.0
        %4046 = vmatpush1.msra.mxu0 %v3490
        %4047 = vmatprep.subr.mxu0 0.0
        %4048 = vmatpush1.msra.mxu0 %v4039
        %4049 = vmatprep.subr.mxu0 0.0
        %4050 = vmatpush1.msra.mxu0 0.0
        %4051 = vmatprep.subr.mxu0 0.0
        %4052 = vmatpush1.msra.mxu0 0.0
        %4053 = vmatprep.subr.mxu0 0.0
        %4054 = vmatpush1.msra.mxu0 0.0
        %4055 = vmatprep.subr.mxu0 0.0
        %4056 = vmatpush1.msra.mxu0 0.0
        %4057 = vmatprep.subr.mxu0 0.0
        %4058 = vmatpush1.msra.mxu0 0.0
        %4059 = vmatprep.subr.mxu0 0.0
        %4060 = vmatpush1.msra.mxu0 0.0
        %4061 = vmatprep.subr.mxu0 0.0
        %4062 = vmatpush1.msra.mxu0 0.0
        %4063 = vmatprep.subr.mxu0 0.0
        %4064 = vmatpush1.msra.mxu0 0.0
        %4065 = vmatprep.subr.mxu0 0.0
        %4066 = vmatpush1.msra.mxu0 0.0
        %4067 = vmatprep.subr.mxu0 0.0
        %4068 = vmatpush1.msra.mxu0 0.0
        %4069 = vmatprep.subr.mxu0 0.0
        %4070 = vmatpush1.msra.mxu0 0.0
        %4071 = vmatprep.subr.mxu0 0.0
        %4072 = vmatpush1.msra.mxu0 0.0
        %4073 = vmatprep.subr.mxu0 0.0
        %4074 = vmatpush1.msra.mxu0 0.0
        %4075 = vmatprep.subr.mxu0 0.0
        %4076 = vmatpush1.msra.mxu0 0.0
        %4077 = vmatprep.subr.mxu0 0.0
        %4078 = vmatpush1.msra.mxu0 0.0
        %4079 = vmatprep.subr.mxu0 0.0
        %4080 = vmatpush1.msra.mxu0 0.0
        %4081 = vmatprep.subr.mxu0 0.0
        %4082 = vmatpush1.msra.mxu0 0.0
        %4083 = vmatprep.subr.mxu0 0.0
        %4084 = vmatpush1.msra.mxu0 0.0
        %4085 = vmatprep.subr.mxu0 0.0
        %4086 = vmatpush1.msra.mxu0 0.0
        %4087 = vmatprep.subr.mxu0 0.0
        %4088 = vmatpush1.msra.mxu0 0.0
        %4089 = vmatprep.subr.mxu0 0.0
        %4090 = vmatpush1.msra.mxu0 0.0
        %4091 = vmatprep.subr.mxu0 0.0
        %4092 = vmatpush1.msra.mxu0 0.0
        %4093 = vmatprep.subr.mxu0 0.0
        %4094 = vmatpush1.msra.mxu0 0.0
        %4095 = vmatprep.subr.mxu0 0.0
        %4096 = vmatpush1.msra.mxu0 0.0
        %4097 = vmatprep.subr.mxu0 0.0
        %4098 = vmatpush1.msra.mxu0 0.0
        %4099 = vmatprep.subr.mxu0 0.0
        %4100 = vmatpush1.msra.mxu0 0.0
        %4101 = vmatprep.subr.mxu0 0.0
        %4102 = vmatpush1.msra.mxu0 0.0
        %4103 = vmatprep.subr.mxu0 0.0
        %4104 = vmatpush1.msra.mxu0 0.0
        %4105 = vmatprep.mubr.f32.mxu0 0.0
        %4106 = vmatmul.mubr.f32.gmra.mrb[0].mxu0 %v4035
        %v4107 = vpop.f32.mrb[0].mxu0
        %v4108 = vadd.f32 %v3492, %v4107
        %v4109 = vpop.f32.mrb[0].mxu0
        %4110 = vdwg.mxu0
        %vm4111 = vcmask 73728
        %4112 = vst.msk [vmem:[%s379] sm:$0x1] %vm4111, %v4108
        %4113 = vmatprep.subr.mxu0 %v3287
        %4114 = vmatpush1.msra.mxu0 %v3286
        %4115 = vmatprep.subr.mxu0 %v3291
        %4116 = vmatpush1.msra.mxu0 %v3290
        %4117 = vmatprep.subr.mxu0 %v3295
        %4118 = vmatpush1.msra.mxu0 %v3294
        %4119 = vmatprep.subr.mxu0 %v3299
        %4120 = vmatpush1.msra.mxu0 %v3298
        %4121 = vmatprep.subr.mxu0 %v3303
        %4122 = vmatpush1.msra.mxu0 %v3302
        %4123 = vmatprep.subr.mxu0 %v3307
        %4124 = vmatpush1.msra.mxu0 %v3306
        %4125 = vmatprep.subr.mxu0 %v3311
        %4126 = vmatpush1.msra.mxu0 %v3310
        %4127 = vmatprep.subr.mxu0 %v3315
        %4128 = vmatpush1.msra.mxu0 %v3314
        %4129 = vmatprep.subr.mxu0 %v3319
        %4130 = vmatpush1.msra.mxu0 %v3318
        %4131 = vmatprep.subr.mxu0 %v3323
        %4132 = vmatpush1.msra.mxu0 %v3322
        %4133 = vmatprep.subr.mxu0 %v3327
        %4134 = vmatpush1.msra.mxu0 %v3326
        %4135 = vmatprep.subr.mxu0 %v3331
        %4136 = vmatpush1.msra.mxu0 %v3330
        %4137 = vmatprep.subr.mxu0 %v3335
        %4138 = vmatpush1.msra.mxu0 %v3334
        %4139 = vmatprep.subr.mxu0 %v3339
        %4140 = vmatpush1.msra.mxu0 %v3338
        %4141 = vmatprep.subr.mxu0 %v3343
        %4142 = vmatpush1.msra.mxu0 %v3342
        %4143 = vmatprep.subr.mxu0 %v3347
        %4144 = vmatpush1.msra.mxu0 %v3346
        %4145 = vmatprep.subr.mxu0 %v3351
        %4146 = vmatpush1.msra.mxu0 %v3350
        %4147 = vmatprep.subr.mxu0 %v3355
        %4148 = vmatpush1.msra.mxu0 %v3354
        %4149 = vmatprep.subr.mxu0 %v3359
        %4150 = vmatpush1.msra.mxu0 %v3358
        %4151 = vmatprep.subr.mxu0 %v3363
        %4152 = vmatpush1.msra.mxu0 %v3362
        %4153 = vmatprep.subr.mxu0 %v3367
        %4154 = vmatpush1.msra.mxu0 %v3366
        %4155 = vmatprep.subr.mxu0 %v3371
        %4156 = vmatpush1.msra.mxu0 %v3370
        %4157 = vmatprep.subr.mxu0 %v3375
        %4158 = vmatpush1.msra.mxu0 %v3374
        %4159 = vmatprep.subr.mxu0 %v3379
        %4160 = vmatpush1.msra.mxu0 %v3378
        %4161 = vmatprep.subr.mxu0 %v3383
        %4162 = vmatpush1.msra.mxu0 %v3382
        %4163 = vmatprep.subr.mxu0 %v3387
        %4164 = vmatpush1.msra.mxu0 %v3386
        %4165 = vmatprep.subr.mxu0 %v3391
        %4166 = vmatpush1.msra.mxu0 %v3390
        %4167 = vmatprep.subr.mxu0 %v3395
        %4168 = vmatpush1.msra.mxu0 %v3394
        %4169 = vmatprep.subr.mxu0 %v3399
        %4170 = vmatpush1.msra.mxu0 %v3398
        %4171 = vmatprep.subr.mxu0 %v3403
        %4172 = vmatpush1.msra.mxu0 %v3402
        %4173 = vmatprep.subr.mxu0 %v3407
        %4174 = vmatpush1.msra.mxu0 %v3406
        %4175 = vmatprep.subr.mxu0 %v3411
        %4176 = vmatpush1.msra.mxu0 %v3410
        %4177 = vmatprep.mubr.f32.mxu0 %v3257
        %4178 = vmatmul.mubr.f32.gmra.mrb[0].mxu0 %v3256
        %v4179 = vpop.f32.mrb[0].mxu0
        %v4180 = vadd.f32 0.0, %v4179
        %v4181 = vpop.f32.mrb[0].mxu0
        %v4182 = vadd.f32 0.0, %v4181
        %4183 = vmatprep.mubr.f32.mxu0 %v3273
        %4184 = vmatmul.mubr.f32.gmra.mrb[0].mxu0 %v3272
        %v4185 = vpop.f32.mrb[0].mxu0
        %v4186 = vadd.f32 0.0, %v4185
        %v4187 = vpop.f32.mrb[0].mxu0
        %v4188 = vadd.f32 0.0, %v4187
        %4189 = vdwg.mxu0
        %4190 = vmatprep.subr.mxu0 %v3289
        %4191 = vmatpush1.msra.mxu0 %v3288
        %4192 = vmatprep.subr.mxu0 %v3293
        %4193 = vmatpush1.msra.mxu0 %v3292
        %4194 = vmatprep.subr.mxu0 %v3297
        %4195 = vmatpush1.msra.mxu0 %v3296
        %4196 = vmatprep.subr.mxu0 %v3301
        %4197 = vmatpush1.msra.mxu0 %v3300
        %4198 = vmatprep.subr.mxu0 %v3305
        %4199 = vmatpush1.msra.mxu0 %v3304
        %4200 = vmatprep.subr.mxu0 %v3309
        %4201 = vmatpush1.msra.mxu0 %v3308
        %4202 = vmatprep.subr.mxu0 %v3313
        %4203 = vmatpush1.msra.mxu0 %v3312
        %4204 = vmatprep.subr.mxu0 %v3317
        %4205 = vmatpush1.msra.mxu0 %v3316
        %4206 = vmatprep.subr.mxu0 %v3321
        %4207 = vmatpush1.msra.mxu0 %v3320
        %4208 = vmatprep.subr.mxu0 %v3325
        %4209 = vmatpush1.msra.mxu0 %v3324
        %4210 = vmatprep.subr.mxu0 %v3329
        %4211 = vmatpush1.msra.mxu0 %v3328
        %4212 = vmatprep.subr.mxu0 %v3333
        %4213 = vmatpush1.msra.mxu0 %v3332
        %4214 = vmatprep.subr.mxu0 %v3337
        %4215 = vmatpush1.msra.mxu0 %v3336
        %4216 = vmatprep.subr.mxu0 %v3341
        %4217 = vmatpush1.msra.mxu0 %v3340
        %4218 = vmatprep.subr.mxu0 %v3345
        %4219 = vmatpush1.msra.mxu0 %v3344
        %4220 = vmatprep.subr.mxu0 %v3349
        %4221 = vmatpush1.msra.mxu0 %v3348
        %4222 = vmatprep.subr.mxu0 %v3353
        %4223 = vmatpush1.msra.mxu0 %v3352
        %4224 = vmatprep.subr.mxu0 %v3357
        %4225 = vmatpush1.msra.mxu0 %v3356
        %4226 = vmatprep.subr.mxu0 %v3361
        %4227 = vmatpush1.msra.mxu0 %v3360
        %4228 = vmatprep.subr.mxu0 %v3365
        %4229 = vmatpush1.msra.mxu0 %v3364
        %4230 = vmatprep.subr.mxu0 %v3369
        %4231 = vmatpush1.msra.mxu0 %v3368
        %4232 = vmatprep.subr.mxu0 %v3373
        %4233 = vmatpush1.msra.mxu0 %v3372
        %4234 = vmatprep.subr.mxu0 %v3377
        %4235 = vmatpush1.msra.mxu0 %v3376
        %4236 = vmatprep.subr.mxu0 %v3381
        %4237 = vmatpush1.msra.mxu0 %v3380
        %4238 = vmatprep.subr.mxu0 %v3385
        %4239 = vmatpush1.msra.mxu0 %v3384
        %4240 = vmatprep.subr.mxu0 %v3389
        %4241 = vmatpush1.msra.mxu0 %v3388
        %4242 = vmatprep.subr.mxu0 %v3393
        %4243 = vmatpush1.msra.mxu0 %v3392
        %4244 = vmatprep.subr.mxu0 %v3397
        %4245 = vmatpush1.msra.mxu0 %v3396
        %4246 = vmatprep.subr.mxu0 %v3401
        %4247 = vmatpush1.msra.mxu0 %v3400
        %4248 = vmatprep.subr.mxu0 %v3405
        %4249 = vmatpush1.msra.mxu0 %v3404
        %4250 = vmatprep.subr.mxu0 %v3409
        %4251 = vmatpush1.msra.mxu0 %v3408
        %4252 = vmatprep.subr.mxu0 %v3413
        %4253 = vmatpush1.msra.mxu0 %v3412
        %4254 = vmatprep.mubr.f32.mxu0 %v3257
        %4255 = vmatmul.mubr.f32.gmra.mrb[0].mxu0 %v3256
        %v4256 = vpop.f32.mrb[0].mxu0
        %v4257 = vadd.f32 0.0, %v4256
        %v4258 = vpop.f32.mrb[0].mxu0
        %v4259 = vadd.f32 0.0, %v4258
        %4260 = vmatprep.mubr.f32.mxu0 %v3273
        %4261 = vmatmul.mubr.f32.gmra.mrb[0].mxu0 %v3272
        %v4262 = vpop.f32.mrb[0].mxu0
        %v4263 = vadd.f32 0.0, %v4262
        %v4264 = vpop.f32.mrb[0].mxu0
        %v4265 = vadd.f32 0.0, %v4264
        %4266 = vdwg.mxu0
        %v4267 = vmul.f32 %v4180, %v3414
        %v4268 = vmul.f32 %v4182, %v3415
        %v4269 = vmul.f32 %v4257, %v3416
        %v4270 = vmul.f32 %v4259, %v3417
        %v4271 = vmul.f32 %v4186, %v3418
        %v4272 = vmul.f32 %v4188, %v3419
        %v4273 = vmul.f32 %v4263, %v3420
        %v4274 = vmul.f32 %v4265, %v3421
        %v4276 = vsel %vm3659, %v4271, 0
        %v4279 = vsel %vm3659, %v4272, 0
        %v4282 = vsel %vm3659, %v4273, 0
        %v4285 = vsel %vm3659, %v4274, 0
        %4287 = vmatprep.subr.mxu0 %v4268
        %4288 = vmatpush1.msra.mxu0 %v4267
        %4289 = vmatprep.subr.mxu0 %v4279
        %4290 = vmatpush1.msra.mxu0 %v4276
        %4291 = vmatprep.subr.mxu0 0.0
        %4292 = vmatpush1.msra.mxu0 0.0
        %4293 = vmatprep.subr.mxu0 0.0
        %4294 = vmatpush1.msra.mxu0 0.0
        %4295 = vmatprep.subr.mxu0 0.0
        %4296 = vmatpush1.msra.mxu0 0.0
        %4297 = vmatprep.subr.mxu0 0.0
        %4298 = vmatpush1.msra.mxu0 0.0
        %4299 = vmatprep.subr.mxu0 0.0
        %4300 = vmatpush1.msra.mxu0 0.0
        %4301 = vmatprep.subr.mxu0 0.0
        %4302 = vmatpush1.msra.mxu0 0.0
        %4303 = vmatprep.subr.mxu0 0.0
        %4304 = vmatpush1.msra.mxu0 0.0
        %4305 = vmatprep.subr.mxu0 0.0
        %4306 = vmatpush1.msra.mxu0 0.0
        %4307 = vmatprep.subr.mxu0 0.0
        %4308 = vmatpush1.msra.mxu0 0.0
        %4309 = vmatprep.subr.mxu0 0.0
        %4310 = vmatpush1.msra.mxu0 0.0
        %4311 = vmatprep.subr.mxu0 0.0
        %4312 = vmatpush1.msra.mxu0 0.0
        %4313 = vmatprep.subr.mxu0 0.0
        %4314 = vmatpush1.msra.mxu0 0.0
        %4315 = vmatprep.subr.mxu0 0.0
        %4316 = vmatpush1.msra.mxu0 0.0
        %4317 = vmatprep.subr.mxu0 0.0
        %4318 = vmatpush1.msra.mxu0 0.0
        %4319 = vmatprep.subr.mxu0 0.0
        %4320 = vmatpush1.msra.mxu0 0.0
        %4321 = vmatprep.subr.mxu0 0.0
        %4322 = vmatpush1.msra.mxu0 0.0
        %4323 = vmatprep.subr.mxu0 0.0
        %4324 = vmatpush1.msra.mxu0 0.0
        %4325 = vmatprep.subr.mxu0 0.0
        %4326 = vmatpush1.msra.mxu0 0.0
        %4327 = vmatprep.subr.mxu0 0.0
        %4328 = vmatpush1.msra.mxu0 0.0
        %4329 = vmatprep.subr.mxu0 0.0
        %4330 = vmatpush1.msra.mxu0 0.0
        %4331 = vmatprep.subr.mxu0 0.0
        %4332 = vmatpush1.msra.mxu0 0.0
        %4333 = vmatprep.subr.mxu0 0.0
        %4334 = vmatpush1.msra.mxu0 0.0
        %4335 = vmatprep.subr.mxu0 0.0
        %4336 = vmatpush1.msra.mxu0 0.0
        %4337 = vmatprep.subr.mxu0 0.0
        %4338 = vmatpush1.msra.mxu0 0.0
        %4339 = vmatprep.subr.mxu0 0.0
        %4340 = vmatpush1.msra.mxu0 0.0
        %4341 = vmatprep.subr.mxu0 0.0
        %4342 = vmatpush1.msra.mxu0 0.0
        %4343 = vmatprep.subr.mxu0 0.0
        %4344 = vmatpush1.msra.mxu0 0.0
        %4345 = vmatprep.subr.mxu0 0.0
        %4346 = vmatpush1.msra.mxu0 0.0
        %4347 = vmatprep.subr.mxu0 0.0
        %4348 = vmatpush1.msra.mxu0 0.0
        %4349 = vmatprep.subr.mxu0 0.0
        %4350 = vmatpush1.msra.mxu0 0.0
        %4351 = vmatprep.mubr.f32.mxu0 0.0
        %4352 = vmatmul.mubr.f32.gmra.mrb[0].mxu0 %v3657
        %v4353 = vpop.f32.mrb[0].mxu0
        %v4354 = vadd.f32 0.0, %v4353
        %v4355 = vpop.f32.mrb[0].mxu0
        %v4356 = vadd.f32 0.0, %v4355
        %4357 = vdwg.mxu0
        %4358 = vmatprep.subr.mxu0 %v4270
        %4359 = vmatpush1.msra.mxu0 %v4269
        %4360 = vmatprep.subr.mxu0 %v4285
        %4361 = vmatpush1.msra.mxu0 %v4282
        %4362 = vmatprep.subr.mxu0 0.0
        %4363 = vmatpush1.msra.mxu0 0.0
        %4364 = vmatprep.subr.mxu0 0.0
        %4365 = vmatpush1.msra.mxu0 0.0
        %4366 = vmatprep.subr.mxu0 0.0
        %4367 = vmatpush1.msra.mxu0 0.0
        %4368 = vmatprep.subr.mxu0 0.0
        %4369 = vmatpush1.msra.mxu0 0.0
        %4370 = vmatprep.subr.mxu0 0.0
        %4371 = vmatpush1.msra.mxu0 0.0
        %4372 = vmatprep.subr.mxu0 0.0
        %4373 = vmatpush1.msra.mxu0 0.0
        %4374 = vmatprep.subr.mxu0 0.0
        %4375 = vmatpush1.msra.mxu0 0.0
        %4376 = vmatprep.subr.mxu0 0.0
        %4377 = vmatpush1.msra.mxu0 0.0
        %4378 = vmatprep.subr.mxu0 0.0
        %4379 = vmatpush1.msra.mxu0 0.0
        %4380 = vmatprep.subr.mxu0 0.0
        %4381 = vmatpush1.msra.mxu0 0.0
        %4382 = vmatprep.subr.mxu0 0.0
        %4383 = vmatpush1.msra.mxu0 0.0
        %4384 = vmatprep.subr.mxu0 0.0
        %4385 = vmatpush1.msra.mxu0 0.0
        %4386 = vmatprep.subr.mxu0 0.0
        %4387 = vmatpush1.msra.mxu0 0.0
        %4388 = vmatprep.subr.mxu0 0.0
        %4389 = vmatpush1.msra.mxu0 0.0
        %4390 = vmatprep.subr.mxu0 0.0
        %4391 = vmatpush1.msra.mxu0 0.0
        %4392 = vmatprep.subr.mxu0 0.0
        %4393 = vmatpush1.msra.mxu0 0.0
        %4394 = vmatprep.subr.mxu0 0.0
        %4395 = vmatpush1.msra.mxu0 0.0
        %4396 = vmatprep.subr.mxu0 0.0
        %4397 = vmatpush1.msra.mxu0 0.0
        %4398 = vmatprep.subr.mxu0 0.0
        %4399 = vmatpush1.msra.mxu0 0.0
        %4400 = vmatprep.subr.mxu0 0.0
        %4401 = vmatpush1.msra.mxu0 0.0
        %4402 = vmatprep.subr.mxu0 0.0
        %4403 = vmatpush1.msra.mxu0 0.0
        %4404 = vmatprep.subr.mxu0 0.0
        %4405 = vmatpush1.msra.mxu0 0.0
        %4406 = vmatprep.subr.mxu0 0.0
        %4407 = vmatpush1.msra.mxu0 0.0
        %4408 = vmatprep.subr.mxu0 0.0
        %4409 = vmatpush1.msra.mxu0 0.0
        %4410 = vmatprep.subr.mxu0 0.0
        %4411 = vmatpush1.msra.mxu0 0.0
        %4412 = vmatprep.subr.mxu0 0.0
        %4413 = vmatpush1.msra.mxu0 0.0
        %4414 = vmatprep.subr.mxu0 0.0
        %4415 = vmatpush1.msra.mxu0 0.0
        %4416 = vmatprep.subr.mxu0 0.0
        %4417 = vmatpush1.msra.mxu0 0.0
        %4418 = vmatprep.subr.mxu0 0.0
        %4419 = vmatpush1.msra.mxu0 0.0
        %4420 = vmatprep.subr.mxu0 0.0
        %4421 = vmatpush1.msra.mxu0 0.0
        %4422 = vmatprep.mubr.f32.mxu0 0.0
        %4423 = vmatmul.mubr.f32.gmra.mrb[0].mxu0 %v3657
        %v4424 = vpop.f32.mrb[0].mxu0
        %v4425 = vadd.f32 0.0, %v4424
        %v4426 = vpop.f32.mrb[0].mxu0
        %v4427 = vadd.f32 0.0, %v4426
        %4428 = vdwg.mxu0
        %v4430 = vsel %vm3814, %v4427, 0
        %4432 = vmatprep.subr.mxu0 0.0
        %4433 = vmatpush1.msra.mxu0 %v3422
        %4434 = vmatprep.subr.mxu0 0.0
        %4435 = vmatpush1.msra.mxu0 %v3423
        %4436 = vmatprep.subr.mxu0 0.0
        %4437 = vmatpush1.msra.mxu0 %v3424
        %4438 = vmatprep.subr.mxu0 0.0
        %4439 = vmatpush1.msra.mxu0 %v3425
        %4440 = vmatprep.subr.mxu0 0.0
        %4441 = vmatpush1.msra.mxu0 %v3426
        %4442 = vmatprep.subr.mxu0 0.0
        %4443 = vmatpush1.msra.mxu0 %v3427
        %4444 = vmatprep.subr.mxu0 0.0
        %4445 = vmatpush1.msra.mxu0 %v3428
        %4446 = vmatprep.subr.mxu0 0.0
        %4447 = vmatpush1.msra.mxu0 %v3429
        %4448 = vmatprep.subr.mxu0 0.0
        %4449 = vmatpush1.msra.mxu0 %v3430
        %4450 = vmatprep.subr.mxu0 0.0
        %4451 = vmatpush1.msra.mxu0 %v3431
        %4452 = vmatprep.subr.mxu0 0.0
        %4453 = vmatpush1.msra.mxu0 %v3432
        %4454 = vmatprep.subr.mxu0 0.0
        %4455 = vmatpush1.msra.mxu0 %v3433
        %4456 = vmatprep.subr.mxu0 0.0
        %4457 = vmatpush1.msra.mxu0 %v3434
        %4458 = vmatprep.subr.mxu0 0.0
        %4459 = vmatpush1.msra.mxu0 %v3435
        %4460 = vmatprep.subr.mxu0 0.0
        %4461 = vmatpush1.msra.mxu0 %v3436
        %4462 = vmatprep.subr.mxu0 0.0
        %4463 = vmatpush1.msra.mxu0 %v3437
        %4464 = vmatprep.subr.mxu0 0.0
        %4465 = vmatpush1.msra.mxu0 %v3438
        %4466 = vmatprep.subr.mxu0 0.0
        %4467 = vmatpush1.msra.mxu0 %v3439
        %4468 = vmatprep.subr.mxu0 0.0
        %4469 = vmatpush1.msra.mxu0 %v3440
        %4470 = vmatprep.subr.mxu0 0.0
        %4471 = vmatpush1.msra.mxu0 %v3441
        %4472 = vmatprep.subr.mxu0 0.0
        %4473 = vmatpush1.msra.mxu0 %v3442
        %4474 = vmatprep.subr.mxu0 0.0
        %4475 = vmatpush1.msra.mxu0 %v3443
        %4476 = vmatprep.subr.mxu0 0.0
        %4477 = vmatpush1.msra.mxu0 %v3444
        %4478 = vmatprep.subr.mxu0 0.0
        %4479 = vmatpush1.msra.mxu0 %v3445
        %4480 = vmatprep.subr.mxu0 0.0
        %4481 = vmatpush1.msra.mxu0 %v3446
        %4482 = vmatprep.subr.mxu0 0.0
        %4483 = vmatpush1.msra.mxu0 %v3447
        %4484 = vmatprep.subr.mxu0 0.0
        %4485 = vmatpush1.msra.mxu0 %v3448
        %4486 = vmatprep.subr.mxu0 0.0
        %4487 = vmatpush1.msra.mxu0 %v3449
        %4488 = vmatprep.subr.mxu0 0.0
        %4489 = vmatpush1.msra.mxu0 %v3450
        %4490 = vmatprep.subr.mxu0 0.0
        %4491 = vmatpush1.msra.mxu0 %v3451
        %4492 = vmatprep.subr.mxu0 0.0
        %4493 = vmatpush1.msra.mxu0 %v3452
        %4494 = vmatprep.subr.mxu0 0.0
        %4495 = vmatpush1.msra.mxu0 %v3453
        %4496 = vmatprep.mubr.f32.mxu0 %v4356
        %4497 = vmatmul.mubr.f32.gmra.mrb[0].mxu0 %v4354
        %v4498 = vpop.f32.mrb[0].mxu0
        %v4499 = vadd.f32 %v3482, %v4498
        %v4500 = vpop.f32.mrb[0].mxu0
        %4501 = vdwg.mxu0
        %4502 = vmatprep.subr.mxu0 0.0
        %4503 = vmatpush1.msra.mxu0 %v3454
        %4504 = vmatprep.subr.mxu0 0.0
        %4505 = vmatpush1.msra.mxu0 %v3455
        %4506 = vmatprep.subr.mxu0 0.0
        %4507 = vmatpush1.msra.mxu0 %v3456
        %4508 = vmatprep.subr.mxu0 0.0
        %4509 = vmatpush1.msra.mxu0 %v3457
        %4510 = vmatprep.subr.mxu0 0.0
        %4511 = vmatpush1.msra.mxu0 %v3458
        %4512 = vmatprep.subr.mxu0 0.0
        %4513 = vmatpush1.msra.mxu0 %v3459
        %4514 = vmatprep.subr.mxu0 0.0
        %4515 = vmatpush1.msra.mxu0 %v3460
        %4516 = vmatprep.subr.mxu0 0.0
        %4517 = vmatpush1.msra.mxu0 %v3461
        %4518 = vmatprep.subr.mxu0 0.0
        %4519 = vmatpush1.msra.mxu0 %v3462
        %4520 = vmatprep.subr.mxu0 0.0
        %4521 = vmatpush1.msra.mxu0 %v3463
        %4522 = vmatprep.subr.mxu0 0.0
        %4523 = vmatpush1.msra.mxu0 %v3464
        %4524 = vmatprep.subr.mxu0 0.0
        %4525 = vmatpush1.msra.mxu0 %v3465
        %4526 = vmatprep.subr.mxu0 0.0
        %4527 = vmatpush1.msra.mxu0 %v3466
        %4528 = vmatprep.subr.mxu0 0.0
        %4529 = vmatpush1.msra.mxu0 %v3467
        %4530 = vmatprep.subr.mxu0 0.0
        %4531 = vmatpush1.msra.mxu0 %v3468
        %4532 = vmatprep.subr.mxu0 0.0
        %4533 = vmatpush1.msra.mxu0 %v3469
        %4534 = vmatprep.subr.mxu0 0.0
        %4535 = vmatpush1.msra.mxu0 %v3470
        %4536 = vmatprep.subr.mxu0 0.0
        %4537 = vmatpush1.msra.mxu0 %v3471
        %4538 = vmatprep.subr.mxu0 0.0
        %4539 = vmatpush1.msra.mxu0 %v3472
        %4540 = vmatprep.subr.mxu0 0.0
        %4541 = vmatpush1.msra.mxu0 %v3473
        %4542 = vmatprep.subr.mxu0 0.0
        %4543 = vmatpush1.msra.mxu0 %v3474
        %4544 = vmatprep.subr.mxu0 0.0
        %4545 = vmatpush1.msra.mxu0 %v3475
        %4546 = vmatprep.subr.mxu0 0.0
        %4547 = vmatpush1.msra.mxu0 %v3476
        %4548 = vmatprep.subr.mxu0 0.0
        %4549 = vmatpush1.msra.mxu0 %v3477
        %4550 = vmatprep.subr.mxu0 0.0
        %4551 = vmatpush1.msra.mxu0 %v3478
        %4552 = vmatprep.subr.mxu0 0.0
        %4553 = vmatpush1.msra.mxu0 %v3479
        %4554 = vmatprep.subr.mxu0 0.0
        %4555 = vmatpush1.msra.mxu0 %v3480
        %4556 = vmatprep.subr.mxu0 0.0
        %4557 = vmatpush1.msra.mxu0 %v3481
        %4558 = vmatprep.subr.mxu0 0.0
        %4559 = vmatpush1.msra.mxu0 0.0
        %4560 = vmatprep.subr.mxu0 0.0
        %4561 = vmatpush1.msra.mxu0 0.0
        %4562 = vmatprep.subr.mxu0 0.0
        %4563 = vmatpush1.msra.mxu0 0.0
        %4564 = vmatprep.subr.mxu0 0.0
        %4565 = vmatpush1.msra.mxu0 0.0
        %4566 = vmatprep.mubr.f32.mxu0 %v4430
        %4567 = vmatmul.mubr.f32.gmra.mrb[0].mxu0 %v4425
        %v4568 = vpop.f32.mrb[0].mxu0
        %v4569 = vadd.f32 %v4499, %v4568
        %v4570 = vpop.f32.mrb[0].mxu0
        %4571 = vdwg.mxu0
        %v4572 = vmax.f32 %v4569, 0.0
        %v4574 = vsel %vm643, %v4572, 0
        %4576 = vmatprep.subr.mxu0 0.0
        %4577 = vmatpush1.msra.mxu0 %v3483
        %4578 = vmatprep.subr.mxu0 0.0
        %4579 = vmatpush1.msra.mxu0 %v3484
        %4580 = vmatprep.subr.mxu0 0.0
        %4581 = vmatpush1.msra.mxu0 %v3485
        %4582 = vmatprep.subr.mxu0 0.0
        %4583 = vmatpush1.msra.mxu0 %v3486
        %4584 = vmatprep.subr.mxu0 0.0
        %4585 = vmatpush1.msra.mxu0 0.0
        %4586 = vmatprep.subr.mxu0 0.0
        %4587 = vmatpush1.msra.mxu0 0.0
        %4588 = vmatprep.subr.mxu0 0.0
        %4589 = vmatpush1.msra.mxu0 0.0
        %4590 = vmatprep.subr.mxu0 0.0
        %4591 = vmatpush1.msra.mxu0 0.0
        %4592 = vmatprep.subr.mxu0 0.0
        %4593 = vmatpush1.msra.mxu0 0.0
        %4594 = vmatprep.subr.mxu0 0.0
        %4595 = vmatpush1.msra.mxu0 0.0
        %4596 = vmatprep.subr.mxu0 0.0
        %4597 = vmatpush1.msra.mxu0 0.0
        %4598 = vmatprep.subr.mxu0 0.0
        %4599 = vmatpush1.msra.mxu0 0.0
        %4600 = vmatprep.subr.mxu0 0.0
        %4601 = vmatpush1.msra.mxu0 0.0
        %4602 = vmatprep.subr.mxu0 0.0
        %4603 = vmatpush1.msra.mxu0 0.0
        %4604 = vmatprep.subr.mxu0 0.0
        %4605 = vmatpush1.msra.mxu0 0.0
        %4606 = vmatprep.subr.mxu0 0.0
        %4607 = vmatpush1.msra.mxu0 0.0
        %4608 = vmatprep.subr.mxu0 0.0
        %4609 = vmatpush1.msra.mxu0 0.0
        %4610 = vmatprep.subr.mxu0 0.0
        %4611 = vmatpush1.msra.mxu0 0.0
        %4612 = vmatprep.subr.mxu0 0.0
        %4613 = vmatpush1.msra.mxu0 0.0
        %4614 = vmatprep.subr.mxu0 0.0
        %4615 = vmatpush1.msra.mxu0 0.0
        %4616 = vmatprep.subr.mxu0 0.0
        %4617 = vmatpush1.msra.mxu0 0.0
        %4618 = vmatprep.subr.mxu0 0.0
        %4619 = vmatpush1.msra.mxu0 0.0
        %4620 = vmatprep.subr.mxu0 0.0
        %4621 = vmatpush1.msra.mxu0 0.0
        %4622 = vmatprep.subr.mxu0 0.0
        %4623 = vmatpush1.msra.mxu0 0.0
        %4624 = vmatprep.subr.mxu0 0.0
        %4625 = vmatpush1.msra.mxu0 0.0
        %4626 = vmatprep.subr.mxu0 0.0
        %4627 = vmatpush1.msra.mxu0 0.0
        %4628 = vmatprep.subr.mxu0 0.0
        %4629 = vmatpush1.msra.mxu0 0.0
        %4630 = vmatprep.subr.mxu0 0.0
        %4631 = vmatpush1.msra.mxu0 0.0
        %4632 = vmatprep.subr.mxu0 0.0
        %4633 = vmatpush1.msra.mxu0 0.0
        %4634 = vmatprep.subr.mxu0 0.0
        %4635 = vmatpush1.msra.mxu0 0.0
        %4636 = vmatprep.subr.mxu0 0.0
        %4637 = vmatpush1.msra.mxu0 0.0
        %4638 = vmatprep.subr.mxu0 0.0
        %4639 = vmatpush1.msra.mxu0 0.0
        %4640 = vmatprep.mubr.f32.mxu0 0.0
        %4641 = vmatmul.mubr.f32.gmra.mrb[0].mxu0 %v4574
        %v4642 = vpop.f32.mrb[0].mxu0
        %v4643 = vadd.f32 %v3487, %v4642
        %v4644 = vpop.f32.mrb[0].mxu0
        %4645 = vdwg.mxu0
        %v4646 = vmax.f32 %v4643, 0.0
        %v4648 = vsel %vm4033, %v4646, 0
        %4650 = vmatprep.subr.mxu0 0.0
        %4651 = vmatpush1.msra.mxu0 %v3488
        %4652 = vmatprep.subr.mxu0 0.0
        %4653 = vmatpush1.msra.mxu0 %v3489
        %4654 = vmatprep.subr.mxu0 0.0
        %4655 = vmatpush1.msra.mxu0 %v3490
        %4656 = vmatprep.subr.mxu0 0.0
        %4657 = vmatpush1.msra.mxu0 %v4039
        %4658 = vmatprep.subr.mxu0 0.0
        %4659 = vmatpush1.msra.mxu0 0.0
        %4660 = vmatprep.subr.mxu0 0.0
        %4661 = vmatpush1.msra.mxu0 0.0
        %4662 = vmatprep.subr.mxu0 0.0
        %4663 = vmatpush1.msra.mxu0 0.0
        %4664 = vmatprep.subr.mxu0 0.0
        %4665 = vmatpush1.msra.mxu0 0.0
        %4666 = vmatprep.subr.mxu0 0.0
        %4667 = vmatpush1.msra.mxu0 0.0
        %4668 = vmatprep.subr.mxu0 0.0
        %4669 = vmatpush1.msra.mxu0 0.0
        %4670 = vmatprep.subr.mxu0 0.0
        %4671 = vmatpush1.msra.mxu0 0.0
        %4672 = vmatprep.subr.mxu0 0.0
        %4673 = vmatpush1.msra.mxu0 0.0
        %4674 = vmatprep.subr.mxu0 0.0
        %4675 = vmatpush1.msra.mxu0 0.0
        %4676 = vmatprep.subr.mxu0 0.0
        %4677 = vmatpush1.msra.mxu0 0.0
        %4678 = vmatprep.subr.mxu0 0.0
        %4679 = vmatpush1.msra.mxu0 0.0
        %4680 = vmatprep.subr.mxu0 0.0
        %4681 = vmatpush1.msra.mxu0 0.0
        %4682 = vmatprep.subr.mxu0 0.0
        %4683 = vmatpush1.msra.mxu0 0.0
        %4684 = vmatprep.subr.mxu0 0.0
        %4685 = vmatpush1.msra.mxu0 0.0
        %4686 = vmatprep.subr.mxu0 0.0
        %4687 = vmatpush1.msra.mxu0 0.0
        %4688 = vmatprep.subr.mxu0 0.0
        %4689 = vmatpush1.msra.mxu0 0.0
        %4690 = vmatprep.subr.mxu0 0.0
        %4691 = vmatpush1.msra.mxu0 0.0
        %4692 = vmatprep.subr.mxu0 0.0
        %4693 = vmatpush1.msra.mxu0 0.0
        %4694 = vmatprep.subr.mxu0 0.0
        %4695 = vmatpush1.msra.mxu0 0.0
        %4696 = vmatprep.subr.mxu0 0.0
        %4697 = vmatpush1.msra.mxu0 0.0
        %4698 = vmatprep.subr.mxu0 0.0
        %4699 = vmatpush1.msra.mxu0 0.0
        %4700 = vmatprep.subr.mxu0 0.0
        %4701 = vmatpush1.msra.mxu0 0.0
        %4702 = vmatprep.subr.mxu0 0.0
        %4703 = vmatpush1.msra.mxu0 0.0
        %4704 = vmatprep.subr.mxu0 0.0
        %4705 = vmatpush1.msra.mxu0 0.0
        %4706 = vmatprep.subr.mxu0 0.0
        %4707 = vmatpush1.msra.mxu0 0.0
        %4708 = vmatprep.subr.mxu0 0.0
        %4709 = vmatpush1.msra.mxu0 0.0
        %4710 = vmatprep.subr.mxu0 0.0
        %4711 = vmatpush1.msra.mxu0 0.0
        %4712 = vmatprep.subr.mxu0 0.0
        %4713 = vmatpush1.msra.mxu0 0.0
        %4714 = vmatprep.mubr.f32.mxu0 0.0
        %4715 = vmatmul.mubr.f32.gmra.mrb[0].mxu0 %v4648
        %v4716 = vpop.f32.mrb[0].mxu0
        %v4717 = vadd.f32 %v3492, %v4716
        %v4718 = vpop.f32.mrb[0].mxu0
        %4719 = vdwg.mxu0
        %4720 = vst.msk [vmem:[%s379 + $0x1] sm:$0x1] %vm4111, %v4717
        %4721 = vmatprep.subr.mxu0 %v3287
        %4722 = vmatpush1.msra.mxu0 %v3286
        %4723 = vmatprep.subr.mxu0 %v3291
        %4724 = vmatpush1.msra.mxu0 %v3290
        %4725 = vmatprep.subr.mxu0 %v3295
        %4726 = vmatpush1.msra.mxu0 %v3294
        %4727 = vmatprep.subr.mxu0 %v3299
        %4728 = vmatpush1.msra.mxu0 %v3298
        %4729 = vmatprep.subr.mxu0 %v3303
        %4730 = vmatpush1.msra.mxu0 %v3302
        %4731 = vmatprep.subr.mxu0 %v3307
        %4732 = vmatpush1.msra.mxu0 %v3306
        %4733 = vmatprep.subr.mxu0 %v3311
        %4734 = vmatpush1.msra.mxu0 %v3310
        %4735 = vmatprep.subr.mxu0 %v3315
        %4736 = vmatpush1.msra.mxu0 %v3314
        %4737 = vmatprep.subr.mxu0 %v3319
        %4738 = vmatpush1.msra.mxu0 %v3318
        %4739 = vmatprep.subr.mxu0 %v3323
        %4740 = vmatpush1.msra.mxu0 %v3322
        %4741 = vmatprep.subr.mxu0 %v3327
        %4742 = vmatpush1.msra.mxu0 %v3326
        %4743 = vmatprep.subr.mxu0 %v3331
        %4744 = vmatpush1.msra.mxu0 %v3330
        %4745 = vmatprep.subr.mxu0 %v3335
        %4746 = vmatpush1.msra.mxu0 %v3334
        %4747 = vmatprep.subr.mxu0 %v3339
        %4748 = vmatpush1.msra.mxu0 %v3338
        %4749 = vmatprep.subr.mxu0 %v3343
        %4750 = vmatpush1.msra.mxu0 %v3342
        %4751 = vmatprep.subr.mxu0 %v3347
        %4752 = vmatpush1.msra.mxu0 %v3346
        %4753 = vmatprep.subr.mxu0 %v3351
        %4754 = vmatpush1.msra.mxu0 %v3350
        %4755 = vmatprep.subr.mxu0 %v3355
        %4756 = vmatpush1.msra.mxu0 %v3354
        %4757 = vmatprep.subr.mxu0 %v3359
        %4758 = vmatpush1.msra.mxu0 %v3358
        %4759 = vmatprep.subr.mxu0 %v3363
        %4760 = vmatpush1.msra.mxu0 %v3362
        %4761 = vmatprep.subr.mxu0 %v3367
        %4762 = vmatpush1.msra.mxu0 %v3366
        %4763 = vmatprep.subr.mxu0 %v3371
        %4764 = vmatpush1.msra.mxu0 %v3370
        %4765 = vmatprep.subr.mxu0 %v3375
        %4766 = vmatpush1.msra.mxu0 %v3374
        %4767 = vmatprep.subr.mxu0 %v3379
        %4768 = vmatpush1.msra.mxu0 %v3378
        %4769 = vmatprep.subr.mxu0 %v3383
        %4770 = vmatpush1.msra.mxu0 %v3382
        %4771 = vmatprep.subr.mxu0 %v3387
        %4772 = vmatpush1.msra.mxu0 %v3386
        %4773 = vmatprep.subr.mxu0 %v3391
        %4774 = vmatpush1.msra.mxu0 %v3390
        %4775 = vmatprep.subr.mxu0 %v3395
        %4776 = vmatpush1.msra.mxu0 %v3394
        %4777 = vmatprep.subr.mxu0 %v3399
        %4778 = vmatpush1.msra.mxu0 %v3398
        %4779 = vmatprep.subr.mxu0 %v3403
        %4780 = vmatpush1.msra.mxu0 %v3402
        %4781 = vmatprep.subr.mxu0 %v3407
        %4782 = vmatpush1.msra.mxu0 %v3406
        %4783 = vmatprep.subr.mxu0 %v3411
        %4784 = vmatpush1.msra.mxu0 %v3410
        %4785 = vmatprep.mubr.f32.mxu0 %v3259
        %4786 = vmatmul.mubr.f32.gmra.mrb[0].mxu0 %v3258
        %v4787 = vpop.f32.mrb[0].mxu0
        %v4788 = vadd.f32 0.0, %v4787
        %v4789 = vpop.f32.mrb[0].mxu0
        %v4790 = vadd.f32 0.0, %v4789
        %4791 = vmatprep.mubr.f32.mxu0 %v3275
        %4792 = vmatmul.mubr.f32.gmra.mrb[0].mxu0 %v3274
        %v4793 = vpop.f32.mrb[0].mxu0
        %v4794 = vadd.f32 0.0, %v4793
        %v4795 = vpop.f32.mrb[0].mxu0
        %v4796 = vadd.f32 0.0, %v4795
        %4797 = vdwg.mxu0
        %4798 = vmatprep.subr.mxu0 %v3289
        %4799 = vmatpush1.msra.mxu0 %v3288
        %4800 = vmatprep.subr.mxu0 %v3293
        %4801 = vmatpush1.msra.mxu0 %v3292
        %4802 = vmatprep.subr.mxu0 %v3297
        %4803 = vmatpush1.msra.mxu0 %v3296
        %4804 = vmatprep.subr.mxu0 %v3301
        %4805 = vmatpush1.msra.mxu0 %v3300
        %4806 = vmatprep.subr.mxu0 %v3305
        %4807 = vmatpush1.msra.mxu0 %v3304
        %4808 = vmatprep.subr.mxu0 %v3309
        %4809 = vmatpush1.msra.mxu0 %v3308
        %4810 = vmatprep.subr.mxu0 %v3313
        %4811 = vmatpush1.msra.mxu0 %v3312
        %4812 = vmatprep.subr.mxu0 %v3317
        %4813 = vmatpush1.msra.mxu0 %v3316
        %4814 = vmatprep.subr.mxu0 %v3321
        %4815 = vmatpush1.msra.mxu0 %v3320
        %4816 = vmatprep.subr.mxu0 %v3325
        %4817 = vmatpush1.msra.mxu0 %v3324
        %4818 = vmatprep.subr.mxu0 %v3329
        %4819 = vmatpush1.msra.mxu0 %v3328
        %4820 = vmatprep.subr.mxu0 %v3333
        %4821 = vmatpush1.msra.mxu0 %v3332
        %4822 = vmatprep.subr.mxu0 %v3337
        %4823 = vmatpush1.msra.mxu0 %v3336
        %4824 = vmatprep.subr.mxu0 %v3341
        %4825 = vmatpush1.msra.mxu0 %v3340
        %4826 = vmatprep.subr.mxu0 %v3345
        %4827 = vmatpush1.msra.mxu0 %v3344
        %4828 = vmatprep.subr.mxu0 %v3349
        %4829 = vmatpush1.msra.mxu0 %v3348
        %4830 = vmatprep.subr.mxu0 %v3353
        %4831 = vmatpush1.msra.mxu0 %v3352
        %4832 = vmatprep.subr.mxu0 %v3357
        %4833 = vmatpush1.msra.mxu0 %v3356
        %4834 = vmatprep.subr.mxu0 %v3361
        %4835 = vmatpush1.msra.mxu0 %v3360
        %4836 = vmatprep.subr.mxu0 %v3365
        %4837 = vmatpush1.msra.mxu0 %v3364
        %4838 = vmatprep.subr.mxu0 %v3369
        %4839 = vmatpush1.msra.mxu0 %v3368
        %4840 = vmatprep.subr.mxu0 %v3373
        %4841 = vmatpush1.msra.mxu0 %v3372
        %4842 = vmatprep.subr.mxu0 %v3377
        %4843 = vmatpush1.msra.mxu0 %v3376
        %4844 = vmatprep.subr.mxu0 %v3381
        %4845 = vmatpush1.msra.mxu0 %v3380
        %4846 = vmatprep.subr.mxu0 %v3385
        %4847 = vmatpush1.msra.mxu0 %v3384
        %4848 = vmatprep.subr.mxu0 %v3389
        %4849 = vmatpush1.msra.mxu0 %v3388
        %4850 = vmatprep.subr.mxu0 %v3393
        %4851 = vmatpush1.msra.mxu0 %v3392
        %4852 = vmatprep.subr.mxu0 %v3397
        %4853 = vmatpush1.msra.mxu0 %v3396
        %4854 = vmatprep.subr.mxu0 %v3401
        %4855 = vmatpush1.msra.mxu0 %v3400
        %4856 = vmatprep.subr.mxu0 %v3405
        %4857 = vmatpush1.msra.mxu0 %v3404
        %4858 = vmatprep.subr.mxu0 %v3409
        %4859 = vmatpush1.msra.mxu0 %v3408
        %4860 = vmatprep.subr.mxu0 %v3413
        %4861 = vmatpush1.msra.mxu0 %v3412
        %4862 = vmatprep.mubr.f32.mxu0 %v3259
        %4863 = vmatmul.mubr.f32.gmra.mrb[0].mxu0 %v3258
        %v4864 = vpop.f32.mrb[0].mxu0
        %v4865 = vadd.f32 0.0, %v4864
        %v4866 = vpop.f32.mrb[0].mxu0
        %v4867 = vadd.f32 0.0, %v4866
        %4868 = vmatprep.mubr.f32.mxu0 %v3275
        %4869 = vmatmul.mubr.f32.gmra.mrb[0].mxu0 %v3274
        %v4870 = vpop.f32.mrb[0].mxu0
        %v4871 = vadd.f32 0.0, %v4870
        %v4872 = vpop.f32.mrb[0].mxu0
        %v4873 = vadd.f32 0.0, %v4872
        %4874 = vdwg.mxu0
        %v4875 = vmul.f32 %v4788, %v3414
        %v4876 = vmul.f32 %v4790, %v3415
        %v4877 = vmul.f32 %v4865, %v3416
        %v4878 = vmul.f32 %v4867, %v3417
        %v4879 = vmul.f32 %v4794, %v3418
        %v4880 = vmul.f32 %v4796, %v3419
        %v4881 = vmul.f32 %v4871, %v3420
        %v4882 = vmul.f32 %v4873, %v3421
        %v4884 = vsel %vm3659, %v4879, 0
        %v4887 = vsel %vm3659, %v4880, 0
        %v4890 = vsel %vm3659, %v4881, 0
        %v4893 = vsel %vm3659, %v4882, 0
        %4895 = vmatprep.subr.mxu0 %v4876
        %4896 = vmatpush1.msra.mxu0 %v4875
        %4897 = vmatprep.subr.mxu0 %v4887
        %4898 = vmatpush1.msra.mxu0 %v4884
        %4899 = vmatprep.subr.mxu0 0.0
        %4900 = vmatpush1.msra.mxu0 0.0
        %4901 = vmatprep.subr.mxu0 0.0
        %4902 = vmatpush1.msra.mxu0 0.0
        %4903 = vmatprep.subr.mxu0 0.0
        %4904 = vmatpush1.msra.mxu0 0.0
        %4905 = vmatprep.subr.mxu0 0.0
        %4906 = vmatpush1.msra.mxu0 0.0
        %4907 = vmatprep.subr.mxu0 0.0
        %4908 = vmatpush1.msra.mxu0 0.0
        %4909 = vmatprep.subr.mxu0 0.0
        %4910 = vmatpush1.msra.mxu0 0.0
        %4911 = vmatprep.subr.mxu0 0.0
        %4912 = vmatpush1.msra.mxu0 0.0
        %4913 = vmatprep.subr.mxu0 0.0
        %4914 = vmatpush1.msra.mxu0 0.0
        %4915 = vmatprep.subr.mxu0 0.0
        %4916 = vmatpush1.msra.mxu0 0.0
        %4917 = vmatprep.subr.mxu0 0.0
        %4918 = vmatpush1.msra.mxu0 0.0
        %4919 = vmatprep.subr.mxu0 0.0
        %4920 = vmatpush1.msra.mxu0 0.0
        %4921 = vmatprep.subr.mxu0 0.0
        %4922 = vmatpush1.msra.mxu0 0.0
        %4923 = vmatprep.subr.mxu0 0.0
        %4924 = vmatpush1.msra.mxu0 0.0
        %4925 = vmatprep.subr.mxu0 0.0
        %4926 = vmatpush1.msra.mxu0 0.0
        %4927 = vmatprep.subr.mxu0 0.0
        %4928 = vmatpush1.msra.mxu0 0.0
        %4929 = vmatprep.subr.mxu0 0.0
        %4930 = vmatpush1.msra.mxu0 0.0
        %4931 = vmatprep.subr.mxu0 0.0
        %4932 = vmatpush1.msra.mxu0 0.0
        %4933 = vmatprep.subr.mxu0 0.0
        %4934 = vmatpush1.msra.mxu0 0.0
        %4935 = vmatprep.subr.mxu0 0.0
        %4936 = vmatpush1.msra.mxu0 0.0
        %4937 = vmatprep.subr.mxu0 0.0
        %4938 = vmatpush1.msra.mxu0 0.0
        %4939 = vmatprep.subr.mxu0 0.0
        %4940 = vmatpush1.msra.mxu0 0.0
        %4941 = vmatprep.subr.mxu0 0.0
        %4942 = vmatpush1.msra.mxu0 0.0
        %4943 = vmatprep.subr.mxu0 0.0
        %4944 = vmatpush1.msra.mxu0 0.0
        %4945 = vmatprep.subr.mxu0 0.0
        %4946 = vmatpush1.msra.mxu0 0.0
        %4947 = vmatprep.subr.mxu0 0.0
        %4948 = vmatpush1.msra.mxu0 0.0
        %4949 = vmatprep.subr.mxu0 0.0
        %4950 = vmatpush1.msra.mxu0 0.0
        %4951 = vmatprep.subr.mxu0 0.0
        %4952 = vmatpush1.msra.mxu0 0.0
        %4953 = vmatprep.subr.mxu0 0.0
        %4954 = vmatpush1.msra.mxu0 0.0
        %4955 = vmatprep.subr.mxu0 0.0
        %4956 = vmatpush1.msra.mxu0 0.0
        %4957 = vmatprep.subr.mxu0 0.0
        %4958 = vmatpush1.msra.mxu0 0.0
        %4959 = vmatprep.mubr.f32.mxu0 0.0
        %4960 = vmatmul.mubr.f32.gmra.mrb[0].mxu0 %v3657
        %v4961 = vpop.f32.mrb[0].mxu0
        %v4962 = vadd.f32 0.0, %v4961
        %v4963 = vpop.f32.mrb[0].mxu0
        %v4964 = vadd.f32 0.0, %v4963
        %4965 = vdwg.mxu0
        %4966 = vmatprep.subr.mxu0 %v4878
        %4967 = vmatpush1.msra.mxu0 %v4877
        %4968 = vmatprep.subr.mxu0 %v4893
        %4969 = vmatpush1.msra.mxu0 %v4890
        %4970 = vmatprep.subr.mxu0 0.0
        %4971 = vmatpush1.msra.mxu0 0.0
        %4972 = vmatprep.subr.mxu0 0.0
        %4973 = vmatpush1.msra.mxu0 0.0
        %4974 = vmatprep.subr.mxu0 0.0
        %4975 = vmatpush1.msra.mxu0 0.0
        %4976 = vmatprep.subr.mxu0 0.0
        %4977 = vmatpush1.msra.mxu0 0.0
        %4978 = vmatprep.subr.mxu0 0.0
        %4979 = vmatpush1.msra.mxu0 0.0
        %4980 = vmatprep.subr.mxu0 0.0
        %4981 = vmatpush1.msra.mxu0 0.0
        %4982 = vmatprep.subr.mxu0 0.0
        %4983 = vmatpush1.msra.mxu0 0.0
        %4984 = vmatprep.subr.mxu0 0.0
        %4985 = vmatpush1.msra.mxu0 0.0
        %4986 = vmatprep.subr.mxu0 0.0
        %4987 = vmatpush1.msra.mxu0 0.0
        %4988 = vmatprep.subr.mxu0 0.0
        %4989 = vmatpush1.msra.mxu0 0.0
        %4990 = vmatprep.subr.mxu0 0.0
        %4991 = vmatpush1.msra.mxu0 0.0
        %4992 = vmatprep.subr.mxu0 0.0
        %4993 = vmatpush1.msra.mxu0 0.0
        %4994 = vmatprep.subr.mxu0 0.0
        %4995 = vmatpush1.msra.mxu0 0.0
        %4996 = vmatprep.subr.mxu0 0.0
        %4997 = vmatpush1.msra.mxu0 0.0
        %4998 = vmatprep.subr.mxu0 0.0
        %4999 = vmatpush1.msra.mxu0 0.0
        %5000 = vmatprep.subr.mxu0 0.0
        %5001 = vmatpush1.msra.mxu0 0.0
        %5002 = vmatprep.subr.mxu0 0.0
        %5003 = vmatpush1.msra.mxu0 0.0
        %5004 = vmatprep.subr.mxu0 0.0
        %5005 = vmatpush1.msra.mxu0 0.0
        %5006 = vmatprep.subr.mxu0 0.0
        %5007 = vmatpush1.msra.mxu0 0.0
        %5008 = vmatprep.subr.mxu0 0.0
        %5009 = vmatpush1.msra.mxu0 0.0
        %5010 = vmatprep.subr.mxu0 0.0
        %5011 = vmatpush1.msra.mxu0 0.0
        %5012 = vmatprep.subr.mxu0 0.0
        %5013 = vmatpush1.msra.mxu0 0.0
        %5014 = vmatprep.subr.mxu0 0.0
        %5015 = vmatpush1.msra.mxu0 0.0
        %5016 = vmatprep.subr.mxu0 0.0
        %5017 = vmatpush1.msra.mxu0 0.0
        %5018 = vmatprep.subr.mxu0 0.0
        %5019 = vmatpush1.msra.mxu0 0.0
        %5020 = vmatprep.subr.mxu0 0.0
        %5021 = vmatpush1.msra.mxu0 0.0
        %5022 = vmatprep.subr.mxu0 0.0
        %5023 = vmatpush1.msra.mxu0 0.0
        %5024 = vmatprep.subr.mxu0 0.0
        %5025 = vmatpush1.msra.mxu0 0.0
        %5026 = vmatprep.subr.mxu0 0.0
        %5027 = vmatpush1.msra.mxu0 0.0
        %5028 = vmatprep.subr.mxu0 0.0
        %5029 = vmatpush1.msra.mxu0 0.0
        %5030 = vmatprep.mubr.f32.mxu0 0.0
        %5031 = vmatmul.mubr.f32.gmra.mrb[0].mxu0 %v3657
        %v5032 = vpop.f32.mrb[0].mxu0
        %v5033 = vadd.f32 0.0, %v5032
        %v5034 = vpop.f32.mrb[0].mxu0
        %v5035 = vadd.f32 0.0, %v5034
        %5036 = vdwg.mxu0
        %v5038 = vsel %vm3814, %v5035, 0
        %5040 = vmatprep.subr.mxu0 0.0
        %5041 = vmatpush1.msra.mxu0 %v3422
        %5042 = vmatprep.subr.mxu0 0.0
        %5043 = vmatpush1.msra.mxu0 %v3423
        %5044 = vmatprep.subr.mxu0 0.0
        %5045 = vmatpush1.msra.mxu0 %v3424
        %5046 = vmatprep.subr.mxu0 0.0
        %5047 = vmatpush1.msra.mxu0 %v3425
        %5048 = vmatprep.subr.mxu0 0.0
        %5049 = vmatpush1.msra.mxu0 %v3426
        %5050 = vmatprep.subr.mxu0 0.0
        %5051 = vmatpush1.msra.mxu0 %v3427
        %5052 = vmatprep.subr.mxu0 0.0
        %5053 = vmatpush1.msra.mxu0 %v3428
        %5054 = vmatprep.subr.mxu0 0.0
        %5055 = vmatpush1.msra.mxu0 %v3429
        %5056 = vmatprep.subr.mxu0 0.0
        %5057 = vmatpush1.msra.mxu0 %v3430
        %5058 = vmatprep.subr.mxu0 0.0
        %5059 = vmatpush1.msra.mxu0 %v3431
        %5060 = vmatprep.subr.mxu0 0.0
        %5061 = vmatpush1.msra.mxu0 %v3432
        %5062 = vmatprep.subr.mxu0 0.0
        %5063 = vmatpush1.msra.mxu0 %v3433
        %5064 = vmatprep.subr.mxu0 0.0
        %5065 = vmatpush1.msra.mxu0 %v3434
        %5066 = vmatprep.subr.mxu0 0.0
        %5067 = vmatpush1.msra.mxu0 %v3435
        %5068 = vmatprep.subr.mxu0 0.0
        %5069 = vmatpush1.msra.mxu0 %v3436
        %5070 = vmatprep.subr.mxu0 0.0
        %5071 = vmatpush1.msra.mxu0 %v3437
        %5072 = vmatprep.subr.mxu0 0.0
        %5073 = vmatpush1.msra.mxu0 %v3438
        %5074 = vmatprep.subr.mxu0 0.0
        %5075 = vmatpush1.msra.mxu0 %v3439
        %5076 = vmatprep.subr.mxu0 0.0
        %5077 = vmatpush1.msra.mxu0 %v3440
        %5078 = vmatprep.subr.mxu0 0.0
        %5079 = vmatpush1.msra.mxu0 %v3441
        %5080 = vmatprep.subr.mxu0 0.0
        %5081 = vmatpush1.msra.mxu0 %v3442
        %5082 = vmatprep.subr.mxu0 0.0
        %5083 = vmatpush1.msra.mxu0 %v3443
        %5084 = vmatprep.subr.mxu0 0.0
        %5085 = vmatpush1.msra.mxu0 %v3444
        %5086 = vmatprep.subr.mxu0 0.0
        %5087 = vmatpush1.msra.mxu0 %v3445
        %5088 = vmatprep.subr.mxu0 0.0
        %5089 = vmatpush1.msra.mxu0 %v3446
        %5090 = vmatprep.subr.mxu0 0.0
        %5091 = vmatpush1.msra.mxu0 %v3447
        %5092 = vmatprep.subr.mxu0 0.0
        %5093 = vmatpush1.msra.mxu0 %v3448
        %5094 = vmatprep.subr.mxu0 0.0
        %5095 = vmatpush1.msra.mxu0 %v3449
        %5096 = vmatprep.subr.mxu0 0.0
        %5097 = vmatpush1.msra.mxu0 %v3450
        %5098 = vmatprep.subr.mxu0 0.0
        %5099 = vmatpush1.msra.mxu0 %v3451
        %5100 = vmatprep.subr.mxu0 0.0
        %5101 = vmatpush1.msra.mxu0 %v3452
        %5102 = vmatprep.subr.mxu0 0.0
        %5103 = vmatpush1.msra.mxu0 %v3453
        %5104 = vmatprep.mubr.f32.mxu0 %v4964
        %5105 = vmatmul.mubr.f32.gmra.mrb[0].mxu0 %v4962
        %v5106 = vpop.f32.mrb[0].mxu0
        %v5107 = vadd.f32 %v3482, %v5106
        %v5108 = vpop.f32.mrb[0].mxu0
        %5109 = vdwg.mxu0
        %5110 = vmatprep.subr.mxu0 0.0
        %5111 = vmatpush1.msra.mxu0 %v3454
        %5112 = vmatprep.subr.mxu0 0.0
        %5113 = vmatpush1.msra.mxu0 %v3455
        %5114 = vmatprep.subr.mxu0 0.0
        %5115 = vmatpush1.msra.mxu0 %v3456
        %5116 = vmatprep.subr.mxu0 0.0
        %5117 = vmatpush1.msra.mxu0 %v3457
        %5118 = vmatprep.subr.mxu0 0.0
        %5119 = vmatpush1.msra.mxu0 %v3458
        %5120 = vmatprep.subr.mxu0 0.0
        %5121 = vmatpush1.msra.mxu0 %v3459
        %5122 = vmatprep.subr.mxu0 0.0
        %5123 = vmatpush1.msra.mxu0 %v3460
        %5124 = vmatprep.subr.mxu0 0.0
        %5125 = vmatpush1.msra.mxu0 %v3461
        %5126 = vmatprep.subr.mxu0 0.0
        %5127 = vmatpush1.msra.mxu0 %v3462
        %5128 = vmatprep.subr.mxu0 0.0
        %5129 = vmatpush1.msra.mxu0 %v3463
        %5130 = vmatprep.subr.mxu0 0.0
        %5131 = vmatpush1.msra.mxu0 %v3464
        %5132 = vmatprep.subr.mxu0 0.0
        %5133 = vmatpush1.msra.mxu0 %v3465
        %5134 = vmatprep.subr.mxu0 0.0
        %5135 = vmatpush1.msra.mxu0 %v3466
        %5136 = vmatprep.subr.mxu0 0.0
        %5137 = vmatpush1.msra.mxu0 %v3467
        %5138 = vmatprep.subr.mxu0 0.0
        %5139 = vmatpush1.msra.mxu0 %v3468
        %5140 = vmatprep.subr.mxu0 0.0
        %5141 = vmatpush1.msra.mxu0 %v3469
        %5142 = vmatprep.subr.mxu0 0.0
        %5143 = vmatpush1.msra.mxu0 %v3470
        %5144 = vmatprep.subr.mxu0 0.0
        %5145 = vmatpush1.msra.mxu0 %v3471
        %5146 = vmatprep.subr.mxu0 0.0
        %5147 = vmatpush1.msra.mxu0 %v3472
        %5148 = vmatprep.subr.mxu0 0.0
        %5149 = vmatpush1.msra.mxu0 %v3473
        %5150 = vmatprep.subr.mxu0 0.0
        %5151 = vmatpush1.msra.mxu0 %v3474
        %5152 = vmatprep.subr.mxu0 0.0
        %5153 = vmatpush1.msra.mxu0 %v3475
        %5154 = vmatprep.subr.mxu0 0.0
        %5155 = vmatpush1.msra.mxu0 %v3476
        %5156 = vmatprep.subr.mxu0 0.0
        %5157 = vmatpush1.msra.mxu0 %v3477
        %5158 = vmatprep.subr.mxu0 0.0
        %5159 = vmatpush1.msra.mxu0 %v3478
        %5160 = vmatprep.subr.mxu0 0.0
        %5161 = vmatpush1.msra.mxu0 %v3479
        %5162 = vmatprep.subr.mxu0 0.0
        %5163 = vmatpush1.msra.mxu0 %v3480
        %5164 = vmatprep.subr.mxu0 0.0
        %5165 = vmatpush1.msra.mxu0 %v3481
        %5166 = vmatprep.subr.mxu0 0.0
        %5167 = vmatpush1.msra.mxu0 0.0
        %5168 = vmatprep.subr.mxu0 0.0
        %5169 = vmatpush1.msra.mxu0 0.0
        %5170 = vmatprep.subr.mxu0 0.0
        %5171 = vmatpush1.msra.mxu0 0.0
        %5172 = vmatprep.subr.mxu0 0.0
        %5173 = vmatpush1.msra.mxu0 0.0
        %5174 = vmatprep.mubr.f32.mxu0 %v5038
        %5175 = vmatmul.mubr.f32.gmra.mrb[0].mxu0 %v5033
        %v5176 = vpop.f32.mrb[0].mxu0
        %v5177 = vadd.f32 %v5107, %v5176
        %v5178 = vpop.f32.mrb[0].mxu0
        %5179 = vdwg.mxu0
        %v5180 = vmax.f32 %v5177, 0.0
        %v5182 = vsel %vm643, %v5180, 0
        %5184 = vmatprep.subr.mxu0 0.0
        %5185 = vmatpush1.msra.mxu0 %v3483
        %5186 = vmatprep.subr.mxu0 0.0
        %5187 = vmatpush1.msra.mxu0 %v3484
        %5188 = vmatprep.subr.mxu0 0.0
        %5189 = vmatpush1.msra.mxu0 %v3485
        %5190 = vmatprep.subr.mxu0 0.0
        %5191 = vmatpush1.msra.mxu0 %v3486
        %5192 = vmatprep.subr.mxu0 0.0
        %5193 = vmatpush1.msra.mxu0 0.0
        %5194 = vmatprep.subr.mxu0 0.0
        %5195 = vmatpush1.msra.mxu0 0.0
        %5196 = vmatprep.subr.mxu0 0.0
        %5197 = vmatpush1.msra.mxu0 0.0
        %5198 = vmatprep.subr.mxu0 0.0
        %5199 = vmatpush1.msra.mxu0 0.0
        %5200 = vmatprep.subr.mxu0 0.0
        %5201 = vmatpush1.msra.mxu0 0.0
        %5202 = vmatprep.subr.mxu0 0.0
        %5203 = vmatpush1.msra.mxu0 0.0
        %5204 = vmatprep.subr.mxu0 0.0
        %5205 = vmatpush1.msra.mxu0 0.0
        %5206 = vmatprep.subr.mxu0 0.0
        %5207 = vmatpush1.msra.mxu0 0.0
        %5208 = vmatprep.subr.mxu0 0.0
        %5209 = vmatpush1.msra.mxu0 0.0
        %5210 = vmatprep.subr.mxu0 0.0
        %5211 = vmatpush1.msra.mxu0 0.0
        %5212 = vmatprep.subr.mxu0 0.0
        %5213 = vmatpush1.msra.mxu0 0.0
        %5214 = vmatprep.subr.mxu0 0.0
        %5215 = vmatpush1.msra.mxu0 0.0
        %5216 = vmatprep.subr.mxu0 0.0
        %5217 = vmatpush1.msra.mxu0 0.0
        %5218 = vmatprep.subr.mxu0 0.0
        %5219 = vmatpush1.msra.mxu0 0.0
        %5220 = vmatprep.subr.mxu0 0.0
        %5221 = vmatpush1.msra.mxu0 0.0
        %5222 = vmatprep.subr.mxu0 0.0
        %5223 = vmatpush1.msra.mxu0 0.0
        %5224 = vmatprep.subr.mxu0 0.0
        %5225 = vmatpush1.msra.mxu0 0.0
        %5226 = vmatprep.subr.mxu0 0.0
        %5227 = vmatpush1.msra.mxu0 0.0
        %5228 = vmatprep.subr.mxu0 0.0
        %5229 = vmatpush1.msra.mxu0 0.0
        %5230 = vmatprep.subr.mxu0 0.0
        %5231 = vmatpush1.msra.mxu0 0.0
        %5232 = vmatprep.subr.mxu0 0.0
        %5233 = vmatpush1.msra.mxu0 0.0
        %5234 = vmatprep.subr.mxu0 0.0
        %5235 = vmatpush1.msra.mxu0 0.0
        %5236 = vmatprep.subr.mxu0 0.0
        %5237 = vmatpush1.msra.mxu0 0.0
        %5238 = vmatprep.subr.mxu0 0.0
        %5239 = vmatpush1.msra.mxu0 0.0
        %5240 = vmatprep.subr.mxu0 0.0
        %5241 = vmatpush1.msra.mxu0 0.0
        %5242 = vmatprep.subr.mxu0 0.0
        %5243 = vmatpush1.msra.mxu0 0.0
        %5244 = vmatprep.subr.mxu0 0.0
        %5245 = vmatpush1.msra.mxu0 0.0
        %5246 = vmatprep.subr.mxu0 0.0
        %5247 = vmatpush1.msra.mxu0 0.0
        %5248 = vmatprep.mubr.f32.mxu0 0.0
        %5249 = vmatmul.mubr.f32.gmra.mrb[0].mxu0 %v5182
        %v5250 = vpop.f32.mrb[0].mxu0
        %v5251 = vadd.f32 %v3487, %v5250
        %v5252 = vpop.f32.mrb[0].mxu0
        %5253 = vdwg.mxu0
        %v5254 = vmax.f32 %v5251, 0.0
        %v5256 = vsel %vm4033, %v5254, 0
        %5258 = vmatprep.subr.mxu0 0.0
        %5259 = vmatpush1.msra.mxu0 %v3488
        %5260 = vmatprep.subr.mxu0 0.0
        %5261 = vmatpush1.msra.mxu0 %v3489
        %5262 = vmatprep.subr.mxu0 0.0
        %5263 = vmatpush1.msra.mxu0 %v3490
        %5264 = vmatprep.subr.mxu0 0.0
        %5265 = vmatpush1.msra.mxu0 %v4039
        %5266 = vmatprep.subr.mxu0 0.0
        %5267 = vmatpush1.msra.mxu0 0.0
        %5268 = vmatprep.subr.mxu0 0.0
        %5269 = vmatpush1.msra.mxu0 0.0
        %5270 = vmatprep.subr.mxu0 0.0
        %5271 = vmatpush1.msra.mxu0 0.0
        %5272 = vmatprep.subr.mxu0 0.0
        %5273 = vmatpush1.msra.mxu0 0.0
        %5274 = vmatprep.subr.mxu0 0.0
        %5275 = vmatpush1.msra.mxu0 0.0
        %5276 = vmatprep.subr.mxu0 0.0
        %5277 = vmatpush1.msra.mxu0 0.0
        %5278 = vmatprep.subr.mxu0 0.0
        %5279 = vmatpush1.msra.mxu0 0.0
        %5280 = vmatprep.subr.mxu0 0.0
        %5281 = vmatpush1.msra.mxu0 0.0
        %5282 = vmatprep.subr.mxu0 0.0
        %5283 = vmatpush1.msra.mxu0 0.0
        %5284 = vmatprep.subr.mxu0 0.0
        %5285 = vmatpush1.msra.mxu0 0.0
        %5286 = vmatprep.subr.mxu0 0.0
        %5287 = vmatpush1.msra.mxu0 0.0
        %5288 = vmatprep.subr.mxu0 0.0
        %5289 = vmatpush1.msra.mxu0 0.0
        %5290 = vmatprep.subr.mxu0 0.0
        %5291 = vmatpush1.msra.mxu0 0.0
        %5292 = vmatprep.subr.mxu0 0.0
        %5293 = vmatpush1.msra.mxu0 0.0
        %5294 = vmatprep.subr.mxu0 0.0
        %5295 = vmatpush1.msra.mxu0 0.0
        %5296 = vmatprep.subr.mxu0 0.0
        %5297 = vmatpush1.msra.mxu0 0.0
        %5298 = vmatprep.subr.mxu0 0.0
        %5299 = vmatpush1.msra.mxu0 0.0
        %5300 = vmatprep.subr.mxu0 0.0
        %5301 = vmatpush1.msra.mxu0 0.0
        %5302 = vmatprep.subr.mxu0 0.0
        %5303 = vmatpush1.msra.mxu0 0.0
        %5304 = vmatprep.subr.mxu0 0.0
        %5305 = vmatpush1.msra.mxu0 0.0
        %5306 = vmatprep.subr.mxu0 0.0
        %5307 = vmatpush1.msra.mxu0 0.0
        %5308 = vmatprep.subr.mxu0 0.0
        %5309 = vmatpush1.msra.mxu0 0.0
        %5310 = vmatprep.subr.mxu0 0.0
        %5311 = vmatpush1.msra.mxu0 0.0
        %5312 = vmatprep.subr.mxu0 0.0
        %5313 = vmatpush1.msra.mxu0 0.0
        %5314 = vmatprep.subr.mxu0 0.0
        %5315 = vmatpush1.msra.mxu0 0.0
        %5316 = vmatprep.subr.mxu0 0.0
        %5317 = vmatpush1.msra.mxu0 0.0
        %5318 = vmatprep.subr.mxu0 0.0
        %5319 = vmatpush1.msra.mxu0 0.0
        %5320 = vmatprep.subr.mxu0 0.0
        %5321 = vmatpush1.msra.mxu0 0.0
        %5322 = vmatprep.mubr.f32.mxu0 0.0
        %5323 = vmatmul.mubr.f32.gmra.mrb[0].mxu0 %v5256
        %v5324 = vpop.f32.mrb[0].mxu0
        %v5325 = vadd.f32 %v3492, %v5324
        %v5326 = vpop.f32.mrb[0].mxu0
        %5327 = vdwg.mxu0
        %5328 = vst.msk [vmem:[%s379 + $0x2] sm:$0x1] %vm4111, %v5325
        %5329 = vmatprep.subr.mxu0 %v3287
        %5330 = vmatpush1.msra.mxu0 %v3286
        %5331 = vmatprep.subr.mxu0 %v3291
        %5332 = vmatpush1.msra.mxu0 %v3290
        %5333 = vmatprep.subr.mxu0 %v3295
        %5334 = vmatpush1.msra.mxu0 %v3294
        %5335 = vmatprep.subr.mxu0 %v3299
        %5336 = vmatpush1.msra.mxu0 %v3298
        %5337 = vmatprep.subr.mxu0 %v3303
        %5338 = vmatpush1.msra.mxu0 %v3302
        %5339 = vmatprep.subr.mxu0 %v3307
        %5340 = vmatpush1.msra.mxu0 %v3306
        %5341 = vmatprep.subr.mxu0 %v3311
        %5342 = vmatpush1.msra.mxu0 %v3310
        %5343 = vmatprep.subr.mxu0 %v3315
        %5344 = vmatpush1.msra.mxu0 %v3314
        %5345 = vmatprep.subr.mxu0 %v3319
        %5346 = vmatpush1.msra.mxu0 %v3318
        %5347 = vmatprep.subr.mxu0 %v3323
        %5348 = vmatpush1.msra.mxu0 %v3322
        %5349 = vmatprep.subr.mxu0 %v3327
        %5350 = vmatpush1.msra.mxu0 %v3326
        %5351 = vmatprep.subr.mxu0 %v3331
        %5352 = vmatpush1.msra.mxu0 %v3330
        %5353 = vmatprep.subr.mxu0 %v3335
        %5354 = vmatpush1.msra.mxu0 %v3334
        %5355 = vmatprep.subr.mxu0 %v3339
        %5356 = vmatpush1.msra.mxu0 %v3338
        %5357 = vmatprep.subr.mxu0 %v3343
        %5358 = vmatpush1.msra.mxu0 %v3342
        %5359 = vmatprep.subr.mxu0 %v3347
        %5360 = vmatpush1.msra.mxu0 %v3346
        %5361 = vmatprep.subr.mxu0 %v3351
        %5362 = vmatpush1.msra.mxu0 %v3350
        %5363 = vmatprep.subr.mxu0 %v3355
        %5364 = vmatpush1.msra.mxu0 %v3354
        %5365 = vmatprep.subr.mxu0 %v3359
        %5366 = vmatpush1.msra.mxu0 %v3358
        %5367 = vmatprep.subr.mxu0 %v3363
        %5368 = vmatpush1.msra.mxu0 %v3362
        %5369 = vmatprep.subr.mxu0 %v3367
        %5370 = vmatpush1.msra.mxu0 %v3366
        %5371 = vmatprep.subr.mxu0 %v3371
        %5372 = vmatpush1.msra.mxu0 %v3370
        %5373 = vmatprep.subr.mxu0 %v3375
        %5374 = vmatpush1.msra.mxu0 %v3374
        %5375 = vmatprep.subr.mxu0 %v3379
        %5376 = vmatpush1.msra.mxu0 %v3378
        %5377 = vmatprep.subr.mxu0 %v3383
        %5378 = vmatpush1.msra.mxu0 %v3382
        %5379 = vmatprep.subr.mxu0 %v3387
        %5380 = vmatpush1.msra.mxu0 %v3386
        %5381 = vmatprep.subr.mxu0 %v3391
        %5382 = vmatpush1.msra.mxu0 %v3390
        %5383 = vmatprep.subr.mxu0 %v3395
        %5384 = vmatpush1.msra.mxu0 %v3394
        %5385 = vmatprep.subr.mxu0 %v3399
        %5386 = vmatpush1.msra.mxu0 %v3398
        %5387 = vmatprep.subr.mxu0 %v3403
        %5388 = vmatpush1.msra.mxu0 %v3402
        %5389 = vmatprep.subr.mxu0 %v3407
        %5390 = vmatpush1.msra.mxu0 %v3406
        %5391 = vmatprep.subr.mxu0 %v3411
        %5392 = vmatpush1.msra.mxu0 %v3410
        %5393 = vmatprep.mubr.f32.mxu0 %v3261
        %5394 = vmatmul.mubr.f32.gmra.mrb[0].mxu0 %v3260
        %v5395 = vpop.f32.mrb[0].mxu0
        %v5396 = vadd.f32 0.0, %v5395
        %v5397 = vpop.f32.mrb[0].mxu0
        %v5398 = vadd.f32 0.0, %v5397
        %5399 = vmatprep.mubr.f32.mxu0 %v3277
        %5400 = vmatmul.mubr.f32.gmra.mrb[0].mxu0 %v3276
        %v5401 = vpop.f32.mrb[0].mxu0
        %v5402 = vadd.f32 0.0, %v5401
        %v5403 = vpop.f32.mrb[0].mxu0
        %v5404 = vadd.f32 0.0, %v5403
        %5405 = vdwg.mxu0
        %5406 = vmatprep.subr.mxu0 %v3289
        %5407 = vmatpush1.msra.mxu0 %v3288
        %5408 = vmatprep.subr.mxu0 %v3293
        %5409 = vmatpush1.msra.mxu0 %v3292
        %5410 = vmatprep.subr.mxu0 %v3297
        %5411 = vmatpush1.msra.mxu0 %v3296
        %5412 = vmatprep.subr.mxu0 %v3301
        %5413 = vmatpush1.msra.mxu0 %v3300
        %5414 = vmatprep.subr.mxu0 %v3305
        %5415 = vmatpush1.msra.mxu0 %v3304
        %5416 = vmatprep.subr.mxu0 %v3309
        %5417 = vmatpush1.msra.mxu0 %v3308
        %5418 = vmatprep.subr.mxu0 %v3313
        %5419 = vmatpush1.msra.mxu0 %v3312
        %5420 = vmatprep.subr.mxu0 %v3317
        %5421 = vmatpush1.msra.mxu0 %v3316
        %5422 = vmatprep.subr.mxu0 %v3321
        %5423 = vmatpush1.msra.mxu0 %v3320
        %5424 = vmatprep.subr.mxu0 %v3325
        %5425 = vmatpush1.msra.mxu0 %v3324
        %5426 = vmatprep.subr.mxu0 %v3329
        %5427 = vmatpush1.msra.mxu0 %v3328
        %5428 = vmatprep.subr.mxu0 %v3333
        %5429 = vmatpush1.msra.mxu0 %v3332
        %5430 = vmatprep.subr.mxu0 %v3337
        %5431 = vmatpush1.msra.mxu0 %v3336
        %5432 = vmatprep.subr.mxu0 %v3341
        %5433 = vmatpush1.msra.mxu0 %v3340
        %5434 = vmatprep.subr.mxu0 %v3345
        %5435 = vmatpush1.msra.mxu0 %v3344
        %5436 = vmatprep.subr.mxu0 %v3349
        %5437 = vmatpush1.msra.mxu0 %v3348
        %5438 = vmatprep.subr.mxu0 %v3353
        %5439 = vmatpush1.msra.mxu0 %v3352
        %5440 = vmatprep.subr.mxu0 %v3357
        %5441 = vmatpush1.msra.mxu0 %v3356
        %5442 = vmatprep.subr.mxu0 %v3361
        %5443 = vmatpush1.msra.mxu0 %v3360
        %5444 = vmatprep.subr.mxu0 %v3365
        %5445 = vmatpush1.msra.mxu0 %v3364
        %5446 = vmatprep.subr.mxu0 %v3369
        %5447 = vmatpush1.msra.mxu0 %v3368
        %5448 = vmatprep.subr.mxu0 %v3373
        %5449 = vmatpush1.msra.mxu0 %v3372
        %5450 = vmatprep.subr.mxu0 %v3377
        %5451 = vmatpush1.msra.mxu0 %v3376
        %5452 = vmatprep.subr.mxu0 %v3381
        %5453 = vmatpush1.msra.mxu0 %v3380
        %5454 = vmatprep.subr.mxu0 %v3385
        %5455 = vmatpush1.msra.mxu0 %v3384
        %5456 = vmatprep.subr.mxu0 %v3389
        %5457 = vmatpush1.msra.mxu0 %v3388
        %5458 = vmatprep.subr.mxu0 %v3393
        %5459 = vmatpush1.msra.mxu0 %v3392
        %5460 = vmatprep.subr.mxu0 %v3397
        %5461 = vmatpush1.msra.mxu0 %v3396
        %5462 = vmatprep.subr.mxu0 %v3401
        %5463 = vmatpush1.msra.mxu0 %v3400
        %5464 = vmatprep.subr.mxu0 %v3405
        %5465 = vmatpush1.msra.mxu0 %v3404
        %5466 = vmatprep.subr.mxu0 %v3409
        %5467 = vmatpush1.msra.mxu0 %v3408
        %5468 = vmatprep.subr.mxu0 %v3413
        %5469 = vmatpush1.msra.mxu0 %v3412
        %5470 = vmatprep.mubr.f32.mxu0 %v3261
        %5471 = vmatmul.mubr.f32.gmra.mrb[0].mxu0 %v3260
        %v5472 = vpop.f32.mrb[0].mxu0
        %v5473 = vadd.f32 0.0, %v5472
        %v5474 = vpop.f32.mrb[0].mxu0
        %v5475 = vadd.f32 0.0, %v5474
        %5476 = vmatprep.mubr.f32.mxu0 %v3277
        %5477 = vmatmul.mubr.f32.gmra.mrb[0].mxu0 %v3276
        %v5478 = vpop.f32.mrb[0].mxu0
        %v5479 = vadd.f32 0.0, %v5478
        %v5480 = vpop.f32.mrb[0].mxu0
        %v5481 = vadd.f32 0.0, %v5480
        %5482 = vdwg.mxu0
        %v5483 = vmul.f32 %v5396, %v3414
        %v5484 = vmul.f32 %v5398, %v3415
        %v5485 = vmul.f32 %v5473, %v3416
        %v5486 = vmul.f32 %v5475, %v3417
        %v5487 = vmul.f32 %v5402, %v3418
        %v5488 = vmul.f32 %v5404, %v3419
        %v5489 = vmul.f32 %v5479, %v3420
        %v5490 = vmul.f32 %v5481, %v3421
        %v5492 = vsel %vm3659, %v5487, 0
        %v5495 = vsel %vm3659, %v5488, 0
        %v5498 = vsel %vm3659, %v5489, 0
        %v5501 = vsel %vm3659, %v5490, 0
        %5503 = vmatprep.subr.mxu0 %v5484
        %5504 = vmatpush1.msra.mxu0 %v5483
        %5505 = vmatprep.subr.mxu0 %v5495
        %5506 = vmatpush1.msra.mxu0 %v5492
        %5507 = vmatprep.subr.mxu0 0.0
        %5508 = vmatpush1.msra.mxu0 0.0
        %5509 = vmatprep.subr.mxu0 0.0
        %5510 = vmatpush1.msra.mxu0 0.0
        %5511 = vmatprep.subr.mxu0 0.0
        %5512 = vmatpush1.msra.mxu0 0.0
        %5513 = vmatprep.subr.mxu0 0.0
        %5514 = vmatpush1.msra.mxu0 0.0
        %5515 = vmatprep.subr.mxu0 0.0
        %5516 = vmatpush1.msra.mxu0 0.0
        %5517 = vmatprep.subr.mxu0 0.0
        %5518 = vmatpush1.msra.mxu0 0.0
        %5519 = vmatprep.subr.mxu0 0.0
        %5520 = vmatpush1.msra.mxu0 0.0
        %5521 = vmatprep.subr.mxu0 0.0
        %5522 = vmatpush1.msra.mxu0 0.0
        %5523 = vmatprep.subr.mxu0 0.0
        %5524 = vmatpush1.msra.mxu0 0.0
        %5525 = vmatprep.subr.mxu0 0.0
        %5526 = vmatpush1.msra.mxu0 0.0
        %5527 = vmatprep.subr.mxu0 0.0
        %5528 = vmatpush1.msra.mxu0 0.0
        %5529 = vmatprep.subr.mxu0 0.0
        %5530 = vmatpush1.msra.mxu0 0.0
        %5531 = vmatprep.subr.mxu0 0.0
        %5532 = vmatpush1.msra.mxu0 0.0
        %5533 = vmatprep.subr.mxu0 0.0
        %5534 = vmatpush1.msra.mxu0 0.0
        %5535 = vmatprep.subr.mxu0 0.0
        %5536 = vmatpush1.msra.mxu0 0.0
        %5537 = vmatprep.subr.mxu0 0.0
        %5538 = vmatpush1.msra.mxu0 0.0
        %5539 = vmatprep.subr.mxu0 0.0
        %5540 = vmatpush1.msra.mxu0 0.0
        %5541 = vmatprep.subr.mxu0 0.0
        %5542 = vmatpush1.msra.mxu0 0.0
        %5543 = vmatprep.subr.mxu0 0.0
        %5544 = vmatpush1.msra.mxu0 0.0
        %5545 = vmatprep.subr.mxu0 0.0
        %5546 = vmatpush1.msra.mxu0 0.0
        %5547 = vmatprep.subr.mxu0 0.0
        %5548 = vmatpush1.msra.mxu0 0.0
        %5549 = vmatprep.subr.mxu0 0.0
        %5550 = vmatpush1.msra.mxu0 0.0
        %5551 = vmatprep.subr.mxu0 0.0
        %5552 = vmatpush1.msra.mxu0 0.0
        %5553 = vmatprep.subr.mxu0 0.0
        %5554 = vmatpush1.msra.mxu0 0.0
        %5555 = vmatprep.subr.mxu0 0.0
        %5556 = vmatpush1.msra.mxu0 0.0
        %5557 = vmatprep.subr.mxu0 0.0
        %5558 = vmatpush1.msra.mxu0 0.0
        %5559 = vmatprep.subr.mxu0 0.0
        %5560 = vmatpush1.msra.mxu0 0.0
        %5561 = vmatprep.subr.mxu0 0.0
        %5562 = vmatpush1.msra.mxu0 0.0
        %5563 = vmatprep.subr.mxu0 0.0
        %5564 = vmatpush1.msra.mxu0 0.0
        %5565 = vmatprep.subr.mxu0 0.0
        %5566 = vmatpush1.msra.mxu0 0.0
        %5567 = vmatprep.mubr.f32.mxu0 0.0
        %5568 = vmatmul.mubr.f32.gmra.mrb[0].mxu0 %v3657
        %v5569 = vpop.f32.mrb[0].mxu0
        %v5570 = vadd.f32 0.0, %v5569
        %v5571 = vpop.f32.mrb[0].mxu0
        %v5572 = vadd.f32 0.0, %v5571
        %5573 = vdwg.mxu0
        %5574 = vmatprep.subr.mxu0 %v5486
        %5575 = vmatpush1.msra.mxu0 %v5485
        %5576 = vmatprep.subr.mxu0 %v5501
        %5577 = vmatpush1.msra.mxu0 %v5498
        %5578 = vmatprep.subr.mxu0 0.0
        %5579 = vmatpush1.msra.mxu0 0.0
        %5580 = vmatprep.subr.mxu0 0.0
        %5581 = vmatpush1.msra.mxu0 0.0
        %5582 = vmatprep.subr.mxu0 0.0
        %5583 = vmatpush1.msra.mxu0 0.0
        %5584 = vmatprep.subr.mxu0 0.0
        %5585 = vmatpush1.msra.mxu0 0.0
        %5586 = vmatprep.subr.mxu0 0.0
        %5587 = vmatpush1.msra.mxu0 0.0
        %5588 = vmatprep.subr.mxu0 0.0
        %5589 = vmatpush1.msra.mxu0 0.0
        %5590 = vmatprep.subr.mxu0 0.0
        %5591 = vmatpush1.msra.mxu0 0.0
        %5592 = vmatprep.subr.mxu0 0.0
        %5593 = vmatpush1.msra.mxu0 0.0
        %5594 = vmatprep.subr.mxu0 0.0
        %5595 = vmatpush1.msra.mxu0 0.0
        %5596 = vmatprep.subr.mxu0 0.0
        %5597 = vmatpush1.msra.mxu0 0.0
        %5598 = vmatprep.subr.mxu0 0.0
        %5599 = vmatpush1.msra.mxu0 0.0
        %5600 = vmatprep.subr.mxu0 0.0
        %5601 = vmatpush1.msra.mxu0 0.0
        %5602 = vmatprep.subr.mxu0 0.0
        %5603 = vmatpush1.msra.mxu0 0.0
        %5604 = vmatprep.subr.mxu0 0.0
        %5605 = vmatpush1.msra.mxu0 0.0
        %5606 = vmatprep.subr.mxu0 0.0
        %5607 = vmatpush1.msra.mxu0 0.0
        %5608 = vmatprep.subr.mxu0 0.0
        %5609 = vmatpush1.msra.mxu0 0.0
        %5610 = vmatprep.subr.mxu0 0.0
        %5611 = vmatpush1.msra.mxu0 0.0
        %5612 = vmatprep.subr.mxu0 0.0
        %5613 = vmatpush1.msra.mxu0 0.0
        %5614 = vmatprep.subr.mxu0 0.0
        %5615 = vmatpush1.msra.mxu0 0.0
        %5616 = vmatprep.subr.mxu0 0.0
        %5617 = vmatpush1.msra.mxu0 0.0
        %5618 = vmatprep.subr.mxu0 0.0
        %5619 = vmatpush1.msra.mxu0 0.0
        %5620 = vmatprep.subr.mxu0 0.0
        %5621 = vmatpush1.msra.mxu0 0.0
        %5622 = vmatprep.subr.mxu0 0.0
        %5623 = vmatpush1.msra.mxu0 0.0
        %5624 = vmatprep.subr.mxu0 0.0
        %5625 = vmatpush1.msra.mxu0 0.0
        %5626 = vmatprep.subr.mxu0 0.0
        %5627 = vmatpush1.msra.mxu0 0.0
        %5628 = vmatprep.subr.mxu0 0.0
        %5629 = vmatpush1.msra.mxu0 0.0
        %5630 = vmatprep.subr.mxu0 0.0
        %5631 = vmatpush1.msra.mxu0 0.0
        %5632 = vmatprep.subr.mxu0 0.0
        %5633 = vmatpush1.msra.mxu0 0.0
        %5634 = vmatprep.subr.mxu0 0.0
        %5635 = vmatpush1.msra.mxu0 0.0
        %5636 = vmatprep.subr.mxu0 0.0
        %5637 = vmatpush1.msra.mxu0 0.0
        %5638 = vmatprep.mubr.f32.mxu0 0.0
        %5639 = vmatmul.mubr.f32.gmra.mrb[0].mxu0 %v3657
        %v5640 = vpop.f32.mrb[0].mxu0
        %v5641 = vadd.f32 0.0, %v5640
        %v5642 = vpop.f32.mrb[0].mxu0
        %v5643 = vadd.f32 0.0, %v5642
        %5644 = vdwg.mxu0
        %v5646 = vsel %vm3814, %v5643, 0
        %5648 = vmatprep.subr.mxu0 0.0
        %5649 = vmatpush1.msra.mxu0 %v3422
        %5650 = vmatprep.subr.mxu0 0.0
        %5651 = vmatpush1.msra.mxu0 %v3423
        %5652 = vmatprep.subr.mxu0 0.0
        %5653 = vmatpush1.msra.mxu0 %v3424
        %5654 = vmatprep.subr.mxu0 0.0
        %5655 = vmatpush1.msra.mxu0 %v3425
        %5656 = vmatprep.subr.mxu0 0.0
        %5657 = vmatpush1.msra.mxu0 %v3426
        %5658 = vmatprep.subr.mxu0 0.0
        %5659 = vmatpush1.msra.mxu0 %v3427
        %5660 = vmatprep.subr.mxu0 0.0
        %5661 = vmatpush1.msra.mxu0 %v3428
        %5662 = vmatprep.subr.mxu0 0.0
        %5663 = vmatpush1.msra.mxu0 %v3429
        %5664 = vmatprep.subr.mxu0 0.0
        %5665 = vmatpush1.msra.mxu0 %v3430
        %5666 = vmatprep.subr.mxu0 0.0
        %5667 = vmatpush1.msra.mxu0 %v3431
        %5668 = vmatprep.subr.mxu0 0.0
        %5669 = vmatpush1.msra.mxu0 %v3432
        %5670 = vmatprep.subr.mxu0 0.0
        %5671 = vmatpush1.msra.mxu0 %v3433
        %5672 = vmatprep.subr.mxu0 0.0
        %5673 = vmatpush1.msra.mxu0 %v3434
        %5674 = vmatprep.subr.mxu0 0.0
        %5675 = vmatpush1.msra.mxu0 %v3435
        %5676 = vmatprep.subr.mxu0 0.0
        %5677 = vmatpush1.msra.mxu0 %v3436
        %5678 = vmatprep.subr.mxu0 0.0
        %5679 = vmatpush1.msra.mxu0 %v3437
        %5680 = vmatprep.subr.mxu0 0.0
        %5681 = vmatpush1.msra.mxu0 %v3438
        %5682 = vmatprep.subr.mxu0 0.0
        %5683 = vmatpush1.msra.mxu0 %v3439
        %5684 = vmatprep.subr.mxu0 0.0
        %5685 = vmatpush1.msra.mxu0 %v3440
        %5686 = vmatprep.subr.mxu0 0.0
        %5687 = vmatpush1.msra.mxu0 %v3441
        %5688 = vmatprep.subr.mxu0 0.0
        %5689 = vmatpush1.msra.mxu0 %v3442
        %5690 = vmatprep.subr.mxu0 0.0
        %5691 = vmatpush1.msra.mxu0 %v3443
        %5692 = vmatprep.subr.mxu0 0.0
        %5693 = vmatpush1.msra.mxu0 %v3444
        %5694 = vmatprep.subr.mxu0 0.0
        %5695 = vmatpush1.msra.mxu0 %v3445
        %5696 = vmatprep.subr.mxu0 0.0
        %5697 = vmatpush1.msra.mxu0 %v3446
        %5698 = vmatprep.subr.mxu0 0.0
        %5699 = vmatpush1.msra.mxu0 %v3447
        %5700 = vmatprep.subr.mxu0 0.0
        %5701 = vmatpush1.msra.mxu0 %v3448
        %5702 = vmatprep.subr.mxu0 0.0
        %5703 = vmatpush1.msra.mxu0 %v3449
        %5704 = vmatprep.subr.mxu0 0.0
        %5705 = vmatpush1.msra.mxu0 %v3450
        %5706 = vmatprep.subr.mxu0 0.0
        %5707 = vmatpush1.msra.mxu0 %v3451
        %5708 = vmatprep.subr.mxu0 0.0
        %5709 = vmatpush1.msra.mxu0 %v3452
        %5710 = vmatprep.subr.mxu0 0.0
        %5711 = vmatpush1.msra.mxu0 %v3453
        %5712 = vmatprep.mubr.f32.mxu0 %v5572
        %5713 = vmatmul.mubr.f32.gmra.mrb[0].mxu0 %v5570
        %v5714 = vpop.f32.mrb[0].mxu0
        %v5715 = vadd.f32 %v3482, %v5714
        %v5716 = vpop.f32.mrb[0].mxu0
        %5717 = vdwg.mxu0
        %5718 = vmatprep.subr.mxu0 0.0
        %5719 = vmatpush1.msra.mxu0 %v3454
        %5720 = vmatprep.subr.mxu0 0.0
        %5721 = vmatpush1.msra.mxu0 %v3455
        %5722 = vmatprep.subr.mxu0 0.0
        %5723 = vmatpush1.msra.mxu0 %v3456
        %5724 = vmatprep.subr.mxu0 0.0
        %5725 = vmatpush1.msra.mxu0 %v3457
        %5726 = vmatprep.subr.mxu0 0.0
        %5727 = vmatpush1.msra.mxu0 %v3458
        %5728 = vmatprep.subr.mxu0 0.0
        %5729 = vmatpush1.msra.mxu0 %v3459
        %5730 = vmatprep.subr.mxu0 0.0
        %5731 = vmatpush1.msra.mxu0 %v3460
        %5732 = vmatprep.subr.mxu0 0.0
        %5733 = vmatpush1.msra.mxu0 %v3461
        %5734 = vmatprep.subr.mxu0 0.0
        %5735 = vmatpush1.msra.mxu0 %v3462
        %5736 = vmatprep.subr.mxu0 0.0
        %5737 = vmatpush1.msra.mxu0 %v3463
        %5738 = vmatprep.subr.mxu0 0.0
        %5739 = vmatpush1.msra.mxu0 %v3464
        %5740 = vmatprep.subr.mxu0 0.0
        %5741 = vmatpush1.msra.mxu0 %v3465
        %5742 = vmatprep.subr.mxu0 0.0
        %5743 = vmatpush1.msra.mxu0 %v3466
        %5744 = vmatprep.subr.mxu0 0.0
        %5745 = vmatpush1.msra.mxu0 %v3467
        %5746 = vmatprep.subr.mxu0 0.0
        %5747 = vmatpush1.msra.mxu0 %v3468
        %5748 = vmatprep.subr.mxu0 0.0
        %5749 = vmatpush1.msra.mxu0 %v3469
        %5750 = vmatprep.subr.mxu0 0.0
        %5751 = vmatpush1.msra.mxu0 %v3470
        %5752 = vmatprep.subr.mxu0 0.0
        %5753 = vmatpush1.msra.mxu0 %v3471
        %5754 = vmatprep.subr.mxu0 0.0
        %5755 = vmatpush1.msra.mxu0 %v3472
        %5756 = vmatprep.subr.mxu0 0.0
        %5757 = vmatpush1.msra.mxu0 %v3473
        %5758 = vmatprep.subr.mxu0 0.0
        %5759 = vmatpush1.msra.mxu0 %v3474
        %5760 = vmatprep.subr.mxu0 0.0
        %5761 = vmatpush1.msra.mxu0 %v3475
        %5762 = vmatprep.subr.mxu0 0.0
        %5763 = vmatpush1.msra.mxu0 %v3476
        %5764 = vmatprep.subr.mxu0 0.0
        %5765 = vmatpush1.msra.mxu0 %v3477
        %5766 = vmatprep.subr.mxu0 0.0
        %5767 = vmatpush1.msra.mxu0 %v3478
        %5768 = vmatprep.subr.mxu0 0.0
        %5769 = vmatpush1.msra.mxu0 %v3479
        %5770 = vmatprep.subr.mxu0 0.0
        %5771 = vmatpush1.msra.mxu0 %v3480
        %5772 = vmatprep.subr.mxu0 0.0
        %5773 = vmatpush1.msra.mxu0 %v3481
        %5774 = vmatprep.subr.mxu0 0.0
        %5775 = vmatpush1.msra.mxu0 0.0
        %5776 = vmatprep.subr.mxu0 0.0
        %5777 = vmatpush1.msra.mxu0 0.0
        %5778 = vmatprep.subr.mxu0 0.0
        %5779 = vmatpush1.msra.mxu0 0.0
        %5780 = vmatprep.subr.mxu0 0.0
        %5781 = vmatpush1.msra.mxu0 0.0
        %5782 = vmatprep.mubr.f32.mxu0 %v5646
        %5783 = vmatmul.mubr.f32.gmra.mrb[0].mxu0 %v5641
        %v5784 = vpop.f32.mrb[0].mxu0
        %v5785 = vadd.f32 %v5715, %v5784
        %v5786 = vpop.f32.mrb[0].mxu0
        %5787 = vdwg.mxu0
        %v5788 = vmax.f32 %v5785, 0.0
        %v5790 = vsel %vm643, %v5788, 0
        %5792 = vmatprep.subr.mxu0 0.0
        %5793 = vmatpush1.msra.mxu0 %v3483
        %5794 = vmatprep.subr.mxu0 0.0
        %5795 = vmatpush1.msra.mxu0 %v3484
        %5796 = vmatprep.subr.mxu0 0.0
        %5797 = vmatpush1.msra.mxu0 %v3485
        %5798 = vmatprep.subr.mxu0 0.0
        %5799 = vmatpush1.msra.mxu0 %v3486
        %5800 = vmatprep.subr.mxu0 0.0
        %5801 = vmatpush1.msra.mxu0 0.0
        %5802 = vmatprep.subr.mxu0 0.0
        %5803 = vmatpush1.msra.mxu0 0.0
        %5804 = vmatprep.subr.mxu0 0.0
        %5805 = vmatpush1.msra.mxu0 0.0
        %5806 = vmatprep.subr.mxu0 0.0
        %5807 = vmatpush1.msra.mxu0 0.0
        %5808 = vmatprep.subr.mxu0 0.0
        %5809 = vmatpush1.msra.mxu0 0.0
        %5810 = vmatprep.subr.mxu0 0.0
        %5811 = vmatpush1.msra.mxu0 0.0
        %5812 = vmatprep.subr.mxu0 0.0
        %5813 = vmatpush1.msra.mxu0 0.0
        %5814 = vmatprep.subr.mxu0 0.0
        %5815 = vmatpush1.msra.mxu0 0.0
        %5816 = vmatprep.subr.mxu0 0.0
        %5817 = vmatpush1.msra.mxu0 0.0
        %5818 = vmatprep.subr.mxu0 0.0
        %5819 = vmatpush1.msra.mxu0 0.0
        %5820 = vmatprep.subr.mxu0 0.0
        %5821 = vmatpush1.msra.mxu0 0.0
        %5822 = vmatprep.subr.mxu0 0.0
        %5823 = vmatpush1.msra.mxu0 0.0
        %5824 = vmatprep.subr.mxu0 0.0
        %5825 = vmatpush1.msra.mxu0 0.0
        %5826 = vmatprep.subr.mxu0 0.0
        %5827 = vmatpush1.msra.mxu0 0.0
        %5828 = vmatprep.subr.mxu0 0.0
        %5829 = vmatpush1.msra.mxu0 0.0
        %5830 = vmatprep.subr.mxu0 0.0
        %5831 = vmatpush1.msra.mxu0 0.0
        %5832 = vmatprep.subr.mxu0 0.0
        %5833 = vmatpush1.msra.mxu0 0.0
        %5834 = vmatprep.subr.mxu0 0.0
        %5835 = vmatpush1.msra.mxu0 0.0
        %5836 = vmatprep.subr.mxu0 0.0
        %5837 = vmatpush1.msra.mxu0 0.0
        %5838 = vmatprep.subr.mxu0 0.0
        %5839 = vmatpush1.msra.mxu0 0.0
        %5840 = vmatprep.subr.mxu0 0.0
        %5841 = vmatpush1.msra.mxu0 0.0
        %5842 = vmatprep.subr.mxu0 0.0
        %5843 = vmatpush1.msra.mxu0 0.0
        %5844 = vmatprep.subr.mxu0 0.0
        %5845 = vmatpush1.msra.mxu0 0.0
        %5846 = vmatprep.subr.mxu0 0.0
        %5847 = vmatpush1.msra.mxu0 0.0
        %5848 = vmatprep.subr.mxu0 0.0
        %5849 = vmatpush1.msra.mxu0 0.0
        %5850 = vmatprep.subr.mxu0 0.0
        %5851 = vmatpush1.msra.mxu0 0.0
        %5852 = vmatprep.subr.mxu0 0.0
        %5853 = vmatpush1.msra.mxu0 0.0
        %5854 = vmatprep.subr.mxu0 0.0
        %5855 = vmatpush1.msra.mxu0 0.0
        %5856 = vmatprep.mubr.f32.mxu0 0.0
        %5857 = vmatmul.mubr.f32.gmra.mrb[0].mxu0 %v5790
        %v5858 = vpop.f32.mrb[0].mxu0
        %v5859 = vadd.f32 %v3487, %v5858
        %v5860 = vpop.f32.mrb[0].mxu0
        %5861 = vdwg.mxu0
        %v5862 = vmax.f32 %v5859, 0.0
        %v5864 = vsel %vm4033, %v5862, 0
        %5866 = vmatprep.subr.mxu0 0.0
        %5867 = vmatpush1.msra.mxu0 %v3488
        %5868 = vmatprep.subr.mxu0 0.0
        %5869 = vmatpush1.msra.mxu0 %v3489
        %5870 = vmatprep.subr.mxu0 0.0
        %5871 = vmatpush1.msra.mxu0 %v3490
        %5872 = vmatprep.subr.mxu0 0.0
        %5873 = vmatpush1.msra.mxu0 %v4039
        %5874 = vmatprep.subr.mxu0 0.0
        %5875 = vmatpush1.msra.mxu0 0.0
        %5876 = vmatprep.subr.mxu0 0.0
        %5877 = vmatpush1.msra.mxu0 0.0
        %5878 = vmatprep.subr.mxu0 0.0
        %5879 = vmatpush1.msra.mxu0 0.0
        %5880 = vmatprep.subr.mxu0 0.0
        %5881 = vmatpush1.msra.mxu0 0.0
        %5882 = vmatprep.subr.mxu0 0.0
        %5883 = vmatpush1.msra.mxu0 0.0
        %5884 = vmatprep.subr.mxu0 0.0
        %5885 = vmatpush1.msra.mxu0 0.0
        %5886 = vmatprep.subr.mxu0 0.0
        %5887 = vmatpush1.msra.mxu0 0.0
        %5888 = vmatprep.subr.mxu0 0.0
        %5889 = vmatpush1.msra.mxu0 0.0
        %5890 = vmatprep.subr.mxu0 0.0
        %5891 = vmatpush1.msra.mxu0 0.0
        %5892 = vmatprep.subr.mxu0 0.0
        %5893 = vmatpush1.msra.mxu0 0.0
        %5894 = vmatprep.subr.mxu0 0.0
        %5895 = vmatpush1.msra.mxu0 0.0
        %5896 = vmatprep.subr.mxu0 0.0
        %5897 = vmatpush1.msra.mxu0 0.0
        %5898 = vmatprep.subr.mxu0 0.0
        %5899 = vmatpush1.msra.mxu0 0.0
        %5900 = vmatprep.subr.mxu0 0.0
        %5901 = vmatpush1.msra.mxu0 0.0
        %5902 = vmatprep.subr.mxu0 0.0
        %5903 = vmatpush1.msra.mxu0 0.0
        %5904 = vmatprep.subr.mxu0 0.0
        %5905 = vmatpush1.msra.mxu0 0.0
        %5906 = vmatprep.subr.mxu0 0.0
        %5907 = vmatpush1.msra.mxu0 0.0
        %5908 = vmatprep.subr.mxu0 0.0
        %5909 = vmatpush1.msra.mxu0 0.0
        %5910 = vmatprep.subr.mxu0 0.0
        %5911 = vmatpush1.msra.mxu0 0.0
        %5912 = vmatprep.subr.mxu0 0.0
        %5913 = vmatpush1.msra.mxu0 0.0
        %5914 = vmatprep.subr.mxu0 0.0
        %5915 = vmatpush1.msra.mxu0 0.0
        %5916 = vmatprep.subr.mxu0 0.0
        %5917 = vmatpush1.msra.mxu0 0.0
        %5918 = vmatprep.subr.mxu0 0.0
        %5919 = vmatpush1.msra.mxu0 0.0
        %5920 = vmatprep.subr.mxu0 0.0
        %5921 = vmatpush1.msra.mxu0 0.0
        %5922 = vmatprep.subr.mxu0 0.0
        %5923 = vmatpush1.msra.mxu0 0.0
        %5924 = vmatprep.subr.mxu0 0.0
        %5925 = vmatpush1.msra.mxu0 0.0
        %5926 = vmatprep.subr.mxu0 0.0
        %5927 = vmatpush1.msra.mxu0 0.0
        %5928 = vmatprep.subr.mxu0 0.0
        %5929 = vmatpush1.msra.mxu0 0.0
        %5930 = vmatprep.mubr.f32.mxu0 0.0
        %5931 = vmatmul.mubr.f32.gmra.mrb[0].mxu0 %v5864
        %v5932 = vpop.f32.mrb[0].mxu0
        %v5933 = vadd.f32 %v3492, %v5932
        %v5934 = vpop.f32.mrb[0].mxu0
        %5935 = vdwg.mxu0
        %5936 = vst.msk [vmem:[%s379 + $0x3] sm:$0x1] %vm4111, %v5933
        %5937 = vmatprep.subr.mxu0 %v3287
        %5938 = vmatpush1.msra.mxu0 %v3286
        %5939 = vmatprep.subr.mxu0 %v3291
        %5940 = vmatpush1.msra.mxu0 %v3290
        %5941 = vmatprep.subr.mxu0 %v3295
        %5942 = vmatpush1.msra.mxu0 %v3294
        %5943 = vmatprep.subr.mxu0 %v3299
        %5944 = vmatpush1.msra.mxu0 %v3298
        %5945 = vmatprep.subr.mxu0 %v3303
        %5946 = vmatpush1.msra.mxu0 %v3302
        %5947 = vmatprep.subr.mxu0 %v3307
        %5948 = vmatpush1.msra.mxu0 %v3306
        %5949 = vmatprep.subr.mxu0 %v3311
        %5950 = vmatpush1.msra.mxu0 %v3310
        %5951 = vmatprep.subr.mxu0 %v3315
        %5952 = vmatpush1.msra.mxu0 %v3314
        %5953 = vmatprep.subr.mxu0 %v3319
        %5954 = vmatpush1.msra.mxu0 %v3318
        %5955 = vmatprep.subr.mxu0 %v3323
        %5956 = vmatpush1.msra.mxu0 %v3322
        %5957 = vmatprep.subr.mxu0 %v3327
        %5958 = vmatpush1.msra.mxu0 %v3326
        %5959 = vmatprep.subr.mxu0 %v3331
        %5960 = vmatpush1.msra.mxu0 %v3330
        %5961 = vmatprep.subr.mxu0 %v3335
        %5962 = vmatpush1.msra.mxu0 %v3334
        %5963 = vmatprep.subr.mxu0 %v3339
        %5964 = vmatpush1.msra.mxu0 %v3338
        %5965 = vmatprep.subr.mxu0 %v3343
        %5966 = vmatpush1.msra.mxu0 %v3342
        %5967 = vmatprep.subr.mxu0 %v3347
        %5968 = vmatpush1.msra.mxu0 %v3346
        %5969 = vmatprep.subr.mxu0 %v3351
        %5970 = vmatpush1.msra.mxu0 %v3350
        %5971 = vmatprep.subr.mxu0 %v3355
        %5972 = vmatpush1.msra.mxu0 %v3354
        %5973 = vmatprep.subr.mxu0 %v3359
        %5974 = vmatpush1.msra.mxu0 %v3358
        %5975 = vmatprep.subr.mxu0 %v3363
        %5976 = vmatpush1.msra.mxu0 %v3362
        %5977 = vmatprep.subr.mxu0 %v3367
        %5978 = vmatpush1.msra.mxu0 %v3366
        %5979 = vmatprep.subr.mxu0 %v3371
        %5980 = vmatpush1.msra.mxu0 %v3370
        %5981 = vmatprep.subr.mxu0 %v3375
        %5982 = vmatpush1.msra.mxu0 %v3374
        %5983 = vmatprep.subr.mxu0 %v3379
        %5984 = vmatpush1.msra.mxu0 %v3378
        %5985 = vmatprep.subr.mxu0 %v3383
        %5986 = vmatpush1.msra.mxu0 %v3382
        %5987 = vmatprep.subr.mxu0 %v3387
        %5988 = vmatpush1.msra.mxu0 %v3386
        %5989 = vmatprep.subr.mxu0 %v3391
        %5990 = vmatpush1.msra.mxu0 %v3390
        %5991 = vmatprep.subr.mxu0 %v3395
        %5992 = vmatpush1.msra.mxu0 %v3394
        %5993 = vmatprep.subr.mxu0 %v3399
        %5994 = vmatpush1.msra.mxu0 %v3398
        %5995 = vmatprep.subr.mxu0 %v3403
        %5996 = vmatpush1.msra.mxu0 %v3402
        %5997 = vmatprep.subr.mxu0 %v3407
        %5998 = vmatpush1.msra.mxu0 %v3406
        %5999 = vmatprep.subr.mxu0 %v3411
        %6000 = vmatpush1.msra.mxu0 %v3410
        %6001 = vmatprep.mubr.f32.mxu0 %v3263
        %6002 = vmatmul.mubr.f32.gmra.mrb[0].mxu0 %v3262
        %v6003 = vpop.f32.mrb[0].mxu0
        %v6004 = vadd.f32 0.0, %v6003
        %v6005 = vpop.f32.mrb[0].mxu0
        %v6006 = vadd.f32 0.0, %v6005
        %6007 = vmatprep.mubr.f32.mxu0 %v3279
        %6008 = vmatmul.mubr.f32.gmra.mrb[0].mxu0 %v3278
        %v6009 = vpop.f32.mrb[0].mxu0
        %v6010 = vadd.f32 0.0, %v6009
        %v6011 = vpop.f32.mrb[0].mxu0
        %v6012 = vadd.f32 0.0, %v6011
        %6013 = vdwg.mxu0
        %6014 = vmatprep.subr.mxu0 %v3289
        %6015 = vmatpush1.msra.mxu0 %v3288
        %6016 = vmatprep.subr.mxu0 %v3293
        %6017 = vmatpush1.msra.mxu0 %v3292
        %6018 = vmatprep.subr.mxu0 %v3297
        %6019 = vmatpush1.msra.mxu0 %v3296
        %6020 = vmatprep.subr.mxu0 %v3301
        %6021 = vmatpush1.msra.mxu0 %v3300
        %6022 = vmatprep.subr.mxu0 %v3305
        %6023 = vmatpush1.msra.mxu0 %v3304
        %6024 = vmatprep.subr.mxu0 %v3309
        %6025 = vmatpush1.msra.mxu0 %v3308
        %6026 = vmatprep.subr.mxu0 %v3313
        %6027 = vmatpush1.msra.mxu0 %v3312
        %6028 = vmatprep.subr.mxu0 %v3317
        %6029 = vmatpush1.msra.mxu0 %v3316
        %6030 = vmatprep.subr.mxu0 %v3321
        %6031 = vmatpush1.msra.mxu0 %v3320
        %6032 = vmatprep.subr.mxu0 %v3325
        %6033 = vmatpush1.msra.mxu0 %v3324
        %6034 = vmatprep.subr.mxu0 %v3329
        %6035 = vmatpush1.msra.mxu0 %v3328
        %6036 = vmatprep.subr.mxu0 %v3333
        %6037 = vmatpush1.msra.mxu0 %v3332
        %6038 = vmatprep.subr.mxu0 %v3337
        %6039 = vmatpush1.msra.mxu0 %v3336
        %6040 = vmatprep.subr.mxu0 %v3341
        %6041 = vmatpush1.msra.mxu0 %v3340
        %6042 = vmatprep.subr.mxu0 %v3345
        %6043 = vmatpush1.msra.mxu0 %v3344
        %6044 = vmatprep.subr.mxu0 %v3349
        %6045 = vmatpush1.msra.mxu0 %v3348
        %6046 = vmatprep.subr.mxu0 %v3353
        %6047 = vmatpush1.msra.mxu0 %v3352
        %6048 = vmatprep.subr.mxu0 %v3357
        %6049 = vmatpush1.msra.mxu0 %v3356
        %6050 = vmatprep.subr.mxu0 %v3361
        %6051 = vmatpush1.msra.mxu0 %v3360
        %6052 = vmatprep.subr.mxu0 %v3365
        %6053 = vmatpush1.msra.mxu0 %v3364
        %6054 = vmatprep.subr.mxu0 %v3369
        %6055 = vmatpush1.msra.mxu0 %v3368
        %6056 = vmatprep.subr.mxu0 %v3373
        %6057 = vmatpush1.msra.mxu0 %v3372
        %6058 = vmatprep.subr.mxu0 %v3377
        %6059 = vmatpush1.msra.mxu0 %v3376
        %6060 = vmatprep.subr.mxu0 %v3381
        %6061 = vmatpush1.msra.mxu0 %v3380
        %6062 = vmatprep.subr.mxu0 %v3385
        %6063 = vmatpush1.msra.mxu0 %v3384
        %6064 = vmatprep.subr.mxu0 %v3389
        %6065 = vmatpush1.msra.mxu0 %v3388
        %6066 = vmatprep.subr.mxu0 %v3393
        %6067 = vmatpush1.msra.mxu0 %v3392
        %6068 = vmatprep.subr.mxu0 %v3397
        %6069 = vmatpush1.msra.mxu0 %v3396
        %6070 = vmatprep.subr.mxu0 %v3401
        %6071 = vmatpush1.msra.mxu0 %v3400
        %6072 = vmatprep.subr.mxu0 %v3405
        %6073 = vmatpush1.msra.mxu0 %v3404
        %6074 = vmatprep.subr.mxu0 %v3409
        %6075 = vmatpush1.msra.mxu0 %v3408
        %6076 = vmatprep.subr.mxu0 %v3413
        %6077 = vmatpush1.msra.mxu0 %v3412
        %6078 = vmatprep.mubr.f32.mxu0 %v3263
        %6079 = vmatmul.mubr.f32.gmra.mrb[0].mxu0 %v3262
        %v6080 = vpop.f32.mrb[0].mxu0
        %v6081 = vadd.f32 0.0, %v6080
        %v6082 = vpop.f32.mrb[0].mxu0
        %v6083 = vadd.f32 0.0, %v6082
        %6084 = vmatprep.mubr.f32.mxu0 %v3279
        %6085 = vmatmul.mubr.f32.gmra.mrb[0].mxu0 %v3278
        %v6086 = vpop.f32.mrb[0].mxu0
        %v6087 = vadd.f32 0.0, %v6086
        %v6088 = vpop.f32.mrb[0].mxu0
        %v6089 = vadd.f32 0.0, %v6088
        %6090 = vdwg.mxu0
        %v6091 = vmul.f32 %v6004, %v3414
        %v6092 = vmul.f32 %v6006, %v3415
        %v6093 = vmul.f32 %v6081, %v3416
        %v6094 = vmul.f32 %v6083, %v3417
        %v6095 = vmul.f32 %v6010, %v3418
        %v6096 = vmul.f32 %v6012, %v3419
        %v6097 = vmul.f32 %v6087, %v3420
        %v6098 = vmul.f32 %v6089, %v3421
        %v6100 = vsel %vm3659, %v6095, 0
        %v6103 = vsel %vm3659, %v6096, 0
        %v6106 = vsel %vm3659, %v6097, 0
        %v6109 = vsel %vm3659, %v6098, 0
        %6111 = vmatprep.subr.mxu0 %v6092
        %6112 = vmatpush1.msra.mxu0 %v6091
        %6113 = vmatprep.subr.mxu0 %v6103
        %6114 = vmatpush1.msra.mxu0 %v6100
        %6115 = vmatprep.subr.mxu0 0.0
        %6116 = vmatpush1.msra.mxu0 0.0
        %6117 = vmatprep.subr.mxu0 0.0
        %6118 = vmatpush1.msra.mxu0 0.0
        %6119 = vmatprep.subr.mxu0 0.0
        %6120 = vmatpush1.msra.mxu0 0.0
        %6121 = vmatprep.subr.mxu0 0.0
        %6122 = vmatpush1.msra.mxu0 0.0
        %6123 = vmatprep.subr.mxu0 0.0
        %6124 = vmatpush1.msra.mxu0 0.0
        %6125 = vmatprep.subr.mxu0 0.0
        %6126 = vmatpush1.msra.mxu0 0.0
        %6127 = vmatprep.subr.mxu0 0.0
        %6128 = vmatpush1.msra.mxu0 0.0
        %6129 = vmatprep.subr.mxu0 0.0
        %6130 = vmatpush1.msra.mxu0 0.0
        %6131 = vmatprep.subr.mxu0 0.0
        %6132 = vmatpush1.msra.mxu0 0.0
        %6133 = vmatprep.subr.mxu0 0.0
        %6134 = vmatpush1.msra.mxu0 0.0
        %6135 = vmatprep.subr.mxu0 0.0
        %6136 = vmatpush1.msra.mxu0 0.0
        %6137 = vmatprep.subr.mxu0 0.0
        %6138 = vmatpush1.msra.mxu0 0.0
        %6139 = vmatprep.subr.mxu0 0.0
        %6140 = vmatpush1.msra.mxu0 0.0
        %6141 = vmatprep.subr.mxu0 0.0
        %6142 = vmatpush1.msra.mxu0 0.0
        %6143 = vmatprep.subr.mxu0 0.0
        %6144 = vmatpush1.msra.mxu0 0.0
        %6145 = vmatprep.subr.mxu0 0.0
        %6146 = vmatpush1.msra.mxu0 0.0
        %6147 = vmatprep.subr.mxu0 0.0
        %6148 = vmatpush1.msra.mxu0 0.0
        %6149 = vmatprep.subr.mxu0 0.0
        %6150 = vmatpush1.msra.mxu0 0.0
        %6151 = vmatprep.subr.mxu0 0.0
        %6152 = vmatpush1.msra.mxu0 0.0
        %6153 = vmatprep.subr.mxu0 0.0
        %6154 = vmatpush1.msra.mxu0 0.0
        %6155 = vmatprep.subr.mxu0 0.0
        %6156 = vmatpush1.msra.mxu0 0.0
        %6157 = vmatprep.subr.mxu0 0.0
        %6158 = vmatpush1.msra.mxu0 0.0
        %6159 = vmatprep.subr.mxu0 0.0
        %6160 = vmatpush1.msra.mxu0 0.0
        %6161 = vmatprep.subr.mxu0 0.0
        %6162 = vmatpush1.msra.mxu0 0.0
        %6163 = vmatprep.subr.mxu0 0.0
        %6164 = vmatpush1.msra.mxu0 0.0
        %6165 = vmatprep.subr.mxu0 0.0
        %6166 = vmatpush1.msra.mxu0 0.0
        %6167 = vmatprep.subr.mxu0 0.0
        %6168 = vmatpush1.msra.mxu0 0.0
        %6169 = vmatprep.subr.mxu0 0.0
        %6170 = vmatpush1.msra.mxu0 0.0
        %6171 = vmatprep.subr.mxu0 0.0
        %6172 = vmatpush1.msra.mxu0 0.0
        %6173 = vmatprep.subr.mxu0 0.0
        %6174 = vmatpush1.msra.mxu0 0.0
        %6175 = vmatprep.mubr.f32.mxu0 0.0
        %6176 = vmatmul.mubr.f32.gmra.mrb[0].mxu0 %v3657
        %v6177 = vpop.f32.mrb[0].mxu0
        %v6178 = vadd.f32 0.0, %v6177
        %v6179 = vpop.f32.mrb[0].mxu0
        %v6180 = vadd.f32 0.0, %v6179
        %6181 = vdwg.mxu0
        %6182 = vmatprep.subr.mxu0 %v6094
        %6183 = vmatpush1.msra.mxu0 %v6093
        %6184 = vmatprep.subr.mxu0 %v6109
        %6185 = vmatpush1.msra.mxu0 %v6106
        %6186 = vmatprep.subr.mxu0 0.0
        %6187 = vmatpush1.msra.mxu0 0.0
        %6188 = vmatprep.subr.mxu0 0.0
        %6189 = vmatpush1.msra.mxu0 0.0
        %6190 = vmatprep.subr.mxu0 0.0
        %6191 = vmatpush1.msra.mxu0 0.0
        %6192 = vmatprep.subr.mxu0 0.0
        %6193 = vmatpush1.msra.mxu0 0.0
        %6194 = vmatprep.subr.mxu0 0.0
        %6195 = vmatpush1.msra.mxu0 0.0
        %6196 = vmatprep.subr.mxu0 0.0
        %6197 = vmatpush1.msra.mxu0 0.0
        %6198 = vmatprep.subr.mxu0 0.0
        %6199 = vmatpush1.msra.mxu0 0.0
        %6200 = vmatprep.subr.mxu0 0.0
        %6201 = vmatpush1.msra.mxu0 0.0
        %6202 = vmatprep.subr.mxu0 0.0
        %6203 = vmatpush1.msra.mxu0 0.0
        %6204 = vmatprep.subr.mxu0 0.0
        %6205 = vmatpush1.msra.mxu0 0.0
        %6206 = vmatprep.subr.mxu0 0.0
        %6207 = vmatpush1.msra.mxu0 0.0
        %6208 = vmatprep.subr.mxu0 0.0
        %6209 = vmatpush1.msra.mxu0 0.0
        %6210 = vmatprep.subr.mxu0 0.0
        %6211 = vmatpush1.msra.mxu0 0.0
        %6212 = vmatprep.subr.mxu0 0.0
        %6213 = vmatpush1.msra.mxu0 0.0
        %6214 = vmatprep.subr.mxu0 0.0
        %6215 = vmatpush1.msra.mxu0 0.0
        %6216 = vmatprep.subr.mxu0 0.0
        %6217 = vmatpush1.msra.mxu0 0.0
        %6218 = vmatprep.subr.mxu0 0.0
        %6219 = vmatpush1.msra.mxu0 0.0
        %6220 = vmatprep.subr.mxu0 0.0
        %6221 = vmatpush1.msra.mxu0 0.0
        %6222 = vmatprep.subr.mxu0 0.0
        %6223 = vmatpush1.msra.mxu0 0.0
        %6224 = vmatprep.subr.mxu0 0.0
        %6225 = vmatpush1.msra.mxu0 0.0
        %6226 = vmatprep.subr.mxu0 0.0
        %6227 = vmatpush1.msra.mxu0 0.0
        %6228 = vmatprep.subr.mxu0 0.0
        %6229 = vmatpush1.msra.mxu0 0.0
        %6230 = vmatprep.subr.mxu0 0.0
        %6231 = vmatpush1.msra.mxu0 0.0
        %6232 = vmatprep.subr.mxu0 0.0
        %6233 = vmatpush1.msra.mxu0 0.0
        %6234 = vmatprep.subr.mxu0 0.0
        %6235 = vmatpush1.msra.mxu0 0.0
        %6236 = vmatprep.subr.mxu0 0.0
        %6237 = vmatpush1.msra.mxu0 0.0
        %6238 = vmatprep.subr.mxu0 0.0
        %6239 = vmatpush1.msra.mxu0 0.0
        %6240 = vmatprep.subr.mxu0 0.0
        %6241 = vmatpush1.msra.mxu0 0.0
        %6242 = vmatprep.subr.mxu0 0.0
        %6243 = vmatpush1.msra.mxu0 0.0
        %6244 = vmatprep.subr.mxu0 0.0
        %6245 = vmatpush1.msra.mxu0 0.0
        %6246 = vmatprep.mubr.f32.mxu0 0.0
        %6247 = vmatmul.mubr.f32.gmra.mrb[0].mxu0 %v3657
        %v6248 = vpop.f32.mrb[0].mxu0
        %v6249 = vadd.f32 0.0, %v6248
        %v6250 = vpop.f32.mrb[0].mxu0
        %v6251 = vadd.f32 0.0, %v6250
        %6252 = vdwg.mxu0
        %v6254 = vsel %vm3814, %v6251, 0
        %6256 = vmatprep.subr.mxu0 0.0
        %6257 = vmatpush1.msra.mxu0 %v3422
        %6258 = vmatprep.subr.mxu0 0.0
        %6259 = vmatpush1.msra.mxu0 %v3423
        %6260 = vmatprep.subr.mxu0 0.0
        %6261 = vmatpush1.msra.mxu0 %v3424
        %6262 = vmatprep.subr.mxu0 0.0
        %6263 = vmatpush1.msra.mxu0 %v3425
        %6264 = vmatprep.subr.mxu0 0.0
        %6265 = vmatpush1.msra.mxu0 %v3426
        %6266 = vmatprep.subr.mxu0 0.0
        %6267 = vmatpush1.msra.mxu0 %v3427
        %6268 = vmatprep.subr.mxu0 0.0
        %6269 = vmatpush1.msra.mxu0 %v3428
        %6270 = vmatprep.subr.mxu0 0.0
        %6271 = vmatpush1.msra.mxu0 %v3429
        %6272 = vmatprep.subr.mxu0 0.0
        %6273 = vmatpush1.msra.mxu0 %v3430
        %6274 = vmatprep.subr.mxu0 0.0
        %6275 = vmatpush1.msra.mxu0 %v3431
        %6276 = vmatprep.subr.mxu0 0.0
        %6277 = vmatpush1.msra.mxu0 %v3432
        %6278 = vmatprep.subr.mxu0 0.0
        %6279 = vmatpush1.msra.mxu0 %v3433
        %6280 = vmatprep.subr.mxu0 0.0
        %6281 = vmatpush1.msra.mxu0 %v3434
        %6282 = vmatprep.subr.mxu0 0.0
        %6283 = vmatpush1.msra.mxu0 %v3435
        %6284 = vmatprep.subr.mxu0 0.0
        %6285 = vmatpush1.msra.mxu0 %v3436
        %6286 = vmatprep.subr.mxu0 0.0
        %6287 = vmatpush1.msra.mxu0 %v3437
        %6288 = vmatprep.subr.mxu0 0.0
        %6289 = vmatpush1.msra.mxu0 %v3438
        %6290 = vmatprep.subr.mxu0 0.0
        %6291 = vmatpush1.msra.mxu0 %v3439
        %6292 = vmatprep.subr.mxu0 0.0
        %6293 = vmatpush1.msra.mxu0 %v3440
        %6294 = vmatprep.subr.mxu0 0.0
        %6295 = vmatpush1.msra.mxu0 %v3441
        %6296 = vmatprep.subr.mxu0 0.0
        %6297 = vmatpush1.msra.mxu0 %v3442
        %6298 = vmatprep.subr.mxu0 0.0
        %6299 = vmatpush1.msra.mxu0 %v3443
        %6300 = vmatprep.subr.mxu0 0.0
        %6301 = vmatpush1.msra.mxu0 %v3444
        %6302 = vmatprep.subr.mxu0 0.0
        %6303 = vmatpush1.msra.mxu0 %v3445
        %6304 = vmatprep.subr.mxu0 0.0
        %6305 = vmatpush1.msra.mxu0 %v3446
        %6306 = vmatprep.subr.mxu0 0.0
        %6307 = vmatpush1.msra.mxu0 %v3447
        %6308 = vmatprep.subr.mxu0 0.0
        %6309 = vmatpush1.msra.mxu0 %v3448
        %6310 = vmatprep.subr.mxu0 0.0
        %6311 = vmatpush1.msra.mxu0 %v3449
        %6312 = vmatprep.subr.mxu0 0.0
        %6313 = vmatpush1.msra.mxu0 %v3450
        %6314 = vmatprep.subr.mxu0 0.0
        %6315 = vmatpush1.msra.mxu0 %v3451
        %6316 = vmatprep.subr.mxu0 0.0
        %6317 = vmatpush1.msra.mxu0 %v3452
        %6318 = vmatprep.subr.mxu0 0.0
        %6319 = vmatpush1.msra.mxu0 %v3453
        %6320 = vmatprep.mubr.f32.mxu0 %v6180
        %6321 = vmatmul.mubr.f32.gmra.mrb[0].mxu0 %v6178
        %v6322 = vpop.f32.mrb[0].mxu0
        %v6323 = vadd.f32 %v3482, %v6322
        %v6324 = vpop.f32.mrb[0].mxu0
        %6325 = vdwg.mxu0
        %6326 = vmatprep.subr.mxu0 0.0
        %6327 = vmatpush1.msra.mxu0 %v3454
        %6328 = vmatprep.subr.mxu0 0.0
        %6329 = vmatpush1.msra.mxu0 %v3455
        %6330 = vmatprep.subr.mxu0 0.0
        %6331 = vmatpush1.msra.mxu0 %v3456
        %6332 = vmatprep.subr.mxu0 0.0
        %6333 = vmatpush1.msra.mxu0 %v3457
        %6334 = vmatprep.subr.mxu0 0.0
        %6335 = vmatpush1.msra.mxu0 %v3458
        %6336 = vmatprep.subr.mxu0 0.0
        %6337 = vmatpush1.msra.mxu0 %v3459
        %6338 = vmatprep.subr.mxu0 0.0
        %6339 = vmatpush1.msra.mxu0 %v3460
        %6340 = vmatprep.subr.mxu0 0.0
        %6341 = vmatpush1.msra.mxu0 %v3461
        %6342 = vmatprep.subr.mxu0 0.0
        %6343 = vmatpush1.msra.mxu0 %v3462
        %6344 = vmatprep.subr.mxu0 0.0
        %6345 = vmatpush1.msra.mxu0 %v3463
        %6346 = vmatprep.subr.mxu0 0.0
        %6347 = vmatpush1.msra.mxu0 %v3464
        %6348 = vmatprep.subr.mxu0 0.0
        %6349 = vmatpush1.msra.mxu0 %v3465
        %6350 = vmatprep.subr.mxu0 0.0
        %6351 = vmatpush1.msra.mxu0 %v3466
        %6352 = vmatprep.subr.mxu0 0.0
        %6353 = vmatpush1.msra.mxu0 %v3467
        %6354 = vmatprep.subr.mxu0 0.0
        %6355 = vmatpush1.msra.mxu0 %v3468
        %6356 = vmatprep.subr.mxu0 0.0
        %6357 = vmatpush1.msra.mxu0 %v3469
        %6358 = vmatprep.subr.mxu0 0.0
        %6359 = vmatpush1.msra.mxu0 %v3470
        %6360 = vmatprep.subr.mxu0 0.0
        %6361 = vmatpush1.msra.mxu0 %v3471
        %6362 = vmatprep.subr.mxu0 0.0
        %6363 = vmatpush1.msra.mxu0 %v3472
        %6364 = vmatprep.subr.mxu0 0.0
        %6365 = vmatpush1.msra.mxu0 %v3473
        %6366 = vmatprep.subr.mxu0 0.0
        %6367 = vmatpush1.msra.mxu0 %v3474
        %6368 = vmatprep.subr.mxu0 0.0
        %6369 = vmatpush1.msra.mxu0 %v3475
        %6370 = vmatprep.subr.mxu0 0.0
        %6371 = vmatpush1.msra.mxu0 %v3476
        %6372 = vmatprep.subr.mxu0 0.0
        %6373 = vmatpush1.msra.mxu0 %v3477
        %6374 = vmatprep.subr.mxu0 0.0
        %6375 = vmatpush1.msra.mxu0 %v3478
        %6376 = vmatprep.subr.mxu0 0.0
        %6377 = vmatpush1.msra.mxu0 %v3479
        %6378 = vmatprep.subr.mxu0 0.0
        %6379 = vmatpush1.msra.mxu0 %v3480
        %6380 = vmatprep.subr.mxu0 0.0
        %6381 = vmatpush1.msra.mxu0 %v3481
        %6382 = vmatprep.subr.mxu0 0.0
        %6383 = vmatpush1.msra.mxu0 0.0
        %6384 = vmatprep.subr.mxu0 0.0
        %6385 = vmatpush1.msra.mxu0 0.0
        %6386 = vmatprep.subr.mxu0 0.0
        %6387 = vmatpush1.msra.mxu0 0.0
        %6388 = vmatprep.subr.mxu0 0.0
        %6389 = vmatpush1.msra.mxu0 0.0
        %6390 = vmatprep.mubr.f32.mxu0 %v6254
        %6391 = vmatmul.mubr.f32.gmra.mrb[0].mxu0 %v6249
        %v6392 = vpop.f32.mrb[0].mxu0
        %v6393 = vadd.f32 %v6323, %v6392
        %v6394 = vpop.f32.mrb[0].mxu0
        %6395 = vdwg.mxu0
        %v6396 = vmax.f32 %v6393, 0.0
        %v6398 = vsel %vm643, %v6396, 0
        %6400 = vmatprep.subr.mxu0 0.0
        %6401 = vmatpush1.msra.mxu0 %v3483
        %6402 = vmatprep.subr.mxu0 0.0
        %6403 = vmatpush1.msra.mxu0 %v3484
        %6404 = vmatprep.subr.mxu0 0.0
        %6405 = vmatpush1.msra.mxu0 %v3485
        %6406 = vmatprep.subr.mxu0 0.0
        %6407 = vmatpush1.msra.mxu0 %v3486
        %6408 = vmatprep.subr.mxu0 0.0
        %6409 = vmatpush1.msra.mxu0 0.0
        %6410 = vmatprep.subr.mxu0 0.0
        %6411 = vmatpush1.msra.mxu0 0.0
        %6412 = vmatprep.subr.mxu0 0.0
        %6413 = vmatpush1.msra.mxu0 0.0
        %6414 = vmatprep.subr.mxu0 0.0
        %6415 = vmatpush1.msra.mxu0 0.0
        %6416 = vmatprep.subr.mxu0 0.0
        %6417 = vmatpush1.msra.mxu0 0.0
        %6418 = vmatprep.subr.mxu0 0.0
        %6419 = vmatpush1.msra.mxu0 0.0
        %6420 = vmatprep.subr.mxu0 0.0
        %6421 = vmatpush1.msra.mxu0 0.0
        %6422 = vmatprep.subr.mxu0 0.0
        %6423 = vmatpush1.msra.mxu0 0.0
        %6424 = vmatprep.subr.mxu0 0.0
        %6425 = vmatpush1.msra.mxu0 0.0
        %6426 = vmatprep.subr.mxu0 0.0
        %6427 = vmatpush1.msra.mxu0 0.0
        %6428 = vmatprep.subr.mxu0 0.0
        %6429 = vmatpush1.msra.mxu0 0.0
        %6430 = vmatprep.subr.mxu0 0.0
        %6431 = vmatpush1.msra.mxu0 0.0
        %6432 = vmatprep.subr.mxu0 0.0
        %6433 = vmatpush1.msra.mxu0 0.0
        %6434 = vmatprep.subr.mxu0 0.0
        %6435 = vmatpush1.msra.mxu0 0.0
        %6436 = vmatprep.subr.mxu0 0.0
        %6437 = vmatpush1.msra.mxu0 0.0
        %6438 = vmatprep.subr.mxu0 0.0
        %6439 = vmatpush1.msra.mxu0 0.0
        %6440 = vmatprep.subr.mxu0 0.0
        %6441 = vmatpush1.msra.mxu0 0.0
        %6442 = vmatprep.subr.mxu0 0.0
        %6443 = vmatpush1.msra.mxu0 0.0
        %6444 = vmatprep.subr.mxu0 0.0
        %6445 = vmatpush1.msra.mxu0 0.0
        %6446 = vmatprep.subr.mxu0 0.0
        %6447 = vmatpush1.msra.mxu0 0.0
        %6448 = vmatprep.subr.mxu0 0.0
        %6449 = vmatpush1.msra.mxu0 0.0
        %6450 = vmatprep.subr.mxu0 0.0
        %6451 = vmatpush1.msra.mxu0 0.0
        %6452 = vmatprep.subr.mxu0 0.0
        %6453 = vmatpush1.msra.mxu0 0.0
        %6454 = vmatprep.subr.mxu0 0.0
        %6455 = vmatpush1.msra.mxu0 0.0
        %6456 = vmatprep.subr.mxu0 0.0
        %6457 = vmatpush1.msra.mxu0 0.0
        %6458 = vmatprep.subr.mxu0 0.0
        %6459 = vmatpush1.msra.mxu0 0.0
        %6460 = vmatprep.subr.mxu0 0.0
        %6461 = vmatpush1.msra.mxu0 0.0
        %6462 = vmatprep.subr.mxu0 0.0
        %6463 = vmatpush1.msra.mxu0 0.0
        %6464 = vmatprep.mubr.f32.mxu0 0.0
        %6465 = vmatmul.mubr.f32.gmra.mrb[0].mxu0 %v6398
        %v6466 = vpop.f32.mrb[0].mxu0
        %v6467 = vadd.f32 %v3487, %v6466
        %v6468 = vpop.f32.mrb[0].mxu0
        %6469 = vdwg.mxu0
        %v6470 = vmax.f32 %v6467, 0.0
        %v6472 = vsel %vm4033, %v6470, 0
        %6474 = vmatprep.subr.mxu0 0.0
        %6475 = vmatpush1.msra.mxu0 %v3488
        %6476 = vmatprep.subr.mxu0 0.0
        %6477 = vmatpush1.msra.mxu0 %v3489
        %6478 = vmatprep.subr.mxu0 0.0
        %6479 = vmatpush1.msra.mxu0 %v3490
        %6480 = vmatprep.subr.mxu0 0.0
        %6481 = vmatpush1.msra.mxu0 %v4039
        %6482 = vmatprep.subr.mxu0 0.0
        %6483 = vmatpush1.msra.mxu0 0.0
        %6484 = vmatprep.subr.mxu0 0.0
        %6485 = vmatpush1.msra.mxu0 0.0
        %6486 = vmatprep.subr.mxu0 0.0
        %6487 = vmatpush1.msra.mxu0 0.0
        %6488 = vmatprep.subr.mxu0 0.0
        %6489 = vmatpush1.msra.mxu0 0.0
        %6490 = vmatprep.subr.mxu0 0.0
        %6491 = vmatpush1.msra.mxu0 0.0
        %6492 = vmatprep.subr.mxu0 0.0
        %6493 = vmatpush1.msra.mxu0 0.0
        %6494 = vmatprep.subr.mxu0 0.0
        %6495 = vmatpush1.msra.mxu0 0.0
        %6496 = vmatprep.subr.mxu0 0.0
        %6497 = vmatpush1.msra.mxu0 0.0
        %6498 = vmatprep.subr.mxu0 0.0
        %6499 = vmatpush1.msra.mxu0 0.0
        %6500 = vmatprep.subr.mxu0 0.0
        %6501 = vmatpush1.msra.mxu0 0.0
        %6502 = vmatprep.subr.mxu0 0.0
        %6503 = vmatpush1.msra.mxu0 0.0
        %6504 = vmatprep.subr.mxu0 0.0
        %6505 = vmatpush1.msra.mxu0 0.0
        %6506 = vmatprep.subr.mxu0 0.0
        %6507 = vmatpush1.msra.mxu0 0.0
        %6508 = vmatprep.subr.mxu0 0.0
        %6509 = vmatpush1.msra.mxu0 0.0
        %6510 = vmatprep.subr.mxu0 0.0
        %6511 = vmatpush1.msra.mxu0 0.0
        %6512 = vmatprep.subr.mxu0 0.0
        %6513 = vmatpush1.msra.mxu0 0.0
        %6514 = vmatprep.subr.mxu0 0.0
        %6515 = vmatpush1.msra.mxu0 0.0
        %6516 = vmatprep.subr.mxu0 0.0
        %6517 = vmatpush1.msra.mxu0 0.0
        %6518 = vmatprep.subr.mxu0 0.0
        %6519 = vmatpush1.msra.mxu0 0.0
        %6520 = vmatprep.subr.mxu0 0.0
        %6521 = vmatpush1.msra.mxu0 0.0
        %6522 = vmatprep.subr.mxu0 0.0
        %6523 = vmatpush1.msra.mxu0 0.0
        %6524 = vmatprep.subr.mxu0 0.0
        %6525 = vmatpush1.msra.mxu0 0.0
        %6526 = vmatprep.subr.mxu0 0.0
        %6527 = vmatpush1.msra.mxu0 0.0
        %6528 = vmatprep.subr.mxu0 0.0
        %6529 = vmatpush1.msra.mxu0 0.0
        %6530 = vmatprep.subr.mxu0 0.0
        %6531 = vmatpush1.msra.mxu0 0.0
        %6532 = vmatprep.subr.mxu0 0.0
        %6533 = vmatpush1.msra.mxu0 0.0
        %6534 = vmatprep.subr.mxu0 0.0
        %6535 = vmatpush1.msra.mxu0 0.0
        %6536 = vmatprep.subr.mxu0 0.0
        %6537 = vmatpush1.msra.mxu0 0.0
        %6538 = vmatprep.mubr.f32.mxu0 0.0
        %6539 = vmatmul.mubr.f32.gmra.mrb[0].mxu0 %v6472
        %v6540 = vpop.f32.mrb[0].mxu0
        %v6541 = vadd.f32 %v3492, %v6540
        %v6542 = vpop.f32.mrb[0].mxu0
        %6543 = vdwg.mxu0
        %6544 = vst.msk [vmem:[%s379 + $0x4] sm:$0x1] %vm4111, %v6541
        %6545 = vmatprep.subr.mxu0 %v3287
        %6546 = vmatpush1.msra.mxu0 %v3286
        %6547 = vmatprep.subr.mxu0 %v3291
        %6548 = vmatpush1.msra.mxu0 %v3290
        %6549 = vmatprep.subr.mxu0 %v3295
        %6550 = vmatpush1.msra.mxu0 %v3294
        %6551 = vmatprep.subr.mxu0 %v3299
        %6552 = vmatpush1.msra.mxu0 %v3298
        %6553 = vmatprep.subr.mxu0 %v3303
        %6554 = vmatpush1.msra.mxu0 %v3302
        %6555 = vmatprep.subr.mxu0 %v3307
        %6556 = vmatpush1.msra.mxu0 %v3306
        %6557 = vmatprep.subr.mxu0 %v3311
        %6558 = vmatpush1.msra.mxu0 %v3310
        %6559 = vmatprep.subr.mxu0 %v3315
        %6560 = vmatpush1.msra.mxu0 %v3314
        %6561 = vmatprep.subr.mxu0 %v3319
        %6562 = vmatpush1.msra.mxu0 %v3318
        %6563 = vmatprep.subr.mxu0 %v3323
        %6564 = vmatpush1.msra.mxu0 %v3322
        %6565 = vmatprep.subr.mxu0 %v3327
        %6566 = vmatpush1.msra.mxu0 %v3326
        %6567 = vmatprep.subr.mxu0 %v3331
        %6568 = vmatpush1.msra.mxu0 %v3330
        %6569 = vmatprep.subr.mxu0 %v3335
        %6570 = vmatpush1.msra.mxu0 %v3334
        %6571 = vmatprep.subr.mxu0 %v3339
        %6572 = vmatpush1.msra.mxu0 %v3338
        %6573 = vmatprep.subr.mxu0 %v3343
        %6574 = vmatpush1.msra.mxu0 %v3342
        %6575 = vmatprep.subr.mxu0 %v3347
        %6576 = vmatpush1.msra.mxu0 %v3346
        %6577 = vmatprep.subr.mxu0 %v3351
        %6578 = vmatpush1.msra.mxu0 %v3350
        %6579 = vmatprep.subr.mxu0 %v3355
        %6580 = vmatpush1.msra.mxu0 %v3354
        %6581 = vmatprep.subr.mxu0 %v3359
        %6582 = vmatpush1.msra.mxu0 %v3358
        %6583 = vmatprep.subr.mxu0 %v3363
        %6584 = vmatpush1.msra.mxu0 %v3362
        %6585 = vmatprep.subr.mxu0 %v3367
        %6586 = vmatpush1.msra.mxu0 %v3366
        %6587 = vmatprep.subr.mxu0 %v3371
        %6588 = vmatpush1.msra.mxu0 %v3370
        %6589 = vmatprep.subr.mxu0 %v3375
        %6590 = vmatpush1.msra.mxu0 %v3374
        %6591 = vmatprep.subr.mxu0 %v3379
        %6592 = vmatpush1.msra.mxu0 %v3378
        %6593 = vmatprep.subr.mxu0 %v3383
        %6594 = vmatpush1.msra.mxu0 %v3382
        %6595 = vmatprep.subr.mxu0 %v3387
        %6596 = vmatpush1.msra.mxu0 %v3386
        %6597 = vmatprep.subr.mxu0 %v3391
        %6598 = vmatpush1.msra.mxu0 %v3390
        %6599 = vmatprep.subr.mxu0 %v3395
        %6600 = vmatpush1.msra.mxu0 %v3394
        %6601 = vmatprep.subr.mxu0 %v3399
        %6602 = vmatpush1.msra.mxu0 %v3398
        %6603 = vmatprep.subr.mxu0 %v3403
        %6604 = vmatpush1.msra.mxu0 %v3402
        %6605 = vmatprep.subr.mxu0 %v3407
        %6606 = vmatpush1.msra.mxu0 %v3406
        %6607 = vmatprep.subr.mxu0 %v3411
        %6608 = vmatpush1.msra.mxu0 %v3410
        %6609 = vmatprep.mubr.f32.mxu0 %v3265
        %6610 = vmatmul.mubr.f32.gmra.mrb[0].mxu0 %v3264
        %v6611 = vpop.f32.mrb[0].mxu0
        %v6612 = vadd.f32 0.0, %v6611
        %v6613 = vpop.f32.mrb[0].mxu0
        %v6614 = vadd.f32 0.0, %v6613
        %6615 = vmatprep.mubr.f32.mxu0 %v3281
        %6616 = vmatmul.mubr.f32.gmra.mrb[0].mxu0 %v3280
        %v6617 = vpop.f32.mrb[0].mxu0
        %v6618 = vadd.f32 0.0, %v6617
        %v6619 = vpop.f32.mrb[0].mxu0
        %v6620 = vadd.f32 0.0, %v6619
        %6621 = vdwg.mxu0
        %6622 = vmatprep.subr.mxu0 %v3289
        %6623 = vmatpush1.msra.mxu0 %v3288
        %6624 = vmatprep.subr.mxu0 %v3293
        %6625 = vmatpush1.msra.mxu0 %v3292
        %6626 = vmatprep.subr.mxu0 %v3297
        %6627 = vmatpush1.msra.mxu0 %v3296
        %6628 = vmatprep.subr.mxu0 %v3301
        %6629 = vmatpush1.msra.mxu0 %v3300
        %6630 = vmatprep.subr.mxu0 %v3305
        %6631 = vmatpush1.msra.mxu0 %v3304
        %6632 = vmatprep.subr.mxu0 %v3309
        %6633 = vmatpush1.msra.mxu0 %v3308
        %6634 = vmatprep.subr.mxu0 %v3313
        %6635 = vmatpush1.msra.mxu0 %v3312
        %6636 = vmatprep.subr.mxu0 %v3317
        %6637 = vmatpush1.msra.mxu0 %v3316
        %6638 = vmatprep.subr.mxu0 %v3321
        %6639 = vmatpush1.msra.mxu0 %v3320
        %6640 = vmatprep.subr.mxu0 %v3325
        %6641 = vmatpush1.msra.mxu0 %v3324
        %6642 = vmatprep.subr.mxu0 %v3329
        %6643 = vmatpush1.msra.mxu0 %v3328
        %6644 = vmatprep.subr.mxu0 %v3333
        %6645 = vmatpush1.msra.mxu0 %v3332
        %6646 = vmatprep.subr.mxu0 %v3337
        %6647 = vmatpush1.msra.mxu0 %v3336
        %6648 = vmatprep.subr.mxu0 %v3341
        %6649 = vmatpush1.msra.mxu0 %v3340
        %6650 = vmatprep.subr.mxu0 %v3345
        %6651 = vmatpush1.msra.mxu0 %v3344
        %6652 = vmatprep.subr.mxu0 %v3349
        %6653 = vmatpush1.msra.mxu0 %v3348
        %6654 = vmatprep.subr.mxu0 %v3353
        %6655 = vmatpush1.msra.mxu0 %v3352
        %6656 = vmatprep.subr.mxu0 %v3357
        %6657 = vmatpush1.msra.mxu0 %v3356
        %6658 = vmatprep.subr.mxu0 %v3361
        %6659 = vmatpush1.msra.mxu0 %v3360
        %6660 = vmatprep.subr.mxu0 %v3365
        %6661 = vmatpush1.msra.mxu0 %v3364
        %6662 = vmatprep.subr.mxu0 %v3369
        %6663 = vmatpush1.msra.mxu0 %v3368
        %6664 = vmatprep.subr.mxu0 %v3373
        %6665 = vmatpush1.msra.mxu0 %v3372
        %6666 = vmatprep.subr.mxu0 %v3377
        %6667 = vmatpush1.msra.mxu0 %v3376
        %6668 = vmatprep.subr.mxu0 %v3381
        %6669 = vmatpush1.msra.mxu0 %v3380
        %6670 = vmatprep.subr.mxu0 %v3385
        %6671 = vmatpush1.msra.mxu0 %v3384
        %6672 = vmatprep.subr.mxu0 %v3389
        %6673 = vmatpush1.msra.mxu0 %v3388
        %6674 = vmatprep.subr.mxu0 %v3393
        %6675 = vmatpush1.msra.mxu0 %v3392
        %6676 = vmatprep.subr.mxu0 %v3397
        %6677 = vmatpush1.msra.mxu0 %v3396
        %6678 = vmatprep.subr.mxu0 %v3401
        %6679 = vmatpush1.msra.mxu0 %v3400
        %6680 = vmatprep.subr.mxu0 %v3405
        %6681 = vmatpush1.msra.mxu0 %v3404
        %6682 = vmatprep.subr.mxu0 %v3409
        %6683 = vmatpush1.msra.mxu0 %v3408
        %6684 = vmatprep.subr.mxu0 %v3413
        %6685 = vmatpush1.msra.mxu0 %v3412
        %6686 = vmatprep.mubr.f32.mxu0 %v3265
        %6687 = vmatmul.mubr.f32.gmra.mrb[0].mxu0 %v3264
        %v6688 = vpop.f32.mrb[0].mxu0
        %v6689 = vadd.f32 0.0, %v6688
        %v6690 = vpop.f32.mrb[0].mxu0
        %v6691 = vadd.f32 0.0, %v6690
        %6692 = vmatprep.mubr.f32.mxu0 %v3281
        %6693 = vmatmul.mubr.f32.gmra.mrb[0].mxu0 %v3280
        %v6694 = vpop.f32.mrb[0].mxu0
        %v6695 = vadd.f32 0.0, %v6694
        %v6696 = vpop.f32.mrb[0].mxu0
        %v6697 = vadd.f32 0.0, %v6696
        %6698 = vdwg.mxu0
        %v6699 = vmul.f32 %v6612, %v3414
        %v6700 = vmul.f32 %v6614, %v3415
        %v6701 = vmul.f32 %v6689, %v3416
        %v6702 = vmul.f32 %v6691, %v3417
        %v6703 = vmul.f32 %v6618, %v3418
        %v6704 = vmul.f32 %v6620, %v3419
        %v6705 = vmul.f32 %v6695, %v3420
        %v6706 = vmul.f32 %v6697, %v3421
        %v6708 = vsel %vm3659, %v6703, 0
        %v6711 = vsel %vm3659, %v6704, 0
        %v6714 = vsel %vm3659, %v6705, 0
        %v6717 = vsel %vm3659, %v6706, 0
        %6719 = vmatprep.subr.mxu0 %v6700
        %6720 = vmatpush1.msra.mxu0 %v6699
        %6721 = vmatprep.subr.mxu0 %v6711
        %6722 = vmatpush1.msra.mxu0 %v6708
        %6723 = vmatprep.subr.mxu0 0.0
        %6724 = vmatpush1.msra.mxu0 0.0
        %6725 = vmatprep.subr.mxu0 0.0
        %6726 = vmatpush1.msra.mxu0 0.0
        %6727 = vmatprep.subr.mxu0 0.0
        %6728 = vmatpush1.msra.mxu0 0.0
        %6729 = vmatprep.subr.mxu0 0.0
        %6730 = vmatpush1.msra.mxu0 0.0
        %6731 = vmatprep.subr.mxu0 0.0
        %6732 = vmatpush1.msra.mxu0 0.0
        %6733 = vmatprep.subr.mxu0 0.0
        %6734 = vmatpush1.msra.mxu0 0.0
        %6735 = vmatprep.subr.mxu0 0.0
        %6736 = vmatpush1.msra.mxu0 0.0
        %6737 = vmatprep.subr.mxu0 0.0
        %6738 = vmatpush1.msra.mxu0 0.0
        %6739 = vmatprep.subr.mxu0 0.0
        %6740 = vmatpush1.msra.mxu0 0.0
        %6741 = vmatprep.subr.mxu0 0.0
        %6742 = vmatpush1.msra.mxu0 0.0
        %6743 = vmatprep.subr.mxu0 0.0
        %6744 = vmatpush1.msra.mxu0 0.0
        %6745 = vmatprep.subr.mxu0 0.0
        %6746 = vmatpush1.msra.mxu0 0.0
        %6747 = vmatprep.subr.mxu0 0.0
        %6748 = vmatpush1.msra.mxu0 0.0
        %6749 = vmatprep.subr.mxu0 0.0
        %6750 = vmatpush1.msra.mxu0 0.0
        %6751 = vmatprep.subr.mxu0 0.0
        %6752 = vmatpush1.msra.mxu0 0.0
        %6753 = vmatprep.subr.mxu0 0.0
        %6754 = vmatpush1.msra.mxu0 0.0
        %6755 = vmatprep.subr.mxu0 0.0
        %6756 = vmatpush1.msra.mxu0 0.0
        %6757 = vmatprep.subr.mxu0 0.0
        %6758 = vmatpush1.msra.mxu0 0.0
        %6759 = vmatprep.subr.mxu0 0.0
        %6760 = vmatpush1.msra.mxu0 0.0
        %6761 = vmatprep.subr.mxu0 0.0
        %6762 = vmatpush1.msra.mxu0 0.0
        %6763 = vmatprep.subr.mxu0 0.0
        %6764 = vmatpush1.msra.mxu0 0.0
        %6765 = vmatprep.subr.mxu0 0.0
        %6766 = vmatpush1.msra.mxu0 0.0
        %6767 = vmatprep.subr.mxu0 0.0
        %6768 = vmatpush1.msra.mxu0 0.0
        %6769 = vmatprep.subr.mxu0 0.0
        %6770 = vmatpush1.msra.mxu0 0.0
        %6771 = vmatprep.subr.mxu0 0.0
        %6772 = vmatpush1.msra.mxu0 0.0
        %6773 = vmatprep.subr.mxu0 0.0
        %6774 = vmatpush1.msra.mxu0 0.0
        %6775 = vmatprep.subr.mxu0 0.0
        %6776 = vmatpush1.msra.mxu0 0.0
        %6777 = vmatprep.subr.mxu0 0.0
        %6778 = vmatpush1.msra.mxu0 0.0
        %6779 = vmatprep.subr.mxu0 0.0
        %6780 = vmatpush1.msra.mxu0 0.0
        %6781 = vmatprep.subr.mxu0 0.0
        %6782 = vmatpush1.msra.mxu0 0.0
        %6783 = vmatprep.mubr.f32.mxu0 0.0
        %6784 = vmatmul.mubr.f32.gmra.mrb[0].mxu0 %v3657
        %v6785 = vpop.f32.mrb[0].mxu0
        %v6786 = vadd.f32 0.0, %v6785
        %v6787 = vpop.f32.mrb[0].mxu0
        %v6788 = vadd.f32 0.0, %v6787
        %6789 = vdwg.mxu0
        %6790 = vmatprep.subr.mxu0 %v6702
        %6791 = vmatpush1.msra.mxu0 %v6701
        %6792 = vmatprep.subr.mxu0 %v6717
        %6793 = vmatpush1.msra.mxu0 %v6714
        %6794 = vmatprep.subr.mxu0 0.0
        %6795 = vmatpush1.msra.mxu0 0.0
        %6796 = vmatprep.subr.mxu0 0.0
        %6797 = vmatpush1.msra.mxu0 0.0
        %6798 = vmatprep.subr.mxu0 0.0
        %6799 = vmatpush1.msra.mxu0 0.0
        %6800 = vmatprep.subr.mxu0 0.0
        %6801 = vmatpush1.msra.mxu0 0.0
        %6802 = vmatprep.subr.mxu0 0.0
        %6803 = vmatpush1.msra.mxu0 0.0
        %6804 = vmatprep.subr.mxu0 0.0
        %6805 = vmatpush1.msra.mxu0 0.0
        %6806 = vmatprep.subr.mxu0 0.0
        %6807 = vmatpush1.msra.mxu0 0.0
        %6808 = vmatprep.subr.mxu0 0.0
        %6809 = vmatpush1.msra.mxu0 0.0
        %6810 = vmatprep.subr.mxu0 0.0
        %6811 = vmatpush1.msra.mxu0 0.0
        %6812 = vmatprep.subr.mxu0 0.0
        %6813 = vmatpush1.msra.mxu0 0.0
        %6814 = vmatprep.subr.mxu0 0.0
        %6815 = vmatpush1.msra.mxu0 0.0
        %6816 = vmatprep.subr.mxu0 0.0
        %6817 = vmatpush1.msra.mxu0 0.0
        %6818 = vmatprep.subr.mxu0 0.0
        %6819 = vmatpush1.msra.mxu0 0.0
        %6820 = vmatprep.subr.mxu0 0.0
        %6821 = vmatpush1.msra.mxu0 0.0
        %6822 = vmatprep.subr.mxu0 0.0
        %6823 = vmatpush1.msra.mxu0 0.0
        %6824 = vmatprep.subr.mxu0 0.0
        %6825 = vmatpush1.msra.mxu0 0.0
        %6826 = vmatprep.subr.mxu0 0.0
        %6827 = vmatpush1.msra.mxu0 0.0
        %6828 = vmatprep.subr.mxu0 0.0
        %6829 = vmatpush1.msra.mxu0 0.0
        %6830 = vmatprep.subr.mxu0 0.0
        %6831 = vmatpush1.msra.mxu0 0.0
        %6832 = vmatprep.subr.mxu0 0.0
        %6833 = vmatpush1.msra.mxu0 0.0
        %6834 = vmatprep.subr.mxu0 0.0
        %6835 = vmatpush1.msra.mxu0 0.0
        %6836 = vmatprep.subr.mxu0 0.0
        %6837 = vmatpush1.msra.mxu0 0.0
        %6838 = vmatprep.subr.mxu0 0.0
        %6839 = vmatpush1.msra.mxu0 0.0
        %6840 = vmatprep.subr.mxu0 0.0
        %6841 = vmatpush1.msra.mxu0 0.0
        %6842 = vmatprep.subr.mxu0 0.0
        %6843 = vmatpush1.msra.mxu0 0.0
        %6844 = vmatprep.subr.mxu0 0.0
        %6845 = vmatpush1.msra.mxu0 0.0
        %6846 = vmatprep.subr.mxu0 0.0
        %6847 = vmatpush1.msra.mxu0 0.0
        %6848 = vmatprep.subr.mxu0 0.0
        %6849 = vmatpush1.msra.mxu0 0.0
        %6850 = vmatprep.subr.mxu0 0.0
        %6851 = vmatpush1.msra.mxu0 0.0
        %6852 = vmatprep.subr.mxu0 0.0
        %6853 = vmatpush1.msra.mxu0 0.0
        %6854 = vmatprep.mubr.f32.mxu0 0.0
        %6855 = vmatmul.mubr.f32.gmra.mrb[0].mxu0 %v3657
        %v6856 = vpop.f32.mrb[0].mxu0
        %v6857 = vadd.f32 0.0, %v6856
        %v6858 = vpop.f32.mrb[0].mxu0
        %v6859 = vadd.f32 0.0, %v6858
        %6860 = vdwg.mxu0
        %v6862 = vsel %vm3814, %v6859, 0
        %6864 = vmatprep.subr.mxu0 0.0
        %6865 = vmatpush1.msra.mxu0 %v3422
        %6866 = vmatprep.subr.mxu0 0.0
        %6867 = vmatpush1.msra.mxu0 %v3423
        %6868 = vmatprep.subr.mxu0 0.0
        %6869 = vmatpush1.msra.mxu0 %v3424
        %6870 = vmatprep.subr.mxu0 0.0
        %6871 = vmatpush1.msra.mxu0 %v3425
        %6872 = vmatprep.subr.mxu0 0.0
        %6873 = vmatpush1.msra.mxu0 %v3426
        %6874 = vmatprep.subr.mxu0 0.0
        %6875 = vmatpush1.msra.mxu0 %v3427
        %6876 = vmatprep.subr.mxu0 0.0
        %6877 = vmatpush1.msra.mxu0 %v3428
        %6878 = vmatprep.subr.mxu0 0.0
        %6879 = vmatpush1.msra.mxu0 %v3429
        %6880 = vmatprep.subr.mxu0 0.0
        %6881 = vmatpush1.msra.mxu0 %v3430
        %6882 = vmatprep.subr.mxu0 0.0
        %6883 = vmatpush1.msra.mxu0 %v3431
        %6884 = vmatprep.subr.mxu0 0.0
        %6885 = vmatpush1.msra.mxu0 %v3432
        %6886 = vmatprep.subr.mxu0 0.0
        %6887 = vmatpush1.msra.mxu0 %v3433
        %6888 = vmatprep.subr.mxu0 0.0
        %6889 = vmatpush1.msra.mxu0 %v3434
        %6890 = vmatprep.subr.mxu0 0.0
        %6891 = vmatpush1.msra.mxu0 %v3435
        %6892 = vmatprep.subr.mxu0 0.0
        %6893 = vmatpush1.msra.mxu0 %v3436
        %6894 = vmatprep.subr.mxu0 0.0
        %6895 = vmatpush1.msra.mxu0 %v3437
        %6896 = vmatprep.subr.mxu0 0.0
        %6897 = vmatpush1.msra.mxu0 %v3438
        %6898 = vmatprep.subr.mxu0 0.0
        %6899 = vmatpush1.msra.mxu0 %v3439
        %6900 = vmatprep.subr.mxu0 0.0
        %6901 = vmatpush1.msra.mxu0 %v3440
        %6902 = vmatprep.subr.mxu0 0.0
        %6903 = vmatpush1.msra.mxu0 %v3441
        %6904 = vmatprep.subr.mxu0 0.0
        %6905 = vmatpush1.msra.mxu0 %v3442
        %6906 = vmatprep.subr.mxu0 0.0
        %6907 = vmatpush1.msra.mxu0 %v3443
        %6908 = vmatprep.subr.mxu0 0.0
        %6909 = vmatpush1.msra.mxu0 %v3444
        %6910 = vmatprep.subr.mxu0 0.0
        %6911 = vmatpush1.msra.mxu0 %v3445
        %6912 = vmatprep.subr.mxu0 0.0
        %6913 = vmatpush1.msra.mxu0 %v3446
        %6914 = vmatprep.subr.mxu0 0.0
        %6915 = vmatpush1.msra.mxu0 %v3447
        %6916 = vmatprep.subr.mxu0 0.0
        %6917 = vmatpush1.msra.mxu0 %v3448
        %6918 = vmatprep.subr.mxu0 0.0
        %6919 = vmatpush1.msra.mxu0 %v3449
        %6920 = vmatprep.subr.mxu0 0.0
        %6921 = vmatpush1.msra.mxu0 %v3450
        %6922 = vmatprep.subr.mxu0 0.0
        %6923 = vmatpush1.msra.mxu0 %v3451
        %6924 = vmatprep.subr.mxu0 0.0
        %6925 = vmatpush1.msra.mxu0 %v3452
        %6926 = vmatprep.subr.mxu0 0.0
        %6927 = vmatpush1.msra.mxu0 %v3453
        %6928 = vmatprep.mubr.f32.mxu0 %v6788
        %6929 = vmatmul.mubr.f32.gmra.mrb[0].mxu0 %v6786
        %v6930 = vpop.f32.mrb[0].mxu0
        %v6931 = vadd.f32 %v3482, %v6930
        %v6932 = vpop.f32.mrb[0].mxu0
        %6933 = vdwg.mxu0
        %6934 = vmatprep.subr.mxu0 0.0
        %6935 = vmatpush1.msra.mxu0 %v3454
        %6936 = vmatprep.subr.mxu0 0.0
        %6937 = vmatpush1.msra.mxu0 %v3455
        %6938 = vmatprep.subr.mxu0 0.0
        %6939 = vmatpush1.msra.mxu0 %v3456
        %6940 = vmatprep.subr.mxu0 0.0
        %6941 = vmatpush1.msra.mxu0 %v3457
        %6942 = vmatprep.subr.mxu0 0.0
        %6943 = vmatpush1.msra.mxu0 %v3458
        %6944 = vmatprep.subr.mxu0 0.0
        %6945 = vmatpush1.msra.mxu0 %v3459
        %6946 = vmatprep.subr.mxu0 0.0
        %6947 = vmatpush1.msra.mxu0 %v3460
        %6948 = vmatprep.subr.mxu0 0.0
        %6949 = vmatpush1.msra.mxu0 %v3461
        %6950 = vmatprep.subr.mxu0 0.0
        %6951 = vmatpush1.msra.mxu0 %v3462
        %6952 = vmatprep.subr.mxu0 0.0
        %6953 = vmatpush1.msra.mxu0 %v3463
        %6954 = vmatprep.subr.mxu0 0.0
        %6955 = vmatpush1.msra.mxu0 %v3464
        %6956 = vmatprep.subr.mxu0 0.0
        %6957 = vmatpush1.msra.mxu0 %v3465
        %6958 = vmatprep.subr.mxu0 0.0
        %6959 = vmatpush1.msra.mxu0 %v3466
        %6960 = vmatprep.subr.mxu0 0.0
        %6961 = vmatpush1.msra.mxu0 %v3467
        %6962 = vmatprep.subr.mxu0 0.0
        %6963 = vmatpush1.msra.mxu0 %v3468
        %6964 = vmatprep.subr.mxu0 0.0
        %6965 = vmatpush1.msra.mxu0 %v3469
        %6966 = vmatprep.subr.mxu0 0.0
        %6967 = vmatpush1.msra.mxu0 %v3470
        %6968 = vmatprep.subr.mxu0 0.0
        %6969 = vmatpush1.msra.mxu0 %v3471
        %6970 = vmatprep.subr.mxu0 0.0
        %6971 = vmatpush1.msra.mxu0 %v3472
        %6972 = vmatprep.subr.mxu0 0.0
        %6973 = vmatpush1.msra.mxu0 %v3473
        %6974 = vmatprep.subr.mxu0 0.0
        %6975 = vmatpush1.msra.mxu0 %v3474
        %6976 = vmatprep.subr.mxu0 0.0
        %6977 = vmatpush1.msra.mxu0 %v3475
        %6978 = vmatprep.subr.mxu0 0.0
        %6979 = vmatpush1.msra.mxu0 %v3476
        %6980 = vmatprep.subr.mxu0 0.0
        %6981 = vmatpush1.msra.mxu0 %v3477
        %6982 = vmatprep.subr.mxu0 0.0
        %6983 = vmatpush1.msra.mxu0 %v3478
        %6984 = vmatprep.subr.mxu0 0.0
        %6985 = vmatpush1.msra.mxu0 %v3479
        %6986 = vmatprep.subr.mxu0 0.0
        %6987 = vmatpush1.msra.mxu0 %v3480
        %6988 = vmatprep.subr.mxu0 0.0
        %6989 = vmatpush1.msra.mxu0 %v3481
        %6990 = vmatprep.subr.mxu0 0.0
        %6991 = vmatpush1.msra.mxu0 0.0
        %6992 = vmatprep.subr.mxu0 0.0
        %6993 = vmatpush1.msra.mxu0 0.0
        %6994 = vmatprep.subr.mxu0 0.0
        %6995 = vmatpush1.msra.mxu0 0.0
        %6996 = vmatprep.subr.mxu0 0.0
        %6997 = vmatpush1.msra.mxu0 0.0
        %6998 = vmatprep.mubr.f32.mxu0 %v6862
        %6999 = vmatmul.mubr.f32.gmra.mrb[0].mxu0 %v6857
        %v7000 = vpop.f32.mrb[0].mxu0
        %v7001 = vadd.f32 %v6931, %v7000
        %v7002 = vpop.f32.mrb[0].mxu0
        %7003 = vdwg.mxu0
        %v7004 = vmax.f32 %v7001, 0.0
        %v7006 = vsel %vm643, %v7004, 0
        %7008 = vmatprep.subr.mxu0 0.0
        %7009 = vmatpush1.msra.mxu0 %v3483
        %7010 = vmatprep.subr.mxu0 0.0
        %7011 = vmatpush1.msra.mxu0 %v3484
        %7012 = vmatprep.subr.mxu0 0.0
        %7013 = vmatpush1.msra.mxu0 %v3485
        %7014 = vmatprep.subr.mxu0 0.0
        %7015 = vmatpush1.msra.mxu0 %v3486
        %7016 = vmatprep.subr.mxu0 0.0
        %7017 = vmatpush1.msra.mxu0 0.0
        %7018 = vmatprep.subr.mxu0 0.0
        %7019 = vmatpush1.msra.mxu0 0.0
        %7020 = vmatprep.subr.mxu0 0.0
        %7021 = vmatpush1.msra.mxu0 0.0
        %7022 = vmatprep.subr.mxu0 0.0
        %7023 = vmatpush1.msra.mxu0 0.0
        %7024 = vmatprep.subr.mxu0 0.0
        %7025 = vmatpush1.msra.mxu0 0.0
        %7026 = vmatprep.subr.mxu0 0.0
        %7027 = vmatpush1.msra.mxu0 0.0
        %7028 = vmatprep.subr.mxu0 0.0
        %7029 = vmatpush1.msra.mxu0 0.0
        %7030 = vmatprep.subr.mxu0 0.0
        %7031 = vmatpush1.msra.mxu0 0.0
        %7032 = vmatprep.subr.mxu0 0.0
        %7033 = vmatpush1.msra.mxu0 0.0
        %7034 = vmatprep.subr.mxu0 0.0
        %7035 = vmatpush1.msra.mxu0 0.0
        %7036 = vmatprep.subr.mxu0 0.0
        %7037 = vmatpush1.msra.mxu0 0.0
        %7038 = vmatprep.subr.mxu0 0.0
        %7039 = vmatpush1.msra.mxu0 0.0
        %7040 = vmatprep.subr.mxu0 0.0
        %7041 = vmatpush1.msra.mxu0 0.0
        %7042 = vmatprep.subr.mxu0 0.0
        %7043 = vmatpush1.msra.mxu0 0.0
        %7044 = vmatprep.subr.mxu0 0.0
        %7045 = vmatpush1.msra.mxu0 0.0
        %7046 = vmatprep.subr.mxu0 0.0
        %7047 = vmatpush1.msra.mxu0 0.0
        %7048 = vmatprep.subr.mxu0 0.0
        %7049 = vmatpush1.msra.mxu0 0.0
        %7050 = vmatprep.subr.mxu0 0.0
        %7051 = vmatpush1.msra.mxu0 0.0
        %7052 = vmatprep.subr.mxu0 0.0
        %7053 = vmatpush1.msra.mxu0 0.0
        %7054 = vmatprep.subr.mxu0 0.0
        %7055 = vmatpush1.msra.mxu0 0.0
        %7056 = vmatprep.subr.mxu0 0.0
        %7057 = vmatpush1.msra.mxu0 0.0
        %7058 = vmatprep.subr.mxu0 0.0
        %7059 = vmatpush1.msra.mxu0 0.0
        %7060 = vmatprep.subr.mxu0 0.0
        %7061 = vmatpush1.msra.mxu0 0.0
        %7062 = vmatprep.subr.mxu0 0.0
        %7063 = vmatpush1.msra.mxu0 0.0
        %7064 = vmatprep.subr.mxu0 0.0
        %7065 = vmatpush1.msra.mxu0 0.0
        %7066 = vmatprep.subr.mxu0 0.0
        %7067 = vmatpush1.msra.mxu0 0.0
        %7068 = vmatprep.subr.mxu0 0.0
        %7069 = vmatpush1.msra.mxu0 0.0
        %7070 = vmatprep.subr.mxu0 0.0
        %7071 = vmatpush1.msra.mxu0 0.0
        %7072 = vmatprep.mubr.f32.mxu0 0.0
        %7073 = vmatmul.mubr.f32.gmra.mrb[0].mxu0 %v7006
        %v7074 = vpop.f32.mrb[0].mxu0
        %v7075 = vadd.f32 %v3487, %v7074
        %v7076 = vpop.f32.mrb[0].mxu0
        %7077 = vdwg.mxu0
        %v7078 = vmax.f32 %v7075, 0.0
        %v7080 = vsel %vm4033, %v7078, 0
        %7082 = vmatprep.subr.mxu0 0.0
        %7083 = vmatpush1.msra.mxu0 %v3488
        %7084 = vmatprep.subr.mxu0 0.0
        %7085 = vmatpush1.msra.mxu0 %v3489
        %7086 = vmatprep.subr.mxu0 0.0
        %7087 = vmatpush1.msra.mxu0 %v3490
        %7088 = vmatprep.subr.mxu0 0.0
        %7089 = vmatpush1.msra.mxu0 %v4039
        %7090 = vmatprep.subr.mxu0 0.0
        %7091 = vmatpush1.msra.mxu0 0.0
        %7092 = vmatprep.subr.mxu0 0.0
        %7093 = vmatpush1.msra.mxu0 0.0
        %7094 = vmatprep.subr.mxu0 0.0
        %7095 = vmatpush1.msra.mxu0 0.0
        %7096 = vmatprep.subr.mxu0 0.0
        %7097 = vmatpush1.msra.mxu0 0.0
        %7098 = vmatprep.subr.mxu0 0.0
        %7099 = vmatpush1.msra.mxu0 0.0
        %7100 = vmatprep.subr.mxu0 0.0
        %7101 = vmatpush1.msra.mxu0 0.0
        %7102 = vmatprep.subr.mxu0 0.0
        %7103 = vmatpush1.msra.mxu0 0.0
        %7104 = vmatprep.subr.mxu0 0.0
        %7105 = vmatpush1.msra.mxu0 0.0
        %7106 = vmatprep.subr.mxu0 0.0
        %7107 = vmatpush1.msra.mxu0 0.0
        %7108 = vmatprep.subr.mxu0 0.0
        %7109 = vmatpush1.msra.mxu0 0.0
        %7110 = vmatprep.subr.mxu0 0.0
        %7111 = vmatpush1.msra.mxu0 0.0
        %7112 = vmatprep.subr.mxu0 0.0
        %7113 = vmatpush1.msra.mxu0 0.0
        %7114 = vmatprep.subr.mxu0 0.0
        %7115 = vmatpush1.msra.mxu0 0.0
        %7116 = vmatprep.subr.mxu0 0.0
        %7117 = vmatpush1.msra.mxu0 0.0
        %7118 = vmatprep.subr.mxu0 0.0
        %7119 = vmatpush1.msra.mxu0 0.0
        %7120 = vmatprep.subr.mxu0 0.0
        %7121 = vmatpush1.msra.mxu0 0.0
        %7122 = vmatprep.subr.mxu0 0.0
        %7123 = vmatpush1.msra.mxu0 0.0
        %7124 = vmatprep.subr.mxu0 0.0
        %7125 = vmatpush1.msra.mxu0 0.0
        %7126 = vmatprep.subr.mxu0 0.0
        %7127 = vmatpush1.msra.mxu0 0.0
        %7128 = vmatprep.subr.mxu0 0.0
        %7129 = vmatpush1.msra.mxu0 0.0
        %7130 = vmatprep.subr.mxu0 0.0
        %7131 = vmatpush1.msra.mxu0 0.0
        %7132 = vmatprep.subr.mxu0 0.0
        %7133 = vmatpush1.msra.mxu0 0.0
        %7134 = vmatprep.subr.mxu0 0.0
        %7135 = vmatpush1.msra.mxu0 0.0
        %7136 = vmatprep.subr.mxu0 0.0
        %7137 = vmatpush1.msra.mxu0 0.0
        %7138 = vmatprep.subr.mxu0 0.0
        %7139 = vmatpush1.msra.mxu0 0.0
        %7140 = vmatprep.subr.mxu0 0.0
        %7141 = vmatpush1.msra.mxu0 0.0
        %7142 = vmatprep.subr.mxu0 0.0
        %7143 = vmatpush1.msra.mxu0 0.0
        %7144 = vmatprep.subr.mxu0 0.0
        %7145 = vmatpush1.msra.mxu0 0.0
        %7146 = vmatprep.mubr.f32.mxu0 0.0
        %7147 = vmatmul.mubr.f32.gmra.mrb[0].mxu0 %v7080
        %v7148 = vpop.f32.mrb[0].mxu0
        %v7149 = vadd.f32 %v3492, %v7148
        %v7150 = vpop.f32.mrb[0].mxu0
        %7151 = vdwg.mxu0
        %7152 = vst.msk [vmem:[%s379 + $0x5] sm:$0x1] %vm4111, %v7149
        %7153 = vmatprep.subr.mxu0 %v3287
        %7154 = vmatpush1.msra.mxu0 %v3286
        %7155 = vmatprep.subr.mxu0 %v3291
        %7156 = vmatpush1.msra.mxu0 %v3290
        %7157 = vmatprep.subr.mxu0 %v3295
        %7158 = vmatpush1.msra.mxu0 %v3294
        %7159 = vmatprep.subr.mxu0 %v3299
        %7160 = vmatpush1.msra.mxu0 %v3298
        %7161 = vmatprep.subr.mxu0 %v3303
        %7162 = vmatpush1.msra.mxu0 %v3302
        %7163 = vmatprep.subr.mxu0 %v3307
        %7164 = vmatpush1.msra.mxu0 %v3306
        %7165 = vmatprep.subr.mxu0 %v3311
        %7166 = vmatpush1.msra.mxu0 %v3310
        %7167 = vmatprep.subr.mxu0 %v3315
        %7168 = vmatpush1.msra.mxu0 %v3314
        %7169 = vmatprep.subr.mxu0 %v3319
        %7170 = vmatpush1.msra.mxu0 %v3318
        %7171 = vmatprep.subr.mxu0 %v3323
        %7172 = vmatpush1.msra.mxu0 %v3322
        %7173 = vmatprep.subr.mxu0 %v3327
        %7174 = vmatpush1.msra.mxu0 %v3326
        %7175 = vmatprep.subr.mxu0 %v3331
        %7176 = vmatpush1.msra.mxu0 %v3330
        %7177 = vmatprep.subr.mxu0 %v3335
        %7178 = vmatpush1.msra.mxu0 %v3334
        %7179 = vmatprep.subr.mxu0 %v3339
        %7180 = vmatpush1.msra.mxu0 %v3338
        %7181 = vmatprep.subr.mxu0 %v3343
        %7182 = vmatpush1.msra.mxu0 %v3342
        %7183 = vmatprep.subr.mxu0 %v3347
        %7184 = vmatpush1.msra.mxu0 %v3346
        %7185 = vmatprep.subr.mxu0 %v3351
        %7186 = vmatpush1.msra.mxu0 %v3350
        %7187 = vmatprep.subr.mxu0 %v3355
        %7188 = vmatpush1.msra.mxu0 %v3354
        %7189 = vmatprep.subr.mxu0 %v3359
        %7190 = vmatpush1.msra.mxu0 %v3358
        %7191 = vmatprep.subr.mxu0 %v3363
        %7192 = vmatpush1.msra.mxu0 %v3362
        %7193 = vmatprep.subr.mxu0 %v3367
        %7194 = vmatpush1.msra.mxu0 %v3366
        %7195 = vmatprep.subr.mxu0 %v3371
        %7196 = vmatpush1.msra.mxu0 %v3370
        %7197 = vmatprep.subr.mxu0 %v3375
        %7198 = vmatpush1.msra.mxu0 %v3374
        %7199 = vmatprep.subr.mxu0 %v3379
        %7200 = vmatpush1.msra.mxu0 %v3378
        %7201 = vmatprep.subr.mxu0 %v3383
        %7202 = vmatpush1.msra.mxu0 %v3382
        %7203 = vmatprep.subr.mxu0 %v3387
        %7204 = vmatpush1.msra.mxu0 %v3386
        %7205 = vmatprep.subr.mxu0 %v3391
        %7206 = vmatpush1.msra.mxu0 %v3390
        %7207 = vmatprep.subr.mxu0 %v3395
        %7208 = vmatpush1.msra.mxu0 %v3394
        %7209 = vmatprep.subr.mxu0 %v3399
        %7210 = vmatpush1.msra.mxu0 %v3398
        %7211 = vmatprep.subr.mxu0 %v3403
        %7212 = vmatpush1.msra.mxu0 %v3402
        %7213 = vmatprep.subr.mxu0 %v3407
        %7214 = vmatpush1.msra.mxu0 %v3406
        %7215 = vmatprep.subr.mxu0 %v3411
        %7216 = vmatpush1.msra.mxu0 %v3410
        %7217 = vmatprep.mubr.f32.mxu0 %v3267
        %7218 = vmatmul.mubr.f32.gmra.mrb[0].mxu0 %v3266
        %v7219 = vpop.f32.mrb[0].mxu0
        %v7220 = vadd.f32 0.0, %v7219
        %v7221 = vpop.f32.mrb[0].mxu0
        %v7222 = vadd.f32 0.0, %v7221
        %7223 = vmatprep.mubr.f32.mxu0 %v3283
        %7224 = vmatmul.mubr.f32.gmra.mrb[0].mxu0 %v3282
        %v7225 = vpop.f32.mrb[0].mxu0
        %v7226 = vadd.f32 0.0, %v7225
        %v7227 = vpop.f32.mrb[0].mxu0
        %v7228 = vadd.f32 0.0, %v7227
        %7229 = vdwg.mxu0
        %7230 = vmatprep.subr.mxu0 %v3289
        %7231 = vmatpush1.msra.mxu0 %v3288
        %7232 = vmatprep.subr.mxu0 %v3293
        %7233 = vmatpush1.msra.mxu0 %v3292
        %7234 = vmatprep.subr.mxu0 %v3297
        %7235 = vmatpush1.msra.mxu0 %v3296
        %7236 = vmatprep.subr.mxu0 %v3301
        %7237 = vmatpush1.msra.mxu0 %v3300
        %7238 = vmatprep.subr.mxu0 %v3305
        %7239 = vmatpush1.msra.mxu0 %v3304
        %7240 = vmatprep.subr.mxu0 %v3309
        %7241 = vmatpush1.msra.mxu0 %v3308
        %7242 = vmatprep.subr.mxu0 %v3313
        %7243 = vmatpush1.msra.mxu0 %v3312
        %7244 = vmatprep.subr.mxu0 %v3317
        %7245 = vmatpush1.msra.mxu0 %v3316
        %7246 = vmatprep.subr.mxu0 %v3321
        %7247 = vmatpush1.msra.mxu0 %v3320
        %7248 = vmatprep.subr.mxu0 %v3325
        %7249 = vmatpush1.msra.mxu0 %v3324
        %7250 = vmatprep.subr.mxu0 %v3329
        %7251 = vmatpush1.msra.mxu0 %v3328
        %7252 = vmatprep.subr.mxu0 %v3333
        %7253 = vmatpush1.msra.mxu0 %v3332
        %7254 = vmatprep.subr.mxu0 %v3337
        %7255 = vmatpush1.msra.mxu0 %v3336
        %7256 = vmatprep.subr.mxu0 %v3341
        %7257 = vmatpush1.msra.mxu0 %v3340
        %7258 = vmatprep.subr.mxu0 %v3345
        %7259 = vmatpush1.msra.mxu0 %v3344
        %7260 = vmatprep.subr.mxu0 %v3349
        %7261 = vmatpush1.msra.mxu0 %v3348
        %7262 = vmatprep.subr.mxu0 %v3353
        %7263 = vmatpush1.msra.mxu0 %v3352
        %7264 = vmatprep.subr.mxu0 %v3357
        %7265 = vmatpush1.msra.mxu0 %v3356
        %7266 = vmatprep.subr.mxu0 %v3361
        %7267 = vmatpush1.msra.mxu0 %v3360
        %7268 = vmatprep.subr.mxu0 %v3365
        %7269 = vmatpush1.msra.mxu0 %v3364
        %7270 = vmatprep.subr.mxu0 %v3369
        %7271 = vmatpush1.msra.mxu0 %v3368
        %7272 = vmatprep.subr.mxu0 %v3373
        %7273 = vmatpush1.msra.mxu0 %v3372
        %7274 = vmatprep.subr.mxu0 %v3377
        %7275 = vmatpush1.msra.mxu0 %v3376
        %7276 = vmatprep.subr.mxu0 %v3381
        %7277 = vmatpush1.msra.mxu0 %v3380
        %7278 = vmatprep.subr.mxu0 %v3385
        %7279 = vmatpush1.msra.mxu0 %v3384
        %7280 = vmatprep.subr.mxu0 %v3389
        %7281 = vmatpush1.msra.mxu0 %v3388
        %7282 = vmatprep.subr.mxu0 %v3393
        %7283 = vmatpush1.msra.mxu0 %v3392
        %7284 = vmatprep.subr.mxu0 %v3397
        %7285 = vmatpush1.msra.mxu0 %v3396
        %7286 = vmatprep.subr.mxu0 %v3401
        %7287 = vmatpush1.msra.mxu0 %v3400
        %7288 = vmatprep.subr.mxu0 %v3405
        %7289 = vmatpush1.msra.mxu0 %v3404
        %7290 = vmatprep.subr.mxu0 %v3409
        %7291 = vmatpush1.msra.mxu0 %v3408
        %7292 = vmatprep.subr.mxu0 %v3413
        %7293 = vmatpush1.msra.mxu0 %v3412
        %7294 = vmatprep.mubr.f32.mxu0 %v3267
        %7295 = vmatmul.mubr.f32.gmra.mrb[0].mxu0 %v3266
        %v7296 = vpop.f32.mrb[0].mxu0
        %v7297 = vadd.f32 0.0, %v7296
        %v7298 = vpop.f32.mrb[0].mxu0
        %v7299 = vadd.f32 0.0, %v7298
        %7300 = vmatprep.mubr.f32.mxu0 %v3283
        %7301 = vmatmul.mubr.f32.gmra.mrb[0].mxu0 %v3282
        %v7302 = vpop.f32.mrb[0].mxu0
        %v7303 = vadd.f32 0.0, %v7302
        %v7304 = vpop.f32.mrb[0].mxu0
        %v7305 = vadd.f32 0.0, %v7304
        %7306 = vdwg.mxu0
        %v7307 = vmul.f32 %v7220, %v3414
        %v7308 = vmul.f32 %v7222, %v3415
        %v7309 = vmul.f32 %v7297, %v3416
        %v7310 = vmul.f32 %v7299, %v3417
        %v7311 = vmul.f32 %v7226, %v3418
        %v7312 = vmul.f32 %v7228, %v3419
        %v7313 = vmul.f32 %v7303, %v3420
        %v7314 = vmul.f32 %v7305, %v3421
        %v7316 = vsel %vm3659, %v7311, 0
        %v7319 = vsel %vm3659, %v7312, 0
        %v7322 = vsel %vm3659, %v7313, 0
        %v7325 = vsel %vm3659, %v7314, 0
        %7327 = vmatprep.subr.mxu0 %v7308
        %7328 = vmatpush1.msra.mxu0 %v7307
        %7329 = vmatprep.subr.mxu0 %v7319
        %7330 = vmatpush1.msra.mxu0 %v7316
        %7331 = vmatprep.subr.mxu0 0.0
        %7332 = vmatpush1.msra.mxu0 0.0
        %7333 = vmatprep.subr.mxu0 0.0
        %7334 = vmatpush1.msra.mxu0 0.0
        %7335 = vmatprep.subr.mxu0 0.0
        %7336 = vmatpush1.msra.mxu0 0.0
        %7337 = vmatprep.subr.mxu0 0.0
        %7338 = vmatpush1.msra.mxu0 0.0
        %7339 = vmatprep.subr.mxu0 0.0
        %7340 = vmatpush1.msra.mxu0 0.0
        %7341 = vmatprep.subr.mxu0 0.0
        %7342 = vmatpush1.msra.mxu0 0.0
        %7343 = vmatprep.subr.mxu0 0.0
        %7344 = vmatpush1.msra.mxu0 0.0
        %7345 = vmatprep.subr.mxu0 0.0
        %7346 = vmatpush1.msra.mxu0 0.0
        %7347 = vmatprep.subr.mxu0 0.0
        %7348 = vmatpush1.msra.mxu0 0.0
        %7349 = vmatprep.subr.mxu0 0.0
        %7350 = vmatpush1.msra.mxu0 0.0
        %7351 = vmatprep.subr.mxu0 0.0
        %7352 = vmatpush1.msra.mxu0 0.0
        %7353 = vmatprep.subr.mxu0 0.0
        %7354 = vmatpush1.msra.mxu0 0.0
        %7355 = vmatprep.subr.mxu0 0.0
        %7356 = vmatpush1.msra.mxu0 0.0
        %7357 = vmatprep.subr.mxu0 0.0
        %7358 = vmatpush1.msra.mxu0 0.0
        %7359 = vmatprep.subr.mxu0 0.0
        %7360 = vmatpush1.msra.mxu0 0.0
        %7361 = vmatprep.subr.mxu0 0.0
        %7362 = vmatpush1.msra.mxu0 0.0
        %7363 = vmatprep.subr.mxu0 0.0
        %7364 = vmatpush1.msra.mxu0 0.0
        %7365 = vmatprep.subr.mxu0 0.0
        %7366 = vmatpush1.msra.mxu0 0.0
        %7367 = vmatprep.subr.mxu0 0.0
        %7368 = vmatpush1.msra.mxu0 0.0
        %7369 = vmatprep.subr.mxu0 0.0
        %7370 = vmatpush1.msra.mxu0 0.0
        %7371 = vmatprep.subr.mxu0 0.0
        %7372 = vmatpush1.msra.mxu0 0.0
        %7373 = vmatprep.subr.mxu0 0.0
        %7374 = vmatpush1.msra.mxu0 0.0
        %7375 = vmatprep.subr.mxu0 0.0
        %7376 = vmatpush1.msra.mxu0 0.0
        %7377 = vmatprep.subr.mxu0 0.0
        %7378 = vmatpush1.msra.mxu0 0.0
        %7379 = vmatprep.subr.mxu0 0.0
        %7380 = vmatpush1.msra.mxu0 0.0
        %7381 = vmatprep.subr.mxu0 0.0
        %7382 = vmatpush1.msra.mxu0 0.0
        %7383 = vmatprep.subr.mxu0 0.0
        %7384 = vmatpush1.msra.mxu0 0.0
        %7385 = vmatprep.subr.mxu0 0.0
        %7386 = vmatpush1.msra.mxu0 0.0
        %7387 = vmatprep.subr.mxu0 0.0
        %7388 = vmatpush1.msra.mxu0 0.0
        %7389 = vmatprep.subr.mxu0 0.0
        %7390 = vmatpush1.msra.mxu0 0.0
        %7391 = vmatprep.mubr.f32.mxu0 0.0
        %7392 = vmatmul.mubr.f32.gmra.mrb[0].mxu0 %v3657
        %v7393 = vpop.f32.mrb[0].mxu0
        %v7394 = vadd.f32 0.0, %v7393
        %v7395 = vpop.f32.mrb[0].mxu0
        %v7396 = vadd.f32 0.0, %v7395
        %7397 = vdwg.mxu0
        %7398 = vmatprep.subr.mxu0 %v7310
        %7399 = vmatpush1.msra.mxu0 %v7309
        %7400 = vmatprep.subr.mxu0 %v7325
        %7401 = vmatpush1.msra.mxu0 %v7322
        %7402 = vmatprep.subr.mxu0 0.0
        %7403 = vmatpush1.msra.mxu0 0.0
        %7404 = vmatprep.subr.mxu0 0.0
        %7405 = vmatpush1.msra.mxu0 0.0
        %7406 = vmatprep.subr.mxu0 0.0
        %7407 = vmatpush1.msra.mxu0 0.0
        %7408 = vmatprep.subr.mxu0 0.0
        %7409 = vmatpush1.msra.mxu0 0.0
        %7410 = vmatprep.subr.mxu0 0.0
        %7411 = vmatpush1.msra.mxu0 0.0
        %7412 = vmatprep.subr.mxu0 0.0
        %7413 = vmatpush1.msra.mxu0 0.0
        %7414 = vmatprep.subr.mxu0 0.0
        %7415 = vmatpush1.msra.mxu0 0.0
        %7416 = vmatprep.subr.mxu0 0.0
        %7417 = vmatpush1.msra.mxu0 0.0
        %7418 = vmatprep.subr.mxu0 0.0
        %7419 = vmatpush1.msra.mxu0 0.0
        %7420 = vmatprep.subr.mxu0 0.0
        %7421 = vmatpush1.msra.mxu0 0.0
        %7422 = vmatprep.subr.mxu0 0.0
        %7423 = vmatpush1.msra.mxu0 0.0
        %7424 = vmatprep.subr.mxu0 0.0
        %7425 = vmatpush1.msra.mxu0 0.0
        %7426 = vmatprep.subr.mxu0 0.0
        %7427 = vmatpush1.msra.mxu0 0.0
        %7428 = vmatprep.subr.mxu0 0.0
        %7429 = vmatpush1.msra.mxu0 0.0
        %7430 = vmatprep.subr.mxu0 0.0
        %7431 = vmatpush1.msra.mxu0 0.0
        %7432 = vmatprep.subr.mxu0 0.0
        %7433 = vmatpush1.msra.mxu0 0.0
        %7434 = vmatprep.subr.mxu0 0.0
        %7435 = vmatpush1.msra.mxu0 0.0
        %7436 = vmatprep.subr.mxu0 0.0
        %7437 = vmatpush1.msra.mxu0 0.0
        %7438 = vmatprep.subr.mxu0 0.0
        %7439 = vmatpush1.msra.mxu0 0.0
        %7440 = vmatprep.subr.mxu0 0.0
        %7441 = vmatpush1.msra.mxu0 0.0
        %7442 = vmatprep.subr.mxu0 0.0
        %7443 = vmatpush1.msra.mxu0 0.0
        %7444 = vmatprep.subr.mxu0 0.0
        %7445 = vmatpush1.msra.mxu0 0.0
        %7446 = vmatprep.subr.mxu0 0.0
        %7447 = vmatpush1.msra.mxu0 0.0
        %7448 = vmatprep.subr.mxu0 0.0
        %7449 = vmatpush1.msra.mxu0 0.0
        %7450 = vmatprep.subr.mxu0 0.0
        %7451 = vmatpush1.msra.mxu0 0.0
        %7452 = vmatprep.subr.mxu0 0.0
        %7453 = vmatpush1.msra.mxu0 0.0
        %7454 = vmatprep.subr.mxu0 0.0
        %7455 = vmatpush1.msra.mxu0 0.0
        %7456 = vmatprep.subr.mxu0 0.0
        %7457 = vmatpush1.msra.mxu0 0.0
        %7458 = vmatprep.subr.mxu0 0.0
        %7459 = vmatpush1.msra.mxu0 0.0
        %7460 = vmatprep.subr.mxu0 0.0
        %7461 = vmatpush1.msra.mxu0 0.0
        %7462 = vmatprep.mubr.f32.mxu0 0.0
        %7463 = vmatmul.mubr.f32.gmra.mrb[0].mxu0 %v3657
        %v7464 = vpop.f32.mrb[0].mxu0
        %v7465 = vadd.f32 0.0, %v7464
        %v7466 = vpop.f32.mrb[0].mxu0
        %v7467 = vadd.f32 0.0, %v7466
        %7468 = vdwg.mxu0
        %v7470 = vsel %vm3814, %v7467, 0
        %7472 = vmatprep.subr.mxu0 0.0
        %7473 = vmatpush1.msra.mxu0 %v3422
        %7474 = vmatprep.subr.mxu0 0.0
        %7475 = vmatpush1.msra.mxu0 %v3423
        %7476 = vmatprep.subr.mxu0 0.0
        %7477 = vmatpush1.msra.mxu0 %v3424
        %7478 = vmatprep.subr.mxu0 0.0
        %7479 = vmatpush1.msra.mxu0 %v3425
        %7480 = vmatprep.subr.mxu0 0.0
        %7481 = vmatpush1.msra.mxu0 %v3426
        %7482 = vmatprep.subr.mxu0 0.0
        %7483 = vmatpush1.msra.mxu0 %v3427
        %7484 = vmatprep.subr.mxu0 0.0
        %7485 = vmatpush1.msra.mxu0 %v3428
        %7486 = vmatprep.subr.mxu0 0.0
        %7487 = vmatpush1.msra.mxu0 %v3429
        %7488 = vmatprep.subr.mxu0 0.0
        %7489 = vmatpush1.msra.mxu0 %v3430
        %7490 = vmatprep.subr.mxu0 0.0
        %7491 = vmatpush1.msra.mxu0 %v3431
        %7492 = vmatprep.subr.mxu0 0.0
        %7493 = vmatpush1.msra.mxu0 %v3432
        %7494 = vmatprep.subr.mxu0 0.0
        %7495 = vmatpush1.msra.mxu0 %v3433
        %7496 = vmatprep.subr.mxu0 0.0
        %7497 = vmatpush1.msra.mxu0 %v3434
        %7498 = vmatprep.subr.mxu0 0.0
        %7499 = vmatpush1.msra.mxu0 %v3435
        %7500 = vmatprep.subr.mxu0 0.0
        %7501 = vmatpush1.msra.mxu0 %v3436
        %7502 = vmatprep.subr.mxu0 0.0
        %7503 = vmatpush1.msra.mxu0 %v3437
        %7504 = vmatprep.subr.mxu0 0.0
        %7505 = vmatpush1.msra.mxu0 %v3438
        %7506 = vmatprep.subr.mxu0 0.0
        %7507 = vmatpush1.msra.mxu0 %v3439
        %7508 = vmatprep.subr.mxu0 0.0
        %7509 = vmatpush1.msra.mxu0 %v3440
        %7510 = vmatprep.subr.mxu0 0.0
        %7511 = vmatpush1.msra.mxu0 %v3441
        %7512 = vmatprep.subr.mxu0 0.0
        %7513 = vmatpush1.msra.mxu0 %v3442
        %7514 = vmatprep.subr.mxu0 0.0
        %7515 = vmatpush1.msra.mxu0 %v3443
        %7516 = vmatprep.subr.mxu0 0.0
        %7517 = vmatpush1.msra.mxu0 %v3444
        %7518 = vmatprep.subr.mxu0 0.0
        %7519 = vmatpush1.msra.mxu0 %v3445
        %7520 = vmatprep.subr.mxu0 0.0
        %7521 = vmatpush1.msra.mxu0 %v3446
        %7522 = vmatprep.subr.mxu0 0.0
        %7523 = vmatpush1.msra.mxu0 %v3447
        %7524 = vmatprep.subr.mxu0 0.0
        %7525 = vmatpush1.msra.mxu0 %v3448
        %7526 = vmatprep.subr.mxu0 0.0
        %7527 = vmatpush1.msra.mxu0 %v3449
        %7528 = vmatprep.subr.mxu0 0.0
        %7529 = vmatpush1.msra.mxu0 %v3450
        %7530 = vmatprep.subr.mxu0 0.0
        %7531 = vmatpush1.msra.mxu0 %v3451
        %7532 = vmatprep.subr.mxu0 0.0
        %7533 = vmatpush1.msra.mxu0 %v3452
        %7534 = vmatprep.subr.mxu0 0.0
        %7535 = vmatpush1.msra.mxu0 %v3453
        %7536 = vmatprep.mubr.f32.mxu0 %v7396
        %7537 = vmatmul.mubr.f32.gmra.mrb[0].mxu0 %v7394
        %v7538 = vpop.f32.mrb[0].mxu0
        %v7539 = vadd.f32 %v3482, %v7538
        %v7540 = vpop.f32.mrb[0].mxu0
        %7541 = vdwg.mxu0
        %7542 = vmatprep.subr.mxu0 0.0
        %7543 = vmatpush1.msra.mxu0 %v3454
        %7544 = vmatprep.subr.mxu0 0.0
        %7545 = vmatpush1.msra.mxu0 %v3455
        %7546 = vmatprep.subr.mxu0 0.0
        %7547 = vmatpush1.msra.mxu0 %v3456
        %7548 = vmatprep.subr.mxu0 0.0
        %7549 = vmatpush1.msra.mxu0 %v3457
        %7550 = vmatprep.subr.mxu0 0.0
        %7551 = vmatpush1.msra.mxu0 %v3458
        %7552 = vmatprep.subr.mxu0 0.0
        %7553 = vmatpush1.msra.mxu0 %v3459
        %7554 = vmatprep.subr.mxu0 0.0
        %7555 = vmatpush1.msra.mxu0 %v3460
        %7556 = vmatprep.subr.mxu0 0.0
        %7557 = vmatpush1.msra.mxu0 %v3461
        %7558 = vmatprep.subr.mxu0 0.0
        %7559 = vmatpush1.msra.mxu0 %v3462
        %7560 = vmatprep.subr.mxu0 0.0
        %7561 = vmatpush1.msra.mxu0 %v3463
        %7562 = vmatprep.subr.mxu0 0.0
        %7563 = vmatpush1.msra.mxu0 %v3464
        %7564 = vmatprep.subr.mxu0 0.0
        %7565 = vmatpush1.msra.mxu0 %v3465
        %7566 = vmatprep.subr.mxu0 0.0
        %7567 = vmatpush1.msra.mxu0 %v3466
        %7568 = vmatprep.subr.mxu0 0.0
        %7569 = vmatpush1.msra.mxu0 %v3467
        %7570 = vmatprep.subr.mxu0 0.0
        %7571 = vmatpush1.msra.mxu0 %v3468
        %7572 = vmatprep.subr.mxu0 0.0
        %7573 = vmatpush1.msra.mxu0 %v3469
        %7574 = vmatprep.subr.mxu0 0.0
        %7575 = vmatpush1.msra.mxu0 %v3470
        %7576 = vmatprep.subr.mxu0 0.0
        %7577 = vmatpush1.msra.mxu0 %v3471
        %7578 = vmatprep.subr.mxu0 0.0
        %7579 = vmatpush1.msra.mxu0 %v3472
        %7580 = vmatprep.subr.mxu0 0.0
        %7581 = vmatpush1.msra.mxu0 %v3473
        %7582 = vmatprep.subr.mxu0 0.0
        %7583 = vmatpush1.msra.mxu0 %v3474
        %7584 = vmatprep.subr.mxu0 0.0
        %7585 = vmatpush1.msra.mxu0 %v3475
        %7586 = vmatprep.subr.mxu0 0.0
        %7587 = vmatpush1.msra.mxu0 %v3476
        %7588 = vmatprep.subr.mxu0 0.0
        %7589 = vmatpush1.msra.mxu0 %v3477
        %7590 = vmatprep.subr.mxu0 0.0
        %7591 = vmatpush1.msra.mxu0 %v3478
        %7592 = vmatprep.subr.mxu0 0.0
        %7593 = vmatpush1.msra.mxu0 %v3479
        %7594 = vmatprep.subr.mxu0 0.0
        %7595 = vmatpush1.msra.mxu0 %v3480
        %7596 = vmatprep.subr.mxu0 0.0
        %7597 = vmatpush1.msra.mxu0 %v3481
        %7598 = vmatprep.subr.mxu0 0.0
        %7599 = vmatpush1.msra.mxu0 0.0
        %7600 = vmatprep.subr.mxu0 0.0
        %7601 = vmatpush1.msra.mxu0 0.0
        %7602 = vmatprep.subr.mxu0 0.0
        %7603 = vmatpush1.msra.mxu0 0.0
        %7604 = vmatprep.subr.mxu0 0.0
        %7605 = vmatpush1.msra.mxu0 0.0
        %7606 = vmatprep.mubr.f32.mxu0 %v7470
        %7607 = vmatmul.mubr.f32.gmra.mrb[0].mxu0 %v7465
        %v7608 = vpop.f32.mrb[0].mxu0
        %v7609 = vadd.f32 %v7539, %v7608
        %v7610 = vpop.f32.mrb[0].mxu0
        %7611 = vdwg.mxu0
        %v7612 = vmax.f32 %v7609, 0.0
        %v7614 = vsel %vm643, %v7612, 0
        %7616 = vmatprep.subr.mxu0 0.0
        %7617 = vmatpush1.msra.mxu0 %v3483
        %7618 = vmatprep.subr.mxu0 0.0
        %7619 = vmatpush1.msra.mxu0 %v3484
        %7620 = vmatprep.subr.mxu0 0.0
        %7621 = vmatpush1.msra.mxu0 %v3485
        %7622 = vmatprep.subr.mxu0 0.0
        %7623 = vmatpush1.msra.mxu0 %v3486
        %7624 = vmatprep.subr.mxu0 0.0
        %7625 = vmatpush1.msra.mxu0 0.0
        %7626 = vmatprep.subr.mxu0 0.0
        %7627 = vmatpush1.msra.mxu0 0.0
        %7628 = vmatprep.subr.mxu0 0.0
        %7629 = vmatpush1.msra.mxu0 0.0
        %7630 = vmatprep.subr.mxu0 0.0
        %7631 = vmatpush1.msra.mxu0 0.0
        %7632 = vmatprep.subr.mxu0 0.0
        %7633 = vmatpush1.msra.mxu0 0.0
        %7634 = vmatprep.subr.mxu0 0.0
        %7635 = vmatpush1.msra.mxu0 0.0
        %7636 = vmatprep.subr.mxu0 0.0
        %7637 = vmatpush1.msra.mxu0 0.0
        %7638 = vmatprep.subr.mxu0 0.0
        %7639 = vmatpush1.msra.mxu0 0.0
        %7640 = vmatprep.subr.mxu0 0.0
        %7641 = vmatpush1.msra.mxu0 0.0
        %7642 = vmatprep.subr.mxu0 0.0
        %7643 = vmatpush1.msra.mxu0 0.0
        %7644 = vmatprep.subr.mxu0 0.0
        %7645 = vmatpush1.msra.mxu0 0.0
        %7646 = vmatprep.subr.mxu0 0.0
        %7647 = vmatpush1.msra.mxu0 0.0
        %7648 = vmatprep.subr.mxu0 0.0
        %7649 = vmatpush1.msra.mxu0 0.0
        %7650 = vmatprep.subr.mxu0 0.0
        %7651 = vmatpush1.msra.mxu0 0.0
        %7652 = vmatprep.subr.mxu0 0.0
        %7653 = vmatpush1.msra.mxu0 0.0
        %7654 = vmatprep.subr.mxu0 0.0
        %7655 = vmatpush1.msra.mxu0 0.0
        %7656 = vmatprep.subr.mxu0 0.0
        %7657 = vmatpush1.msra.mxu0 0.0
        %7658 = vmatprep.subr.mxu0 0.0
        %7659 = vmatpush1.msra.mxu0 0.0
        %7660 = vmatprep.subr.mxu0 0.0
        %7661 = vmatpush1.msra.mxu0 0.0
        %7662 = vmatprep.subr.mxu0 0.0
        %7663 = vmatpush1.msra.mxu0 0.0
        %7664 = vmatprep.subr.mxu0 0.0
        %7665 = vmatpush1.msra.mxu0 0.0
        %7666 = vmatprep.subr.mxu0 0.0
        %7667 = vmatpush1.msra.mxu0 0.0
        %7668 = vmatprep.subr.mxu0 0.0
        %7669 = vmatpush1.msra.mxu0 0.0
        %7670 = vmatprep.subr.mxu0 0.0
        %7671 = vmatpush1.msra.mxu0 0.0
        %7672 = vmatprep.subr.mxu0 0.0
        %7673 = vmatpush1.msra.mxu0 0.0
        %7674 = vmatprep.subr.mxu0 0.0
        %7675 = vmatpush1.msra.mxu0 0.0
        %7676 = vmatprep.subr.mxu0 0.0
        %7677 = vmatpush1.msra.mxu0 0.0
        %7678 = vmatprep.subr.mxu0 0.0
        %7679 = vmatpush1.msra.mxu0 0.0
        %7680 = vmatprep.mubr.f32.mxu0 0.0
        %7681 = vmatmul.mubr.f32.gmra.mrb[0].mxu0 %v7614
        %v7682 = vpop.f32.mrb[0].mxu0
        %v7683 = vadd.f32 %v3487, %v7682
        %v7684 = vpop.f32.mrb[0].mxu0
        %7685 = vdwg.mxu0
        %v7686 = vmax.f32 %v7683, 0.0
        %v7688 = vsel %vm4033, %v7686, 0
        %7690 = vmatprep.subr.mxu0 0.0
        %7691 = vmatpush1.msra.mxu0 %v3488
        %7692 = vmatprep.subr.mxu0 0.0
        %7693 = vmatpush1.msra.mxu0 %v3489
        %7694 = vmatprep.subr.mxu0 0.0
        %7695 = vmatpush1.msra.mxu0 %v3490
        %7696 = vmatprep.subr.mxu0 0.0
        %7697 = vmatpush1.msra.mxu0 %v4039
        %7698 = vmatprep.subr.mxu0 0.0
        %7699 = vmatpush1.msra.mxu0 0.0
        %7700 = vmatprep.subr.mxu0 0.0
        %7701 = vmatpush1.msra.mxu0 0.0
        %7702 = vmatprep.subr.mxu0 0.0
        %7703 = vmatpush1.msra.mxu0 0.0
        %7704 = vmatprep.subr.mxu0 0.0
        %7705 = vmatpush1.msra.mxu0 0.0
        %7706 = vmatprep.subr.mxu0 0.0
        %7707 = vmatpush1.msra.mxu0 0.0
        %7708 = vmatprep.subr.mxu0 0.0
        %7709 = vmatpush1.msra.mxu0 0.0
        %7710 = vmatprep.subr.mxu0 0.0
        %7711 = vmatpush1.msra.mxu0 0.0
        %7712 = vmatprep.subr.mxu0 0.0
        %7713 = vmatpush1.msra.mxu0 0.0
        %7714 = vmatprep.subr.mxu0 0.0
        %7715 = vmatpush1.msra.mxu0 0.0
        %7716 = vmatprep.subr.mxu0 0.0
        %7717 = vmatpush1.msra.mxu0 0.0
        %7718 = vmatprep.subr.mxu0 0.0
        %7719 = vmatpush1.msra.mxu0 0.0
        %7720 = vmatprep.subr.mxu0 0.0
        %7721 = vmatpush1.msra.mxu0 0.0
        %7722 = vmatprep.subr.mxu0 0.0
        %7723 = vmatpush1.msra.mxu0 0.0
        %7724 = vmatprep.subr.mxu0 0.0
        %7725 = vmatpush1.msra.mxu0 0.0
        %7726 = vmatprep.subr.mxu0 0.0
        %7727 = vmatpush1.msra.mxu0 0.0
        %7728 = vmatprep.subr.mxu0 0.0
        %7729 = vmatpush1.msra.mxu0 0.0
        %7730 = vmatprep.subr.mxu0 0.0
        %7731 = vmatpush1.msra.mxu0 0.0
        %7732 = vmatprep.subr.mxu0 0.0
        %7733 = vmatpush1.msra.mxu0 0.0
        %7734 = vmatprep.subr.mxu0 0.0
        %7735 = vmatpush1.msra.mxu0 0.0
        %7736 = vmatprep.subr.mxu0 0.0
        %7737 = vmatpush1.msra.mxu0 0.0
        %7738 = vmatprep.subr.mxu0 0.0
        %7739 = vmatpush1.msra.mxu0 0.0
        %7740 = vmatprep.subr.mxu0 0.0
        %7741 = vmatpush1.msra.mxu0 0.0
        %7742 = vmatprep.subr.mxu0 0.0
        %7743 = vmatpush1.msra.mxu0 0.0
        %7744 = vmatprep.subr.mxu0 0.0
        %7745 = vmatpush1.msra.mxu0 0.0
        %7746 = vmatprep.subr.mxu0 0.0
        %7747 = vmatpush1.msra.mxu0 0.0
        %7748 = vmatprep.subr.mxu0 0.0
        %7749 = vmatpush1.msra.mxu0 0.0
        %7750 = vmatprep.subr.mxu0 0.0
        %7751 = vmatpush1.msra.mxu0 0.0
        %7752 = vmatprep.subr.mxu0 0.0
        %7753 = vmatpush1.msra.mxu0 0.0
        %7754 = vmatprep.mubr.f32.mxu0 0.0
        %7755 = vmatmul.mubr.f32.gmra.mrb[0].mxu0 %v7688
        %v7756 = vpop.f32.mrb[0].mxu0
        %v7757 = vadd.f32 %v3492, %v7756
        %v7758 = vpop.f32.mrb[0].mxu0
        %7759 = vdwg.mxu0
        %7760 = vst.msk [vmem:[%s379 + $0x6] sm:$0x1] %vm4111, %v7757
        %7761 = vmatprep.subr.mxu0 %v3287
        %7762 = vmatpush1.msra.mxu0 %v3286
        %7763 = vmatprep.subr.mxu0 %v3291
        %7764 = vmatpush1.msra.mxu0 %v3290
        %7765 = vmatprep.subr.mxu0 %v3295
        %7766 = vmatpush1.msra.mxu0 %v3294
        %7767 = vmatprep.subr.mxu0 %v3299
        %7768 = vmatpush1.msra.mxu0 %v3298
        %7769 = vmatprep.subr.mxu0 %v3303
        %7770 = vmatpush1.msra.mxu0 %v3302
        %7771 = vmatprep.subr.mxu0 %v3307
        %7772 = vmatpush1.msra.mxu0 %v3306
        %7773 = vmatprep.subr.mxu0 %v3311
        %7774 = vmatpush1.msra.mxu0 %v3310
        %7775 = vmatprep.subr.mxu0 %v3315
        %7776 = vmatpush1.msra.mxu0 %v3314
        %7777 = vmatprep.subr.mxu0 %v3319
        %7778 = vmatpush1.msra.mxu0 %v3318
        %7779 = vmatprep.subr.mxu0 %v3323
        %7780 = vmatpush1.msra.mxu0 %v3322
        %7781 = vmatprep.subr.mxu0 %v3327
        %7782 = vmatpush1.msra.mxu0 %v3326
        %7783 = vmatprep.subr.mxu0 %v3331
        %7784 = vmatpush1.msra.mxu0 %v3330
        %7785 = vmatprep.subr.mxu0 %v3335
        %7786 = vmatpush1.msra.mxu0 %v3334
        %7787 = vmatprep.subr.mxu0 %v3339
        %7788 = vmatpush1.msra.mxu0 %v3338
        %7789 = vmatprep.subr.mxu0 %v3343
        %7790 = vmatpush1.msra.mxu0 %v3342
        %7791 = vmatprep.subr.mxu0 %v3347
        %7792 = vmatpush1.msra.mxu0 %v3346
        %7793 = vmatprep.subr.mxu0 %v3351
        %7794 = vmatpush1.msra.mxu0 %v3350
        %7795 = vmatprep.subr.mxu0 %v3355
        %7796 = vmatpush1.msra.mxu0 %v3354
        %7797 = vmatprep.subr.mxu0 %v3359
        %7798 = vmatpush1.msra.mxu0 %v3358
        %7799 = vmatprep.subr.mxu0 %v3363
        %7800 = vmatpush1.msra.mxu0 %v3362
        %7801 = vmatprep.subr.mxu0 %v3367
        %7802 = vmatpush1.msra.mxu0 %v3366
        %7803 = vmatprep.subr.mxu0 %v3371
        %7804 = vmatpush1.msra.mxu0 %v3370
        %7805 = vmatprep.subr.mxu0 %v3375
        %7806 = vmatpush1.msra.mxu0 %v3374
        %7807 = vmatprep.subr.mxu0 %v3379
        %7808 = vmatpush1.msra.mxu0 %v3378
        %7809 = vmatprep.subr.mxu0 %v3383
        %7810 = vmatpush1.msra.mxu0 %v3382
        %7811 = vmatprep.subr.mxu0 %v3387
        %7812 = vmatpush1.msra.mxu0 %v3386
        %7813 = vmatprep.subr.mxu0 %v3391
        %7814 = vmatpush1.msra.mxu0 %v3390
        %7815 = vmatprep.subr.mxu0 %v3395
        %7816 = vmatpush1.msra.mxu0 %v3394
        %7817 = vmatprep.subr.mxu0 %v3399
        %7818 = vmatpush1.msra.mxu0 %v3398
        %7819 = vmatprep.subr.mxu0 %v3403
        %7820 = vmatpush1.msra.mxu0 %v3402
        %7821 = vmatprep.subr.mxu0 %v3407
        %7822 = vmatpush1.msra.mxu0 %v3406
        %7823 = vmatprep.subr.mxu0 %v3411
        %7824 = vmatpush1.msra.mxu0 %v3410
        %7825 = vmatprep.mubr.f32.mxu0 %v3269
        %7826 = vmatmul.mubr.f32.gmra.mrb[0].mxu0 %v3268
        %v7827 = vpop.f32.mrb[0].mxu0
        %v7828 = vadd.f32 0.0, %v7827
        %v7829 = vpop.f32.mrb[0].mxu0
        %v7830 = vadd.f32 0.0, %v7829
        %7831 = vmatprep.mubr.f32.mxu0 %v3285
        %7832 = vmatmul.mubr.f32.gmra.mrb[0].mxu0 %v3284
        %v7833 = vpop.f32.mrb[0].mxu0
        %v7834 = vadd.f32 0.0, %v7833
        %v7835 = vpop.f32.mrb[0].mxu0
        %v7836 = vadd.f32 0.0, %v7835
        %7837 = vdwg.mxu0
        %7838 = vmatprep.subr.mxu0 %v3289
        %7839 = vmatpush1.msra.mxu0 %v3288
        %7840 = vmatprep.subr.mxu0 %v3293
        %7841 = vmatpush1.msra.mxu0 %v3292
        %7842 = vmatprep.subr.mxu0 %v3297
        %7843 = vmatpush1.msra.mxu0 %v3296
        %7844 = vmatprep.subr.mxu0 %v3301
        %7845 = vmatpush1.msra.mxu0 %v3300
        %7846 = vmatprep.subr.mxu0 %v3305
        %7847 = vmatpush1.msra.mxu0 %v3304
        %7848 = vmatprep.subr.mxu0 %v3309
        %7849 = vmatpush1.msra.mxu0 %v3308
        %7850 = vmatprep.subr.mxu0 %v3313
        %7851 = vmatpush1.msra.mxu0 %v3312
        %7852 = vmatprep.subr.mxu0 %v3317
        %7853 = vmatpush1.msra.mxu0 %v3316
        %7854 = vmatprep.subr.mxu0 %v3321
        %7855 = vmatpush1.msra.mxu0 %v3320
        %7856 = vmatprep.subr.mxu0 %v3325
        %7857 = vmatpush1.msra.mxu0 %v3324
        %7858 = vmatprep.subr.mxu0 %v3329
        %7859 = vmatpush1.msra.mxu0 %v3328
        %7860 = vmatprep.subr.mxu0 %v3333
        %7861 = vmatpush1.msra.mxu0 %v3332
        %7862 = vmatprep.subr.mxu0 %v3337
        %7863 = vmatpush1.msra.mxu0 %v3336
        %7864 = vmatprep.subr.mxu0 %v3341
        %7865 = vmatpush1.msra.mxu0 %v3340
        %7866 = vmatprep.subr.mxu0 %v3345
        %7867 = vmatpush1.msra.mxu0 %v3344
        %7868 = vmatprep.subr.mxu0 %v3349
        %7869 = vmatpush1.msra.mxu0 %v3348
        %7870 = vmatprep.subr.mxu0 %v3353
        %7871 = vmatpush1.msra.mxu0 %v3352
        %7872 = vmatprep.subr.mxu0 %v3357
        %7873 = vmatpush1.msra.mxu0 %v3356
        %7874 = vmatprep.subr.mxu0 %v3361
        %7875 = vmatpush1.msra.mxu0 %v3360
        %7876 = vmatprep.subr.mxu0 %v3365
        %7877 = vmatpush1.msra.mxu0 %v3364
        %7878 = vmatprep.subr.mxu0 %v3369
        %7879 = vmatpush1.msra.mxu0 %v3368
        %7880 = vmatprep.subr.mxu0 %v3373
        %7881 = vmatpush1.msra.mxu0 %v3372
        %7882 = vmatprep.subr.mxu0 %v3377
        %7883 = vmatpush1.msra.mxu0 %v3376
        %7884 = vmatprep.subr.mxu0 %v3381
        %7885 = vmatpush1.msra.mxu0 %v3380
        %7886 = vmatprep.subr.mxu0 %v3385
        %7887 = vmatpush1.msra.mxu0 %v3384
        %7888 = vmatprep.subr.mxu0 %v3389
        %7889 = vmatpush1.msra.mxu0 %v3388
        %7890 = vmatprep.subr.mxu0 %v3393
        %7891 = vmatpush1.msra.mxu0 %v3392
        %7892 = vmatprep.subr.mxu0 %v3397
        %7893 = vmatpush1.msra.mxu0 %v3396
        %7894 = vmatprep.subr.mxu0 %v3401
        %7895 = vmatpush1.msra.mxu0 %v3400
        %7896 = vmatprep.subr.mxu0 %v3405
        %7897 = vmatpush1.msra.mxu0 %v3404
        %7898 = vmatprep.subr.mxu0 %v3409
        %7899 = vmatpush1.msra.mxu0 %v3408
        %7900 = vmatprep.subr.mxu0 %v3413
        %7901 = vmatpush1.msra.mxu0 %v3412
        %7902 = vmatprep.mubr.f32.mxu0 %v3269
        %7903 = vmatmul.mubr.f32.gmra.mrb[0].mxu0 %v3268
        %v7904 = vpop.f32.mrb[0].mxu0
        %v7905 = vadd.f32 0.0, %v7904
        %v7906 = vpop.f32.mrb[0].mxu0
        %v7907 = vadd.f32 0.0, %v7906
        %7908 = vmatprep.mubr.f32.mxu0 %v3285
        %7909 = vmatmul.mubr.f32.gmra.mrb[0].mxu0 %v3284
        %v7910 = vpop.f32.mrb[0].mxu0
        %v7911 = vadd.f32 0.0, %v7910
        %v7912 = vpop.f32.mrb[0].mxu0
        %v7913 = vadd.f32 0.0, %v7912
        %7914 = vdwg.mxu0
        %v7915 = vmul.f32 %v7828, %v3414
        %v7916 = vmul.f32 %v7830, %v3415
        %v7917 = vmul.f32 %v7905, %v3416
        %v7918 = vmul.f32 %v7907, %v3417
        %v7919 = vmul.f32 %v7834, %v3418
        %v7920 = vmul.f32 %v7836, %v3419
        %v7921 = vmul.f32 %v7911, %v3420
        %v7922 = vmul.f32 %v7913, %v3421
        %v7924 = vsel %vm3659, %v7919, 0
        %v7927 = vsel %vm3659, %v7920, 0
        %v7930 = vsel %vm3659, %v7921, 0
        %v7933 = vsel %vm3659, %v7922, 0
        %7935 = vmatprep.subr.mxu0 %v7916
        %7936 = vmatpush1.msra.mxu0 %v7915
        %7937 = vmatprep.subr.mxu0 %v7927
        %7938 = vmatpush1.msra.mxu0 %v7924
        %7939 = vmatprep.subr.mxu0 0.0
        %7940 = vmatpush1.msra.mxu0 0.0
        %7941 = vmatprep.subr.mxu0 0.0
        %7942 = vmatpush1.msra.mxu0 0.0
        %7943 = vmatprep.subr.mxu0 0.0
        %7944 = vmatpush1.msra.mxu0 0.0
        %7945 = vmatprep.subr.mxu0 0.0
        %7946 = vmatpush1.msra.mxu0 0.0
        %7947 = vmatprep.subr.mxu0 0.0
        %7948 = vmatpush1.msra.mxu0 0.0
        %7949 = vmatprep.subr.mxu0 0.0
        %7950 = vmatpush1.msra.mxu0 0.0
        %7951 = vmatprep.subr.mxu0 0.0
        %7952 = vmatpush1.msra.mxu0 0.0
        %7953 = vmatprep.subr.mxu0 0.0
        %7954 = vmatpush1.msra.mxu0 0.0
        %7955 = vmatprep.subr.mxu0 0.0
        %7956 = vmatpush1.msra.mxu0 0.0
        %7957 = vmatprep.subr.mxu0 0.0
        %7958 = vmatpush1.msra.mxu0 0.0
        %7959 = vmatprep.subr.mxu0 0.0
        %7960 = vmatpush1.msra.mxu0 0.0
        %7961 = vmatprep.subr.mxu0 0.0
        %7962 = vmatpush1.msra.mxu0 0.0
        %7963 = vmatprep.subr.mxu0 0.0
        %7964 = vmatpush1.msra.mxu0 0.0
        %7965 = vmatprep.subr.mxu0 0.0
        %7966 = vmatpush1.msra.mxu0 0.0
        %7967 = vmatprep.subr.mxu0 0.0
        %7968 = vmatpush1.msra.mxu0 0.0
        %7969 = vmatprep.subr.mxu0 0.0
        %7970 = vmatpush1.msra.mxu0 0.0
        %7971 = vmatprep.subr.mxu0 0.0
        %7972 = vmatpush1.msra.mxu0 0.0
        %7973 = vmatprep.subr.mxu0 0.0
        %7974 = vmatpush1.msra.mxu0 0.0
        %7975 = vmatprep.subr.mxu0 0.0
        %7976 = vmatpush1.msra.mxu0 0.0
        %7977 = vmatprep.subr.mxu0 0.0
        %7978 = vmatpush1.msra.mxu0 0.0
        %7979 = vmatprep.subr.mxu0 0.0
        %7980 = vmatpush1.msra.mxu0 0.0
        %7981 = vmatprep.subr.mxu0 0.0
        %7982 = vmatpush1.msra.mxu0 0.0
        %7983 = vmatprep.subr.mxu0 0.0
        %7984 = vmatpush1.msra.mxu0 0.0
        %7985 = vmatprep.subr.mxu0 0.0
        %7986 = vmatpush1.msra.mxu0 0.0
        %7987 = vmatprep.subr.mxu0 0.0
        %7988 = vmatpush1.msra.mxu0 0.0
        %7989 = vmatprep.subr.mxu0 0.0
        %7990 = vmatpush1.msra.mxu0 0.0
        %7991 = vmatprep.subr.mxu0 0.0
        %7992 = vmatpush1.msra.mxu0 0.0
        %7993 = vmatprep.subr.mxu0 0.0
        %7994 = vmatpush1.msra.mxu0 0.0
        %7995 = vmatprep.subr.mxu0 0.0
        %7996 = vmatpush1.msra.mxu0 0.0
        %7997 = vmatprep.subr.mxu0 0.0
        %7998 = vmatpush1.msra.mxu0 0.0
        %7999 = vmatprep.mubr.f32.mxu0 0.0
        %8000 = vmatmul.mubr.f32.gmra.mrb[0].mxu0 %v3657
        %v8001 = vpop.f32.mrb[0].mxu0
        %v8002 = vadd.f32 0.0, %v8001
        %v8003 = vpop.f32.mrb[0].mxu0
        %v8004 = vadd.f32 0.0, %v8003
        %8005 = vdwg.mxu0
        %8006 = vmatprep.subr.mxu0 %v7918
        %8007 = vmatpush1.msra.mxu0 %v7917
        %8008 = vmatprep.subr.mxu0 %v7933
        %8009 = vmatpush1.msra.mxu0 %v7930
        %8010 = vmatprep.subr.mxu0 0.0
        %8011 = vmatpush1.msra.mxu0 0.0
        %8012 = vmatprep.subr.mxu0 0.0
        %8013 = vmatpush1.msra.mxu0 0.0
        %8014 = vmatprep.subr.mxu0 0.0
        %8015 = vmatpush1.msra.mxu0 0.0
        %8016 = vmatprep.subr.mxu0 0.0
        %8017 = vmatpush1.msra.mxu0 0.0
        %8018 = vmatprep.subr.mxu0 0.0
        %8019 = vmatpush1.msra.mxu0 0.0
        %8020 = vmatprep.subr.mxu0 0.0
        %8021 = vmatpush1.msra.mxu0 0.0
        %8022 = vmatprep.subr.mxu0 0.0
        %8023 = vmatpush1.msra.mxu0 0.0
        %8024 = vmatprep.subr.mxu0 0.0
        %8025 = vmatpush1.msra.mxu0 0.0
        %8026 = vmatprep.subr.mxu0 0.0
        %8027 = vmatpush1.msra.mxu0 0.0
        %8028 = vmatprep.subr.mxu0 0.0
        %8029 = vmatpush1.msra.mxu0 0.0
        %8030 = vmatprep.subr.mxu0 0.0
        %8031 = vmatpush1.msra.mxu0 0.0
        %8032 = vmatprep.subr.mxu0 0.0
        %8033 = vmatpush1.msra.mxu0 0.0
        %8034 = vmatprep.subr.mxu0 0.0
        %8035 = vmatpush1.msra.mxu0 0.0
        %8036 = vmatprep.subr.mxu0 0.0
        %8037 = vmatpush1.msra.mxu0 0.0
        %8038 = vmatprep.subr.mxu0 0.0
        %8039 = vmatpush1.msra.mxu0 0.0
        %8040 = vmatprep.subr.mxu0 0.0
        %8041 = vmatpush1.msra.mxu0 0.0
        %8042 = vmatprep.subr.mxu0 0.0
        %8043 = vmatpush1.msra.mxu0 0.0
        %8044 = vmatprep.subr.mxu0 0.0
        %8045 = vmatpush1.msra.mxu0 0.0
        %8046 = vmatprep.subr.mxu0 0.0
        %8047 = vmatpush1.msra.mxu0 0.0
        %8048 = vmatprep.subr.mxu0 0.0
        %8049 = vmatpush1.msra.mxu0 0.0
        %8050 = vmatprep.subr.mxu0 0.0
        %8051 = vmatpush1.msra.mxu0 0.0
        %8052 = vmatprep.subr.mxu0 0.0
        %8053 = vmatpush1.msra.mxu0 0.0
        %8054 = vmatprep.subr.mxu0 0.0
        %8055 = vmatpush1.msra.mxu0 0.0
        %8056 = vmatprep.subr.mxu0 0.0
        %8057 = vmatpush1.msra.mxu0 0.0
        %8058 = vmatprep.subr.mxu0 0.0
        %8059 = vmatpush1.msra.mxu0 0.0
        %8060 = vmatprep.subr.mxu0 0.0
        %8061 = vmatpush1.msra.mxu0 0.0
        %8062 = vmatprep.subr.mxu0 0.0
        %8063 = vmatpush1.msra.mxu0 0.0
        %8064 = vmatprep.subr.mxu0 0.0
        %8065 = vmatpush1.msra.mxu0 0.0
        %8066 = vmatprep.subr.mxu0 0.0
        %8067 = vmatpush1.msra.mxu0 0.0
        %8068 = vmatprep.subr.mxu0 0.0
        %8069 = vmatpush1.msra.mxu0 0.0
        %8070 = vmatprep.mubr.f32.mxu0 0.0
        %8071 = vmatmul.mubr.f32.gmra.mrb[0].mxu0 %v3657
        %v8072 = vpop.f32.mrb[0].mxu0
        %v8073 = vadd.f32 0.0, %v8072
        %v8074 = vpop.f32.mrb[0].mxu0
        %v8075 = vadd.f32 0.0, %v8074
        %8076 = vdwg.mxu0
        %v8078 = vsel %vm3814, %v8075, 0
        %8080 = vmatprep.subr.mxu0 0.0
        %8081 = vmatpush1.msra.mxu0 %v3422
        %8082 = vmatprep.subr.mxu0 0.0
        %8083 = vmatpush1.msra.mxu0 %v3423
        %8084 = vmatprep.subr.mxu0 0.0
        %8085 = vmatpush1.msra.mxu0 %v3424
        %8086 = vmatprep.subr.mxu0 0.0
        %8087 = vmatpush1.msra.mxu0 %v3425
        %8088 = vmatprep.subr.mxu0 0.0
        %8089 = vmatpush1.msra.mxu0 %v3426
        %8090 = vmatprep.subr.mxu0 0.0
        %8091 = vmatpush1.msra.mxu0 %v3427
        %8092 = vmatprep.subr.mxu0 0.0
        %8093 = vmatpush1.msra.mxu0 %v3428
        %8094 = vmatprep.subr.mxu0 0.0
        %8095 = vmatpush1.msra.mxu0 %v3429
        %8096 = vmatprep.subr.mxu0 0.0
        %8097 = vmatpush1.msra.mxu0 %v3430
        %8098 = vmatprep.subr.mxu0 0.0
        %8099 = vmatpush1.msra.mxu0 %v3431
        %8100 = vmatprep.subr.mxu0 0.0
        %8101 = vmatpush1.msra.mxu0 %v3432
        %8102 = vmatprep.subr.mxu0 0.0
        %8103 = vmatpush1.msra.mxu0 %v3433
        %8104 = vmatprep.subr.mxu0 0.0
        %8105 = vmatpush1.msra.mxu0 %v3434
        %8106 = vmatprep.subr.mxu0 0.0
        %8107 = vmatpush1.msra.mxu0 %v3435
        %8108 = vmatprep.subr.mxu0 0.0
        %8109 = vmatpush1.msra.mxu0 %v3436
        %8110 = vmatprep.subr.mxu0 0.0
        %8111 = vmatpush1.msra.mxu0 %v3437
        %8112 = vmatprep.subr.mxu0 0.0
        %8113 = vmatpush1.msra.mxu0 %v3438
        %8114 = vmatprep.subr.mxu0 0.0
        %8115 = vmatpush1.msra.mxu0 %v3439
        %8116 = vmatprep.subr.mxu0 0.0
        %8117 = vmatpush1.msra.mxu0 %v3440
        %8118 = vmatprep.subr.mxu0 0.0
        %8119 = vmatpush1.msra.mxu0 %v3441
        %8120 = vmatprep.subr.mxu0 0.0
        %8121 = vmatpush1.msra.mxu0 %v3442
        %8122 = vmatprep.subr.mxu0 0.0
        %8123 = vmatpush1.msra.mxu0 %v3443
        %8124 = vmatprep.subr.mxu0 0.0
        %8125 = vmatpush1.msra.mxu0 %v3444
        %8126 = vmatprep.subr.mxu0 0.0
        %8127 = vmatpush1.msra.mxu0 %v3445
        %8128 = vmatprep.subr.mxu0 0.0
        %8129 = vmatpush1.msra.mxu0 %v3446
        %8130 = vmatprep.subr.mxu0 0.0
        %8131 = vmatpush1.msra.mxu0 %v3447
        %8132 = vmatprep.subr.mxu0 0.0
        %8133 = vmatpush1.msra.mxu0 %v3448
        %8134 = vmatprep.subr.mxu0 0.0
        %8135 = vmatpush1.msra.mxu0 %v3449
        %8136 = vmatprep.subr.mxu0 0.0
        %8137 = vmatpush1.msra.mxu0 %v3450
        %8138 = vmatprep.subr.mxu0 0.0
        %8139 = vmatpush1.msra.mxu0 %v3451
        %8140 = vmatprep.subr.mxu0 0.0
        %8141 = vmatpush1.msra.mxu0 %v3452
        %8142 = vmatprep.subr.mxu0 0.0
        %8143 = vmatpush1.msra.mxu0 %v3453
        %8144 = vmatprep.mubr.f32.mxu0 %v8004
        %8145 = vmatmul.mubr.f32.gmra.mrb[0].mxu0 %v8002
        %v8146 = vpop.f32.mrb[0].mxu0
        %v8147 = vadd.f32 %v3482, %v8146
        %v8148 = vpop.f32.mrb[0].mxu0
        %8149 = vdwg.mxu0
        %8150 = vmatprep.subr.mxu0 0.0
        %8151 = vmatpush1.msra.mxu0 %v3454
        %8152 = vmatprep.subr.mxu0 0.0
        %8153 = vmatpush1.msra.mxu0 %v3455
        %8154 = vmatprep.subr.mxu0 0.0
        %8155 = vmatpush1.msra.mxu0 %v3456
        %8156 = vmatprep.subr.mxu0 0.0
        %8157 = vmatpush1.msra.mxu0 %v3457
        %8158 = vmatprep.subr.mxu0 0.0
        %8159 = vmatpush1.msra.mxu0 %v3458
        %8160 = vmatprep.subr.mxu0 0.0
        %8161 = vmatpush1.msra.mxu0 %v3459
        %8162 = vmatprep.subr.mxu0 0.0
        %8163 = vmatpush1.msra.mxu0 %v3460
        %8164 = vmatprep.subr.mxu0 0.0
        %8165 = vmatpush1.msra.mxu0 %v3461
        %8166 = vmatprep.subr.mxu0 0.0
        %8167 = vmatpush1.msra.mxu0 %v3462
        %8168 = vmatprep.subr.mxu0 0.0
        %8169 = vmatpush1.msra.mxu0 %v3463
        %8170 = vmatprep.subr.mxu0 0.0
        %8171 = vmatpush1.msra.mxu0 %v3464
        %8172 = vmatprep.subr.mxu0 0.0
        %8173 = vmatpush1.msra.mxu0 %v3465
        %8174 = vmatprep.subr.mxu0 0.0
        %8175 = vmatpush1.msra.mxu0 %v3466
        %8176 = vmatprep.subr.mxu0 0.0
        %8177 = vmatpush1.msra.mxu0 %v3467
        %8178 = vmatprep.subr.mxu0 0.0
        %8179 = vmatpush1.msra.mxu0 %v3468
        %8180 = vmatprep.subr.mxu0 0.0
        %8181 = vmatpush1.msra.mxu0 %v3469
        %8182 = vmatprep.subr.mxu0 0.0
        %8183 = vmatpush1.msra.mxu0 %v3470
        %8184 = vmatprep.subr.mxu0 0.0
        %8185 = vmatpush1.msra.mxu0 %v3471
        %8186 = vmatprep.subr.mxu0 0.0
        %8187 = vmatpush1.msra.mxu0 %v3472
        %8188 = vmatprep.subr.mxu0 0.0
        %8189 = vmatpush1.msra.mxu0 %v3473
        %8190 = vmatprep.subr.mxu0 0.0
        %8191 = vmatpush1.msra.mxu0 %v3474
        %8192 = vmatprep.subr.mxu0 0.0
        %8193 = vmatpush1.msra.mxu0 %v3475
        %8194 = vmatprep.subr.mxu0 0.0
        %8195 = vmatpush1.msra.mxu0 %v3476
        %8196 = vmatprep.subr.mxu0 0.0
        %8197 = vmatpush1.msra.mxu0 %v3477
        %8198 = vmatprep.subr.mxu0 0.0
        %8199 = vmatpush1.msra.mxu0 %v3478
        %8200 = vmatprep.subr.mxu0 0.0
        %8201 = vmatpush1.msra.mxu0 %v3479
        %8202 = vmatprep.subr.mxu0 0.0
        %8203 = vmatpush1.msra.mxu0 %v3480
        %8204 = vmatprep.subr.mxu0 0.0
        %8205 = vmatpush1.msra.mxu0 %v3481
        %8206 = vmatprep.subr.mxu0 0.0
        %8207 = vmatpush1.msra.mxu0 0.0
        %8208 = vmatprep.subr.mxu0 0.0
        %8209 = vmatpush1.msra.mxu0 0.0
        %8210 = vmatprep.subr.mxu0 0.0
        %8211 = vmatpush1.msra.mxu0 0.0
        %8212 = vmatprep.subr.mxu0 0.0
        %8213 = vmatpush1.msra.mxu0 0.0
        %8214 = vmatprep.mubr.f32.mxu0 %v8078
        %8215 = vmatmul.mubr.f32.gmra.mrb[0].mxu0 %v8073
        %v8216 = vpop.f32.mrb[0].mxu0
        %v8217 = vadd.f32 %v8147, %v8216
        %v8218 = vpop.f32.mrb[0].mxu0
        %8219 = vdwg.mxu0
        %v8220 = vmax.f32 %v8217, 0.0
        %v8222 = vsel %vm643, %v8220, 0
        %8224 = vmatprep.subr.mxu0 0.0
        %8225 = vmatpush1.msra.mxu0 %v3483
        %8226 = vmatprep.subr.mxu0 0.0
        %8227 = vmatpush1.msra.mxu0 %v3484
        %8228 = vmatprep.subr.mxu0 0.0
        %8229 = vmatpush1.msra.mxu0 %v3485
        %8230 = vmatprep.subr.mxu0 0.0
        %8231 = vmatpush1.msra.mxu0 %v3486
        %8232 = vmatprep.subr.mxu0 0.0
        %8233 = vmatpush1.msra.mxu0 0.0
        %8234 = vmatprep.subr.mxu0 0.0
        %8235 = vmatpush1.msra.mxu0 0.0
        %8236 = vmatprep.subr.mxu0 0.0
        %8237 = vmatpush1.msra.mxu0 0.0
        %8238 = vmatprep.subr.mxu0 0.0
        %8239 = vmatpush1.msra.mxu0 0.0
        %8240 = vmatprep.subr.mxu0 0.0
        %8241 = vmatpush1.msra.mxu0 0.0
        %8242 = vmatprep.subr.mxu0 0.0
        %8243 = vmatpush1.msra.mxu0 0.0
        %8244 = vmatprep.subr.mxu0 0.0
        %8245 = vmatpush1.msra.mxu0 0.0
        %8246 = vmatprep.subr.mxu0 0.0
        %8247 = vmatpush1.msra.mxu0 0.0
        %8248 = vmatprep.subr.mxu0 0.0
        %8249 = vmatpush1.msra.mxu0 0.0
        %8250 = vmatprep.subr.mxu0 0.0
        %8251 = vmatpush1.msra.mxu0 0.0
        %8252 = vmatprep.subr.mxu0 0.0
        %8253 = vmatpush1.msra.mxu0 0.0
        %8254 = vmatprep.subr.mxu0 0.0
        %8255 = vmatpush1.msra.mxu0 0.0
        %8256 = vmatprep.subr.mxu0 0.0
        %8257 = vmatpush1.msra.mxu0 0.0
        %8258 = vmatprep.subr.mxu0 0.0
        %8259 = vmatpush1.msra.mxu0 0.0
        %8260 = vmatprep.subr.mxu0 0.0
        %8261 = vmatpush1.msra.mxu0 0.0
        %8262 = vmatprep.subr.mxu0 0.0
        %8263 = vmatpush1.msra.mxu0 0.0
        %8264 = vmatprep.subr.mxu0 0.0
        %8265 = vmatpush1.msra.mxu0 0.0
        %8266 = vmatprep.subr.mxu0 0.0
        %8267 = vmatpush1.msra.mxu0 0.0
        %8268 = vmatprep.subr.mxu0 0.0
        %8269 = vmatpush1.msra.mxu0 0.0
        %8270 = vmatprep.subr.mxu0 0.0
        %8271 = vmatpush1.msra.mxu0 0.0
        %8272 = vmatprep.subr.mxu0 0.0
        %8273 = vmatpush1.msra.mxu0 0.0
        %8274 = vmatprep.subr.mxu0 0.0
        %8275 = vmatpush1.msra.mxu0 0.0
        %8276 = vmatprep.subr.mxu0 0.0
        %8277 = vmatpush1.msra.mxu0 0.0
        %8278 = vmatprep.subr.mxu0 0.0
        %8279 = vmatpush1.msra.mxu0 0.0
        %8280 = vmatprep.subr.mxu0 0.0
        %8281 = vmatpush1.msra.mxu0 0.0
        %8282 = vmatprep.subr.mxu0 0.0
        %8283 = vmatpush1.msra.mxu0 0.0
        %8284 = vmatprep.subr.mxu0 0.0
        %8285 = vmatpush1.msra.mxu0 0.0
        %8286 = vmatprep.subr.mxu0 0.0
        %8287 = vmatpush1.msra.mxu0 0.0
        %8288 = vmatprep.mubr.f32.mxu0 0.0
        %8289 = vmatmul.mubr.f32.gmra.mrb[0].mxu0 %v8222
        %v8290 = vpop.f32.mrb[0].mxu0
        %v8291 = vadd.f32 %v3487, %v8290
        %v8292 = vpop.f32.mrb[0].mxu0
        %8293 = vdwg.mxu0
        %v8294 = vmax.f32 %v8291, 0.0
        %v8296 = vsel %vm4033, %v8294, 0
        %8298 = vmatprep.subr.mxu0 0.0
        %8299 = vmatpush1.msra.mxu0 %v3488
        %8300 = vmatprep.subr.mxu0 0.0
        %8301 = vmatpush1.msra.mxu0 %v3489
        %8302 = vmatprep.subr.mxu0 0.0
        %8303 = vmatpush1.msra.mxu0 %v3490
        %8304 = vmatprep.subr.mxu0 0.0
        %8305 = vmatpush1.msra.mxu0 %v4039
        %8306 = vmatprep.subr.mxu0 0.0
        %8307 = vmatpush1.msra.mxu0 0.0
        %8308 = vmatprep.subr.mxu0 0.0
        %8309 = vmatpush1.msra.mxu0 0.0
        %8310 = vmatprep.subr.mxu0 0.0
        %8311 = vmatpush1.msra.mxu0 0.0
        %8312 = vmatprep.subr.mxu0 0.0
        %8313 = vmatpush1.msra.mxu0 0.0
        %8314 = vmatprep.subr.mxu0 0.0
        %8315 = vmatpush1.msra.mxu0 0.0
        %8316 = vmatprep.subr.mxu0 0.0
        %8317 = vmatpush1.msra.mxu0 0.0
        %8318 = vmatprep.subr.mxu0 0.0
        %8319 = vmatpush1.msra.mxu0 0.0
        %8320 = vmatprep.subr.mxu0 0.0
        %8321 = vmatpush1.msra.mxu0 0.0
        %8322 = vmatprep.subr.mxu0 0.0
        %8323 = vmatpush1.msra.mxu0 0.0
        %8324 = vmatprep.subr.mxu0 0.0
        %8325 = vmatpush1.msra.mxu0 0.0
        %8326 = vmatprep.subr.mxu0 0.0
        %8327 = vmatpush1.msra.mxu0 0.0
        %8328 = vmatprep.subr.mxu0 0.0
        %8329 = vmatpush1.msra.mxu0 0.0
        %8330 = vmatprep.subr.mxu0 0.0
        %8331 = vmatpush1.msra.mxu0 0.0
        %8332 = vmatprep.subr.mxu0 0.0
        %8333 = vmatpush1.msra.mxu0 0.0
        %8334 = vmatprep.subr.mxu0 0.0
        %8335 = vmatpush1.msra.mxu0 0.0
        %8336 = vmatprep.subr.mxu0 0.0
        %8337 = vmatpush1.msra.mxu0 0.0
        %8338 = vmatprep.subr.mxu0 0.0
        %8339 = vmatpush1.msra.mxu0 0.0
        %8340 = vmatprep.subr.mxu0 0.0
        %8341 = vmatpush1.msra.mxu0 0.0
        %8342 = vmatprep.subr.mxu0 0.0
        %8343 = vmatpush1.msra.mxu0 0.0
        %8344 = vmatprep.subr.mxu0 0.0
        %8345 = vmatpush1.msra.mxu0 0.0
        %8346 = vmatprep.subr.mxu0 0.0
        %8347 = vmatpush1.msra.mxu0 0.0
        %8348 = vmatprep.subr.mxu0 0.0
        %8349 = vmatpush1.msra.mxu0 0.0
        %8350 = vmatprep.subr.mxu0 0.0
        %8351 = vmatpush1.msra.mxu0 0.0
        %8352 = vmatprep.subr.mxu0 0.0
        %8353 = vmatpush1.msra.mxu0 0.0
        %8354 = vmatprep.subr.mxu0 0.0
        %8355 = vmatpush1.msra.mxu0 0.0
        %8356 = vmatprep.subr.mxu0 0.0
        %8357 = vmatpush1.msra.mxu0 0.0
        %8358 = vmatprep.subr.mxu0 0.0
        %8359 = vmatpush1.msra.mxu0 0.0
        %8360 = vmatprep.subr.mxu0 0.0
        %8361 = vmatpush1.msra.mxu0 0.0
        %8362 = vmatprep.mubr.f32.mxu0 0.0
        %8363 = vmatmul.mubr.f32.gmra.mrb[0].mxu0 %v8296
        %v8364 = vpop.f32.mrb[0].mxu0
        %v8365 = vadd.f32 %v3492, %v8364
        %v8366 = vpop.f32.mrb[0].mxu0
        %8367 = vdwg.mxu0
        %8368 = vst.msk [vmem:[%s379 + $0x7] sm:$0x1] %vm4111, %v8365
        %s8369 = sand.u32 %s269, 1
        %s8370 = scalar_lea.sflag [#allocation3], %s8369
        %s8371 = sand.u32 %s269, 1
        %s8372 = smul.addr %s8371, 8
        %s8373 = scalar_lea.vmem [#allocation2], %s8372
        // Predicated region
        $region65: #{neuralnet_forward.1} parent=63 // pred_check
          %p8374 = pneg %p279
        $region66: #{neuralnet_forward.1} parent=63 // pred_check_branch
          %8376 = sbr.rel (%p8374) target = $region68
        $region67: #{neuralnet_forward.1} parent=63 // pred_region
          %s8378 = ssub.s32 128, 128
          %8379 = vsyncadd %s8370, %s8378
          %s8380 = smul.addr %s25, 128
          %s8381 = scalar_lea.hbm %s11, %s8380
          %s8383 = sshll.u32 %s8373, 4
          %s8384 = int_to_ptr.vmem [resolvable:$true] %s8383
          %8386 = dma.vmem_to_hbm [thread:$0]  %s8384, 128, %s8381, %s8370
        $region68: #{neuralnet_forward.1} parent=63 // pred_fallthru
          _
      $region64: #{neuralnet_forward.1} parent=5 // pred_fallthru
        _
      %p8387 = scmp.le.s32.totalorder 2, %s20
      // Predicated region
      $region69: #{neuralnet_forward.1} parent=5 // pred_check
        %p8388 = pneg %p8387
      $region70: #{neuralnet_forward.1} parent=5 // pred_check_branch
        %8390 = sbr.rel (%p8388) target = $region72
      $region71: #{neuralnet_forward.1} parent=5 // pred_region
        %s8391 = ssub.s32 %s20, 2
        // Predicated region
        $region73: #{neuralnet_forward.1} parent=71 // pred_check
          %p8392 = pneg %p285
        $region74: #{neuralnet_forward.1} parent=71 // pred_check_branch
          %8394 = sbr.rel (%p8392) target = $region76
        $region75: #{neuralnet_forward.1} parent=71 // pred_region
          %s8395 = sand.u32 %s270, 1
          %s8396 = scalar_lea.sflag [#allocation3], %s8395
          %s8397 = sand.u32 %s270, 1
          %s8398 = smul.addr %s8397, 8
          %s8399 = scalar_lea.vmem [#allocation2], %s8398
          %8400 = dma.done %s8396, 128
        $region76: #{neuralnet_forward.1} parent=71 // pred_fallthru
          _
      $region72: #{neuralnet_forward.1} parent=5 // pred_fallthru
        _
    $region6: #{neuralnet_forward.1} parent=1 // loop_footer
      %s24 = sadd.s32 1, %s20
    $region7: #{neuralnet_forward.1} parent=1 // loop_footer_branch
      %19 = sbr.rel target = $region3
    $region8: #{neuralnet_forward.1} parent=1 // loop_exit
      _
    %8401 = vsyncpa [#allocation3], 1
    %s8402 = scalar_lea.sflag [#allocation3], 1
    %8403 = vsyncpa %s8402, 1

</llo_original>
